<compile_context>
chip_gen: v7x
topology: tpu7x:2x2x1
jax: 0.10.0
libtpu: 0.0.40
codegen_flags: <defaults>
</compile_context>

<pallas_src>
import math
import functools

import jax
import jax.numpy as jnp
from jax.experimental import pallas as pl
from jax.experimental.pallas import tpu as pltpu


_NEG_BIG = -1e30  # finite "-inf" for masked softmax keys (avoids inf/NaN math)


def _round_up(v, m):
    return ((v + m - 1) // m) * m


# ------------------------------ in-kernel math ------------------------------ #

def _erf(x):
    # Abramowitz & Stegun 7.1.26 rational approximation; the divide is routed
    # to the EUP via pl.reciprocal (error well inside the test tolerance).
    a1, a2, a3, a4, a5 = 0.254829592, -0.284496736, 1.421413741, -1.453152027, 1.061405429
    p = 0.3275911
    ax = jnp.abs(x)
    t = pl.reciprocal(1.0 + p * ax, approx=True)
    poly = ((((a5 * t + a4) * t + a3) * t + a2) * t + a1) * t
    y = 1.0 - poly * jnp.exp(-ax * ax)
    return jnp.where(x >= 0, y, -y)


def _gelu(x):
    # torch.nn.GELU(approximate='none'): 0.5 * x * (1 + erf(x / sqrt(2)))
    return 0.5 * x * (1.0 + _erf(x * (1.0 / math.sqrt(2.0))))


def _layernorm(x, g, b, eps=1e-5):
    mu = jnp.mean(x, axis=-1, keepdims=True)
    var = jnp.mean(jnp.square(x - mu), axis=-1, keepdims=True)
    return (x - mu) * jax.lax.rsqrt(var + eps) * g + b


# ---------------------------------- kernel ---------------------------------- #

def transmil_kernel(
        x_ref, fc_w_ref, fc_b_ref, cls_ref,
        ln1_g_ref, ln1_b_ref, wqkv_ref, bqkv_ref, wo_ref, bo_ref,
        ln2_g_ref, ln2_b_ref, w1_ref, b1_ref, w2_ref, b2_ref,
        lnf_g_ref, lnf_b_ref, head_w_ref, head_b_ref,
        out_ref,
        seq_ref, qkv_ref,
        *, heads, depth, dim, n_valid, tile_n, n_tiles, q_tile, kv_tile, s_pad):
    cd = jnp.bfloat16                         # MXU-native matmul operand dtype
    t = pl.program_id(1)
    hd = dim // heads
    n_q = s_pad // q_tile
    n_kv = s_pad // kv_tile
    scale = 1.0 / math.sqrt(hd)               # nn.MultiheadAttention scaling

    # ---------- stage 1: streamed fc (Linear + GELU), written in place -------
    xt = x_ref[0].astype(cd)                                        # (tile_n, D_in)
    h = jnp.dot(xt, fc_w_ref[...], preferred_element_type=jnp.float32) + fc_b_ref[...]
    h = _gelu(h)
    # Zero rows past the true bag length (edge x block may contain garbage).
    row = jax.lax.broadcasted_iota(jnp.int32, (tile_n, 1), 0) + t * tile_n
    h = jnp.where(row < n_valid, h, 0.0)
    r0 = pl.multiple_of(8 + t * tile_n, 8)
    seq_ref[pl.ds(r0, tile_n), :] = h          # residual stream, persists over t

    @pl.when(t == 0)
    def _init():
        # rows [0,8): [cls | 7 zero rows]; tail padding rows zeroed so that
        # LN/QKV on them stays finite (they are masked as softmax keys).
        cls8 = jnp.where(jax.lax.broadcasted_iota(jnp.int32, (8, 1), 0) == 0,
                         cls_ref[...], 0.0)
        seq_ref[0:8, :] = cls8
        tail0 = 8 + n_tiles * tile_n
        if s_pad > tail0:
            seq_ref[tail0:s_pad, :] = jnp.zeros((s_pad - tail0, dim), jnp.float32)

    # ---------- stage 2: transformer + cls head, once the bag is resident ----
    @pl.when(t == n_tiles - 1)
    def _transformer():
        for l in range(depth):                 # depth is small -> static unroll
            # -- pass 1: pre-LN + fused QKV for every row, stored once as bf16
            @pl.loop(0, n_q)
            def _(qi):
                q0 = pl.multiple_of(qi * q_tile, q_tile)
                xq = seq_ref[pl.ds(q0, q_tile), :]
                xn = _layernorm(xq, ln1_g_ref[l], ln1_b_ref[l]).astype(cd)
                qkv = (jnp.dot(xn, wqkv_ref[l], preferred_element_type=jnp.float32)
                       + bqkv_ref[l])
                qkv_ref[pl.ds(q0, q_tile), :] = qkv.astype(cd)

            # -- pass 2: per q tile: flash attention over kv chunks, single
            #    full-K Wo matmul, residual, FF, residual (in-place update) --
            @pl.loop(0, n_q)
            def _(qi):
                q0 = pl.multiple_of(qi * q_tile, q_tile)
                xq = seq_ref[pl.ds(q0, q_tile), :]                  # (q_tile, dim) f32
                qkv_q = qkv_ref[pl.ds(q0, q_tile), :]               # (q_tile, 3*dim) bf16
                ohs = []
                for hh in range(heads):                             # heads small
                    q_h = qkv_q[:, hh * hd:(hh + 1) * hd]           # bf16 (q_tile, hd)

                    def kv_body(c, carry, _hh=hh, _q_h=q_h):
                        m_i, l_i, acc = carry
                        k0 = pl.multiple_of(c * kv_tile, kv_tile)
                        k_c = qkv_ref[pl.ds(k0, kv_tile),
                                      pl.ds(dim + _hh * hd, hd)]
                        v_c = qkv_ref[pl.ds(k0, kv_tile),
                                      pl.ds(2 * dim + _hh * hd, hd)]
                        s = jax.lax.dot_general(
                            _q_h, k_c, (((1,), (1,)), ((), ())),
                            preferred_element_type=jnp.float32) * scale
                        col = jax.lax.broadcasted_iota(jnp.int32, (1, kv_tile), 1) + k0
                        valid = (col == 0) | ((col >= 8) & (col < 8 + n_valid))
                        s = s + jnp.where(valid, 0.0, _NEG_BIG)
                        m_new = jnp.maximum(m_i, jnp.max(s, axis=-1, keepdims=True))
                        alpha = jnp.exp(m_i - m_new)
                        p = jnp.exp(s - m_new)
                        l_new = alpha * l_i + jnp.sum(p, axis=-1, keepdims=True)
                        acc_new = alpha * acc + jnp.dot(
                            p.astype(cd), v_c, preferred_element_type=jnp.float32)
                        return m_new, l_new, acc_new

                    m0 = jnp.full((q_tile, 1), _NEG_BIG, jnp.float32)
                    l0 = jnp.zeros((q_tile, 1), jnp.float32)
                    a0 = jnp.zeros((q_tile, hd), jnp.float32)
                    m_i, l_i, acc = jax.lax.fori_loop(0, n_kv, kv_body, (m0, l0, a0))
                    ohs.append((acc * pl.reciprocal(l_i, approx=True)).astype(cd))

                # lane-contiguous head outputs -> single full-K output projection
                attn_cat = jnp.concatenate(ohs, axis=-1) if heads > 1 else ohs[0]
                attn = (jnp.dot(attn_cat, wo_ref[l], preferred_element_type=jnp.float32)
                        + bo_ref[l])
                y = xq + attn                                        # attn residual

                xn2 = _layernorm(y, ln2_g_ref[l], ln2_b_ref[l]).astype(cd)
                mid = _gelu(jnp.dot(xn2, w1_ref[l], preferred_element_type=jnp.float32)
                            + b1_ref[l]).astype(cd)
                ff = jnp.dot(mid, w2_ref[l], preferred_element_type=jnp.float32) + b2_ref[l]
                seq_ref[pl.ds(q0, q_tile), :] = y + ff               # ff residual

        # Final LayerNorm + head on the cls row only (LN is per-token, so this
        # is mathematically identical to normalising the whole sequence).
        pooled = _layernorm(seq_ref[0:8, :], lnf_g_ref[...], lnf_b_ref[...]).astype(cd)
        logits = (jnp.dot(pooled, head_w_ref[...], preferred_element_type=jnp.float32)
                  + head_b_ref[...])
        out_ref[0] = logits[0:1, :].astype(out_ref.dtype)


# ---------------------------------- wrapper --------------------------------- #

def transmil_forward(x, lens, params, *, heads, depth, num_classes,
                     tile_n=None, q_tile=256, kv_tile=512):
    # `lens` only feeds the dead (`... and False`) mask branch / mean pooling;
    # with pool='cls' and mask=None it cannot change the output.
    del lens
    b, n, d_in = x.shape
    dim = params["fc_w"].shape[1]
    mlp_dim = params["w1"].shape[2]
    cd = jnp.bfloat16

    # fc-stage row tiles.
    if tile_n is None:
        tile_n = min(512, _round_up(n, 8))
    tile_n = max(8, _round_up(tile_n, 8))
    n_tiles = pl.cdiv(n, tile_n)
    s_min = 8 + n_tiles * tile_n               # rows actually produced

    # stage-2 tiles: kv_tile is a multiple of q_tile; s_pad divisible by both.
    q_tile = max(8, _round_up(min(q_tile, s_min), 8))
    n_from_q = _round_up(s_min, q_tile)
    kv_mult = max(1, min(kv_tile // q_tile, n_from_q // q_tile))
    kv_tile = q_tile * kv_mult
    s_pad = _round_up(s_min, kv_tile)

    # Fused QKV weight/bias; matmul weights shipped as bf16 (f32 accumulation
    # inside the kernel).  Biases / LN params / cls token stay f32.
    wqkv = jnp.concatenate([params["wq"], params["wk"], params["wv"]], axis=-1).astype(cd)
    bqkv = jnp.concatenate([params["bq"], params["bk"], params["bv"]], axis=-1)
    weights = [
        params["fc_w"].astype(cd), params["fc_b"], params["cls"],
        params["ln1_g"], params["ln1_b"],
        wqkv, bqkv, params["wo"].astype(cd), params["bo"],
        params["ln2_g"], params["ln2_b"],
        params["w1"].astype(cd), params["b1"],
        params["w2"].astype(cd), params["b2"],
        params["lnf_g"], params["lnf_b"],
        params["head_w"].astype(cd), params["head_b"],
    ]
    weight_bytes = sum(int(w.size) * w.dtype.itemsize for w in weights)

    # Generation-aware VMEM capacity (v5e/v6e: 128 MiB, v7x: 64 MiB per TC).
    try:
        vmem_cap = int(pltpu.get_tpu_info().vmem_capacity_bytes)
    except Exception:
        vmem_cap = 64 * 2 ** 20                # smallest-VMEM generation

    kernel = functools.partial(
        transmil_kernel, heads=heads, depth=depth, dim=dim,
        n_valid=n, tile_n=tile_n, n_tiles=n_tiles,
        q_tile=q_tile, kv_tile=kv_tile, s_pad=s_pad)

    def build_and_call(single_buffer_weights):
        if single_buffer_weights and not hasattr(pl, "Buffered"):
            raise ValueError("pl.Buffered not available")

        def full_spec(w):
            # Constant index_map: block never changes -> DMA'd once.
            idx = lambda bb, tt, _nd=w.ndim: (0,) * _nd
            if single_buffer_weights:
                return pl.BlockSpec(w.shape, idx, pipeline_mode=pl.Buffered(1))
            return pl.BlockSpec(w.shape, idx)

        in_specs = ([pl.BlockSpec((1, tile_n, d_in), lambda bb, tt: (bb, tt, 0))]
                    + [full_spec(w) for w in weights])
        # Output kept 3-D (B, 1, C) so the block's last two dims equal the full
        # array dims; written only on the last row-tile step, squeezed after.
        out_specs = pl.BlockSpec((1, 1, num_classes), lambda bb, tt: (bb, 0, 0))

        wbuf = (1 if single_buffer_weights else 2) * weight_bytes
        est = (wbuf
               + 2 * tile_n * d_in * x.dtype.itemsize        # double-buffered x tile
               + s_pad * dim * 4                              # residual-stream scratch
               + s_pad * 3 * dim * 2                          # bf16 QKV scratch
               + q_tile * (4 * dim * 4 + 2 * kv_tile * 4 + 2 * mlp_dim * 4))
        vmem_limit = int(min(0.85 * vmem_cap, max(32 * 2 ** 20, 2.0 * est)))

        return pl.pallas_call(
            kernel,
            out_shape=jax.ShapeDtypeStruct((b, 1, num_classes), jnp.float32),
            grid_spec=pltpu.PrefetchScalarGridSpec(
                num_scalar_prefetch=0,
                grid=(b, n_tiles),
                in_specs=in_specs,
                out_specs=out_specs,
                scratch_shapes=[
                    pltpu.VMEM((s_pad, dim), jnp.float32),       # residual stream
                    pltpu.VMEM((s_pad, 3 * dim), jnp.bfloat16),  # per-layer QKV
                ],
            ),
            compiler_params=pltpu.CompilerParams(
                dimension_semantics=("parallel", "arbitrary"),
                vmem_limit_bytes=vmem_limit,
            ),
        )(x, *weights)

    try:
        out = build_and_call(True)          # single-buffered constant weights
    except Exception:
        out = build_and_call(False)         # fallback: default double-buffering
    return out[:, 0, :]


# ---------------------------- pure-JAX reference ---------------------------- #

def transmil_reference(x, params, *, heads):
    """Faithful f32 reference of the TransMIL forward (eval mode)."""
    b, _, _ = x.shape
    dim = params["fc_w"].shape[1]
    depth = params["wq"].shape[0]
    hd = dim // heads

    def ln(z, g, bb):
        mu = jnp.mean(z, axis=-1, keepdims=True)
        var = jnp.mean(jnp.square(z - mu), axis=-1, keepdims=True)
        return (z - mu) * jax.lax.rsqrt(var + 1e-5) * g + bb

    h = jax.nn.gelu(x @ params["fc_w"] + params["fc_b"], approximate=False)
    cls = jnp.broadcast_to(params["cls"][None], (b, 1, dim))
    seq = jnp.concatenate([cls, h], axis=1)
    for l in range(depth):
        xn = ln(seq, params["ln1_g"][l], params["ln1_b"][l])
        q = (xn @ params["wq"][l] + params["bq"][l]).reshape(b, -1, heads, hd)
        k = (xn @ params["wk"][l] + params["bk"][l]).reshape(b, -1, heads, hd)
        v = (xn @ params["wv"][l] + params["bv"][l]).reshape(b, -1, heads, hd)
        s = jnp.einsum("bqhd,bkhd->bhqk", q, k) / math.sqrt(hd)
        p = jax.nn.softmax(s, axis=-1)
        o = jnp.einsum("bhqk,bkhd->bqhd", p, v).reshape(b, -1, dim)
        seq = seq + o @ params["wo"][l] + params["bo"][l]
        xn2 = ln(seq, params["ln2_g"][l], params["ln2_b"][l])
        mid = jax.nn.gelu(xn2 @ params["w1"][l] + params["b1"][l], approximate=False)
        seq = seq + mid @ params["w2"][l] + params["b2"][l]
    seq = ln(seq, params["lnf_g"], params["lnf_b"])
    return seq[:, 0] @ params["head_w"] + params["head_b"]


# -------------------------- deterministic parameters ------------------------ #

def init_params(key, *, input_dim, dim, depth, mlp_dim, num_classes):
    ks = jax.random.split(key, 16)
    s = 0.02
    p = {}
    p["fc_w"] = s * jax.random.normal(ks[0], (input_dim, dim), jnp.float32)
    p["fc_b"] = s * jax.random.normal(ks[1], (1, dim), jnp.float32)
    p["cls"] = jax.random.normal(ks[2], (1, dim), jnp.float32)       # nn.Parameter(randn(dim))
    p["ln1_g"] = jnp.ones((depth, 1, dim), jnp.float32)
    p["ln1_b"] = jnp.zeros((depth, 1, dim), jnp.float32)
    p["wq"] = s * jax.random.normal(ks[3], (depth, dim, dim), jnp.float32)
    p["bq"] = s * jax.random.normal(ks[4], (depth, 1, dim), jnp.float32)
    p["wk"] = s * jax.random.normal(ks[5], (depth, dim, dim), jnp.float32)
    p["bk"] = s * jax.random.normal(ks[6], (depth, 1, dim), jnp.float32)
    p["wv"] = s * jax.random.normal(ks[7], (depth, dim, dim), jnp.float32)
    p["bv"] = s * jax.random.normal(ks[8], (depth, 1, dim), jnp.float32)
    p["wo"] = s * jax.random.normal(ks[9], (depth, dim, dim), jnp.float32)
    p["bo"] = s * jax.random.normal(ks[10], (depth, 1, dim), jnp.float32)
    p["ln2_g"] = jnp.ones((depth, 1, dim), jnp.float32)
    p["ln2_b"] = jnp.zeros((depth, 1, dim), jnp.float32)
    p["w1"] = s * jax.random.normal(ks[11], (depth, dim, mlp_dim), jnp.float32)
    p["b1"] = s * jax.random.normal(ks[12], (depth, 1, mlp_dim), jnp.float32)
    p["w2"] = s * jax.random.normal(ks[13], (depth, mlp_dim, dim), jnp.float32)
    p["b2"] = s * jax.random.normal(ks[14], (depth, 1, dim), jnp.float32)
    p["lnf_g"] = jnp.ones((1, dim), jnp.float32)
    p["lnf_b"] = jnp.zeros((1, dim), jnp.float32)
    p["head_w"] = s * jax.random.normal(ks[15], (dim, num_classes), jnp.float32)
    p["head_b"] = jnp.zeros((1, num_classes), jnp.float32)
    return p


if __name__ == "__main__":
    key = jax.random.PRNGKey(0)

    # Case 1: canonical small TransMIL shapes (single fc tile, single q/kv tile).
    B, N, INPUT_DIM = 2, 7, 32
    DIM, DEPTH, HEADS, MLP_DIM, NUM_CLASSES = 32, 2, 4, 64, 3
    kx, kp, kx2 = jax.random.split(key, 3)
    x = jax.random.normal(kx, (B, N, INPUT_DIM), jnp.float32)
    lens = jnp.full((B,), N, dtype=jnp.int32)
    params = init_params(kp, input_dim=INPUT_DIM, dim=DIM, depth=DEPTH,
                         mlp_dim=MLP_DIM, num_classes=NUM_CLASSES)

    out = transmil_forward(x, lens, params,
                           heads=HEADS, depth=DEPTH, num_classes=NUM_CLASSES)
    out = jax.block_until_ready(out)
    ref = transmil_reference(x, params, heads=HEADS)
    assert out.shape == (B, NUM_CLASSES)
    assert bool(jnp.all(jnp.isfinite(out)))
    err1 = float(jnp.max(jnp.abs(out - ref)))
    assert err1 < 3e-2, f"case1 kernel vs reference mismatch: {err1}"

    # Case 2: exercise the tiled paths (several fc row tiles, q tiles, kv chunks).
    N2 = 30
    x2 = jax.random.normal(kx2, (B, N2, INPUT_DIM), jnp.float32)
    lens2 = jnp.full((B,), N2, dtype=jnp.int32)
    out2 = transmil_forward(x2, lens2, params, heads=HEADS, depth=DEPTH,
                            num_classes=NUM_CLASSES, tile_n=8, q_tile=16, kv_tile=16)
    out2 = jax.block_until_ready(out2)
    ref2 = transmil_reference(x2, params, heads=HEADS)
    assert out2.shape == (B, NUM_CLASSES)
    assert bool(jnp.all(jnp.isfinite(out2)))
    err2 = float(jnp.max(jnp.abs(out2 - ref2)))
    assert err2 < 3e-2, f"case2 kernel vs reference mismatch: {err2}"

    print("KERNEL_OK")
</pallas_src>

<mosaic_0001>
module attributes {stable_mosaic.version = 11 : i64} {
  func.func @transmil_kernel(%arg0: i32, %arg1: i32, %arg2: memref<1x8x32xf32, #tpu.memory_space<vmem>>, %arg3: memref<32x32xbf16, #tpu.memory_space<vmem>>, %arg4: memref<1x32xf32, #tpu.memory_space<vmem>>, %arg5: memref<1x32xf32, #tpu.memory_space<vmem>>, %arg6: memref<2x1x32xf32, #tpu.memory_space<vmem>>, %arg7: memref<2x1x32xf32, #tpu.memory_space<vmem>>, %arg8: memref<2x32x96xbf16, #tpu.memory_space<vmem>>, %arg9: memref<2x1x96xf32, #tpu.memory_space<vmem>>, %arg10: memref<2x32x32xbf16, #tpu.memory_space<vmem>>, %arg11: memref<2x1x32xf32, #tpu.memory_space<vmem>>, %arg12: memref<2x1x32xf32, #tpu.memory_space<vmem>>, %arg13: memref<2x1x32xf32, #tpu.memory_space<vmem>>, %arg14: memref<2x32x64xbf16, #tpu.memory_space<vmem>>, %arg15: memref<2x1x64xf32, #tpu.memory_space<vmem>>, %arg16: memref<2x64x32xbf16, #tpu.memory_space<vmem>>, %arg17: memref<2x1x32xf32, #tpu.memory_space<vmem>>, %arg18: memref<1x32xf32, #tpu.memory_space<vmem>>, %arg19: memref<1x32xf32, #tpu.memory_space<vmem>>, %arg20: memref<32x3xbf16, #tpu.memory_space<vmem>>, %arg21: memref<1x3xf32, #tpu.memory_space<vmem>>, %arg22: memref<1x1x3xf32, #tpu.memory_space<vmem>>, %arg23: memref<16x32xf32, #tpu.memory_space<vmem>>, %arg24: memref<16x96xbf16, #tpu.memory_space<vmem>>) attributes {dimension_semantics = [#tpu.dimension_semantics<parallel>, #tpu.dimension_semantics<arbitrary>], iteration_bounds = array<i64: 2, 1>, scalar_prefetch = 0 : i64, scratch_operands = 2 : i64, tpu.core_type = #tpu.core_type<tc>, window_params = [{transform_indices = @transform_0, window_bounds = array<i64: 1, 8, 32>}, {pipeline_mode = #tpu.pipeline_mode<synchronous>, transform_indices = @transform_1, window_bounds = array<i64: 32, 32>}, {pipeline_mode = #tpu.pipeline_mode<synchronous>, transform_indices = @transform_2, window_bounds = array<i64: 1, 32>}, {pipeline_mode = #tpu.pipeline_mode<synchronous>, transform_indices = @transform_3, window_bounds = array<i64: 1, 32>}, {pipeline_mode = #tpu.pipeline_mode<synchronous>, transform_indices = @transform_4, window_bounds = array<i64: 2, 1, 32>}, {pipeline_mode = #tpu.pipeline_mode<synchronous>, transform_indices = @transform_5, window_bounds = array<i64: 2, 1, 32>}, {pipeline_mode = #tpu.pipeline_mode<synchronous>, transform_indices = @transform_6, window_bounds = array<i64: 2, 32, 96>}, {pipeline_mode = #tpu.pipeline_mode<synchronous>, transform_indices = @transform_7, window_bounds = array<i64: 2, 1, 96>}, {pipeline_mode = #tpu.pipeline_mode<synchronous>, transform_indices = @transform_8, window_bounds = array<i64: 2, 32, 32>}, {pipeline_mode = #tpu.pipeline_mode<synchronous>, transform_indices = @transform_9, window_bounds = array<i64: 2, 1, 32>}, {pipeline_mode = #tpu.pipeline_mode<synchronous>, transform_indices = @transform_10, window_bounds = array<i64: 2, 1, 32>}, {pipeline_mode = #tpu.pipeline_mode<synchronous>, transform_indices = @transform_11, window_bounds = array<i64: 2, 1, 32>}, {pipeline_mode = #tpu.pipeline_mode<synchronous>, transform_indices = @transform_12, window_bounds = array<i64: 2, 32, 64>}, {pipeline_mode = #tpu.pipeline_mode<synchronous>, transform_indices = @transform_13, window_bounds = array<i64: 2, 1, 64>}, {pipeline_mode = #tpu.pipeline_mode<synchronous>, transform_indices = @transform_14, window_bounds = array<i64: 2, 64, 32>}, {pipeline_mode = #tpu.pipeline_mode<synchronous>, transform_indices = @transform_15, window_bounds = array<i64: 2, 1, 32>}, {pipeline_mode = #tpu.pipeline_mode<synchronous>, transform_indices = @transform_16, window_bounds = array<i64: 1, 32>}, {pipeline_mode = #tpu.pipeline_mode<synchronous>, transform_indices = @transform_17, window_bounds = array<i64: 1, 32>}, {pipeline_mode = #tpu.pipeline_mode<synchronous>, transform_indices = @transform_18, window_bounds = array<i64: 32, 3>}, {pipeline_mode = #tpu.pipeline_mode<synchronous>, transform_indices = @transform_19, window_bounds = array<i64: 1, 3>}, {transform_indices = @transform_20, window_bounds = array<i64: 1, 1, 3>}]} {
    %c0 = arith.constant 0 : index
    %c0_0 = arith.constant 0 : index
    %c0_1 = arith.constant 0 : index
    %0 = vector.load %arg2[%c0, %c0_0, %c0_1] : memref<1x8x32xf32, #tpu.memory_space<vmem>>, vector<1x8x32xf32>
    %1 = vector.shape_cast %0 : vector<1x8x32xf32> to vector<8x32xf32>
    %2 = arith.truncf %1 : vector<8x32xf32> to vector<8x32xbf16>
    %c0_2 = arith.constant 0 : index
    %c0_3 = arith.constant 0 : index
    %3 = vector.load %arg3[%c0_2, %c0_3] : memref<32x32xbf16, #tpu.memory_space<vmem>>, vector<32x32xbf16>
    %cst = arith.constant dense<0.000000e+00> : vector<8x32xf32>
    %4 = tpu.matmul %2, %3, %cst {dimension_numbers = #tpu.dot_dimension_numbers<[1], [0], [0], [1], [0, 0, 1, 1], [], []>} : vector<8x32xbf16>, vector<32x32xbf16>, vector<8x32xf32> -> vector<8x32xf32>
    %c0_4 = arith.constant 0 : index
    %c0_5 = arith.constant 0 : index
    %5 = vector.load %arg4[%c0_4, %c0_5] : memref<1x32xf32, #tpu.memory_space<vmem>>, vector<1x32xf32>
    %6 = vector.broadcast %5 : vector<1x32xf32> to vector<8x32xf32>
    %7 = arith.addf %4, %6 : vector<8x32xf32>
    %cst_6 = arith.constant 5.000000e-01 : f32
    %8 = vector.broadcast %cst_6 : f32 to vector<8x32xf32>
    %9 = arith.mulf %8, %7 : vector<8x32xf32>
    %cst_7 = arith.constant 0.707106769 : f32
    %10 = vector.broadcast %cst_7 : f32 to vector<8x32xf32>
    %11 = arith.mulf %7, %10 : vector<8x32xf32>
    %12 = math.absf %11 : vector<8x32xf32>
    %cst_8 = arith.constant 0.327591091 : f32
    %13 = vector.broadcast %cst_8 : f32 to vector<8x32xf32>
    %14 = arith.mulf %13, %12 : vector<8x32xf32>
    %cst_9 = arith.constant 1.000000e+00 : f32
    %15 = vector.broadcast %cst_9 : f32 to vector<8x32xf32>
    %16 = arith.addf %15, %14 : vector<8x32xf32>
    %17 = tpu.reciprocal %16 {approx = true} : vector<8x32xf32> -> vector<8x32xf32>
    %cst_10 = arith.constant 1.06140542 : f32
    %18 = vector.broadcast %cst_10 : f32 to vector<8x32xf32>
    %19 = arith.mulf %18, %17 : vector<8x32xf32>
    %cst_11 = arith.constant -1.45315206 : f32
    %20 = vector.broadcast %cst_11 : f32 to vector<8x32xf32>
    %21 = arith.addf %19, %20 : vector<8x32xf32>
    %22 = arith.mulf %21, %17 : vector<8x32xf32>
    %cst_12 = arith.constant 1.42141378 : f32
    %23 = vector.broadcast %cst_12 : f32 to vector<8x32xf32>
    %24 = arith.addf %22, %23 : vector<8x32xf32>
    %25 = arith.mulf %24, %17 : vector<8x32xf32>
    %cst_13 = arith.constant -0.284496725 : f32
    %26 = vector.broadcast %cst_13 : f32 to vector<8x32xf32>
    %27 = arith.addf %25, %26 : vector<8x32xf32>
    %28 = arith.mulf %27, %17 : vector<8x32xf32>
    %cst_14 = arith.constant 0.254829586 : f32
    %29 = vector.broadcast %cst_14 : f32 to vector<8x32xf32>
    %30 = arith.addf %28, %29 : vector<8x32xf32>
    %31 = arith.mulf %30, %17 : vector<8x32xf32>
    %cst_15 = arith.constant 0.000000e+00 : f32
    %32 = vector.broadcast %cst_15 : f32 to vector<8x32xf32>
    %33 = arith.subf %32, %12 : vector<8x32xf32>
    %34 = arith.mulf %33, %12 : vector<8x32xf32>
    %35 = math.exp %34 : vector<8x32xf32>
    %36 = arith.mulf %31, %35 : vector<8x32xf32>
    %cst_16 = arith.constant 1.000000e+00 : f32
    %37 = vector.broadcast %cst_16 : f32 to vector<8x32xf32>
    %38 = arith.subf %37, %36 : vector<8x32xf32>
    %cst_17 = arith.constant 0.000000e+00 : f32
    %39 = vector.broadcast %cst_17 : f32 to vector<8x32xf32>
    %40 = arith.cmpf oge, %11, %39 : vector<8x32xf32>
    %cst_18 = arith.constant 0.000000e+00 : f32
    %41 = vector.broadcast %cst_18 : f32 to vector<8x32xf32>
    %42 = arith.subf %41, %38 : vector<8x32xf32>
    %43 = arith.select %40, %38, %42 : vector<8x32xi1>, vector<8x32xf32>
    %cst_19 = arith.constant 1.000000e+00 : f32
    %44 = vector.broadcast %cst_19 : f32 to vector<8x32xf32>
    %45 = arith.addf %44, %43 : vector<8x32xf32>
    %46 = arith.mulf %9, %45 : vector<8x32xf32>
    %47 = tpu.iota {dimensions = array<i32: 0>} : vector<8x1xi32>
    %c8_i32 = arith.constant 8 : i32
    %48 = arith.muli %arg1, %c8_i32 : i32
    %49 = vector.broadcast %48 : i32 to vector<8x1xi32>
    %50 = arith.addi %47, %49 : vector<8x1xi32>
    %c7_i32 = arith.constant 7 : i32
    %51 = vector.broadcast %c7_i32 : i32 to vector<8x1xi32>
    %52 = arith.cmpi slt, %50, %51 : vector<8x1xi32>
    %cst_20 = arith.constant 0.000000e+00 : f32
    %53 = vector.shape_cast %52 : vector<8x1xi1> to vector<8x1xi1>
    %54 = vector.broadcast %53 : vector<8x1xi1> to vector<8x32xi1>
    %55 = vector.broadcast %cst_20 : f32 to vector<8x32xf32>
    %56 = arith.select %54, %46, %55 : vector<8x32xi1>, vector<8x32xf32>
    %c8_i32_21 = arith.constant 8 : i32
    %57 = arith.muli %arg1, %c8_i32_21 : i32
    %c8_i32_22 = arith.constant 8 : i32
    %58 = arith.addi %c8_i32_22, %57 : i32
    %59 = tpu.assume_multiple %58, 8 : i32
    %60 = arith.index_cast %59 : i32 to index
    %c0_23 = arith.constant 0 : index
    %61 = vector.load %arg23[%60, %c0_23] : memref<16x32xf32, #tpu.memory_space<vmem>>, vector<8x32xf32>
    tpu.vector_store %arg23[%60, %c0_23], %56 {strides = array<i32>} : memref<16x32xf32, #tpu.memory_space<vmem>>, vector<8x32xf32>,
    %c0_i32 = arith.constant 0 : i32
    %62 = arith.cmpi eq, %arg1, %c0_i32 : i32
    %63 = arith.extui %62 : i1 to i32
    %c0_i32_24 = arith.constant 0 : i32
    %64 = arith.cmpi ne, %63, %c0_i32_24 : i32
    scf.if %64 {
      %68 = tpu.iota {dimensions = array<i32: 0>} : vector<8x1xi32>
      %c0_i32_27 = arith.constant 0 : i32
      %69 = vector.broadcast %c0_i32_27 : i32 to vector<8x1xi32>
      %70 = arith.cmpi eq, %68, %69 : vector<8x1xi32>
      %c0_28 = arith.constant 0 : index
      %c0_29 = arith.constant 0 : index
      %71 = vector.load %arg5[%c0_28, %c0_29] : memref<1x32xf32, #tpu.memory_space<vmem>>, vector<1x32xf32>
      %cst_30 = arith.constant 0.000000e+00 : f32
      %72 = vector.shape_cast %70 : vector<8x1xi1> to vector<8x1xi1>
      %73 = vector.broadcast %72 : vector<8x1xi1> to vector<8x32xi1>
      %74 = vector.shape_cast %71 : vector<1x32xf32> to vector<1x32xf32>
      %75 = vector.broadcast %74 : vector<1x32xf32> to vector<8x32xf32>
      %76 = vector.broadcast %cst_30 : f32 to vector<8x32xf32>
      %77 = arith.select %73, %75, %76 : vector<8x32xi1>, vector<8x32xf32>
      %c0_31 = arith.constant 0 : index
      %c0_32 = arith.constant 0 : index
      %78 = vector.load %arg23[%c0_31, %c0_32] : memref<16x32xf32, #tpu.memory_space<vmem>>, vector<8x32xf32>
      tpu.vector_store %arg23[%c0_31, %c0_32], %77 {strides = array<i32>} : memref<16x32xf32, #tpu.memory_space<vmem>>, vector<8x32xf32>,
    } else {
    }
    %c0_i32_25 = arith.constant 0 : i32
    %65 = arith.cmpi eq, %arg1, %c0_i32_25 : i32
    %66 = arith.extui %65 : i1 to i32
    %c0_i32_26 = arith.constant 0 : i32
    %67 = arith.cmpi ne, %66, %c0_i32_26 : i32
    scf.if %67 {
      %c0_i32_27 = arith.constant 0 : i32
      %c1_i32 = arith.constant 1 : i32
      %68 = arith.muli %c0_i32_27, %c1_i32 : i32
      %c0_i32_28 = arith.constant 0 : i32
      %69 = arith.addi %c0_i32_28, %68 : i32
      %c16_i32 = arith.constant 16 : i32
      %70 = arith.muli %69, %c16_i32 : i32
      %71 = tpu.assume_multiple %70, 16 : i32
      %72 = arith.index_cast %71 : i32 to index
      %c0_29 = arith.constant 0 : index
      %73 = vector.load %arg23[%72, %c0_29] : memref<16x32xf32, #tpu.memory_space<vmem>>, vector<16x32xf32>
      %c0_30 = arith.constant 0 : index
      %c0_31 = arith.constant 0 : index
      %c0_32 = arith.constant 0 : index
      %74 = vector.load %arg6[%c0_30, %c0_31, %c0_32] : memref<2x1x32xf32, #tpu.memory_space<vmem>>, vector<1x1x32xf32>
      %75 = vector.shape_cast %74 : vector<1x1x32xf32> to vector<1x32xf32>
      %c0_33 = arith.constant 0 : index
      %c0_34 = arith.constant 0 : index
      %c0_35 = arith.constant 0 : index
      %76 = vector.load %arg7[%c0_33, %c0_34, %c0_35] : memref<2x1x32xf32, #tpu.memory_space<vmem>>, vector<1x1x32xf32>
      %77 = vector.shape_cast %76 : vector<1x1x32xf32> to vector<1x32xf32>
      %cst_36 = arith.constant dense<0.000000e+00> : vector<16xf32>
      %78 = vector.multi_reduction <add>, %73, %cst_36 [1] : vector<16x32xf32> to vector<16xf32>
      %79 = vector.shape_cast %78 : vector<16xf32> to vector<16x1xf32>
      %cst_37 = arith.constant 3.200000e+01 : f32
      %80 = vector.broadcast %cst_37 : f32 to vector<16x1xf32>
      %81 = arith.divf %79, %80 : vector<16x1xf32>
      %82 = vector.broadcast %81 : vector<16x1xf32> to vector<16x32xf32>
      %83 = arith.subf %73, %82 : vector<16x32xf32>
      %84 = arith.mulf %83, %83 : vector<16x32xf32>
      %cst_38 = arith.constant dense<0.000000e+00> : vector<16xf32>
      %85 = vector.multi_reduction <add>, %84, %cst_38 [1] : vector<16x32xf32> to vector<16xf32>
      %86 = vector.shape_cast %85 : vector<16xf32> to vector<16x1xf32>
      %cst_39 = arith.constant 3.200000e+01 : f32
      %87 = vector.broadcast %cst_39 : f32 to vector<16x1xf32>
      %88 = arith.divf %86, %87 : vector<16x1xf32>
      %89 = vector.broadcast %81 : vector<16x1xf32> to vector<16x32xf32>
      %90 = arith.subf %73, %89 : vector<16x32xf32>
      %cst_40 = arith.constant 9.99999974E-6 : f32
      %91 = vector.broadcast %cst_40 : f32 to vector<16x1xf32>
      %92 = arith.addf %88, %91 : vector<16x1xf32>
      %93 = math.rsqrt %92 : vector<16x1xf32>
      %94 = vector.broadcast %93 : vector<16x1xf32> to vector<16x32xf32>
      %95 = arith.mulf %90, %94 : vector<16x32xf32>
      %96 = vector.broadcast %75 : vector<1x32xf32> to vector<16x32xf32>
      %97 = arith.mulf %95, %96 : vector<16x32xf32>
      %98 = vector.broadcast %77 : vector<1x32xf32> to vector<16x32xf32>
      %99 = arith.addf %97, %98 : vector<16x32xf32>
      %100 = arith.truncf %99 : vector<16x32xf32> to vector<16x32xbf16>
      %c0_41 = arith.constant 0 : index
      %c0_42 = arith.constant 0 : index
      %c0_43 = arith.constant 0 : index
      %101 = vector.load %arg8[%c0_41, %c0_42, %c0_43] : memref<2x32x96xbf16, #tpu.memory_space<vmem>>, vector<1x32x96xbf16>
      %102 = vector.shape_cast %101 : vector<1x32x96xbf16> to vector<32x96xbf16>
      %cst_44 = arith.constant dense<0.000000e+00> : vector<16x96xf32>
      %103 = tpu.matmul %100, %102, %cst_44 {dimension_numbers = #tpu.dot_dimension_numbers<[1], [0], [0], [1], [0, 0, 1, 1], [], []>} : vector<16x32xbf16>, vector<32x96xbf16>, vector<16x96xf32> -> vector<16x96xf32>
      %c0_45 = arith.constant 0 : index
      %c0_46 = arith.constant 0 : index
      %c0_47 = arith.constant 0 : index
      %104 = vector.load %arg9[%c0_45, %c0_46, %c0_47] : memref<2x1x96xf32, #tpu.memory_space<vmem>>, vector<1x1x96xf32>
      %105 = vector.shape_cast %104 : vector<1x1x96xf32> to vector<1x96xf32>
      %106 = vector.broadcast %105 : vector<1x96xf32> to vector<16x96xf32>
      %107 = arith.addf %103, %106 : vector<16x96xf32>
      %108 = arith.truncf %107 : vector<16x96xf32> to vector<16x96xbf16>
      %109 = arith.index_cast %71 : i32 to index
      %c0_48 = arith.constant 0 : index
      %110 = vector.load %arg24[%109, %c0_48] : memref<16x96xbf16, #tpu.memory_space<vmem>>, vector<16x96xbf16>
      tpu.vector_store %arg24[%109, %c0_48], %108 {strides = array<i32>} : memref<16x96xbf16, #tpu.memory_space<vmem>>, vector<16x96xbf16>,
      %c1_i32_49 = arith.constant 1 : i32
      %c0_i32_50 = arith.constant 0 : i32
      %c1_i32_51 = arith.constant 1 : i32
      %111 = arith.muli %c0_i32_50, %c1_i32_51 : i32
      %c0_i32_52 = arith.constant 0 : i32
      %112 = arith.addi %c0_i32_52, %111 : i32
      %c16_i32_53 = arith.constant 16 : i32
      %113 = arith.muli %112, %c16_i32_53 : i32
      %114 = tpu.assume_multiple %113, 16 : i32
      %115 = arith.index_cast %114 : i32 to index
      %c0_54 = arith.constant 0 : index
      %116 = vector.load %arg23[%115, %c0_54] : memref<16x32xf32, #tpu.memory_space<vmem>>, vector<16x32xf32>
      %117 = arith.index_cast %114 : i32 to index
      %c0_55 = arith.constant 0 : index
      %118 = vector.load %arg24[%117, %c0_55] : memref<16x96xbf16, #tpu.memory_space<vmem>>, vector<16x96xbf16>
      %119 = vector.extract_strided_slice %118 {offsets = [0, 0], sizes = [16, 8], strides = [1, 1]} : vector<16x96xbf16> to vector<16x8xbf16>
      %cst_56 = arith.constant -1.000000e+30 : f32
      %120 = vector.broadcast %cst_56 : f32 to vector<16x1xf32>
      %cst_57 = arith.constant 0.000000e+00 : f32
      %121 = vector.broadcast %cst_57 : f32 to vector<16x1xf32>
      %cst_58 = arith.constant 0.000000e+00 : f32
      %122 = vector.broadcast %cst_58 : f32 to vector<16x8xf32>
      %c0_i32_59 = arith.constant 0 : i32
      %c16_i32_60 = arith.constant 16 : i32
      %123 = arith.muli %c0_i32_59, %c16_i32_60 : i32
      %124 = tpu.assume_multiple %123, 16 : i32
      %125 = arith.index_cast %124 : i32 to index
      %c32 = arith.constant 32 : index
      %126 = vector.load %arg24[%125, %c32] : memref<16x96xbf16, #tpu.memory_space<vmem>>, vector<16x8xbf16>
      %127 = arith.index_cast %124 : i32 to index
      %c64 = arith.constant 64 : index
      %128 = vector.load %arg24[%127, %c64] : memref<16x96xbf16, #tpu.memory_space<vmem>>, vector<16x8xbf16>
      %cst_61 = arith.constant dense<0.000000e+00> : vector<16x16xf32>
      %129 = tpu.matmul %119, %126, %cst_61 {dimension_numbers = #tpu.dot_dimension_numbers<[1], [1], [0], [0], [0, 0, 1, 0], [], []>} : vector<16x8xbf16>, vector<16x8xbf16>, vector<16x16xf32> -> vector<16x16xf32>
      %cst_62 = arith.constant 0.353553385 : f32
      %130 = vector.broadcast %cst_62 : f32 to vector<16x16xf32>
      %131 = arith.mulf %129, %130 : vector<16x16xf32>
      %132 = tpu.iota {dimensions = array<i32: 1>} : vector<1x16xi32>
      %133 = vector.broadcast %124 : i32 to vector<1x16xi32>
      %134 = arith.addi %132, %133 : vector<1x16xi32>
      %c0_i32_63 = arith.constant 0 : i32
      %135 = vector.broadcast %c0_i32_63 : i32 to vector<1x16xi32>
      %136 = arith.cmpi eq, %134, %135 : vector<1x16xi32>
      %c8_i32_64 = arith.constant 8 : i32
      %137 = vector.broadcast %c8_i32_64 : i32 to vector<1x16xi32>
      %138 = arith.cmpi sge, %134, %137 : vector<1x16xi32>
      %c15_i32 = arith.constant 15 : i32
      %139 = vector.broadcast %c15_i32 : i32 to vector<1x16xi32>
      %140 = arith.cmpi slt, %134, %139 : vector<1x16xi32>
      %141 = arith.andi %138, %140 : vector<1x16xi1>
      %142 = arith.ori %136, %141 : vector<1x16xi1>
      %cst_65 = arith.constant 0.000000e+00 : f32
      %cst_66 = arith.constant -1.000000e+30 : f32
      %143 = vector.broadcast %cst_65 : f32 to vector<1x16xf32>
      %144 = vector.broadcast %cst_66 : f32 to vector<1x16xf32>
      %145 = arith.select %142, %143, %144 : vector<1x16xi1>, vector<1x16xf32>
      %146 = vector.broadcast %145 : vector<1x16xf32> to vector<16x16xf32>
      %147 = arith.addf %131, %146 : vector<16x16xf32>
      %cst_67 = arith.constant dense<0xFF800000> : vector<16xf32>
      %148 = vector.multi_reduction <maximumf>, %147, %cst_67 [1] : vector<16x16xf32> to vector<16xf32>
      %149 = vector.shape_cast %148 : vector<16xf32> to vector<16x1xf32>
      %150 = arith.maximumf %120, %149 : vector<16x1xf32>
      %151 = arith.subf %120, %150 : vector<16x1xf32>
      %152 = math.exp %151 : vector<16x1xf32>
      %153 = vector.broadcast %150 : vector<16x1xf32> to vector<16x16xf32>
      %154 = arith.subf %147, %153 : vector<16x16xf32>
      %155 = math.exp %154 : vector<16x16xf32>
      %156 = arith.mulf %152, %121 : vector<16x1xf32>
      %cst_68 = arith.constant dense<0.000000e+00> : vector<16xf32>
      %157 = vector.multi_reduction <add>, %155, %cst_68 [1] : vector<16x16xf32> to vector<16xf32>
      %158 = vector.shape_cast %157 : vector<16xf32> to vector<16x1xf32>
      %159 = arith.addf %156, %158 : vector<16x1xf32>
      %160 = vector.broadcast %152 : vector<16x1xf32> to vector<16x8xf32>
      %161 = arith.mulf %160, %122 : vector<16x8xf32>
      %162 = arith.truncf %155 : vector<16x16xf32> to vector<16x16xbf16>
      %cst_69 = arith.constant dense<0.000000e+00> : vector<16x8xf32>
      %163 = tpu.matmul %162, %128, %cst_69 {dimension_numbers = #tpu.dot_dimension_numbers<[1], [0], [0], [1], [0, 0, 1, 1], [], []>} : vector<16x16xbf16>, vector<16x8xbf16>, vector<16x8xf32> -> vector<16x8xf32>
      %164 = arith.addf %161, %163 : vector<16x8xf32>
      %c1_i32_70 = arith.constant 1 : i32
      %165 = tpu.reciprocal %159 {approx = true} : vector<16x1xf32> -> vector<16x1xf32>
      %166 = vector.broadcast %165 : vector<16x1xf32> to vector<16x8xf32>
      %167 = arith.mulf %164, %166 : vector<16x8xf32>
      %168 = arith.truncf %167 : vector<16x8xf32> to vector<16x8xbf16>
      %169 = vector.extract_strided_slice %118 {offsets = [0, 8], sizes = [16, 8], strides = [1, 1]} : vector<16x96xbf16> to vector<16x8xbf16>
      %cst_71 = arith.constant -1.000000e+30 : f32
      %170 = vector.broadcast %cst_71 : f32 to vector<16x1xf32>
      %cst_72 = arith.constant 0.000000e+00 : f32
      %171 = vector.broadcast %cst_72 : f32 to vector<16x1xf32>
      %cst_73 = arith.constant 0.000000e+00 : f32
      %172 = vector.broadcast %cst_73 : f32 to vector<16x8xf32>
      %c0_i32_74 = arith.constant 0 : i32
      %c16_i32_75 = arith.constant 16 : i32
      %173 = arith.muli %c0_i32_74, %c16_i32_75 : i32
      %174 = tpu.assume_multiple %173, 16 : i32
      %175 = arith.index_cast %174 : i32 to index
      %c40 = arith.constant 40 : index
      %176 = vector.load %arg24[%175, %c40] : memref<16x96xbf16, #tpu.memory_space<vmem>>, vector<16x8xbf16>
      %177 = arith.index_cast %174 : i32 to index
      %c72 = arith.constant 72 : index
      %178 = vector.load %arg24[%177, %c72] : memref<16x96xbf16, #tpu.memory_space<vmem>>, vector<16x8xbf16>
      %cst_76 = arith.constant dense<0.000000e+00> : vector<16x16xf32>
      %179 = tpu.matmul %169, %176, %cst_76 {dimension_numbers = #tpu.dot_dimension_numbers<[1], [1], [0], [0], [0, 0, 1, 0], [], []>} : vector<16x8xbf16>, vector<16x8xbf16>, vector<16x16xf32> -> vector<16x16xf32>
      %cst_77 = arith.constant 0.353553385 : f32
      %180 = vector.broadcast %cst_77 : f32 to vector<16x16xf32>
      %181 = arith.mulf %179, %180 : vector<16x16xf32>
      %182 = tpu.iota {dimensions = array<i32: 1>} : vector<1x16xi32>
      %183 = vector.broadcast %174 : i32 to vector<1x16xi32>
      %184 = arith.addi %182, %183 : vector<1x16xi32>
      %c0_i32_78 = arith.constant 0 : i32
      %185 = vector.broadcast %c0_i32_78 : i32 to vector<1x16xi32>
      %186 = arith.cmpi eq, %184, %185 : vector<1x16xi32>
      %c8_i32_79 = arith.constant 8 : i32
      %187 = vector.broadcast %c8_i32_79 : i32 to vector<1x16xi32>
      %188 = arith.cmpi sge, %184, %187 : vector<1x16xi32>
      %c15_i32_80 = arith.constant 15 : i32
      %189 = vector.broadcast %c15_i32_80 : i32 to vector<1x16xi32>
      %190 = arith.cmpi slt, %184, %189 : vector<1x16xi32>
      %191 = arith.andi %188, %190 : vector<1x16xi1>
      %192 = arith.ori %186, %191 : vector<1x16xi1>
      %cst_81 = arith.constant 0.000000e+00 : f32
      %cst_82 = arith.constant -1.000000e+30 : f32
      %193 = vector.broadcast %cst_81 : f32 to vector<1x16xf32>
      %194 = vector.broadcast %cst_82 : f32 to vector<1x16xf32>
      %195 = arith.select %192, %193, %194 : vector<1x16xi1>, vector<1x16xf32>
      %196 = vector.broadcast %195 : vector<1x16xf32> to vector<16x16xf32>
      %197 = arith.addf %181, %196 : vector<16x16xf32>
      %cst_83 = arith.constant dense<0xFF800000> : vector<16xf32>
      %198 = vector.multi_reduction <maximumf>, %197, %cst_83 [1] : vector<16x16xf32> to vector<16xf32>
      %199 = vector.shape_cast %198 : vector<16xf32> to vector<16x1xf32>
      %200 = arith.maximumf %170, %199 : vector<16x1xf32>
      %201 = arith.subf %170, %200 : vector<16x1xf32>
      %202 = math.exp %201 : vector<16x1xf32>
      %203 = vector.broadcast %200 : vector<16x1xf32> to vector<16x16xf32>
      %204 = arith.subf %197, %203 : vector<16x16xf32>
      %205 = math.exp %204 : vector<16x16xf32>
      %206 = arith.mulf %202, %171 : vector<16x1xf32>
      %cst_84 = arith.constant dense<0.000000e+00> : vector<16xf32>
      %207 = vector.multi_reduction <add>, %205, %cst_84 [1] : vector<16x16xf32> to vector<16xf32>
      %208 = vector.shape_cast %207 : vector<16xf32> to vector<16x1xf32>
      %209 = arith.addf %206, %208 : vector<16x1xf32>
      %210 = vector.broadcast %202 : vector<16x1xf32> to vector<16x8xf32>
      %211 = arith.mulf %210, %172 : vector<16x8xf32>
      %212 = arith.truncf %205 : vector<16x16xf32> to vector<16x16xbf16>
      %cst_85 = arith.constant dense<0.000000e+00> : vector<16x8xf32>
      %213 = tpu.matmul %212, %178, %cst_85 {dimension_numbers = #tpu.dot_dimension_numbers<[1], [0], [0], [1], [0, 0, 1, 1], [], []>} : vector<16x16xbf16>, vector<16x8xbf16>, vector<16x8xf32> -> vector<16x8xf32>
      %214 = arith.addf %211, %213 : vector<16x8xf32>
      %c1_i32_86 = arith.constant 1 : i32
      %215 = tpu.reciprocal %209 {approx = true} : vector<16x1xf32> -> vector<16x1xf32>
      %216 = vector.broadcast %215 : vector<16x1xf32> to vector<16x8xf32>
      %217 = arith.mulf %214, %216 : vector<16x8xf32>
      %218 = arith.truncf %217 : vector<16x8xf32> to vector<16x8xbf16>
      %219 = vector.extract_strided_slice %118 {offsets = [0, 16], sizes = [16, 8], strides = [1, 1]} : vector<16x96xbf16> to vector<16x8xbf16>
      %cst_87 = arith.constant -1.000000e+30 : f32
      %220 = vector.broadcast %cst_87 : f32 to vector<16x1xf32>
      %cst_88 = arith.constant 0.000000e+00 : f32
      %221 = vector.broadcast %cst_88 : f32 to vector<16x1xf32>
      %cst_89 = arith.constant 0.000000e+00 : f32
      %222 = vector.broadcast %cst_89 : f32 to vector<16x8xf32>
      %c0_i32_90 = arith.constant 0 : i32
      %c16_i32_91 = arith.constant 16 : i32
      %223 = arith.muli %c0_i32_90, %c16_i32_91 : i32
      %224 = tpu.assume_multiple %223, 16 : i32
      %225 = arith.index_cast %224 : i32 to index
      %c48 = arith.constant 48 : index
      %226 = vector.load %arg24[%225, %c48] : memref<16x96xbf16, #tpu.memory_space<vmem>>, vector<16x8xbf16>
      %227 = arith.index_cast %224 : i32 to index
      %c80 = arith.constant 80 : index
      %228 = vector.load %arg24[%227, %c80] : memref<16x96xbf16, #tpu.memory_space<vmem>>, vector<16x8xbf16>
      %cst_92 = arith.constant dense<0.000000e+00> : vector<16x16xf32>
      %229 = tpu.matmul %219, %226, %cst_92 {dimension_numbers = #tpu.dot_dimension_numbers<[1], [1], [0], [0], [0, 0, 1, 0], [], []>} : vector<16x8xbf16>, vector<16x8xbf16>, vector<16x16xf32> -> vector<16x16xf32>
      %cst_93 = arith.constant 0.353553385 : f32
      %230 = vector.broadcast %cst_93 : f32 to vector<16x16xf32>
      %231 = arith.mulf %229, %230 : vector<16x16xf32>
      %232 = tpu.iota {dimensions = array<i32: 1>} : vector<1x16xi32>
      %233 = vector.broadcast %224 : i32 to vector<1x16xi32>
      %234 = arith.addi %232, %233 : vector<1x16xi32>
      %c0_i32_94 = arith.constant 0 : i32
      %235 = vector.broadcast %c0_i32_94 : i32 to vector<1x16xi32>
      %236 = arith.cmpi eq, %234, %235 : vector<1x16xi32>
      %c8_i32_95 = arith.constant 8 : i32
      %237 = vector.broadcast %c8_i32_95 : i32 to vector<1x16xi32>
      %238 = arith.cmpi sge, %234, %237 : vector<1x16xi32>
      %c15_i32_96 = arith.constant 15 : i32
      %239 = vector.broadcast %c15_i32_96 : i32 to vector<1x16xi32>
      %240 = arith.cmpi slt, %234, %239 : vector<1x16xi32>
      %241 = arith.andi %238, %240 : vector<1x16xi1>
      %242 = arith.ori %236, %241 : vector<1x16xi1>
      %cst_97 = arith.constant 0.000000e+00 : f32
      %cst_98 = arith.constant -1.000000e+30 : f32
      %243 = vector.broadcast %cst_97 : f32 to vector<1x16xf32>
      %244 = vector.broadcast %cst_98 : f32 to vector<1x16xf32>
      %245 = arith.select %242, %243, %244 : vector<1x16xi1>, vector<1x16xf32>
      %246 = vector.broadcast %245 : vector<1x16xf32> to vector<16x16xf32>
      %247 = arith.addf %231, %246 : vector<16x16xf32>
      %cst_99 = arith.constant dense<0xFF800000> : vector<16xf32>
      %248 = vector.multi_reduction <maximumf>, %247, %cst_99 [1] : vector<16x16xf32> to vector<16xf32>
      %249 = vector.shape_cast %248 : vector<16xf32> to vector<16x1xf32>
      %250 = arith.maximumf %220, %249 : vector<16x1xf32>
      %251 = arith.subf %220, %250 : vector<16x1xf32>
      %252 = math.exp %251 : vector<16x1xf32>
      %253 = vector.broadcast %250 : vector<16x1xf32> to vector<16x16xf32>
      %254 = arith.subf %247, %253 : vector<16x16xf32>
      %255 = math.exp %254 : vector<16x16xf32>
      %256 = arith.mulf %252, %221 : vector<16x1xf32>
      %cst_100 = arith.constant dense<0.000000e+00> : vector<16xf32>
      %257 = vector.multi_reduction <add>, %255, %cst_100 [1] : vector<16x16xf32> to vector<16xf32>
      %258 = vector.shape_cast %257 : vector<16xf32> to vector<16x1xf32>
      %259 = arith.addf %256, %258 : vector<16x1xf32>
      %260 = vector.broadcast %252 : vector<16x1xf32> to vector<16x8xf32>
      %261 = arith.mulf %260, %222 : vector<16x8xf32>
      %262 = arith.truncf %255 : vector<16x16xf32> to vector<16x16xbf16>
      %cst_101 = arith.constant dense<0.000000e+00> : vector<16x8xf32>
      %263 = tpu.matmul %262, %228, %cst_101 {dimension_numbers = #tpu.dot_dimension_numbers<[1], [0], [0], [1], [0, 0, 1, 1], [], []>} : vector<16x16xbf16>, vector<16x8xbf16>, vector<16x8xf32> -> vector<16x8xf32>
      %264 = arith.addf %261, %263 : vector<16x8xf32>
      %c1_i32_102 = arith.constant 1 : i32
      %265 = tpu.reciprocal %259 {approx = true} : vector<16x1xf32> -> vector<16x1xf32>
      %266 = vector.broadcast %265 : vector<16x1xf32> to vector<16x8xf32>
      %267 = arith.mulf %264, %266 : vector<16x8xf32>
      %268 = arith.truncf %267 : vector<16x8xf32> to vector<16x8xbf16>
      %269 = vector.extract_strided_slice %118 {offsets = [0, 24], sizes = [16, 8], strides = [1, 1]} : vector<16x96xbf16> to vector<16x8xbf16>
      %cst_103 = arith.constant -1.000000e+30 : f32
      %270 = vector.broadcast %cst_103 : f32 to vector<16x1xf32>
      %cst_104 = arith.constant 0.000000e+00 : f32
      %271 = vector.broadcast %cst_104 : f32 to vector<16x1xf32>
      %cst_105 = arith.constant 0.000000e+00 : f32
      %272 = vector.broadcast %cst_105 : f32 to vector<16x8xf32>
      %c0_i32_106 = arith.constant 0 : i32
      %c16_i32_107 = arith.constant 16 : i32
      %273 = arith.muli %c0_i32_106, %c16_i32_107 : i32
      %274 = tpu.assume_multiple %273, 16 : i32
      %275 = arith.index_cast %274 : i32 to index
      %c56 = arith.constant 56 : index
      %276 = vector.load %arg24[%275, %c56] : memref<16x96xbf16, #tpu.memory_space<vmem>>, vector<16x8xbf16>
      %277 = arith.index_cast %274 : i32 to index
      %c88 = arith.constant 88 : index
      %278 = vector.load %arg24[%277, %c88] : memref<16x96xbf16, #tpu.memory_space<vmem>>, vector<16x8xbf16>
      %cst_108 = arith.constant dense<0.000000e+00> : vector<16x16xf32>
      %279 = tpu.matmul %269, %276, %cst_108 {dimension_numbers = #tpu.dot_dimension_numbers<[1], [1], [0], [0], [0, 0, 1, 0], [], []>} : vector<16x8xbf16>, vector<16x8xbf16>, vector<16x16xf32> -> vector<16x16xf32>
      %cst_109 = arith.constant 0.353553385 : f32
      %280 = vector.broadcast %cst_109 : f32 to vector<16x16xf32>
      %281 = arith.mulf %279, %280 : vector<16x16xf32>
      %282 = tpu.iota {dimensions = array<i32: 1>} : vector<1x16xi32>
      %283 = vector.broadcast %274 : i32 to vector<1x16xi32>
      %284 = arith.addi %282, %283 : vector<1x16xi32>
      %c0_i32_110 = arith.constant 0 : i32
      %285 = vector.broadcast %c0_i32_110 : i32 to vector<1x16xi32>
      %286 = arith.cmpi eq, %284, %285 : vector<1x16xi32>
      %c8_i32_111 = arith.constant 8 : i32
      %287 = vector.broadcast %c8_i32_111 : i32 to vector<1x16xi32>
      %288 = arith.cmpi sge, %284, %287 : vector<1x16xi32>
      %c15_i32_112 = arith.constant 15 : i32
      %289 = vector.broadcast %c15_i32_112 : i32 to vector<1x16xi32>
      %290 = arith.cmpi slt, %284, %289 : vector<1x16xi32>
      %291 = arith.andi %288, %290 : vector<1x16xi1>
      %292 = arith.ori %286, %291 : vector<1x16xi1>
      %cst_113 = arith.constant 0.000000e+00 : f32
      %cst_114 = arith.constant -1.000000e+30 : f32
      %293 = vector.broadcast %cst_113 : f32 to vector<1x16xf32>
      %294 = vector.broadcast %cst_114 : f32 to vector<1x16xf32>
      %295 = arith.select %292, %293, %294 : vector<1x16xi1>, vector<1x16xf32>
      %296 = vector.broadcast %295 : vector<1x16xf32> to vector<16x16xf32>
      %297 = arith.addf %281, %296 : vector<16x16xf32>
      %cst_115 = arith.constant dense<0xFF800000> : vector<16xf32>
      %298 = vector.multi_reduction <maximumf>, %297, %cst_115 [1] : vector<16x16xf32> to vector<16xf32>
      %299 = vector.shape_cast %298 : vector<16xf32> to vector<16x1xf32>
      %300 = arith.maximumf %270, %299 : vector<16x1xf32>
      %301 = arith.subf %270, %300 : vector<16x1xf32>
      %302 = math.exp %301 : vector<16x1xf32>
      %303 = vector.broadcast %300 : vector<16x1xf32> to vector<16x16xf32>
      %304 = arith.subf %297, %303 : vector<16x16xf32>
      %305 = math.exp %304 : vector<16x16xf32>
      %306 = arith.mulf %302, %271 : vector<16x1xf32>
      %cst_116 = arith.constant dense<0.000000e+00> : vector<16xf32>
      %307 = vector.multi_reduction <add>, %305, %cst_116 [1] : vector<16x16xf32> to vector<16xf32>
      %308 = vector.shape_cast %307 : vector<16xf32> to vector<16x1xf32>
      %309 = arith.addf %306, %308 : vector<16x1xf32>
      %310 = vector.broadcast %302 : vector<16x1xf32> to vector<16x8xf32>
      %311 = arith.mulf %310, %272 : vector<16x8xf32>
      %312 = arith.truncf %305 : vector<16x16xf32> to vector<16x16xbf16>
      %cst_117 = arith.constant dense<0.000000e+00> : vector<16x8xf32>
      %313 = tpu.matmul %312, %278, %cst_117 {dimension_numbers = #tpu.dot_dimension_numbers<[1], [0], [0], [1], [0, 0, 1, 1], [], []>} : vector<16x16xbf16>, vector<16x8xbf16>, vector<16x8xf32> -> vector<16x8xf32>
      %314 = arith.addf %311, %313 : vector<16x8xf32>
      %c1_i32_118 = arith.constant 1 : i32
      %315 = tpu.reciprocal %309 {approx = true} : vector<16x1xf32> -> vector<16x1xf32>
      %316 = vector.broadcast %315 : vector<16x1xf32> to vector<16x8xf32>
      %317 = arith.mulf %314, %316 : vector<16x8xf32>
      %318 = arith.truncf %317 : vector<16x8xf32> to vector<16x8xbf16>
      %319 = tpu.concatenate %168, %218, %268, %318 in 1 : vector<16x8xbf16>, vector<16x8xbf16>, vector<16x8xbf16>, vector<16x8xbf16> -> vector<16x32xbf16>
      %c0_119 = arith.constant 0 : index
      %c0_120 = arith.constant 0 : index
      %c0_121 = arith.constant 0 : index
      %320 = vector.load %arg10[%c0_119, %c0_120, %c0_121] : memref<2x32x32xbf16, #tpu.memory_space<vmem>>, vector<1x32x32xbf16>
      %321 = vector.shape_cast %320 : vector<1x32x32xbf16> to vector<32x32xbf16>
      %cst_122 = arith.constant dense<0.000000e+00> : vector<16x32xf32>
      %322 = tpu.matmul %319, %321, %cst_122 {dimension_numbers = #tpu.dot_dimension_numbers<[1], [0], [0], [1], [0, 0, 1, 1], [], []>} : vector<16x32xbf16>, vector<32x32xbf16>, vector<16x32xf32> -> vector<16x32xf32>
      %c0_123 = arith.constant 0 : index
      %c0_124 = arith.constant 0 : index
      %c0_125 = arith.constant 0 : index
      %323 = vector.load %arg11[%c0_123, %c0_124, %c0_125] : memref<2x1x32xf32, #tpu.memory_space<vmem>>, vector<1x1x32xf32>
      %324 = vector.shape_cast %323 : vector<1x1x32xf32> to vector<1x32xf32>
      %325 = vector.broadcast %324 : vector<1x32xf32> to vector<16x32xf32>
      %326 = arith.addf %322, %325 : vector<16x32xf32>
      %327 = arith.addf %116, %326 : vector<16x32xf32>
      %c0_126 = arith.constant 0 : index
      %c0_127 = arith.constant 0 : index
      %c0_128 = arith.constant 0 : index
      %328 = vector.load %arg12[%c0_126, %c0_127, %c0_128] : memref<2x1x32xf32, #tpu.memory_space<vmem>>, vector<1x1x32xf32>
      %329 = vector.shape_cast %328 : vector<1x1x32xf32> to vector<1x32xf32>
      %c0_129 = arith.constant 0 : index
      %c0_130 = arith.constant 0 : index
      %c0_131 = arith.constant 0 : index
      %330 = vector.load %arg13[%c0_129, %c0_130, %c0_131] : memref<2x1x32xf32, #tpu.memory_space<vmem>>, vector<1x1x32xf32>
      %331 = vector.shape_cast %330 : vector<1x1x32xf32> to vector<1x32xf32>
      %cst_132 = arith.constant dense<0.000000e+00> : vector<16xf32>
      %332 = vector.multi_reduction <add>, %327, %cst_132 [1] : vector<16x32xf32> to vector<16xf32>
      %333 = vector.shape_cast %332 : vector<16xf32> to vector<16x1xf32>
      %cst_133 = arith.constant 3.200000e+01 : f32
      %334 = vector.broadcast %cst_133 : f32 to vector<16x1xf32>
      %335 = arith.divf %333, %334 : vector<16x1xf32>
      %336 = vector.broadcast %335 : vector<16x1xf32> to vector<16x32xf32>
      %337 = arith.subf %327, %336 : vector<16x32xf32>
      %338 = arith.mulf %337, %337 : vector<16x32xf32>
      %cst_134 = arith.constant dense<0.000000e+00> : vector<16xf32>
      %339 = vector.multi_reduction <add>, %338, %cst_134 [1] : vector<16x32xf32> to vector<16xf32>
      %340 = vector.shape_cast %339 : vector<16xf32> to vector<16x1xf32>
      %cst_135 = arith.constant 3.200000e+01 : f32
      %341 = vector.broadcast %cst_135 : f32 to vector<16x1xf32>
      %342 = arith.divf %340, %341 : vector<16x1xf32>
      %343 = vector.broadcast %335 : vector<16x1xf32> to vector<16x32xf32>
      %344 = arith.subf %327, %343 : vector<16x32xf32>
      %cst_136 = arith.constant 9.99999974E-6 : f32
      %345 = vector.broadcast %cst_136 : f32 to vector<16x1xf32>
      %346 = arith.addf %342, %345 : vector<16x1xf32>
      %347 = math.rsqrt %346 : vector<16x1xf32>
      %348 = vector.broadcast %347 : vector<16x1xf32> to vector<16x32xf32>
      %349 = arith.mulf %344, %348 : vector<16x32xf32>
      %350 = vector.broadcast %329 : vector<1x32xf32> to vector<16x32xf32>
      %351 = arith.mulf %349, %350 : vector<16x32xf32>
      %352 = vector.broadcast %331 : vector<1x32xf32> to vector<16x32xf32>
      %353 = arith.addf %351, %352 : vector<16x32xf32>
      %354 = arith.truncf %353 : vector<16x32xf32> to vector<16x32xbf16>
      %c0_137 = arith.constant 0 : index
      %c0_138 = arith.constant 0 : index
      %c0_139 = arith.constant 0 : index
      %355 = vector.load %arg14[%c0_137, %c0_138, %c0_139] : memref<2x32x64xbf16, #tpu.memory_space<vmem>>, vector<1x32x64xbf16>
      %356 = vector.shape_cast %355 : vector<1x32x64xbf16> to vector<32x64xbf16>
      %cst_140 = arith.constant dense<0.000000e+00> : vector<16x64xf32>
      %357 = tpu.matmul %354, %356, %cst_140 {dimension_numbers = #tpu.dot_dimension_numbers<[1], [0], [0], [1], [0, 0, 1, 1], [], []>} : vector<16x32xbf16>, vector<32x64xbf16>, vector<16x64xf32> -> vector<16x64xf32>
      %c0_141 = arith.constant 0 : index
      %c0_142 = arith.constant 0 : index
      %c0_143 = arith.constant 0 : index
      %358 = vector.load %arg15[%c0_141, %c0_142, %c0_143] : memref<2x1x64xf32, #tpu.memory_space<vmem>>, vector<1x1x64xf32>
      %359 = vector.shape_cast %358 : vector<1x1x64xf32> to vector<1x64xf32>
      %360 = vector.broadcast %359 : vector<1x64xf32> to vector<16x64xf32>
      %361 = arith.addf %357, %360 : vector<16x64xf32>
      %cst_144 = arith.constant 5.000000e-01 : f32
      %362 = vector.broadcast %cst_144 : f32 to vector<16x64xf32>
      %363 = arith.mulf %362, %361 : vector<16x64xf32>
      %cst_145 = arith.constant 0.707106769 : f32
      %364 = vector.broadcast %cst_145 : f32 to vector<16x64xf32>
      %365 = arith.mulf %361, %364 : vector<16x64xf32>
      %366 = math.absf %365 : vector<16x64xf32>
      %cst_146 = arith.constant 0.327591091 : f32
      %367 = vector.broadcast %cst_146 : f32 to vector<16x64xf32>
      %368 = arith.mulf %367, %366 : vector<16x64xf32>
      %cst_147 = arith.constant 1.000000e+00 : f32
      %369 = vector.broadcast %cst_147 : f32 to vector<16x64xf32>
      %370 = arith.addf %369, %368 : vector<16x64xf32>
      %371 = tpu.reciprocal %370 {approx = true} : vector<16x64xf32> -> vector<16x64xf32>
      %cst_148 = arith.constant 1.06140542 : f32
      %372 = vector.broadcast %cst_148 : f32 to vector<16x64xf32>
      %373 = arith.mulf %372, %371 : vector<16x64xf32>
      %cst_149 = arith.constant -1.45315206 : f32
      %374 = vector.broadcast %cst_149 : f32 to vector<16x64xf32>
      %375 = arith.addf %373, %374 : vector<16x64xf32>
      %376 = arith.mulf %375, %371 : vector<16x64xf32>
      %cst_150 = arith.constant 1.42141378 : f32
      %377 = vector.broadcast %cst_150 : f32 to vector<16x64xf32>
      %378 = arith.addf %376, %377 : vector<16x64xf32>
      %379 = arith.mulf %378, %371 : vector<16x64xf32>
      %cst_151 = arith.constant -0.284496725 : f32
      %380 = vector.broadcast %cst_151 : f32 to vector<16x64xf32>
      %381 = arith.addf %379, %380 : vector<16x64xf32>
      %382 = arith.mulf %381, %371 : vector<16x64xf32>
      %cst_152 = arith.constant 0.254829586 : f32
      %383 = vector.broadcast %cst_152 : f32 to vector<16x64xf32>
      %384 = arith.addf %382, %383 : vector<16x64xf32>
      %385 = arith.mulf %384, %371 : vector<16x64xf32>
      %cst_153 = arith.constant 0.000000e+00 : f32
      %386 = vector.broadcast %cst_153 : f32 to vector<16x64xf32>
      %387 = arith.subf %386, %366 : vector<16x64xf32>
      %388 = arith.mulf %387, %366 : vector<16x64xf32>
      %389 = math.exp %388 : vector<16x64xf32>
      %390 = arith.mulf %385, %389 : vector<16x64xf32>
      %cst_154 = arith.constant 1.000000e+00 : f32
      %391 = vector.broadcast %cst_154 : f32 to vector<16x64xf32>
      %392 = arith.subf %391, %390 : vector<16x64xf32>
      %cst_155 = arith.constant 0.000000e+00 : f32
      %393 = vector.broadcast %cst_155 : f32 to vector<16x64xf32>
      %394 = arith.cmpf oge, %365, %393 : vector<16x64xf32>
      %cst_156 = arith.constant 0.000000e+00 : f32
      %395 = vector.broadcast %cst_156 : f32 to vector<16x64xf32>
      %396 = arith.subf %395, %392 : vector<16x64xf32>
      %397 = arith.select %394, %392, %396 : vector<16x64xi1>, vector<16x64xf32>
      %cst_157 = arith.constant 1.000000e+00 : f32
      %398 = vector.broadcast %cst_157 : f32 to vector<16x64xf32>
      %399 = arith.addf %398, %397 : vector<16x64xf32>
      %400 = arith.mulf %363, %399 : vector<16x64xf32>
      %401 = arith.truncf %400 : vector<16x64xf32> to vector<16x64xbf16>
      %c0_158 = arith.constant 0 : index
      %c0_159 = arith.constant 0 : index
      %c0_160 = arith.constant 0 : index
      %402 = vector.load %arg16[%c0_158, %c0_159, %c0_160] : memref<2x64x32xbf16, #tpu.memory_space<vmem>>, vector<1x64x32xbf16>
      %403 = vector.shape_cast %402 : vector<1x64x32xbf16> to vector<64x32xbf16>
      %cst_161 = arith.constant dense<0.000000e+00> : vector<16x32xf32>
      %404 = tpu.matmul %401, %403, %cst_161 {dimension_numbers = #tpu.dot_dimension_numbers<[1], [0], [0], [1], [0, 0, 1, 1], [], []>} : vector<16x64xbf16>, vector<64x32xbf16>, vector<16x32xf32> -> vector<16x32xf32>
      %c0_162 = arith.constant 0 : index
      %c0_163 = arith.constant 0 : index
      %c0_164 = arith.constant 0 : index
      %405 = vector.load %arg17[%c0_162, %c0_163, %c0_164] : memref<2x1x32xf32, #tpu.memory_space<vmem>>, vector<1x1x32xf32>
      %406 = vector.shape_cast %405 : vector<1x1x32xf32> to vector<1x32xf32>
      %407 = vector.broadcast %406 : vector<1x32xf32> to vector<16x32xf32>
      %408 = arith.addf %404, %407 : vector<16x32xf32>
      %409 = arith.addf %327, %408 : vector<16x32xf32>
      %410 = arith.index_cast %114 : i32 to index
      %c0_165 = arith.constant 0 : index
      %411 = vector.load %arg23[%410, %c0_165] : memref<16x32xf32, #tpu.memory_space<vmem>>, vector<16x32xf32>
      tpu.vector_store %arg23[%410, %c0_165], %409 {strides = array<i32>} : memref<16x32xf32, #tpu.memory_space<vmem>>, vector<16x32xf32>,
      %c1_i32_166 = arith.constant 1 : i32
      %c0_i32_167 = arith.constant 0 : i32
      %c1_i32_168 = arith.constant 1 : i32
      %412 = arith.muli %c0_i32_167, %c1_i32_168 : i32
      %c0_i32_169 = arith.constant 0 : i32
      %413 = arith.addi %c0_i32_169, %412 : i32
      %c16_i32_170 = arith.constant 16 : i32
      %414 = arith.muli %413, %c16_i32_170 : i32
      %415 = tpu.assume_multiple %414, 16 : i32
      %416 = arith.index_cast %415 : i32 to index
      %c0_171 = arith.constant 0 : index
      %417 = vector.load %arg23[%416, %c0_171] : memref<16x32xf32, #tpu.memory_space<vmem>>, vector<16x32xf32>
      %c1 = arith.constant 1 : index
      %c0_172 = arith.constant 0 : index
      %c0_173 = arith.constant 0 : index
      %418 = vector.load %arg6[%c1, %c0_172, %c0_173] : memref<2x1x32xf32, #tpu.memory_space<vmem>>, vector<1x1x32xf32>
      %419 = vector.shape_cast %418 : vector<1x1x32xf32> to vector<1x32xf32>
      %c1_174 = arith.constant 1 : index
      %c0_175 = arith.constant 0 : index
      %c0_176 = arith.constant 0 : index
      %420 = vector.load %arg7[%c1_174, %c0_175, %c0_176] : memref<2x1x32xf32, #tpu.memory_space<vmem>>, vector<1x1x32xf32>
      %421 = vector.shape_cast %420 : vector<1x1x32xf32> to vector<1x32xf32>
      %cst_177 = arith.constant dense<0.000000e+00> : vector<16xf32>
      %422 = vector.multi_reduction <add>, %417, %cst_177 [1] : vector<16x32xf32> to vector<16xf32>
      %423 = vector.shape_cast %422 : vector<16xf32> to vector<16x1xf32>
      %cst_178 = arith.constant 3.200000e+01 : f32
      %424 = vector.broadcast %cst_178 : f32 to vector<16x1xf32>
      %425 = arith.divf %423, %424 : vector<16x1xf32>
      %426 = vector.broadcast %425 : vector<16x1xf32> to vector<16x32xf32>
      %427 = arith.subf %417, %426 : vector<16x32xf32>
      %428 = arith.mulf %427, %427 : vector<16x32xf32>
      %cst_179 = arith.constant dense<0.000000e+00> : vector<16xf32>
      %429 = vector.multi_reduction <add>, %428, %cst_179 [1] : vector<16x32xf32> to vector<16xf32>
      %430 = vector.shape_cast %429 : vector<16xf32> to vector<16x1xf32>
      %cst_180 = arith.constant 3.200000e+01 : f32
      %431 = vector.broadcast %cst_180 : f32 to vector<16x1xf32>
      %432 = arith.divf %430, %431 : vector<16x1xf32>
      %433 = vector.broadcast %425 : vector<16x1xf32> to vector<16x32xf32>
      %434 = arith.subf %417, %433 : vector<16x32xf32>
      %cst_181 = arith.constant 9.99999974E-6 : f32
      %435 = vector.broadcast %cst_181 : f32 to vector<16x1xf32>
      %436 = arith.addf %432, %435 : vector<16x1xf32>
      %437 = math.rsqrt %436 : vector<16x1xf32>
      %438 = vector.broadcast %437 : vector<16x1xf32> to vector<16x32xf32>
      %439 = arith.mulf %434, %438 : vector<16x32xf32>
      %440 = vector.broadcast %419 : vector<1x32xf32> to vector<16x32xf32>
      %441 = arith.mulf %439, %440 : vector<16x32xf32>
      %442 = vector.broadcast %421 : vector<1x32xf32> to vector<16x32xf32>
      %443 = arith.addf %441, %442 : vector<16x32xf32>
      %444 = arith.truncf %443 : vector<16x32xf32> to vector<16x32xbf16>
      %c1_182 = arith.constant 1 : index
      %c0_183 = arith.constant 0 : index
      %c0_184 = arith.constant 0 : index
      %445 = vector.load %arg8[%c1_182, %c0_183, %c0_184] : memref<2x32x96xbf16, #tpu.memory_space<vmem>>, vector<1x32x96xbf16>
      %446 = vector.shape_cast %445 : vector<1x32x96xbf16> to vector<32x96xbf16>
      %cst_185 = arith.constant dense<0.000000e+00> : vector<16x96xf32>
      %447 = tpu.matmul %444, %446, %cst_185 {dimension_numbers = #tpu.dot_dimension_numbers<[1], [0], [0], [1], [0, 0, 1, 1], [], []>} : vector<16x32xbf16>, vector<32x96xbf16>, vector<16x96xf32> -> vector<16x96xf32>
      %c1_186 = arith.constant 1 : index
      %c0_187 = arith.constant 0 : index
      %c0_188 = arith.constant 0 : index
      %448 = vector.load %arg9[%c1_186, %c0_187, %c0_188] : memref<2x1x96xf32, #tpu.memory_space<vmem>>, vector<1x1x96xf32>
      %449 = vector.shape_cast %448 : vector<1x1x96xf32> to vector<1x96xf32>
      %450 = vector.broadcast %449 : vector<1x96xf32> to vector<16x96xf32>
      %451 = arith.addf %447, %450 : vector<16x96xf32>
      %452 = arith.truncf %451 : vector<16x96xf32> to vector<16x96xbf16>
      %453 = arith.index_cast %415 : i32 to index
      %c0_189 = arith.constant 0 : index
      %454 = vector.load %arg24[%453, %c0_189] : memref<16x96xbf16, #tpu.memory_space<vmem>>, vector<16x96xbf16>
      tpu.vector_store %arg24[%453, %c0_189], %452 {strides = array<i32>} : memref<16x96xbf16, #tpu.memory_space<vmem>>, vector<16x96xbf16>,
      %c1_i32_190 = arith.constant 1 : i32
      %c0_i32_191 = arith.constant 0 : i32
      %c1_i32_192 = arith.constant 1 : i32
      %455 = arith.muli %c0_i32_191, %c1_i32_192 : i32
      %c0_i32_193 = arith.constant 0 : i32
      %456 = arith.addi %c0_i32_193, %455 : i32
      %c16_i32_194 = arith.constant 16 : i32
      %457 = arith.muli %456, %c16_i32_194 : i32
      %458 = tpu.assume_multiple %457, 16 : i32
      %459 = arith.index_cast %458 : i32 to index
      %c0_195 = arith.constant 0 : index
      %460 = vector.load %arg23[%459, %c0_195] : memref<16x32xf32, #tpu.memory_space<vmem>>, vector<16x32xf32>
      %461 = arith.index_cast %458 : i32 to index
      %c0_196 = arith.constant 0 : index
      %462 = vector.load %arg24[%461, %c0_196] : memref<16x96xbf16, #tpu.memory_space<vmem>>, vector<16x96xbf16>
      %463 = vector.extract_strided_slice %462 {offsets = [0, 0], sizes = [16, 8], strides = [1, 1]} : vector<16x96xbf16> to vector<16x8xbf16>
      %cst_197 = arith.constant -1.000000e+30 : f32
      %464 = vector.broadcast %cst_197 : f32 to vector<16x1xf32>
      %cst_198 = arith.constant 0.000000e+00 : f32
      %465 = vector.broadcast %cst_198 : f32 to vector<16x1xf32>
      %cst_199 = arith.constant 0.000000e+00 : f32
      %466 = vector.broadcast %cst_199 : f32 to vector<16x8xf32>
      %c0_i32_200 = arith.constant 0 : i32
      %c16_i32_201 = arith.constant 16 : i32
      %467 = arith.muli %c0_i32_200, %c16_i32_201 : i32
      %468 = tpu.assume_multiple %467, 16 : i32
      %469 = arith.index_cast %468 : i32 to index
      %c32_202 = arith.constant 32 : index
      %470 = vector.load %arg24[%469, %c32_202] : memref<16x96xbf16, #tpu.memory_space<vmem>>, vector<16x8xbf16>
      %471 = arith.index_cast %468 : i32 to index
      %c64_203 = arith.constant 64 : index
      %472 = vector.load %arg24[%471, %c64_203] : memref<16x96xbf16, #tpu.memory_space<vmem>>, vector<16x8xbf16>
      %cst_204 = arith.constant dense<0.000000e+00> : vector<16x16xf32>
      %473 = tpu.matmul %463, %470, %cst_204 {dimension_numbers = #tpu.dot_dimension_numbers<[1], [1], [0], [0], [0, 0, 1, 0], [], []>} : vector<16x8xbf16>, vector<16x8xbf16>, vector<16x16xf32> -> vector<16x16xf32>
      %cst_205 = arith.constant 0.353553385 : f32
      %474 = vector.broadcast %cst_205 : f32 to vector<16x16xf32>
      %475 = arith.mulf %473, %474 : vector<16x16xf32>
      %476 = tpu.iota {dimensions = array<i32: 1>} : vector<1x16xi32>
      %477 = vector.broadcast %468 : i32 to vector<1x16xi32>
      %478 = arith.addi %476, %477 : vector<1x16xi32>
      %c0_i32_206 = arith.constant 0 : i32
      %479 = vector.broadcast %c0_i32_206 : i32 to vector<1x16xi32>
      %480 = arith.cmpi eq, %478, %479 : vector<1x16xi32>
      %c8_i32_207 = arith.constant 8 : i32
      %481 = vector.broadcast %c8_i32_207 : i32 to vector<1x16xi32>
      %482 = arith.cmpi sge, %478, %481 : vector<1x16xi32>
      %c15_i32_208 = arith.constant 15 : i32
      %483 = vector.broadcast %c15_i32_208 : i32 to vector<1x16xi32>
      %484 = arith.cmpi slt, %478, %483 : vector<1x16xi32>
      %485 = arith.andi %482, %484 : vector<1x16xi1>
      %486 = arith.ori %480, %485 : vector<1x16xi1>
      %cst_209 = arith.constant 0.000000e+00 : f32
      %cst_210 = arith.constant -1.000000e+30 : f32
      %487 = vector.broadcast %cst_209 : f32 to vector<1x16xf32>
      %488 = vector.broadcast %cst_210 : f32 to vector<1x16xf32>
      %489 = arith.select %486, %487, %488 : vector<1x16xi1>, vector<1x16xf32>
      %490 = vector.broadcast %489 : vector<1x16xf32> to vector<16x16xf32>
      %491 = arith.addf %475, %490 : vector<16x16xf32>
      %cst_211 = arith.constant dense<0xFF800000> : vector<16xf32>
      %492 = vector.multi_reduction <maximumf>, %491, %cst_211 [1] : vector<16x16xf32> to vector<16xf32>
      %493 = vector.shape_cast %492 : vector<16xf32> to vector<16x1xf32>
      %494 = arith.maximumf %464, %493 : vector<16x1xf32>
      %495 = arith.subf %464, %494 : vector<16x1xf32>
      %496 = math.exp %495 : vector<16x1xf32>
      %497 = vector.broadcast %494 : vector<16x1xf32> to vector<16x16xf32>
      %498 = arith.subf %491, %497 : vector<16x16xf32>
      %499 = math.exp %498 : vector<16x16xf32>
      %500 = arith.mulf %496, %465 : vector<16x1xf32>
      %cst_212 = arith.constant dense<0.000000e+00> : vector<16xf32>
      %501 = vector.multi_reduction <add>, %499, %cst_212 [1] : vector<16x16xf32> to vector<16xf32>
      %502 = vector.shape_cast %501 : vector<16xf32> to vector<16x1xf32>
      %503 = arith.addf %500, %502 : vector<16x1xf32>
      %504 = vector.broadcast %496 : vector<16x1xf32> to vector<16x8xf32>
      %505 = arith.mulf %504, %466 : vector<16x8xf32>
      %506 = arith.truncf %499 : vector<16x16xf32> to vector<16x16xbf16>
      %cst_213 = arith.constant dense<0.000000e+00> : vector<16x8xf32>
      %507 = tpu.matmul %506, %472, %cst_213 {dimension_numbers = #tpu.dot_dimension_numbers<[1], [0], [0], [1], [0, 0, 1, 1], [], []>} : vector<16x16xbf16>, vector<16x8xbf16>, vector<16x8xf32> -> vector<16x8xf32>
      %508 = arith.addf %505, %507 : vector<16x8xf32>
      %c1_i32_214 = arith.constant 1 : i32
      %509 = tpu.reciprocal %503 {approx = true} : vector<16x1xf32> -> vector<16x1xf32>
      %510 = vector.broadcast %509 : vector<16x1xf32> to vector<16x8xf32>
      %511 = arith.mulf %508, %510 : vector<16x8xf32>
      %512 = arith.truncf %511 : vector<16x8xf32> to vector<16x8xbf16>
      %513 = vector.extract_strided_slice %462 {offsets = [0, 8], sizes = [16, 8], strides = [1, 1]} : vector<16x96xbf16> to vector<16x8xbf16>
      %cst_215 = arith.constant -1.000000e+30 : f32
      %514 = vector.broadcast %cst_215 : f32 to vector<16x1xf32>
      %cst_216 = arith.constant 0.000000e+00 : f32
      %515 = vector.broadcast %cst_216 : f32 to vector<16x1xf32>
      %cst_217 = arith.constant 0.000000e+00 : f32
      %516 = vector.broadcast %cst_217 : f32 to vector<16x8xf32>
      %c0_i32_218 = arith.constant 0 : i32
      %c16_i32_219 = arith.constant 16 : i32
      %517 = arith.muli %c0_i32_218, %c16_i32_219 : i32
      %518 = tpu.assume_multiple %517, 16 : i32
      %519 = arith.index_cast %518 : i32 to index
      %c40_220 = arith.constant 40 : index
      %520 = vector.load %arg24[%519, %c40_220] : memref<16x96xbf16, #tpu.memory_space<vmem>>, vector<16x8xbf16>
      %521 = arith.index_cast %518 : i32 to index
      %c72_221 = arith.constant 72 : index
      %522 = vector.load %arg24[%521, %c72_221] : memref<16x96xbf16, #tpu.memory_space<vmem>>, vector<16x8xbf16>
      %cst_222 = arith.constant dense<0.000000e+00> : vector<16x16xf32>
      %523 = tpu.matmul %513, %520, %cst_222 {dimension_numbers = #tpu.dot_dimension_numbers<[1], [1], [0], [0], [0, 0, 1, 0], [], []>} : vector<16x8xbf16>, vector<16x8xbf16>, vector<16x16xf32> -> vector<16x16xf32>
      %cst_223 = arith.constant 0.353553385 : f32
      %524 = vector.broadcast %cst_223 : f32 to vector<16x16xf32>
      %525 = arith.mulf %523, %524 : vector<16x16xf32>
      %526 = tpu.iota {dimensions = array<i32: 1>} : vector<1x16xi32>
      %527 = vector.broadcast %518 : i32 to vector<1x16xi32>
      %528 = arith.addi %526, %527 : vector<1x16xi32>
      %c0_i32_224 = arith.constant 0 : i32
      %529 = vector.broadcast %c0_i32_224 : i32 to vector<1x16xi32>
      %530 = arith.cmpi eq, %528, %529 : vector<1x16xi32>
      %c8_i32_225 = arith.constant 8 : i32
      %531 = vector.broadcast %c8_i32_225 : i32 to vector<1x16xi32>
      %532 = arith.cmpi sge, %528, %531 : vector<1x16xi32>
      %c15_i32_226 = arith.constant 15 : i32
      %533 = vector.broadcast %c15_i32_226 : i32 to vector<1x16xi32>
      %534 = arith.cmpi slt, %528, %533 : vector<1x16xi32>
      %535 = arith.andi %532, %534 : vector<1x16xi1>
      %536 = arith.ori %530, %535 : vector<1x16xi1>
      %cst_227 = arith.constant 0.000000e+00 : f32
      %cst_228 = arith.constant -1.000000e+30 : f32
      %537 = vector.broadcast %cst_227 : f32 to vector<1x16xf32>
      %538 = vector.broadcast %cst_228 : f32 to vector<1x16xf32>
      %539 = arith.select %536, %537, %538 : vector<1x16xi1>, vector<1x16xf32>
      %540 = vector.broadcast %539 : vector<1x16xf32> to vector<16x16xf32>
      %541 = arith.addf %525, %540 : vector<16x16xf32>
      %cst_229 = arith.constant dense<0xFF800000> : vector<16xf32>
      %542 = vector.multi_reduction <maximumf>, %541, %cst_229 [1] : vector<16x16xf32> to vector<16xf32>
      %543 = vector.shape_cast %542 : vector<16xf32> to vector<16x1xf32>
      %544 = arith.maximumf %514, %543 : vector<16x1xf32>
      %545 = arith.subf %514, %544 : vector<16x1xf32>
      %546 = math.exp %545 : vector<16x1xf32>
      %547 = vector.broadcast %544 : vector<16x1xf32> to vector<16x16xf32>
      %548 = arith.subf %541, %547 : vector<16x16xf32>
      %549 = math.exp %548 : vector<16x16xf32>
      %550 = arith.mulf %546, %515 : vector<16x1xf32>
      %cst_230 = arith.constant dense<0.000000e+00> : vector<16xf32>
      %551 = vector.multi_reduction <add>, %549, %cst_230 [1] : vector<16x16xf32> to vector<16xf32>
      %552 = vector.shape_cast %551 : vector<16xf32> to vector<16x1xf32>
      %553 = arith.addf %550, %552 : vector<16x1xf32>
      %554 = vector.broadcast %546 : vector<16x1xf32> to vector<16x8xf32>
      %555 = arith.mulf %554, %516 : vector<16x8xf32>
      %556 = arith.truncf %549 : vector<16x16xf32> to vector<16x16xbf16>
      %cst_231 = arith.constant dense<0.000000e+00> : vector<16x8xf32>
      %557 = tpu.matmul %556, %522, %cst_231 {dimension_numbers = #tpu.dot_dimension_numbers<[1], [0], [0], [1], [0, 0, 1, 1], [], []>} : vector<16x16xbf16>, vector<16x8xbf16>, vector<16x8xf32> -> vector<16x8xf32>
      %558 = arith.addf %555, %557 : vector<16x8xf32>
      %c1_i32_232 = arith.constant 1 : i32
      %559 = tpu.reciprocal %553 {approx = true} : vector<16x1xf32> -> vector<16x1xf32>
      %560 = vector.broadcast %559 : vector<16x1xf32> to vector<16x8xf32>
      %561 = arith.mulf %558, %560 : vector<16x8xf32>
      %562 = arith.truncf %561 : vector<16x8xf32> to vector<16x8xbf16>
      %563 = vector.extract_strided_slice %462 {offsets = [0, 16], sizes = [16, 8], strides = [1, 1]} : vector<16x96xbf16> to vector<16x8xbf16>
      %cst_233 = arith.constant -1.000000e+30 : f32
      %564 = vector.broadcast %cst_233 : f32 to vector<16x1xf32>
      %cst_234 = arith.constant 0.000000e+00 : f32
      %565 = vector.broadcast %cst_234 : f32 to vector<16x1xf32>
      %cst_235 = arith.constant 0.000000e+00 : f32
      %566 = vector.broadcast %cst_235 : f32 to vector<16x8xf32>
      %c0_i32_236 = arith.constant 0 : i32
      %c16_i32_237 = arith.constant 16 : i32
      %567 = arith.muli %c0_i32_236, %c16_i32_237 : i32
      %568 = tpu.assume_multiple %567, 16 : i32
      %569 = arith.index_cast %568 : i32 to index
      %c48_238 = arith.constant 48 : index
      %570 = vector.load %arg24[%569, %c48_238] : memref<16x96xbf16, #tpu.memory_space<vmem>>, vector<16x8xbf16>
      %571 = arith.index_cast %568 : i32 to index
      %c80_239 = arith.constant 80 : index
      %572 = vector.load %arg24[%571, %c80_239] : memref<16x96xbf16, #tpu.memory_space<vmem>>, vector<16x8xbf16>
      %cst_240 = arith.constant dense<0.000000e+00> : vector<16x16xf32>
      %573 = tpu.matmul %563, %570, %cst_240 {dimension_numbers = #tpu.dot_dimension_numbers<[1], [1], [0], [0], [0, 0, 1, 0], [], []>} : vector<16x8xbf16>, vector<16x8xbf16>, vector<16x16xf32> -> vector<16x16xf32>
      %cst_241 = arith.constant 0.353553385 : f32
      %574 = vector.broadcast %cst_241 : f32 to vector<16x16xf32>
      %575 = arith.mulf %573, %574 : vector<16x16xf32>
      %576 = tpu.iota {dimensions = array<i32: 1>} : vector<1x16xi32>
      %577 = vector.broadcast %568 : i32 to vector<1x16xi32>
      %578 = arith.addi %576, %577 : vector<1x16xi32>
      %c0_i32_242 = arith.constant 0 : i32
      %579 = vector.broadcast %c0_i32_242 : i32 to vector<1x16xi32>
      %580 = arith.cmpi eq, %578, %579 : vector<1x16xi32>
      %c8_i32_243 = arith.constant 8 : i32
      %581 = vector.broadcast %c8_i32_243 : i32 to vector<1x16xi32>
      %582 = arith.cmpi sge, %578, %581 : vector<1x16xi32>
      %c15_i32_244 = arith.constant 15 : i32
      %583 = vector.broadcast %c15_i32_244 : i32 to vector<1x16xi32>
      %584 = arith.cmpi slt, %578, %583 : vector<1x16xi32>
      %585 = arith.andi %582, %584 : vector<1x16xi1>
      %586 = arith.ori %580, %585 : vector<1x16xi1>
      %cst_245 = arith.constant 0.000000e+00 : f32
      %cst_246 = arith.constant -1.000000e+30 : f32
      %587 = vector.broadcast %cst_245 : f32 to vector<1x16xf32>
      %588 = vector.broadcast %cst_246 : f32 to vector<1x16xf32>
      %589 = arith.select %586, %587, %588 : vector<1x16xi1>, vector<1x16xf32>
      %590 = vector.broadcast %589 : vector<1x16xf32> to vector<16x16xf32>
      %591 = arith.addf %575, %590 : vector<16x16xf32>
      %cst_247 = arith.constant dense<0xFF800000> : vector<16xf32>
      %592 = vector.multi_reduction <maximumf>, %591, %cst_247 [1] : vector<16x16xf32> to vector<16xf32>
      %593 = vector.shape_cast %592 : vector<16xf32> to vector<16x1xf32>
      %594 = arith.maximumf %564, %593 : vector<16x1xf32>
      %595 = arith.subf %564, %594 : vector<16x1xf32>
      %596 = math.exp %595 : vector<16x1xf32>
      %597 = vector.broadcast %594 : vector<16x1xf32> to vector<16x16xf32>
      %598 = arith.subf %591, %597 : vector<16x16xf32>
      %599 = math.exp %598 : vector<16x16xf32>
      %600 = arith.mulf %596, %565 : vector<16x1xf32>
      %cst_248 = arith.constant dense<0.000000e+00> : vector<16xf32>
      %601 = vector.multi_reduction <add>, %599, %cst_248 [1] : vector<16x16xf32> to vector<16xf32>
      %602 = vector.shape_cast %601 : vector<16xf32> to vector<16x1xf32>
      %603 = arith.addf %600, %602 : vector<16x1xf32>
      %604 = vector.broadcast %596 : vector<16x1xf32> to vector<16x8xf32>
      %605 = arith.mulf %604, %566 : vector<16x8xf32>
      %606 = arith.truncf %599 : vector<16x16xf32> to vector<16x16xbf16>
      %cst_249 = arith.constant dense<0.000000e+00> : vector<16x8xf32>
      %607 = tpu.matmul %606, %572, %cst_249 {dimension_numbers = #tpu.dot_dimension_numbers<[1], [0], [0], [1], [0, 0, 1, 1], [], []>} : vector<16x16xbf16>, vector<16x8xbf16>, vector<16x8xf32> -> vector<16x8xf32>
      %608 = arith.addf %605, %607 : vector<16x8xf32>
      %c1_i32_250 = arith.constant 1 : i32
      %609 = tpu.reciprocal %603 {approx = true} : vector<16x1xf32> -> vector<16x1xf32>
      %610 = vector.broadcast %609 : vector<16x1xf32> to vector<16x8xf32>
      %611 = arith.mulf %608, %610 : vector<16x8xf32>
      %612 = arith.truncf %611 : vector<16x8xf32> to vector<16x8xbf16>
      %613 = vector.extract_strided_slice %462 {offsets = [0, 24], sizes = [16, 8], strides = [1, 1]} : vector<16x96xbf16> to vector<16x8xbf16>
      %cst_251 = arith.constant -1.000000e+30 : f32
      %614 = vector.broadcast %cst_251 : f32 to vector<16x1xf32>
      %cst_252 = arith.constant 0.000000e+00 : f32
      %615 = vector.broadcast %cst_252 : f32 to vector<16x1xf32>
      %cst_253 = arith.constant 0.000000e+00 : f32
      %616 = vector.broadcast %cst_253 : f32 to vector<16x8xf32>
      %c0_i32_254 = arith.constant 0 : i32
      %c16_i32_255 = arith.constant 16 : i32
      %617 = arith.muli %c0_i32_254, %c16_i32_255 : i32
      %618 = tpu.assume_multiple %617, 16 : i32
      %619 = arith.index_cast %618 : i32 to index
      %c56_256 = arith.constant 56 : index
      %620 = vector.load %arg24[%619, %c56_256] : memref<16x96xbf16, #tpu.memory_space<vmem>>, vector<16x8xbf16>
      %621 = arith.index_cast %618 : i32 to index
      %c88_257 = arith.constant 88 : index
      %622 = vector.load %arg24[%621, %c88_257] : memref<16x96xbf16, #tpu.memory_space<vmem>>, vector<16x8xbf16>
      %cst_258 = arith.constant dense<0.000000e+00> : vector<16x16xf32>
      %623 = tpu.matmul %613, %620, %cst_258 {dimension_numbers = #tpu.dot_dimension_numbers<[1], [1], [0], [0], [0, 0, 1, 0], [], []>} : vector<16x8xbf16>, vector<16x8xbf16>, vector<16x16xf32> -> vector<16x16xf32>
      %cst_259 = arith.constant 0.353553385 : f32
      %624 = vector.broadcast %cst_259 : f32 to vector<16x16xf32>
      %625 = arith.mulf %623, %624 : vector<16x16xf32>
      %626 = tpu.iota {dimensions = array<i32: 1>} : vector<1x16xi32>
      %627 = vector.broadcast %618 : i32 to vector<1x16xi32>
      %628 = arith.addi %626, %627 : vector<1x16xi32>
      %c0_i32_260 = arith.constant 0 : i32
      %629 = vector.broadcast %c0_i32_260 : i32 to vector<1x16xi32>
      %630 = arith.cmpi eq, %628, %629 : vector<1x16xi32>
      %c8_i32_261 = arith.constant 8 : i32
      %631 = vector.broadcast %c8_i32_261 : i32 to vector<1x16xi32>
      %632 = arith.cmpi sge, %628, %631 : vector<1x16xi32>
      %c15_i32_262 = arith.constant 15 : i32
      %633 = vector.broadcast %c15_i32_262 : i32 to vector<1x16xi32>
      %634 = arith.cmpi slt, %628, %633 : vector<1x16xi32>
      %635 = arith.andi %632, %634 : vector<1x16xi1>
      %636 = arith.ori %630, %635 : vector<1x16xi1>
      %cst_263 = arith.constant 0.000000e+00 : f32
      %cst_264 = arith.constant -1.000000e+30 : f32
      %637 = vector.broadcast %cst_263 : f32 to vector<1x16xf32>
      %638 = vector.broadcast %cst_264 : f32 to vector<1x16xf32>
      %639 = arith.select %636, %637, %638 : vector<1x16xi1>, vector<1x16xf32>
      %640 = vector.broadcast %639 : vector<1x16xf32> to vector<16x16xf32>
      %641 = arith.addf %625, %640 : vector<16x16xf32>
      %cst_265 = arith.constant dense<0xFF800000> : vector<16xf32>
      %642 = vector.multi_reduction <maximumf>, %641, %cst_265 [1] : vector<16x16xf32> to vector<16xf32>
      %643 = vector.shape_cast %642 : vector<16xf32> to vector<16x1xf32>
      %644 = arith.maximumf %614, %643 : vector<16x1xf32>
      %645 = arith.subf %614, %644 : vector<16x1xf32>
      %646 = math.exp %645 : vector<16x1xf32>
      %647 = vector.broadcast %644 : vector<16x1xf32> to vector<16x16xf32>
      %648 = arith.subf %641, %647 : vector<16x16xf32>
      %649 = math.exp %648 : vector<16x16xf32>
      %650 = arith.mulf %646, %615 : vector<16x1xf32>
      %cst_266 = arith.constant dense<0.000000e+00> : vector<16xf32>
      %651 = vector.multi_reduction <add>, %649, %cst_266 [1] : vector<16x16xf32> to vector<16xf32>
      %652 = vector.shape_cast %651 : vector<16xf32> to vector<16x1xf32>
      %653 = arith.addf %650, %652 : vector<16x1xf32>
      %654 = vector.broadcast %646 : vector<16x1xf32> to vector<16x8xf32>
      %655 = arith.mulf %654, %616 : vector<16x8xf32>
      %656 = arith.truncf %649 : vector<16x16xf32> to vector<16x16xbf16>
      %cst_267 = arith.constant dense<0.000000e+00> : vector<16x8xf32>
      %657 = tpu.matmul %656, %622, %cst_267 {dimension_numbers = #tpu.dot_dimension_numbers<[1], [0], [0], [1], [0, 0, 1, 1], [], []>} : vector<16x16xbf16>, vector<16x8xbf16>, vector<16x8xf32> -> vector<16x8xf32>
      %658 = arith.addf %655, %657 : vector<16x8xf32>
      %c1_i32_268 = arith.constant 1 : i32
      %659 = tpu.reciprocal %653 {approx = true} : vector<16x1xf32> -> vector<16x1xf32>
      %660 = vector.broadcast %659 : vector<16x1xf32> to vector<16x8xf32>
      %661 = arith.mulf %658, %660 : vector<16x8xf32>
      %662 = arith.truncf %661 : vector<16x8xf32> to vector<16x8xbf16>
      %663 = tpu.concatenate %512, %562, %612, %662 in 1 : vector<16x8xbf16>, vector<16x8xbf16>, vector<16x8xbf16>, vector<16x8xbf16> -> vector<16x32xbf16>
      %c1_269 = arith.constant 1 : index
      %c0_270 = arith.constant 0 : index
      %c0_271 = arith.constant 0 : index
      %664 = vector.load %arg10[%c1_269, %c0_270, %c0_271] : memref<2x32x32xbf16, #tpu.memory_space<vmem>>, vector<1x32x32xbf16>
      %665 = vector.shape_cast %664 : vector<1x32x32xbf16> to vector<32x32xbf16>
      %cst_272 = arith.constant dense<0.000000e+00> : vector<16x32xf32>
      %666 = tpu.matmul %663, %665, %cst_272 {dimension_numbers = #tpu.dot_dimension_numbers<[1], [0], [0], [1], [0, 0, 1, 1], [], []>} : vector<16x32xbf16>, vector<32x32xbf16>, vector<16x32xf32> -> vector<16x32xf32>
      %c1_273 = arith.constant 1 : index
      %c0_274 = arith.constant 0 : index
      %c0_275 = arith.constant 0 : index
      %667 = vector.load %arg11[%c1_273, %c0_274, %c0_275] : memref<2x1x32xf32, #tpu.memory_space<vmem>>, vector<1x1x32xf32>
      %668 = vector.shape_cast %667 : vector<1x1x32xf32> to vector<1x32xf32>
      %669 = vector.broadcast %668 : vector<1x32xf32> to vector<16x32xf32>
      %670 = arith.addf %666, %669 : vector<16x32xf32>
      %671 = arith.addf %460, %670 : vector<16x32xf32>
      %c1_276 = arith.constant 1 : index
      %c0_277 = arith.constant 0 : index
      %c0_278 = arith.constant 0 : index
      %672 = vector.load %arg12[%c1_276, %c0_277, %c0_278] : memref<2x1x32xf32, #tpu.memory_space<vmem>>, vector<1x1x32xf32>
      %673 = vector.shape_cast %672 : vector<1x1x32xf32> to vector<1x32xf32>
      %c1_279 = arith.constant 1 : index
      %c0_280 = arith.constant 0 : index
      %c0_281 = arith.constant 0 : index
      %674 = vector.load %arg13[%c1_279, %c0_280, %c0_281] : memref<2x1x32xf32, #tpu.memory_space<vmem>>, vector<1x1x32xf32>
      %675 = vector.shape_cast %674 : vector<1x1x32xf32> to vector<1x32xf32>
      %cst_282 = arith.constant dense<0.000000e+00> : vector<16xf32>
      %676 = vector.multi_reduction <add>, %671, %cst_282 [1] : vector<16x32xf32> to vector<16xf32>
      %677 = vector.shape_cast %676 : vector<16xf32> to vector<16x1xf32>
      %cst_283 = arith.constant 3.200000e+01 : f32
      %678 = vector.broadcast %cst_283 : f32 to vector<16x1xf32>
      %679 = arith.divf %677, %678 : vector<16x1xf32>
      %680 = vector.broadcast %679 : vector<16x1xf32> to vector<16x32xf32>
      %681 = arith.subf %671, %680 : vector<16x32xf32>
      %682 = arith.mulf %681, %681 : vector<16x32xf32>
      %cst_284 = arith.constant dense<0.000000e+00> : vector<16xf32>
      %683 = vector.multi_reduction <add>, %682, %cst_284 [1] : vector<16x32xf32> to vector<16xf32>
      %684 = vector.shape_cast %683 : vector<16xf32> to vector<16x1xf32>
      %cst_285 = arith.constant 3.200000e+01 : f32
      %685 = vector.broadcast %cst_285 : f32 to vector<16x1xf32>
      %686 = arith.divf %684, %685 : vector<16x1xf32>
      %687 = vector.broadcast %679 : vector<16x1xf32> to vector<16x32xf32>
      %688 = arith.subf %671, %687 : vector<16x32xf32>
      %cst_286 = arith.constant 9.99999974E-6 : f32
      %689 = vector.broadcast %cst_286 : f32 to vector<16x1xf32>
      %690 = arith.addf %686, %689 : vector<16x1xf32>
      %691 = math.rsqrt %690 : vector<16x1xf32>
      %692 = vector.broadcast %691 : vector<16x1xf32> to vector<16x32xf32>
      %693 = arith.mulf %688, %692 : vector<16x32xf32>
      %694 = vector.broadcast %673 : vector<1x32xf32> to vector<16x32xf32>
      %695 = arith.mulf %693, %694 : vector<16x32xf32>
      %696 = vector.broadcast %675 : vector<1x32xf32> to vector<16x32xf32>
      %697 = arith.addf %695, %696 : vector<16x32xf32>
      %698 = arith.truncf %697 : vector<16x32xf32> to vector<16x32xbf16>
      %c1_287 = arith.constant 1 : index
      %c0_288 = arith.constant 0 : index
      %c0_289 = arith.constant 0 : index
      %699 = vector.load %arg14[%c1_287, %c0_288, %c0_289] : memref<2x32x64xbf16, #tpu.memory_space<vmem>>, vector<1x32x64xbf16>
      %700 = vector.shape_cast %699 : vector<1x32x64xbf16> to vector<32x64xbf16>
      %cst_290 = arith.constant dense<0.000000e+00> : vector<16x64xf32>
      %701 = tpu.matmul %698, %700, %cst_290 {dimension_numbers = #tpu.dot_dimension_numbers<[1], [0], [0], [1], [0, 0, 1, 1], [], []>} : vector<16x32xbf16>, vector<32x64xbf16>, vector<16x64xf32> -> vector<16x64xf32>
      %c1_291 = arith.constant 1 : index
      %c0_292 = arith.constant 0 : index
      %c0_293 = arith.constant 0 : index
      %702 = vector.load %arg15[%c1_291, %c0_292, %c0_293] : memref<2x1x64xf32, #tpu.memory_space<vmem>>, vector<1x1x64xf32>
      %703 = vector.shape_cast %702 : vector<1x1x64xf32> to vector<1x64xf32>
      %704 = vector.broadcast %703 : vector<1x64xf32> to vector<16x64xf32>
      %705 = arith.addf %701, %704 : vector<16x64xf32>
      %cst_294 = arith.constant 5.000000e-01 : f32
      %706 = vector.broadcast %cst_294 : f32 to vector<16x64xf32>
      %707 = arith.mulf %706, %705 : vector<16x64xf32>
      %cst_295 = arith.constant 0.707106769 : f32
      %708 = vector.broadcast %cst_295 : f32 to vector<16x64xf32>
      %709 = arith.mulf %705, %708 : vector<16x64xf32>
      %710 = math.absf %709 : vector<16x64xf32>
      %cst_296 = arith.constant 0.327591091 : f32
      %711 = vector.broadcast %cst_296 : f32 to vector<16x64xf32>
      %712 = arith.mulf %711, %710 : vector<16x64xf32>
      %cst_297 = arith.constant 1.000000e+00 : f32
      %713 = vector.broadcast %cst_297 : f32 to vector<16x64xf32>
      %714 = arith.addf %713, %712 : vector<16x64xf32>
      %715 = tpu.reciprocal %714 {approx = true} : vector<16x64xf32> -> vector<16x64xf32>
      %cst_298 = arith.constant 1.06140542 : f32
      %716 = vector.broadcast %cst_298 : f32 to vector<16x64xf32>
      %717 = arith.mulf %716, %715 : vector<16x64xf32>
      %cst_299 = arith.constant -1.45315206 : f32
      %718 = vector.broadcast %cst_299 : f32 to vector<16x64xf32>
      %719 = arith.addf %717, %718 : vector<16x64xf32>
      %720 = arith.mulf %719, %715 : vector<16x64xf32>
      %cst_300 = arith.constant 1.42141378 : f32
      %721 = vector.broadcast %cst_300 : f32 to vector<16x64xf32>
      %722 = arith.addf %720, %721 : vector<16x64xf32>
      %723 = arith.mulf %722, %715 : vector<16x64xf32>
      %cst_301 = arith.constant -0.284496725 : f32
      %724 = vector.broadcast %cst_301 : f32 to vector<16x64xf32>
      %725 = arith.addf %723, %724 : vector<16x64xf32>
      %726 = arith.mulf %725, %715 : vector<16x64xf32>
      %cst_302 = arith.constant 0.254829586 : f32
      %727 = vector.broadcast %cst_302 : f32 to vector<16x64xf32>
      %728 = arith.addf %726, %727 : vector<16x64xf32>
      %729 = arith.mulf %728, %715 : vector<16x64xf32>
      %cst_303 = arith.constant 0.000000e+00 : f32
      %730 = vector.broadcast %cst_303 : f32 to vector<16x64xf32>
      %731 = arith.subf %730, %710 : vector<16x64xf32>
      %732 = arith.mulf %731, %710 : vector<16x64xf32>
      %733 = math.exp %732 : vector<16x64xf32>
      %734 = arith.mulf %729, %733 : vector<16x64xf32>
      %cst_304 = arith.constant 1.000000e+00 : f32
      %735 = vector.broadcast %cst_304 : f32 to vector<16x64xf32>
      %736 = arith.subf %735, %734 : vector<16x64xf32>
      %cst_305 = arith.constant 0.000000e+00 : f32
      %737 = vector.broadcast %cst_305 : f32 to vector<16x64xf32>
      %738 = arith.cmpf oge, %709, %737 : vector<16x64xf32>
      %cst_306 = arith.constant 0.000000e+00 : f32
      %739 = vector.broadcast %cst_306 : f32 to vector<16x64xf32>
      %740 = arith.subf %739, %736 : vector<16x64xf32>
      %741 = arith.select %738, %736, %740 : vector<16x64xi1>, vector<16x64xf32>
      %cst_307 = arith.constant 1.000000e+00 : f32
      %742 = vector.broadcast %cst_307 : f32 to vector<16x64xf32>
      %743 = arith.addf %742, %741 : vector<16x64xf32>
      %744 = arith.mulf %707, %743 : vector<16x64xf32>
      %745 = arith.truncf %744 : vector<16x64xf32> to vector<16x64xbf16>
      %c1_308 = arith.constant 1 : index
      %c0_309 = arith.constant 0 : index
      %c0_310 = arith.constant 0 : index
      %746 = vector.load %arg16[%c1_308, %c0_309, %c0_310] : memref<2x64x32xbf16, #tpu.memory_space<vmem>>, vector<1x64x32xbf16>
      %747 = vector.shape_cast %746 : vector<1x64x32xbf16> to vector<64x32xbf16>
      %cst_311 = arith.constant dense<0.000000e+00> : vector<16x32xf32>
      %748 = tpu.matmul %745, %747, %cst_311 {dimension_numbers = #tpu.dot_dimension_numbers<[1], [0], [0], [1], [0, 0, 1, 1], [], []>} : vector<16x64xbf16>, vector<64x32xbf16>, vector<16x32xf32> -> vector<16x32xf32>
      %c1_312 = arith.constant 1 : index
      %c0_313 = arith.constant 0 : index
      %c0_314 = arith.constant 0 : index
      %749 = vector.load %arg17[%c1_312, %c0_313, %c0_314] : memref<2x1x32xf32, #tpu.memory_space<vmem>>, vector<1x1x32xf32>
      %750 = vector.shape_cast %749 : vector<1x1x32xf32> to vector<1x32xf32>
      %751 = vector.broadcast %750 : vector<1x32xf32> to vector<16x32xf32>
      %752 = arith.addf %748, %751 : vector<16x32xf32>
      %753 = arith.addf %671, %752 : vector<16x32xf32>
      %754 = arith.index_cast %458 : i32 to index
      %c0_315 = arith.constant 0 : index
      %755 = vector.load %arg23[%754, %c0_315] : memref<16x32xf32, #tpu.memory_space<vmem>>, vector<16x32xf32>
      tpu.vector_store %arg23[%754, %c0_315], %753 {strides = array<i32>} : memref<16x32xf32, #tpu.memory_space<vmem>>, vector<16x32xf32>,
      %c1_i32_316 = arith.constant 1 : i32
      %c0_317 = arith.constant 0 : index
      %c0_318 = arith.constant 0 : index
      %756 = vector.load %arg23[%c0_317, %c0_318] : memref<16x32xf32, #tpu.memory_space<vmem>>, vector<8x32xf32>
      %c0_319 = arith.constant 0 : index
      %c0_320 = arith.constant 0 : index
      %757 = vector.load %arg18[%c0_319, %c0_320] : memref<1x32xf32, #tpu.memory_space<vmem>>, vector<1x32xf32>
      %c0_321 = arith.constant 0 : index
      %c0_322 = arith.constant 0 : index
      %758 = vector.load %arg19[%c0_321, %c0_322] : memref<1x32xf32, #tpu.memory_space<vmem>>, vector<1x32xf32>
      %cst_323 = arith.constant dense<0.000000e+00> : vector<8xf32>
      %759 = vector.multi_reduction <add>, %756, %cst_323 [1] : vector<8x32xf32> to vector<8xf32>
      %760 = vector.shape_cast %759 : vector<8xf32> to vector<8x1xf32>
      %cst_324 = arith.constant 3.200000e+01 : f32
      %761 = vector.broadcast %cst_324 : f32 to vector<8x1xf32>
      %762 = arith.divf %760, %761 : vector<8x1xf32>
      %763 = vector.broadcast %762 : vector<8x1xf32> to vector<8x32xf32>
      %764 = arith.subf %756, %763 : vector<8x32xf32>
      %765 = arith.mulf %764, %764 : vector<8x32xf32>
      %cst_325 = arith.constant dense<0.000000e+00> : vector<8xf32>
      %766 = vector.multi_reduction <add>, %765, %cst_325 [1] : vector<8x32xf32> to vector<8xf32>
      %767 = vector.shape_cast %766 : vector<8xf32> to vector<8x1xf32>
      %cst_326 = arith.constant 3.200000e+01 : f32
      %768 = vector.broadcast %cst_326 : f32 to vector<8x1xf32>
      %769 = arith.divf %767, %768 : vector<8x1xf32>
      %770 = vector.broadcast %762 : vector<8x1xf32> to vector<8x32xf32>
      %771 = arith.subf %756, %770 : vector<8x32xf32>
      %cst_327 = arith.constant 9.99999974E-6 : f32
      %772 = vector.broadcast %cst_327 : f32 to vector<8x1xf32>
      %773 = arith.addf %769, %772 : vector<8x1xf32>
      %774 = math.rsqrt %773 : vector<8x1xf32>
      %775 = vector.broadcast %774 : vector<8x1xf32> to vector<8x32xf32>
      %776 = arith.mulf %771, %775 : vector<8x32xf32>
      %777 = vector.broadcast %757 : vector<1x32xf32> to vector<8x32xf32>
      %778 = arith.mulf %776, %777 : vector<8x32xf32>
      %779 = vector.broadcast %758 : vector<1x32xf32> to vector<8x32xf32>
      %780 = arith.addf %778, %779 : vector<8x32xf32>
      %781 = arith.truncf %780 : vector<8x32xf32> to vector<8x32xbf16>
      %c0_328 = arith.constant 0 : index
      %c0_329 = arith.constant 0 : index
      %782 = vector.load %arg20[%c0_328, %c0_329] : memref<32x3xbf16, #tpu.memory_space<vmem>>, vector<32x3xbf16>
      %cst_330 = arith.constant dense<0.000000e+00> : vector<8x3xf32>
      %783 = tpu.matmul %781, %782, %cst_330 {dimension_numbers = #tpu.dot_dimension_numbers<[1], [0], [0], [1], [0, 0, 1, 1], [], []>} : vector<8x32xbf16>, vector<32x3xbf16>, vector<8x3xf32> -> vector<8x3xf32>
      %c0_331 = arith.constant 0 : index
      %c0_332 = arith.constant 0 : index
      %784 = vector.load %arg21[%c0_331, %c0_332] : memref<1x3xf32, #tpu.memory_space<vmem>>, vector<1x3xf32>
      %785 = vector.broadcast %784 : vector<1x3xf32> to vector<8x3xf32>
      %786 = arith.addf %783, %785 : vector<8x3xf32>
      %787 = vector.extract_strided_slice %786 {offsets = [0, 0], sizes = [1, 3], strides = [1, 1]} : vector<8x3xf32> to vector<1x3xf32>
      %c0_333 = arith.constant 0 : index
      %c0_334 = arith.constant 0 : index
      %c0_335 = arith.constant 0 : index
      %788 = vector.load %arg22[%c0_333, %c0_334, %c0_335] : memref<1x1x3xf32, #tpu.memory_space<vmem>>, vector<1x1x3xf32>
      %789 = vector.shape_cast %788 : vector<1x1x3xf32> to vector<1x3xf32>
      %790 = vector.shape_cast %787 : vector<1x3xf32> to vector<1x1x3xf32>
      tpu.vector_store %arg22[%c0_333, %c0_334, %c0_335], %790 {strides = array<i32>} : memref<1x1x3xf32, #tpu.memory_space<vmem>>, vector<1x1x3xf32>,
    } else {
    }
    return
  }
  func.func @transform_0(%arg0: i32, %arg1: i32) -> (i32, i32, i32) {
    %c0_i32 = arith.constant 0 : i32
    %c0_i32_0 = arith.constant 0 : i32
    return %arg0, %arg1, %c0_i32 : i32, i32, i32
  }
  func.func @transform_1(%arg0: i32, %arg1: i32) -> (i32, i32) {
    %c0_i32 = arith.constant 0 : i32
    %c0_i32_0 = arith.constant 0 : i32
    %c0_i32_1 = arith.constant 0 : i32
    return %c0_i32, %c0_i32_0 : i32, i32
  }
  func.func @transform_2(%arg0: i32, %arg1: i32) -> (i32, i32) {
    %c0_i32 = arith.constant 0 : i32
    %c0_i32_0 = arith.constant 0 : i32
    %c0_i32_1 = arith.constant 0 : i32
    return %c0_i32, %c0_i32_0 : i32, i32
  }
  func.func @transform_3(%arg0: i32, %arg1: i32) -> (i32, i32) {
    %c0_i32 = arith.constant 0 : i32
    %c0_i32_0 = arith.constant 0 : i32
    %c0_i32_1 = arith.constant 0 : i32
    return %c0_i32, %c0_i32_0 : i32, i32
  }
  func.func @transform_4(%arg0: i32, %arg1: i32) -> (i32, i32, i32) {
    %c0_i32 = arith.constant 0 : i32
    %c0_i32_0 = arith.constant 0 : i32
    %c0_i32_1 = arith.constant 0 : i32
    %c0_i32_2 = arith.constant 0 : i32
    return %c0_i32, %c0_i32_0, %c0_i32_1 : i32, i32, i32
  }
  func.func @transform_5(%arg0: i32, %arg1: i32) -> (i32, i32, i32) {
    %c0_i32 = arith.constant 0 : i32
    %c0_i32_0 = arith.constant 0 : i32
    %c0_i32_1 = arith.constant 0 : i32
    %c0_i32_2 = arith.constant 0 : i32
    return %c0_i32, %c0_i32_0, %c0_i32_1 : i32, i32, i32
  }
  func.func @transform_6(%arg0: i32, %arg1: i32) -> (i32, i32, i32) {
    %c0_i32 = arith.constant 0 : i32
    %c0_i32_0 = arith.constant 0 : i32
    %c0_i32_1 = arith.constant 0 : i32
    %c0_i32_2 = arith.constant 0 : i32
    return %c0_i32, %c0_i32_0, %c0_i32_1 : i32, i32, i32
  }
  func.func @transform_7(%arg0: i32, %arg1: i32) -> (i32, i32, i32) {
    %c0_i32 = arith.constant 0 : i32
    %c0_i32_0 = arith.constant 0 : i32
    %c0_i32_1 = arith.constant 0 : i32
    %c0_i32_2 = arith.constant 0 : i32
    return %c0_i32, %c0_i32_0, %c0_i32_1 : i32, i32, i32
  }
  func.func @transform_8(%arg0: i32, %arg1: i32) -> (i32, i32, i32) {
    %c0_i32 = arith.constant 0 : i32
    %c0_i32_0 = arith.constant 0 : i32
    %c0_i32_1 = arith.constant 0 : i32
    %c0_i32_2 = arith.constant 0 : i32
    return %c0_i32, %c0_i32_0, %c0_i32_1 : i32, i32, i32
  }
  func.func @transform_9(%arg0: i32, %arg1: i32) -> (i32, i32, i32) {
    %c0_i32 = arith.constant 0 : i32
    %c0_i32_0 = arith.constant 0 : i32
    %c0_i32_1 = arith.constant 0 : i32
    %c0_i32_2 = arith.constant 0 : i32
    return %c0_i32, %c0_i32_0, %c0_i32_1 : i32, i32, i32
  }
  func.func @transform_10(%arg0: i32, %arg1: i32) -> (i32, i32, i32) {
    %c0_i32 = arith.constant 0 : i32
    %c0_i32_0 = arith.constant 0 : i32
    %c0_i32_1 = arith.constant 0 : i32
    %c0_i32_2 = arith.constant 0 : i32
    return %c0_i32, %c0_i32_0, %c0_i32_1 : i32, i32, i32
  }
  func.func @transform_11(%arg0: i32, %arg1: i32) -> (i32, i32, i32) {
    %c0_i32 = arith.constant 0 : i32
    %c0_i32_0 = arith.constant 0 : i32
    %c0_i32_1 = arith.constant 0 : i32
    %c0_i32_2 = arith.constant 0 : i32
    return %c0_i32, %c0_i32_0, %c0_i32_1 : i32, i32, i32
  }
  func.func @transform_12(%arg0: i32, %arg1: i32) -> (i32, i32, i32) {
    %c0_i32 = arith.constant 0 : i32
    %c0_i32_0 = arith.constant 0 : i32
    %c0_i32_1 = arith.constant 0 : i32
    %c0_i32_2 = arith.constant 0 : i32
    return %c0_i32, %c0_i32_0, %c0_i32_1 : i32, i32, i32
  }
  func.func @transform_13(%arg0: i32, %arg1: i32) -> (i32, i32, i32) {
    %c0_i32 = arith.constant 0 : i32
    %c0_i32_0 = arith.constant 0 : i32
    %c0_i32_1 = arith.constant 0 : i32
    %c0_i32_2 = arith.constant 0 : i32
    return %c0_i32, %c0_i32_0, %c0_i32_1 : i32, i32, i32
  }
  func.func @transform_14(%arg0: i32, %arg1: i32) -> (i32, i32, i32) {
    %c0_i32 = arith.constant 0 : i32
    %c0_i32_0 = arith.constant 0 : i32
    %c0_i32_1 = arith.constant 0 : i32
    %c0_i32_2 = arith.constant 0 : i32
    return %c0_i32, %c0_i32_0, %c0_i32_1 : i32, i32, i32
  }
  func.func @transform_15(%arg0: i32, %arg1: i32) -> (i32, i32, i32) {
    %c0_i32 = arith.constant 0 : i32
    %c0_i32_0 = arith.constant 0 : i32
    %c0_i32_1 = arith.constant 0 : i32
    %c0_i32_2 = arith.constant 0 : i32
    return %c0_i32, %c0_i32_0, %c0_i32_1 : i32, i32, i32
  }
  func.func @transform_16(%arg0: i32, %arg1: i32) -> (i32, i32) {
    %c0_i32 = arith.constant 0 : i32
    %c0_i32_0 = arith.constant 0 : i32
    %c0_i32_1 = arith.constant 0 : i32
    return %c0_i32, %c0_i32_0 : i32, i32
  }
  func.func @transform_17(%arg0: i32, %arg1: i32) -> (i32, i32) {
    %c0_i32 = arith.constant 0 : i32
    %c0_i32_0 = arith.constant 0 : i32
    %c0_i32_1 = arith.constant 0 : i32
    return %c0_i32, %c0_i32_0 : i32, i32
  }
  func.func @transform_18(%arg0: i32, %arg1: i32) -> (i32, i32) {
    %c0_i32 = arith.constant 0 : i32
    %c0_i32_0 = arith.constant 0 : i32
    %c0_i32_1 = arith.constant 0 : i32
    return %c0_i32, %c0_i32_0 : i32, i32
  }
  func.func @transform_19(%arg0: i32, %arg1: i32) -> (i32, i32) {
    %c0_i32 = arith.constant 0 : i32
    %c0_i32_0 = arith.constant 0 : i32
    %c0_i32_1 = arith.constant 0 : i32
    return %c0_i32, %c0_i32_0 : i32, i32
  }
  func.func @transform_20(%arg0: i32, %arg1: i32) -> (i32, i32, i32) {
    %c0_i32 = arith.constant 0 : i32
    %c0_i32_0 = arith.constant 0 : i32
    %c0_i32_1 = arith.constant 0 : i32
    return %arg0, %c0_i32, %c0_i32_0 : i32, i32, i32
  }
}

module attributes {stable_mosaic.version = 11 : i64} {
  func.func @transmil_kernel(%arg0: i32, %arg1: i32, %arg2: memref<1x8x32xf32, #tpu.memory_space<vmem>>, %arg3: memref<32x32xbf16, #tpu.memory_space<vmem>>, %arg4: memref<1x32xf32, #tpu.memory_space<vmem>>, %arg5: memref<1x32xf32, #tpu.memory_space<vmem>>, %arg6: memref<2x1x32xf32, #tpu.memory_space<vmem>>, %arg7: memref<2x1x32xf32, #tpu.memory_space<vmem>>, %arg8: memref<2x32x96xbf16, #tpu.memory_space<vmem>>, %arg9: memref<2x1x96xf32, #tpu.memory_space<vmem>>, %arg10: memref<2x32x32xbf16, #tpu.memory_space<vmem>>, %arg11: memref<2x1x32xf32, #tpu.memory_space<vmem>>, %arg12: memref<2x1x32xf32, #tpu.memory_space<vmem>>, %arg13: memref<2x1x32xf32, #tpu.memory_space<vmem>>, %arg14: memref<2x32x64xbf16, #tpu.memory_space<vmem>>, %arg15: memref<2x1x64xf32, #tpu.memory_space<vmem>>, %arg16: memref<2x64x32xbf16, #tpu.memory_space<vmem>>, %arg17: memref<2x1x32xf32, #tpu.memory_space<vmem>>, %arg18: memref<1x32xf32, #tpu.memory_space<vmem>>, %arg19: memref<1x32xf32, #tpu.memory_space<vmem>>, %arg20: memref<32x3xbf16, #tpu.memory_space<vmem>>, %arg21: memref<1x3xf32, #tpu.memory_space<vmem>>, %arg22: memref<1x1x3xf32, #tpu.memory_space<vmem>>, %arg23: memref<16x32xf32, #tpu.memory_space<vmem>>, %arg24: memref<16x96xbf16, #tpu.memory_space<vmem>>) attributes {dimension_semantics = [#tpu.dimension_semantics<parallel>, #tpu.dimension_semantics<arbitrary>], iteration_bounds = array<i64: 2, 1>, scalar_prefetch = 0 : i64, scratch_operands = 2 : i64, tpu.core_type = #tpu.core_type<tc>, window_params = [{transform_indices = @transform_0, window_bounds = array<i64: 1, 8, 32>}, {pipeline_mode = #tpu.pipeline_mode<synchronous>, transform_indices = @transform_1, window_bounds = array<i64: 32, 32>}, {pipeline_mode = #tpu.pipeline_mode<synchronous>, transform_indices = @transform_2, window_bounds = array<i64: 1, 32>}, {pipeline_mode = #tpu.pipeline_mode<synchronous>, transform_indices = @transform_3, window_bounds = array<i64: 1, 32>}, {pipeline_mode = #tpu.pipeline_mode<synchronous>, transform_indices = @transform_4, window_bounds = array<i64: 2, 1, 32>}, {pipeline_mode = #tpu.pipeline_mode<synchronous>, transform_indices = @transform_5, window_bounds = array<i64: 2, 1, 32>}, {pipeline_mode = #tpu.pipeline_mode<synchronous>, transform_indices = @transform_6, window_bounds = array<i64: 2, 32, 96>}, {pipeline_mode = #tpu.pipeline_mode<synchronous>, transform_indices = @transform_7, window_bounds = array<i64: 2, 1, 96>}, {pipeline_mode = #tpu.pipeline_mode<synchronous>, transform_indices = @transform_8, window_bounds = array<i64: 2, 32, 32>}, {pipeline_mode = #tpu.pipeline_mode<synchronous>, transform_indices = @transform_9, window_bounds = array<i64: 2, 1, 32>}, {pipeline_mode = #tpu.pipeline_mode<synchronous>, transform_indices = @transform_10, window_bounds = array<i64: 2, 1, 32>}, {pipeline_mode = #tpu.pipeline_mode<synchronous>, transform_indices = @transform_11, window_bounds = array<i64: 2, 1, 32>}, {pipeline_mode = #tpu.pipeline_mode<synchronous>, transform_indices = @transform_12, window_bounds = array<i64: 2, 32, 64>}, {pipeline_mode = #tpu.pipeline_mode<synchronous>, transform_indices = @transform_13, window_bounds = array<i64: 2, 1, 64>}, {pipeline_mode = #tpu.pipeline_mode<synchronous>, transform_indices = @transform_14, window_bounds = array<i64: 2, 64, 32>}, {pipeline_mode = #tpu.pipeline_mode<synchronous>, transform_indices = @transform_15, window_bounds = array<i64: 2, 1, 32>}, {pipeline_mode = #tpu.pipeline_mode<synchronous>, transform_indices = @transform_16, window_bounds = array<i64: 1, 32>}, {pipeline_mode = #tpu.pipeline_mode<synchronous>, transform_indices = @transform_17, window_bounds = array<i64: 1, 32>}, {pipeline_mode = #tpu.pipeline_mode<synchronous>, transform_indices = @transform_18, window_bounds = array<i64: 32, 3>}, {pipeline_mode = #tpu.pipeline_mode<synchronous>, transform_indices = @transform_19, window_bounds = array<i64: 1, 3>}, {transform_indices = @transform_20, window_bounds = array<i64: 1, 1, 3>}]} {
    %c0 = arith.constant 0 : index
    %c0_0 = arith.constant 0 : index
    %c0_1 = arith.constant 0 : index
    %0 = vector.load %arg2[%c0, %c0_0, %c0_1] : memref<1x8x32xf32, #tpu.memory_space<vmem>>, vector<1x8x32xf32>
    %1 = vector.shape_cast %0 : vector<1x8x32xf32> to vector<8x32xf32>
    %2 = arith.truncf %1 : vector<8x32xf32> to vector<8x32xbf16>
    %c0_2 = arith.constant 0 : index
    %c0_3 = arith.constant 0 : index
    %3 = vector.load %arg3[%c0_2, %c0_3] : memref<32x32xbf16, #tpu.memory_space<vmem>>, vector<32x32xbf16>
    %cst = arith.constant dense<0.000000e+00> : vector<8x32xf32>
    %4 = tpu.matmul %2, %3, %cst {dimension_numbers = #tpu.dot_dimension_numbers<[1], [0], [0], [1], [0, 0, 1, 1], [], []>} : vector<8x32xbf16>, vector<32x32xbf16>, vector<8x32xf32> -> vector<8x32xf32>
    %c0_4 = arith.constant 0 : index
    %c0_5 = arith.constant 0 : index
    %5 = vector.load %arg4[%c0_4, %c0_5] : memref<1x32xf32, #tpu.memory_space<vmem>>, vector<1x32xf32>
    %6 = vector.broadcast %5 : vector<1x32xf32> to vector<8x32xf32>
    %7 = arith.addf %4, %6 : vector<8x32xf32>
    %cst_6 = arith.constant 5.000000e-01 : f32
    %8 = vector.broadcast %cst_6 : f32 to vector<8x32xf32>
    %9 = arith.mulf %8, %7 : vector<8x32xf32>
    %cst_7 = arith.constant 0.707106769 : f32
    %10 = vector.broadcast %cst_7 : f32 to vector<8x32xf32>
    %11 = arith.mulf %7, %10 : vector<8x32xf32>
    %12 = math.absf %11 : vector<8x32xf32>
    %cst_8 = arith.constant 0.327591091 : f32
    %13 = vector.broadcast %cst_8 : f32 to vector<8x32xf32>
    %14 = arith.mulf %13, %12 : vector<8x32xf32>
    %cst_9 = arith.constant 1.000000e+00 : f32
    %15 = vector.broadcast %cst_9 : f32 to vector<8x32xf32>
    %16 = arith.addf %15, %14 : vector<8x32xf32>
    %17 = tpu.reciprocal %16 {approx = true} : vector<8x32xf32> -> vector<8x32xf32>
    %cst_10 = arith.constant 1.06140542 : f32
    %18 = vector.broadcast %cst_10 : f32 to vector<8x32xf32>
    %19 = arith.mulf %18, %17 : vector<8x32xf32>
    %cst_11 = arith.constant -1.45315206 : f32
    %20 = vector.broadcast %cst_11 : f32 to vector<8x32xf32>
    %21 = arith.addf %19, %20 : vector<8x32xf32>
    %22 = arith.mulf %21, %17 : vector<8x32xf32>
    %cst_12 = arith.constant 1.42141378 : f32
    %23 = vector.broadcast %cst_12 : f32 to vector<8x32xf32>
    %24 = arith.addf %22, %23 : vector<8x32xf32>
    %25 = arith.mulf %24, %17 : vector<8x32xf32>
    %cst_13 = arith.constant -0.284496725 : f32
    %26 = vector.broadcast %cst_13 : f32 to vector<8x32xf32>
    %27 = arith.addf %25, %26 : vector<8x32xf32>
    %28 = arith.mulf %27, %17 : vector<8x32xf32>
    %cst_14 = arith.constant 0.254829586 : f32
    %29 = vector.broadcast %cst_14 : f32 to vector<8x32xf32>
    %30 = arith.addf %28, %29 : vector<8x32xf32>
    %31 = arith.mulf %30, %17 : vector<8x32xf32>
    %cst_15 = arith.constant 0.000000e+00 : f32
    %32 = vector.broadcast %cst_15 : f32 to vector<8x32xf32>
    %33 = arith.subf %32, %12 : vector<8x32xf32>
    %34 = arith.mulf %33, %12 : vector<8x32xf32>
    %35 = math.exp %34 : vector<8x32xf32>
    %36 = arith.mulf %31, %35 : vector<8x32xf32>
    %cst_16 = arith.constant 1.000000e+00 : f32
    %37 = vector.broadcast %cst_16 : f32 to vector<8x32xf32>
    %38 = arith.subf %37, %36 : vector<8x32xf32>
    %cst_17 = arith.constant 0.000000e+00 : f32
    %39 = vector.broadcast %cst_17 : f32 to vector<8x32xf32>
    %40 = arith.cmpf oge, %11, %39 : vector<8x32xf32>
    %cst_18 = arith.constant 0.000000e+00 : f32
    %41 = vector.broadcast %cst_18 : f32 to vector<8x32xf32>
    %42 = arith.subf %41, %38 : vector<8x32xf32>
    %43 = arith.select %40, %38, %42 : vector<8x32xi1>, vector<8x32xf32>
    %cst_19 = arith.constant 1.000000e+00 : f32
    %44 = vector.broadcast %cst_19 : f32 to vector<8x32xf32>
    %45 = arith.addf %44, %43 : vector<8x32xf32>
    %46 = arith.mulf %9, %45 : vector<8x32xf32>
    %47 = tpu.iota {dimensions = array<i32: 0>} : vector<8x1xi32>
    %c8_i32 = arith.constant 8 : i32
    %48 = arith.muli %arg1, %c8_i32 : i32
    %49 = vector.broadcast %48 : i32 to vector<8x1xi32>
    %50 = arith.addi %47, %49 : vector<8x1xi32>
    %c7_i32 = arith.constant 7 : i32
    %51 = vector.broadcast %c7_i32 : i32 to vector<8x1xi32>
    %52 = arith.cmpi slt, %50, %51 : vector<8x1xi32>
    %cst_20 = arith.constant 0.000000e+00 : f32
    %53 = vector.shape_cast %52 : vector<8x1xi1> to vector<8x1xi1>
    %54 = vector.broadcast %53 : vector<8x1xi1> to vector<8x32xi1>
    %55 = vector.broadcast %cst_20 : f32 to vector<8x32xf32>
    %56 = arith.select %54, %46, %55 : vector<8x32xi1>, vector<8x32xf32>
    %c8_i32_21 = arith.constant 8 : i32
    %57 = arith.muli %arg1, %c8_i32_21 : i32
    %c8_i32_22 = arith.constant 8 : i32
    %58 = arith.addi %c8_i32_22, %57 : i32
    %59 = tpu.assume_multiple %58, 8 : i32
    %60 = arith.index_cast %59 : i32 to index
    %c0_23 = arith.constant 0 : index
    %61 = vector.load %arg23[%60, %c0_23] : memref<16x32xf32, #tpu.memory_space<vmem>>, vector<8x32xf32>
    tpu.vector_store %arg23[%60, %c0_23], %56 {strides = array<i32>} : memref<16x32xf32, #tpu.memory_space<vmem>>, vector<8x32xf32>,
    %c0_i32 = arith.constant 0 : i32
    %62 = arith.cmpi eq, %arg1, %c0_i32 : i32
    %63 = arith.extui %62 : i1 to i32
    %c0_i32_24 = arith.constant 0 : i32
    %64 = arith.cmpi ne, %63, %c0_i32_24 : i32
    scf.if %64 {
      %68 = tpu.iota {dimensions = array<i32: 0>} : vector<8x1xi32>
      %c0_i32_27 = arith.constant 0 : i32
      %69 = vector.broadcast %c0_i32_27 : i32 to vector<8x1xi32>
      %70 = arith.cmpi eq, %68, %69 : vector<8x1xi32>
      %c0_28 = arith.constant 0 : index
      %c0_29 = arith.constant 0 : index
      %71 = vector.load %arg5[%c0_28, %c0_29] : memref<1x32xf32, #tpu.memory_space<vmem>>, vector<1x32xf32>
      %cst_30 = arith.constant 0.000000e+00 : f32
      %72 = vector.shape_cast %70 : vector<8x1xi1> to vector<8x1xi1>
      %73 = vector.broadcast %72 : vector<8x1xi1> to vector<8x32xi1>
      %74 = vector.shape_cast %71 : vector<1x32xf32> to vector<1x32xf32>
      %75 = vector.broadcast %74 : vector<1x32xf32> to vector<8x32xf32>
      %76 = vector.broadcast %cst_30 : f32 to vector<8x32xf32>
      %77 = arith.select %73, %75, %76 : vector<8x32xi1>, vector<8x32xf32>
      %c0_31 = arith.constant 0 : index
      %c0_32 = arith.constant 0 : index
      %78 = vector.load %arg23[%c0_31, %c0_32] : memref<16x32xf32, #tpu.memory_space<vmem>>, vector<8x32xf32>
      tpu.vector_store %arg23[%c0_31, %c0_32], %77 {strides = array<i32>} : memref<16x32xf32, #tpu.memory_space<vmem>>, vector<8x32xf32>,
    } else {
    }
    %c0_i32_25 = arith.constant 0 : i32
    %65 = arith.cmpi eq, %arg1, %c0_i32_25 : i32
    %66 = arith.extui %65 : i1 to i32
    %c0_i32_26 = arith.constant 0 : i32
    %67 = arith.cmpi ne, %66, %c0_i32_26 : i32
    scf.if %67 {
      %c0_i32_27 = arith.constant 0 : i32
      %c1_i32 = arith.constant 1 : i32
      %68 = arith.muli %c0_i32_27, %c1_i32 : i32
      %c0_i32_28 = arith.constant 0 : i32
      %69 = arith.addi %c0_i32_28, %68 : i32
      %c16_i32 = arith.constant 16 : i32
      %70 = arith.muli %69, %c16_i32 : i32
      %71 = tpu.assume_multiple %70, 16 : i32
      %72 = arith.index_cast %71 : i32 to index
      %c0_29 = arith.constant 0 : index
      %73 = vector.load %arg23[%72, %c0_29] : memref<16x32xf32, #tpu.memory_space<vmem>>, vector<16x32xf32>
      %c0_30 = arith.constant 0 : index
      %c0_31 = arith.constant 0 : index
      %c0_32 = arith.constant 0 : index
      %74 = vector.load %arg6[%c0_30, %c0_31, %c0_32] : memref<2x1x32xf32, #tpu.memory_space<vmem>>, vector<1x1x32xf32>
      %75 = vector.shape_cast %74 : vector<1x1x32xf32> to vector<1x32xf32>
      %c0_33 = arith.constant 0 : index
      %c0_34 = arith.constant 0 : index
      %c0_35 = arith.constant 0 : index
      %76 = vector.load %arg7[%c0_33, %c0_34, %c0_35] : memref<2x1x32xf32, #tpu.memory_space<vmem>>, vector<1x1x32xf32>
      %77 = vector.shape_cast %76 : vector<1x1x32xf32> to vector<1x32xf32>
      %cst_36 = arith.constant dense<0.000000e+00> : vector<16xf32>
      %78 = vector.multi_reduction <add>, %73, %cst_36 [1] : vector<16x32xf32> to vector<16xf32>
      %79 = vector.shape_cast %78 : vector<16xf32> to vector<16x1xf32>
      %cst_37 = arith.constant 3.200000e+01 : f32
      %80 = vector.broadcast %cst_37 : f32 to vector<16x1xf32>
      %81 = arith.divf %79, %80 : vector<16x1xf32>
      %82 = vector.broadcast %81 : vector<16x1xf32> to vector<16x32xf32>
      %83 = arith.subf %73, %82 : vector<16x32xf32>
      %84 = arith.mulf %83, %83 : vector<16x32xf32>
      %cst_38 = arith.constant dense<0.000000e+00> : vector<16xf32>
      %85 = vector.multi_reduction <add>, %84, %cst_38 [1] : vector<16x32xf32> to vector<16xf32>
      %86 = vector.shape_cast %85 : vector<16xf32> to vector<16x1xf32>
      %cst_39 = arith.constant 3.200000e+01 : f32
      %87 = vector.broadcast %cst_39 : f32 to vector<16x1xf32>
      %88 = arith.divf %86, %87 : vector<16x1xf32>
      %89 = vector.broadcast %81 : vector<16x1xf32> to vector<16x32xf32>
      %90 = arith.subf %73, %89 : vector<16x32xf32>
      %cst_40 = arith.constant 9.99999974E-6 : f32
      %91 = vector.broadcast %cst_40 : f32 to vector<16x1xf32>
      %92 = arith.addf %88, %91 : vector<16x1xf32>
      %93 = math.rsqrt %92 : vector<16x1xf32>
      %94 = vector.broadcast %93 : vector<16x1xf32> to vector<16x32xf32>
      %95 = arith.mulf %90, %94 : vector<16x32xf32>
      %96 = vector.broadcast %75 : vector<1x32xf32> to vector<16x32xf32>
      %97 = arith.mulf %95, %96 : vector<16x32xf32>
      %98 = vector.broadcast %77 : vector<1x32xf32> to vector<16x32xf32>
      %99 = arith.addf %97, %98 : vector<16x32xf32>
      %100 = arith.truncf %99 : vector<16x32xf32> to vector<16x32xbf16>
      %c0_41 = arith.constant 0 : index
      %c0_42 = arith.constant 0 : index
      %c0_43 = arith.constant 0 : index
      %101 = vector.load %arg8[%c0_41, %c0_42, %c0_43] : memref<2x32x96xbf16, #tpu.memory_space<vmem>>, vector<1x32x96xbf16>
      %102 = vector.shape_cast %101 : vector<1x32x96xbf16> to vector<32x96xbf16>
      %cst_44 = arith.constant dense<0.000000e+00> : vector<16x96xf32>
      %103 = tpu.matmul %100, %102, %cst_44 {dimension_numbers = #tpu.dot_dimension_numbers<[1], [0], [0], [1], [0, 0, 1, 1], [], []>} : vector<16x32xbf16>, vector<32x96xbf16>, vector<16x96xf32> -> vector<16x96xf32>
      %c0_45 = arith.constant 0 : index
      %c0_46 = arith.constant 0 : index
      %c0_47 = arith.constant 0 : index
      %104 = vector.load %arg9[%c0_45, %c0_46, %c0_47] : memref<2x1x96xf32, #tpu.memory_space<vmem>>, vector<1x1x96xf32>
      %105 = vector.shape_cast %104 : vector<1x1x96xf32> to vector<1x96xf32>
      %106 = vector.broadcast %105 : vector<1x96xf32> to vector<16x96xf32>
      %107 = arith.addf %103, %106 : vector<16x96xf32>
      %108 = arith.truncf %107 : vector<16x96xf32> to vector<16x96xbf16>
      %109 = arith.index_cast %71 : i32 to index
      %c0_48 = arith.constant 0 : index
      %110 = vector.load %arg24[%109, %c0_48] : memref<16x96xbf16, #tpu.memory_space<vmem>>, vector<16x96xbf16>
      tpu.vector_store %arg24[%109, %c0_48], %108 {strides = array<i32>} : memref<16x96xbf16, #tpu.memory_space<vmem>>, vector<16x96xbf16>,
      %c1_i32_49 = arith.constant 1 : i32
      %c0_i32_50 = arith.constant 0 : i32
      %c1_i32_51 = arith.constant 1 : i32
      %111 = arith.muli %c0_i32_50, %c1_i32_51 : i32
      %c0_i32_52 = arith.constant 0 : i32
      %112 = arith.addi %c0_i32_52, %111 : i32
      %c16_i32_53 = arith.constant 16 : i32
      %113 = arith.muli %112, %c16_i32_53 : i32
      %114 = tpu.assume_multiple %113, 16 : i32
      %115 = arith.index_cast %114 : i32 to index
      %c0_54 = arith.constant 0 : index
      %116 = vector.load %arg23[%115, %c0_54] : memref<16x32xf32, #tpu.memory_space<vmem>>, vector<16x32xf32>
      %117 = arith.index_cast %114 : i32 to index
      %c0_55 = arith.constant 0 : index
      %118 = vector.load %arg24[%117, %c0_55] : memref<16x96xbf16, #tpu.memory_space<vmem>>, vector<16x96xbf16>
      %119 = vector.extract_strided_slice %118 {offsets = [0, 0], sizes = [16, 8], strides = [1, 1]} : vector<16x96xbf16> to vector<16x8xbf16>
      %cst_56 = arith.constant -1.000000e+30 : f32
      %120 = vector.broadcast %cst_56 : f32 to vector<16x1xf32>
      %cst_57 = arith.constant 0.000000e+00 : f32
      %121 = vector.broadcast %cst_57 : f32 to vector<16x1xf32>
      %cst_58 = arith.constant 0.000000e+00 : f32
      %122 = vector.broadcast %cst_58 : f32 to vector<16x8xf32>
      %c0_i32_59 = arith.constant 0 : i32
      %c16_i32_60 = arith.constant 16 : i32
      %123 = arith.muli %c0_i32_59, %c16_i32_60 : i32
      %124 = tpu.assume_multiple %123, 16 : i32
      %125 = arith.index_cast %124 : i32 to index
      %c32 = arith.constant 32 : index
      %126 = vector.load %arg24[%125, %c32] : memref<16x96xbf16, #tpu.memory_space<vmem>>, vector<16x8xbf16>
      %127 = arith.index_cast %124 : i32 to index
      %c64 = arith.constant 64 : index
      %128 = vector.load %arg24[%127, %c64] : memref<16x96xbf16, #tpu.memory_space<vmem>>, vector<16x8xbf16>
      %cst_61 = arith.constant dense<0.000000e+00> : vector<16x16xf32>
      %129 = tpu.matmul %119, %126, %cst_61 {dimension_numbers = #tpu.dot_dimension_numbers<[1], [1], [0], [0], [0, 0, 1, 0], [], []>} : vector<16x8xbf16>, vector<16x8xbf16>, vector<16x16xf32> -> vector<16x16xf32>
      %cst_62 = arith.constant 0.353553385 : f32
      %130 = vector.broadcast %cst_62 : f32 to vector<16x16xf32>
      %131 = arith.mulf %129, %130 : vector<16x16xf32>
      %132 = tpu.iota {dimensions = array<i32: 1>} : vector<1x16xi32>
      %133 = vector.broadcast %124 : i32 to vector<1x16xi32>
      %134 = arith.addi %132, %133 : vector<1x16xi32>
      %c0_i32_63 = arith.constant 0 : i32
      %135 = vector.broadcast %c0_i32_63 : i32 to vector<1x16xi32>
      %136 = arith.cmpi eq, %134, %135 : vector<1x16xi32>
      %c8_i32_64 = arith.constant 8 : i32
      %137 = vector.broadcast %c8_i32_64 : i32 to vector<1x16xi32>
      %138 = arith.cmpi sge, %134, %137 : vector<1x16xi32>
      %c15_i32 = arith.constant 15 : i32
      %139 = vector.broadcast %c15_i32 : i32 to vector<1x16xi32>
      %140 = arith.cmpi slt, %134, %139 : vector<1x16xi32>
      %141 = arith.andi %138, %140 : vector<1x16xi1>
      %142 = arith.ori %136, %141 : vector<1x16xi1>
      %cst_65 = arith.constant 0.000000e+00 : f32
      %cst_66 = arith.constant -1.000000e+30 : f32
      %143 = vector.broadcast %cst_65 : f32 to vector<1x16xf32>
      %144 = vector.broadcast %cst_66 : f32 to vector<1x16xf32>
      %145 = arith.select %142, %143, %144 : vector<1x16xi1>, vector<1x16xf32>
      %146 = vector.broadcast %145 : vector<1x16xf32> to vector<16x16xf32>
      %147 = arith.addf %131, %146 : vector<16x16xf32>
      %cst_67 = arith.constant dense<0xFF800000> : vector<16xf32>
      %148 = vector.multi_reduction <maximumf>, %147, %cst_67 [1] : vector<16x16xf32> to vector<16xf32>
      %149 = vector.shape_cast %148 : vector<16xf32> to vector<16x1xf32>
      %150 = arith.maximumf %120, %149 : vector<16x1xf32>
      %151 = arith.subf %120, %150 : vector<16x1xf32>
      %152 = math.exp %151 : vector<16x1xf32>
      %153 = vector.broadcast %150 : vector<16x1xf32> to vector<16x16xf32>
      %154 = arith.subf %147, %153 : vector<16x16xf32>
      %155 = math.exp %154 : vector<16x16xf32>
      %156 = arith.mulf %152, %121 : vector<16x1xf32>
      %cst_68 = arith.constant dense<0.000000e+00> : vector<16xf32>
      %157 = vector.multi_reduction <add>, %155, %cst_68 [1] : vector<16x16xf32> to vector<16xf32>
      %158 = vector.shape_cast %157 : vector<16xf32> to vector<16x1xf32>
      %159 = arith.addf %156, %158 : vector<16x1xf32>
      %160 = vector.broadcast %152 : vector<16x1xf32> to vector<16x8xf32>
      %161 = arith.mulf %160, %122 : vector<16x8xf32>
      %162 = arith.truncf %155 : vector<16x16xf32> to vector<16x16xbf16>
      %cst_69 = arith.constant dense<0.000000e+00> : vector<16x8xf32>
      %163 = tpu.matmul %162, %128, %cst_69 {dimension_numbers = #tpu.dot_dimension_numbers<[1], [0], [0], [1], [0, 0, 1, 1], [], []>} : vector<16x16xbf16>, vector<16x8xbf16>, vector<16x8xf32> -> vector<16x8xf32>
      %164 = arith.addf %161, %163 : vector<16x8xf32>
      %c1_i32_70 = arith.constant 1 : i32
      %165 = tpu.reciprocal %159 {approx = true} : vector<16x1xf32> -> vector<16x1xf32>
      %166 = vector.broadcast %165 : vector<16x1xf32> to vector<16x8xf32>
      %167 = arith.mulf %164, %166 : vector<16x8xf32>
      %168 = arith.truncf %167 : vector<16x8xf32> to vector<16x8xbf16>
      %169 = vector.extract_strided_slice %118 {offsets = [0, 8], sizes = [16, 8], strides = [1, 1]} : vector<16x96xbf16> to vector<16x8xbf16>
      %cst_71 = arith.constant -1.000000e+30 : f32
      %170 = vector.broadcast %cst_71 : f32 to vector<16x1xf32>
      %cst_72 = arith.constant 0.000000e+00 : f32
      %171 = vector.broadcast %cst_72 : f32 to vector<16x1xf32>
      %cst_73 = arith.constant 0.000000e+00 : f32
      %172 = vector.broadcast %cst_73 : f32 to vector<16x8xf32>
      %c0_i32_74 = arith.constant 0 : i32
      %c16_i32_75 = arith.constant 16 : i32
      %173 = arith.muli %c0_i32_74, %c16_i32_75 : i32
      %174 = tpu.assume_multiple %173, 16 : i32
      %175 = arith.index_cast %174 : i32 to index
      %c40 = arith.constant 40 : index
      %176 = vector.load %arg24[%175, %c40] : memref<16x96xbf16, #tpu.memory_space<vmem>>, vector<16x8xbf16>
      %177 = arith.index_cast %174 : i32 to index
      %c72 = arith.constant 72 : index
      %178 = vector.load %arg24[%177, %c72] : memref<16x96xbf16, #tpu.memory_space<vmem>>, vector<16x8xbf16>
      %cst_76 = arith.constant dense<0.000000e+00> : vector<16x16xf32>
      %179 = tpu.matmul %169, %176, %cst_76 {dimension_numbers = #tpu.dot_dimension_numbers<[1], [1], [0], [0], [0, 0, 1, 0], [], []>} : vector<16x8xbf16>, vector<16x8xbf16>, vector<16x16xf32> -> vector<16x16xf32>
      %cst_77 = arith.constant 0.353553385 : f32
      %180 = vector.broadcast %cst_77 : f32 to vector<16x16xf32>
      %181 = arith.mulf %179, %180 : vector<16x16xf32>
      %182 = tpu.iota {dimensions = array<i32: 1>} : vector<1x16xi32>
      %183 = vector.broadcast %174 : i32 to vector<1x16xi32>
      %184 = arith.addi %182, %183 : vector<1x16xi32>
      %c0_i32_78 = arith.constant 0 : i32
      %185 = vector.broadcast %c0_i32_78 : i32 to vector<1x16xi32>
      %186 = arith.cmpi eq, %184, %185 : vector<1x16xi32>
      %c8_i32_79 = arith.constant 8 : i32
      %187 = vector.broadcast %c8_i32_79 : i32 to vector<1x16xi32>
      %188 = arith.cmpi sge, %184, %187 : vector<1x16xi32>
      %c15_i32_80 = arith.constant 15 : i32
      %189 = vector.broadcast %c15_i32_80 : i32 to vector<1x16xi32>
      %190 = arith.cmpi slt, %184, %189 : vector<1x16xi32>
      %191 = arith.andi %188, %190 : vector<1x16xi1>
      %192 = arith.ori %186, %191 : vector<1x16xi1>
      %cst_81 = arith.constant 0.000000e+00 : f32
      %cst_82 = arith.constant -1.000000e+30 : f32
      %193 = vector.broadcast %cst_81 : f32 to vector<1x16xf32>
      %194 = vector.broadcast %cst_82 : f32 to vector<1x16xf32>
      %195 = arith.select %192, %193, %194 : vector<1x16xi1>, vector<1x16xf32>
      %196 = vector.broadcast %195 : vector<1x16xf32> to vector<16x16xf32>
      %197 = arith.addf %181, %196 : vector<16x16xf32>
      %cst_83 = arith.constant dense<0xFF800000> : vector<16xf32>
      %198 = vector.multi_reduction <maximumf>, %197, %cst_83 [1] : vector<16x16xf32> to vector<16xf32>
      %199 = vector.shape_cast %198 : vector<16xf32> to vector<16x1xf32>
      %200 = arith.maximumf %170, %199 : vector<16x1xf32>
      %201 = arith.subf %170, %200 : vector<16x1xf32>
      %202 = math.exp %201 : vector<16x1xf32>
      %203 = vector.broadcast %200 : vector<16x1xf32> to vector<16x16xf32>
      %204 = arith.subf %197, %203 : vector<16x16xf32>
      %205 = math.exp %204 : vector<16x16xf32>
      %206 = arith.mulf %202, %171 : vector<16x1xf32>
      %cst_84 = arith.constant dense<0.000000e+00> : vector<16xf32>
      %207 = vector.multi_reduction <add>, %205, %cst_84 [1] : vector<16x16xf32> to vector<16xf32>
      %208 = vector.shape_cast %207 : vector<16xf32> to vector<16x1xf32>
      %209 = arith.addf %206, %208 : vector<16x1xf32>
      %210 = vector.broadcast %202 : vector<16x1xf32> to vector<16x8xf32>
      %211 = arith.mulf %210, %172 : vector<16x8xf32>
      %212 = arith.truncf %205 : vector<16x16xf32> to vector<16x16xbf16>
      %cst_85 = arith.constant dense<0.000000e+00> : vector<16x8xf32>
      %213 = tpu.matmul %212, %178, %cst_85 {dimension_numbers = #tpu.dot_dimension_numbers<[1], [0], [0], [1], [0, 0, 1, 1], [], []>} : vector<16x16xbf16>, vector<16x8xbf16>, vector<16x8xf32> -> vector<16x8xf32>
      %214 = arith.addf %211, %213 : vector<16x8xf32>
      %c1_i32_86 = arith.constant 1 : i32
      %215 = tpu.reciprocal %209 {approx = true} : vector<16x1xf32> -> vector<16x1xf32>
      %216 = vector.broadcast %215 : vector<16x1xf32> to vector<16x8xf32>
      %217 = arith.mulf %214, %216 : vector<16x8xf32>
      %218 = arith.truncf %217 : vector<16x8xf32> to vector<16x8xbf16>
      %219 = vector.extract_strided_slice %118 {offsets = [0, 16], sizes = [16, 8], strides = [1, 1]} : vector<16x96xbf16> to vector<16x8xbf16>
      %cst_87 = arith.constant -1.000000e+30 : f32
      %220 = vector.broadcast %cst_87 : f32 to vector<16x1xf32>
      %cst_88 = arith.constant 0.000000e+00 : f32
      %221 = vector.broadcast %cst_88 : f32 to vector<16x1xf32>
      %cst_89 = arith.constant 0.000000e+00 : f32
      %222 = vector.broadcast %cst_89 : f32 to vector<16x8xf32>
      %c0_i32_90 = arith.constant 0 : i32
      %c16_i32_91 = arith.constant 16 : i32
      %223 = arith.muli %c0_i32_90, %c16_i32_91 : i32
      %224 = tpu.assume_multiple %223, 16 : i32
      %225 = arith.index_cast %224 : i32 to index
      %c48 = arith.constant 48 : index
      %226 = vector.load %arg24[%225, %c48] : memref<16x96xbf16, #tpu.memory_space<vmem>>, vector<16x8xbf16>
      %227 = arith.index_cast %224 : i32 to index
      %c80 = arith.constant 80 : index
      %228 = vector.load %arg24[%227, %c80] : memref<16x96xbf16, #tpu.memory_space<vmem>>, vector<16x8xbf16>
      %cst_92 = arith.constant dense<0.000000e+00> : vector<16x16xf32>
      %229 = tpu.matmul %219, %226, %cst_92 {dimension_numbers = #tpu.dot_dimension_numbers<[1], [1], [0], [0], [0, 0, 1, 0], [], []>} : vector<16x8xbf16>, vector<16x8xbf16>, vector<16x16xf32> -> vector<16x16xf32>
      %cst_93 = arith.constant 0.353553385 : f32
      %230 = vector.broadcast %cst_93 : f32 to vector<16x16xf32>
      %231 = arith.mulf %229, %230 : vector<16x16xf32>
      %232 = tpu.iota {dimensions = array<i32: 1>} : vector<1x16xi32>
      %233 = vector.broadcast %224 : i32 to vector<1x16xi32>
      %234 = arith.addi %232, %233 : vector<1x16xi32>
      %c0_i32_94 = arith.constant 0 : i32
      %235 = vector.broadcast %c0_i32_94 : i32 to vector<1x16xi32>
      %236 = arith.cmpi eq, %234, %235 : vector<1x16xi32>
      %c8_i32_95 = arith.constant 8 : i32
      %237 = vector.broadcast %c8_i32_95 : i32 to vector<1x16xi32>
      %238 = arith.cmpi sge, %234, %237 : vector<1x16xi32>
      %c15_i32_96 = arith.constant 15 : i32
      %239 = vector.broadcast %c15_i32_96 : i32 to vector<1x16xi32>
      %240 = arith.cmpi slt, %234, %239 : vector<1x16xi32>
      %241 = arith.andi %238, %240 : vector<1x16xi1>
      %242 = arith.ori %236, %241 : vector<1x16xi1>
      %cst_97 = arith.constant 0.000000e+00 : f32
      %cst_98 = arith.constant -1.000000e+30 : f32
      %243 = vector.broadcast %cst_97 : f32 to vector<1x16xf32>
      %244 = vector.broadcast %cst_98 : f32 to vector<1x16xf32>
      %245 = arith.select %242, %243, %244 : vector<1x16xi1>, vector<1x16xf32>
      %246 = vector.broadcast %245 : vector<1x16xf32> to vector<16x16xf32>
      %247 = arith.addf %231, %246 : vector<16x16xf32>
      %cst_99 = arith.constant dense<0xFF800000> : vector<16xf32>
      %248 = vector.multi_reduction <maximumf>, %247, %cst_99 [1] : vector<16x16xf32> to vector<16xf32>
      %249 = vector.shape_cast %248 : vector<16xf32> to vector<16x1xf32>
      %250 = arith.maximumf %220, %249 : vector<16x1xf32>
      %251 = arith.subf %220, %250 : vector<16x1xf32>
      %252 = math.exp %251 : vector<16x1xf32>
      %253 = vector.broadcast %250 : vector<16x1xf32> to vector<16x16xf32>
      %254 = arith.subf %247, %253 : vector<16x16xf32>
      %255 = math.exp %254 : vector<16x16xf32>
      %256 = arith.mulf %252, %221 : vector<16x1xf32>
      %cst_100 = arith.constant dense<0.000000e+00> : vector<16xf32>
      %257 = vector.multi_reduction <add>, %255, %cst_100 [1] : vector<16x16xf32> to vector<16xf32>
      %258 = vector.shape_cast %257 : vector<16xf32> to vector<16x1xf32>
      %259 = arith.addf %256, %258 : vector<16x1xf32>
      %260 = vector.broadcast %252 : vector<16x1xf32> to vector<16x8xf32>
      %261 = arith.mulf %260, %222 : vector<16x8xf32>
      %262 = arith.truncf %255 : vector<16x16xf32> to vector<16x16xbf16>
      %cst_101 = arith.constant dense<0.000000e+00> : vector<16x8xf32>
      %263 = tpu.matmul %262, %228, %cst_101 {dimension_numbers = #tpu.dot_dimension_numbers<[1], [0], [0], [1], [0, 0, 1, 1], [], []>} : vector<16x16xbf16>, vector<16x8xbf16>, vector<16x8xf32> -> vector<16x8xf32>
      %264 = arith.addf %261, %263 : vector<16x8xf32>
      %c1_i32_102 = arith.constant 1 : i32
      %265 = tpu.reciprocal %259 {approx = true} : vector<16x1xf32> -> vector<16x1xf32>
      %266 = vector.broadcast %265 : vector<16x1xf32> to vector<16x8xf32>
      %267 = arith.mulf %264, %266 : vector<16x8xf32>
      %268 = arith.truncf %267 : vector<16x8xf32> to vector<16x8xbf16>
      %269 = vector.extract_strided_slice %118 {offsets = [0, 24], sizes = [16, 8], strides = [1, 1]} : vector<16x96xbf16> to vector<16x8xbf16>
      %cst_103 = arith.constant -1.000000e+30 : f32
      %270 = vector.broadcast %cst_103 : f32 to vector<16x1xf32>
      %cst_104 = arith.constant 0.000000e+00 : f32
      %271 = vector.broadcast %cst_104 : f32 to vector<16x1xf32>
      %cst_105 = arith.constant 0.000000e+00 : f32
      %272 = vector.broadcast %cst_105 : f32 to vector<16x8xf32>
      %c0_i32_106 = arith.constant 0 : i32
      %c16_i32_107 = arith.constant 16 : i32
      %273 = arith.muli %c0_i32_106, %c16_i32_107 : i32
      %274 = tpu.assume_multiple %273, 16 : i32
      %275 = arith.index_cast %274 : i32 to index
      %c56 = arith.constant 56 : index
      %276 = vector.load %arg24[%275, %c56] : memref<16x96xbf16, #tpu.memory_space<vmem>>, vector<16x8xbf16>
      %277 = arith.index_cast %274 : i32 to index
      %c88 = arith.constant 88 : index
      %278 = vector.load %arg24[%277, %c88] : memref<16x96xbf16, #tpu.memory_space<vmem>>, vector<16x8xbf16>
      %cst_108 = arith.constant dense<0.000000e+00> : vector<16x16xf32>
      %279 = tpu.matmul %269, %276, %cst_108 {dimension_numbers = #tpu.dot_dimension_numbers<[1], [1], [0], [0], [0, 0, 1, 0], [], []>} : vector<16x8xbf16>, vector<16x8xbf16>, vector<16x16xf32> -> vector<16x16xf32>
      %cst_109 = arith.constant 0.353553385 : f32
      %280 = vector.broadcast %cst_109 : f32 to vector<16x16xf32>
      %281 = arith.mulf %279, %280 : vector<16x16xf32>
      %282 = tpu.iota {dimensions = array<i32: 1>} : vector<1x16xi32>
      %283 = vector.broadcast %274 : i32 to vector<1x16xi32>
      %284 = arith.addi %282, %283 : vector<1x16xi32>
      %c0_i32_110 = arith.constant 0 : i32
      %285 = vector.broadcast %c0_i32_110 : i32 to vector<1x16xi32>
      %286 = arith.cmpi eq, %284, %285 : vector<1x16xi32>
      %c8_i32_111 = arith.constant 8 : i32
      %287 = vector.broadcast %c8_i32_111 : i32 to vector<1x16xi32>
      %288 = arith.cmpi sge, %284, %287 : vector<1x16xi32>
      %c15_i32_112 = arith.constant 15 : i32
      %289 = vector.broadcast %c15_i32_112 : i32 to vector<1x16xi32>
      %290 = arith.cmpi slt, %284, %289 : vector<1x16xi32>
      %291 = arith.andi %288, %290 : vector<1x16xi1>
      %292 = arith.ori %286, %291 : vector<1x16xi1>
      %cst_113 = arith.constant 0.000000e+00 : f32
      %cst_114 = arith.constant -1.000000e+30 : f32
      %293 = vector.broadcast %cst_113 : f32 to vector<1x16xf32>
      %294 = vector.broadcast %cst_114 : f32 to vector<1x16xf32>
      %295 = arith.select %292, %293, %294 : vector<1x16xi1>, vector<1x16xf32>
      %296 = vector.broadcast %295 : vector<1x16xf32> to vector<16x16xf32>
      %297 = arith.addf %281, %296 : vector<16x16xf32>
      %cst_115 = arith.constant dense<0xFF800000> : vector<16xf32>
      %298 = vector.multi_reduction <maximumf>, %297, %cst_115 [1] : vector<16x16xf32> to vector<16xf32>
      %299 = vector.shape_cast %298 : vector<16xf32> to vector<16x1xf32>
      %300 = arith.maximumf %270, %299 : vector<16x1xf32>
      %301 = arith.subf %270, %300 : vector<16x1xf32>
      %302 = math.exp %301 : vector<16x1xf32>
      %303 = vector.broadcast %300 : vector<16x1xf32> to vector<16x16xf32>
      %304 = arith.subf %297, %303 : vector<16x16xf32>
      %305 = math.exp %304 : vector<16x16xf32>
      %306 = arith.mulf %302, %271 : vector<16x1xf32>
      %cst_116 = arith.constant dense<0.000000e+00> : vector<16xf32>
      %307 = vector.multi_reduction <add>, %305, %cst_116 [1] : vector<16x16xf32> to vector<16xf32>
      %308 = vector.shape_cast %307 : vector<16xf32> to vector<16x1xf32>
      %309 = arith.addf %306, %308 : vector<16x1xf32>
      %310 = vector.broadcast %302 : vector<16x1xf32> to vector<16x8xf32>
      %311 = arith.mulf %310, %272 : vector<16x8xf32>
      %312 = arith.truncf %305 : vector<16x16xf32> to vector<16x16xbf16>
      %cst_117 = arith.constant dense<0.000000e+00> : vector<16x8xf32>
      %313 = tpu.matmul %312, %278, %cst_117 {dimension_numbers = #tpu.dot_dimension_numbers<[1], [0], [0], [1], [0, 0, 1, 1], [], []>} : vector<16x16xbf16>, vector<16x8xbf16>, vector<16x8xf32> -> vector<16x8xf32>
      %314 = arith.addf %311, %313 : vector<16x8xf32>
      %c1_i32_118 = arith.constant 1 : i32
      %315 = tpu.reciprocal %309 {approx = true} : vector<16x1xf32> -> vector<16x1xf32>
      %316 = vector.broadcast %315 : vector<16x1xf32> to vector<16x8xf32>
      %317 = arith.mulf %314, %316 : vector<16x8xf32>
      %318 = arith.truncf %317 : vector<16x8xf32> to vector<16x8xbf16>
      %319 = tpu.concatenate %168, %218, %268, %318 in 1 : vector<16x8xbf16>, vector<16x8xbf16>, vector<16x8xbf16>, vector<16x8xbf16> -> vector<16x32xbf16>
      %c0_119 = arith.constant 0 : index
      %c0_120 = arith.constant 0 : index
      %c0_121 = arith.constant 0 : index
      %320 = vector.load %arg10[%c0_119, %c0_120, %c0_121] : memref<2x32x32xbf16, #tpu.memory_space<vmem>>, vector<1x32x32xbf16>
      %321 = vector.shape_cast %320 : vector<1x32x32xbf16> to vector<32x32xbf16>
      %cst_122 = arith.constant dense<0.000000e+00> : vector<16x32xf32>
      %322 = tpu.matmul %319, %321, %cst_122 {dimension_numbers = #tpu.dot_dimension_numbers<[1], [0], [0], [1], [0, 0, 1, 1], [], []>} : vector<16x32xbf16>, vector<32x32xbf16>, vector<16x32xf32> -> vector<16x32xf32>
      %c0_123 = arith.constant 0 : index
      %c0_124 = arith.constant 0 : index
      %c0_125 = arith.constant 0 : index
      %323 = vector.load %arg11[%c0_123, %c0_124, %c0_125] : memref<2x1x32xf32, #tpu.memory_space<vmem>>, vector<1x1x32xf32>
      %324 = vector.shape_cast %323 : vector<1x1x32xf32> to vector<1x32xf32>
      %325 = vector.broadcast %324 : vector<1x32xf32> to vector<16x32xf32>
      %326 = arith.addf %322, %325 : vector<16x32xf32>
      %327 = arith.addf %116, %326 : vector<16x32xf32>
      %c0_126 = arith.constant 0 : index
      %c0_127 = arith.constant 0 : index
      %c0_128 = arith.constant 0 : index
      %328 = vector.load %arg12[%c0_126, %c0_127, %c0_128] : memref<2x1x32xf32, #tpu.memory_space<vmem>>, vector<1x1x32xf32>
      %329 = vector.shape_cast %328 : vector<1x1x32xf32> to vector<1x32xf32>
      %c0_129 = arith.constant 0 : index
      %c0_130 = arith.constant 0 : index
      %c0_131 = arith.constant 0 : index
      %330 = vector.load %arg13[%c0_129, %c0_130, %c0_131] : memref<2x1x32xf32, #tpu.memory_space<vmem>>, vector<1x1x32xf32>
      %331 = vector.shape_cast %330 : vector<1x1x32xf32> to vector<1x32xf32>
      %cst_132 = arith.constant dense<0.000000e+00> : vector<16xf32>
      %332 = vector.multi_reduction <add>, %327, %cst_132 [1] : vector<16x32xf32> to vector<16xf32>
      %333 = vector.shape_cast %332 : vector<16xf32> to vector<16x1xf32>
      %cst_133 = arith.constant 3.200000e+01 : f32
      %334 = vector.broadcast %cst_133 : f32 to vector<16x1xf32>
      %335 = arith.divf %333, %334 : vector<16x1xf32>
      %336 = vector.broadcast %335 : vector<16x1xf32> to vector<16x32xf32>
      %337 = arith.subf %327, %336 : vector<16x32xf32>
      %338 = arith.mulf %337, %337 : vector<16x32xf32>
      %cst_134 = arith.constant dense<0.000000e+00> : vector<16xf32>
      %339 = vector.multi_reduction <add>, %338, %cst_134 [1] : vector<16x32xf32> to vector<16xf32>
      %340 = vector.shape_cast %339 : vector<16xf32> to vector<16x1xf32>
      %cst_135 = arith.constant 3.200000e+01 : f32
      %341 = vector.broadcast %cst_135 : f32 to vector<16x1xf32>
      %342 = arith.divf %340, %341 : vector<16x1xf32>
      %343 = vector.broadcast %335 : vector<16x1xf32> to vector<16x32xf32>
      %344 = arith.subf %327, %343 : vector<16x32xf32>
      %cst_136 = arith.constant 9.99999974E-6 : f32
      %345 = vector.broadcast %cst_136 : f32 to vector<16x1xf32>
      %346 = arith.addf %342, %345 : vector<16x1xf32>
      %347 = math.rsqrt %346 : vector<16x1xf32>
      %348 = vector.broadcast %347 : vector<16x1xf32> to vector<16x32xf32>
      %349 = arith.mulf %344, %348 : vector<16x32xf32>
      %350 = vector.broadcast %329 : vector<1x32xf32> to vector<16x32xf32>
      %351 = arith.mulf %349, %350 : vector<16x32xf32>
      %352 = vector.broadcast %331 : vector<1x32xf32> to vector<16x32xf32>
      %353 = arith.addf %351, %352 : vector<16x32xf32>
      %354 = arith.truncf %353 : vector<16x32xf32> to vector<16x32xbf16>
      %c0_137 = arith.constant 0 : index
      %c0_138 = arith.constant 0 : index
      %c0_139 = arith.constant 0 : index
      %355 = vector.load %arg14[%c0_137, %c0_138, %c0_139] : memref<2x32x64xbf16, #tpu.memory_space<vmem>>, vector<1x32x64xbf16>
      %356 = vector.shape_cast %355 : vector<1x32x64xbf16> to vector<32x64xbf16>
      %cst_140 = arith.constant dense<0.000000e+00> : vector<16x64xf32>
      %357 = tpu.matmul %354, %356, %cst_140 {dimension_numbers = #tpu.dot_dimension_numbers<[1], [0], [0], [1], [0, 0, 1, 1], [], []>} : vector<16x32xbf16>, vector<32x64xbf16>, vector<16x64xf32> -> vector<16x64xf32>
      %c0_141 = arith.constant 0 : index
      %c0_142 = arith.constant 0 : index
      %c0_143 = arith.constant 0 : index
      %358 = vector.load %arg15[%c0_141, %c0_142, %c0_143] : memref<2x1x64xf32, #tpu.memory_space<vmem>>, vector<1x1x64xf32>
      %359 = vector.shape_cast %358 : vector<1x1x64xf32> to vector<1x64xf32>
      %360 = vector.broadcast %359 : vector<1x64xf32> to vector<16x64xf32>
      %361 = arith.addf %357, %360 : vector<16x64xf32>
      %cst_144 = arith.constant 5.000000e-01 : f32
      %362 = vector.broadcast %cst_144 : f32 to vector<16x64xf32>
      %363 = arith.mulf %362, %361 : vector<16x64xf32>
      %cst_145 = arith.constant 0.707106769 : f32
      %364 = vector.broadcast %cst_145 : f32 to vector<16x64xf32>
      %365 = arith.mulf %361, %364 : vector<16x64xf32>
      %366 = math.absf %365 : vector<16x64xf32>
      %cst_146 = arith.constant 0.327591091 : f32
      %367 = vector.broadcast %cst_146 : f32 to vector<16x64xf32>
      %368 = arith.mulf %367, %366 : vector<16x64xf32>
      %cst_147 = arith.constant 1.000000e+00 : f32
      %369 = vector.broadcast %cst_147 : f32 to vector<16x64xf32>
      %370 = arith.addf %369, %368 : vector<16x64xf32>
      %371 = tpu.reciprocal %370 {approx = true} : vector<16x64xf32> -> vector<16x64xf32>
      %cst_148 = arith.constant 1.06140542 : f32
      %372 = vector.broadcast %cst_148 : f32 to vector<16x64xf32>
      %373 = arith.mulf %372, %371 : vector<16x64xf32>
      %cst_149 = arith.constant -1.45315206 : f32
      %374 = vector.broadcast %cst_149 : f32 to vector<16x64xf32>
      %375 = arith.addf %373, %374 : vector<16x64xf32>
      %376 = arith.mulf %375, %371 : vector<16x64xf32>
      %cst_150 = arith.constant 1.42141378 : f32
      %377 = vector.broadcast %cst_150 : f32 to vector<16x64xf32>
      %378 = arith.addf %376, %377 : vector<16x64xf32>
      %379 = arith.mulf %378, %371 : vector<16x64xf32>
      %cst_151 = arith.constant -0.284496725 : f32
      %380 = vector.broadcast %cst_151 : f32 to vector<16x64xf32>
      %381 = arith.addf %379, %380 : vector<16x64xf32>
      %382 = arith.mulf %381, %371 : vector<16x64xf32>
      %cst_152 = arith.constant 0.254829586 : f32
      %383 = vector.broadcast %cst_152 : f32 to vector<16x64xf32>
      %384 = arith.addf %382, %383 : vector<16x64xf32>
      %385 = arith.mulf %384, %371 : vector<16x64xf32>
      %cst_153 = arith.constant 0.000000e+00 : f32
      %386 = vector.broadcast %cst_153 : f32 to vector<16x64xf32>
      %387 = arith.subf %386, %366 : vector<16x64xf32>
      %388 = arith.mulf %387, %366 : vector<16x64xf32>
      %389 = math.exp %388 : vector<16x64xf32>
      %390 = arith.mulf %385, %389 : vector<16x64xf32>
      %cst_154 = arith.constant 1.000000e+00 : f32
      %391 = vector.broadcast %cst_154 : f32 to vector<16x64xf32>
      %392 = arith.subf %391, %390 : vector<16x64xf32>
      %cst_155 = arith.constant 0.000000e+00 : f32
      %393 = vector.broadcast %cst_155 : f32 to vector<16x64xf32>
      %394 = arith.cmpf oge, %365, %393 : vector<16x64xf32>
      %cst_156 = arith.constant 0.000000e+00 : f32
      %395 = vector.broadcast %cst_156 : f32 to vector<16x64xf32>
      %396 = arith.subf %395, %392 : vector<16x64xf32>
      %397 = arith.select %394, %392, %396 : vector<16x64xi1>, vector<16x64xf32>
      %cst_157 = arith.constant 1.000000e+00 : f32
      %398 = vector.broadcast %cst_157 : f32 to vector<16x64xf32>
      %399 = arith.addf %398, %397 : vector<16x64xf32>
      %400 = arith.mulf %363, %399 : vector<16x64xf32>
      %401 = arith.truncf %400 : vector<16x64xf32> to vector<16x64xbf16>
      %c0_158 = arith.constant 0 : index
      %c0_159 = arith.constant 0 : index
      %c0_160 = arith.constant 0 : index
      %402 = vector.load %arg16[%c0_158, %c0_159, %c0_160] : memref<2x64x32xbf16, #tpu.memory_space<vmem>>, vector<1x64x32xbf16>
      %403 = vector.shape_cast %402 : vector<1x64x32xbf16> to vector<64x32xbf16>
      %cst_161 = arith.constant dense<0.000000e+00> : vector<16x32xf32>
      %404 = tpu.matmul %401, %403, %cst_161 {dimension_numbers = #tpu.dot_dimension_numbers<[1], [0], [0], [1], [0, 0, 1, 1], [], []>} : vector<16x64xbf16>, vector<64x32xbf16>, vector<16x32xf32> -> vector<16x32xf32>
      %c0_162 = arith.constant 0 : index
      %c0_163 = arith.constant 0 : index
      %c0_164 = arith.constant 0 : index
      %405 = vector.load %arg17[%c0_162, %c0_163, %c0_164] : memref<2x1x32xf32, #tpu.memory_space<vmem>>, vector<1x1x32xf32>
      %406 = vector.shape_cast %405 : vector<1x1x32xf32> to vector<1x32xf32>
      %407 = vector.broadcast %406 : vector<1x32xf32> to vector<16x32xf32>
      %408 = arith.addf %404, %407 : vector<16x32xf32>
      %409 = arith.addf %327, %408 : vector<16x32xf32>
      %410 = arith.index_cast %114 : i32 to index
      %c0_165 = arith.constant 0 : index
      %411 = vector.load %arg23[%410, %c0_165] : memref<16x32xf32, #tpu.memory_space<vmem>>, vector<16x32xf32>
      tpu.vector_store %arg23[%410, %c0_165], %409 {strides = array<i32>} : memref<16x32xf32, #tpu.memory_space<vmem>>, vector<16x32xf32>,
      %c1_i32_166 = arith.constant 1 : i32
      %c0_i32_167 = arith.constant 0 : i32
      %c1_i32_168 = arith.constant 1 : i32
      %412 = arith.muli %c0_i32_167, %c1_i32_168 : i32
      %c0_i32_169 = arith.constant 0 : i32
      %413 = arith.addi %c0_i32_169, %412 : i32
      %c16_i32_170 = arith.constant 16 : i32
      %414 = arith.muli %413, %c16_i32_170 : i32
      %415 = tpu.assume_multiple %414, 16 : i32
      %416 = arith.index_cast %415 : i32 to index
      %c0_171 = arith.constant 0 : index
      %417 = vector.load %arg23[%416, %c0_171] : memref<16x32xf32, #tpu.memory_space<vmem>>, vector<16x32xf32>
      %c1 = arith.constant 1 : index
      %c0_172 = arith.constant 0 : index
      %c0_173 = arith.constant 0 : index
      %418 = vector.load %arg6[%c1, %c0_172, %c0_173] : memref<2x1x32xf32, #tpu.memory_space<vmem>>, vector<1x1x32xf32>
      %419 = vector.shape_cast %418 : vector<1x1x32xf32> to vector<1x32xf32>
      %c1_174 = arith.constant 1 : index
      %c0_175 = arith.constant 0 : index
      %c0_176 = arith.constant 0 : index
      %420 = vector.load %arg7[%c1_174, %c0_175, %c0_176] : memref<2x1x32xf32, #tpu.memory_space<vmem>>, vector<1x1x32xf32>
      %421 = vector.shape_cast %420 : vector<1x1x32xf32> to vector<1x32xf32>
      %cst_177 = arith.constant dense<0.000000e+00> : vector<16xf32>
      %422 = vector.multi_reduction <add>, %417, %cst_177 [1] : vector<16x32xf32> to vector<16xf32>
      %423 = vector.shape_cast %422 : vector<16xf32> to vector<16x1xf32>
      %cst_178 = arith.constant 3.200000e+01 : f32
      %424 = vector.broadcast %cst_178 : f32 to vector<16x1xf32>
      %425 = arith.divf %423, %424 : vector<16x1xf32>
      %426 = vector.broadcast %425 : vector<16x1xf32> to vector<16x32xf32>
      %427 = arith.subf %417, %426 : vector<16x32xf32>
      %428 = arith.mulf %427, %427 : vector<16x32xf32>
      %cst_179 = arith.constant dense<0.000000e+00> : vector<16xf32>
      %429 = vector.multi_reduction <add>, %428, %cst_179 [1] : vector<16x32xf32> to vector<16xf32>
      %430 = vector.shape_cast %429 : vector<16xf32> to vector<16x1xf32>
      %cst_180 = arith.constant 3.200000e+01 : f32
      %431 = vector.broadcast %cst_180 : f32 to vector<16x1xf32>
      %432 = arith.divf %430, %431 : vector<16x1xf32>
      %433 = vector.broadcast %425 : vector<16x1xf32> to vector<16x32xf32>
      %434 = arith.subf %417, %433 : vector<16x32xf32>
      %cst_181 = arith.constant 9.99999974E-6 : f32
      %435 = vector.broadcast %cst_181 : f32 to vector<16x1xf32>
      %436 = arith.addf %432, %435 : vector<16x1xf32>
      %437 = math.rsqrt %436 : vector<16x1xf32>
      %438 = vector.broadcast %437 : vector<16x1xf32> to vector<16x32xf32>
      %439 = arith.mulf %434, %438 : vector<16x32xf32>
      %440 = vector.broadcast %419 : vector<1x32xf32> to vector<16x32xf32>
      %441 = arith.mulf %439, %440 : vector<16x32xf32>
      %442 = vector.broadcast %421 : vector<1x32xf32> to vector<16x32xf32>
      %443 = arith.addf %441, %442 : vector<16x32xf32>
      %444 = arith.truncf %443 : vector<16x32xf32> to vector<16x32xbf16>
      %c1_182 = arith.constant 1 : index
      %c0_183 = arith.constant 0 : index
      %c0_184 = arith.constant 0 : index
      %445 = vector.load %arg8[%c1_182, %c0_183, %c0_184] : memref<2x32x96xbf16, #tpu.memory_space<vmem>>, vector<1x32x96xbf16>
      %446 = vector.shape_cast %445 : vector<1x32x96xbf16> to vector<32x96xbf16>
      %cst_185 = arith.constant dense<0.000000e+00> : vector<16x96xf32>
      %447 = tpu.matmul %444, %446, %cst_185 {dimension_numbers = #tpu.dot_dimension_numbers<[1], [0], [0], [1], [0, 0, 1, 1], [], []>} : vector<16x32xbf16>, vector<32x96xbf16>, vector<16x96xf32> -> vector<16x96xf32>
      %c1_186 = arith.constant 1 : index
      %c0_187 = arith.constant 0 : index
      %c0_188 = arith.constant 0 : index
      %448 = vector.load %arg9[%c1_186, %c0_187, %c0_188] : memref<2x1x96xf32, #tpu.memory_space<vmem>>, vector<1x1x96xf32>
      %449 = vector.shape_cast %448 : vector<1x1x96xf32> to vector<1x96xf32>
      %450 = vector.broadcast %449 : vector<1x96xf32> to vector<16x96xf32>
      %451 = arith.addf %447, %450 : vector<16x96xf32>
      %452 = arith.truncf %451 : vector<16x96xf32> to vector<16x96xbf16>
      %453 = arith.index_cast %415 : i32 to index
      %c0_189 = arith.constant 0 : index
      %454 = vector.load %arg24[%453, %c0_189] : memref<16x96xbf16, #tpu.memory_space<vmem>>, vector<16x96xbf16>
      tpu.vector_store %arg24[%453, %c0_189], %452 {strides = array<i32>} : memref<16x96xbf16, #tpu.memory_space<vmem>>, vector<16x96xbf16>,
      %c1_i32_190 = arith.constant 1 : i32
      %c0_i32_191 = arith.constant 0 : i32
      %c1_i32_192 = arith.constant 1 : i32
      %455 = arith.muli %c0_i32_191, %c1_i32_192 : i32
      %c0_i32_193 = arith.constant 0 : i32
      %456 = arith.addi %c0_i32_193, %455 : i32
      %c16_i32_194 = arith.constant 16 : i32
      %457 = arith.muli %456, %c16_i32_194 : i32
      %458 = tpu.assume_multiple %457, 16 : i32
      %459 = arith.index_cast %458 : i32 to index
      %c0_195 = arith.constant 0 : index
      %460 = vector.load %arg23[%459, %c0_195] : memref<16x32xf32, #tpu.memory_space<vmem>>, vector<16x32xf32>
      %461 = arith.index_cast %458 : i32 to index
      %c0_196 = arith.constant 0 : index
      %462 = vector.load %arg24[%461, %c0_196] : memref<16x96xbf16, #tpu.memory_space<vmem>>, vector<16x96xbf16>
      %463 = vector.extract_strided_slice %462 {offsets = [0, 0], sizes = [16, 8], strides = [1, 1]} : vector<16x96xbf16> to vector<16x8xbf16>
      %cst_197 = arith.constant -1.000000e+30 : f32
      %464 = vector.broadcast %cst_197 : f32 to vector<16x1xf32>
      %cst_198 = arith.constant 0.000000e+00 : f32
      %465 = vector.broadcast %cst_198 : f32 to vector<16x1xf32>
      %cst_199 = arith.constant 0.000000e+00 : f32
      %466 = vector.broadcast %cst_199 : f32 to vector<16x8xf32>
      %c0_i32_200 = arith.constant 0 : i32
      %c16_i32_201 = arith.constant 16 : i32
      %467 = arith.muli %c0_i32_200, %c16_i32_201 : i32
      %468 = tpu.assume_multiple %467, 16 : i32
      %469 = arith.index_cast %468 : i32 to index
      %c32_202 = arith.constant 32 : index
      %470 = vector.load %arg24[%469, %c32_202] : memref<16x96xbf16, #tpu.memory_space<vmem>>, vector<16x8xbf16>
      %471 = arith.index_cast %468 : i32 to index
      %c64_203 = arith.constant 64 : index
      %472 = vector.load %arg24[%471, %c64_203] : memref<16x96xbf16, #tpu.memory_space<vmem>>, vector<16x8xbf16>
      %cst_204 = arith.constant dense<0.000000e+00> : vector<16x16xf32>
      %473 = tpu.matmul %463, %470, %cst_204 {dimension_numbers = #tpu.dot_dimension_numbers<[1], [1], [0], [0], [0, 0, 1, 0], [], []>} : vector<16x8xbf16>, vector<16x8xbf16>, vector<16x16xf32> -> vector<16x16xf32>
      %cst_205 = arith.constant 0.353553385 : f32
      %474 = vector.broadcast %cst_205 : f32 to vector<16x16xf32>
      %475 = arith.mulf %473, %474 : vector<16x16xf32>
      %476 = tpu.iota {dimensions = array<i32: 1>} : vector<1x16xi32>
      %477 = vector.broadcast %468 : i32 to vector<1x16xi32>
      %478 = arith.addi %476, %477 : vector<1x16xi32>
      %c0_i32_206 = arith.constant 0 : i32
      %479 = vector.broadcast %c0_i32_206 : i32 to vector<1x16xi32>
      %480 = arith.cmpi eq, %478, %479 : vector<1x16xi32>
      %c8_i32_207 = arith.constant 8 : i32
      %481 = vector.broadcast %c8_i32_207 : i32 to vector<1x16xi32>
      %482 = arith.cmpi sge, %478, %481 : vector<1x16xi32>
      %c15_i32_208 = arith.constant 15 : i32
      %483 = vector.broadcast %c15_i32_208 : i32 to vector<1x16xi32>
      %484 = arith.cmpi slt, %478, %483 : vector<1x16xi32>
      %485 = arith.andi %482, %484 : vector<1x16xi1>
      %486 = arith.ori %480, %485 : vector<1x16xi1>
      %cst_209 = arith.constant 0.000000e+00 : f32
      %cst_210 = arith.constant -1.000000e+30 : f32
      %487 = vector.broadcast %cst_209 : f32 to vector<1x16xf32>
      %488 = vector.broadcast %cst_210 : f32 to vector<1x16xf32>
      %489 = arith.select %486, %487, %488 : vector<1x16xi1>, vector<1x16xf32>
      %490 = vector.broadcast %489 : vector<1x16xf32> to vector<16x16xf32>
      %491 = arith.addf %475, %490 : vector<16x16xf32>
      %cst_211 = arith.constant dense<0xFF800000> : vector<16xf32>
      %492 = vector.multi_reduction <maximumf>, %491, %cst_211 [1] : vector<16x16xf32> to vector<16xf32>
      %493 = vector.shape_cast %492 : vector<16xf32> to vector<16x1xf32>
      %494 = arith.maximumf %464, %493 : vector<16x1xf32>
      %495 = arith.subf %464, %494 : vector<16x1xf32>
      %496 = math.exp %495 : vector<16x1xf32>
      %497 = vector.broadcast %494 : vector<16x1xf32> to vector<16x16xf32>
      %498 = arith.subf %491, %497 : vector<16x16xf32>
      %499 = math.exp %498 : vector<16x16xf32>
      %500 = arith.mulf %496, %465 : vector<16x1xf32>
      %cst_212 = arith.constant dense<0.000000e+00> : vector<16xf32>
      %501 = vector.multi_reduction <add>, %499, %cst_212 [1] : vector<16x16xf32> to vector<16xf32>
      %502 = vector.shape_cast %501 : vector<16xf32> to vector<16x1xf32>
      %503 = arith.addf %500, %502 : vector<16x1xf32>
      %504 = vector.broadcast %496 : vector<16x1xf32> to vector<16x8xf32>
      %505 = arith.mulf %504, %466 : vector<16x8xf32>
      %506 = arith.truncf %499 : vector<16x16xf32> to vector<16x16xbf16>
      %cst_213 = arith.constant dense<0.000000e+00> : vector<16x8xf32>
      %507 = tpu.matmul %506, %472, %cst_213 {dimension_numbers = #tpu.dot_dimension_numbers<[1], [0], [0], [1], [0, 0, 1, 1], [], []>} : vector<16x16xbf16>, vector<16x8xbf16>, vector<16x8xf32> -> vector<16x8xf32>
      %508 = arith.addf %505, %507 : vector<16x8xf32>
      %c1_i32_214 = arith.constant 1 : i32
      %509 = tpu.reciprocal %503 {approx = true} : vector<16x1xf32> -> vector<16x1xf32>
      %510 = vector.broadcast %509 : vector<16x1xf32> to vector<16x8xf32>
      %511 = arith.mulf %508, %510 : vector<16x8xf32>
      %512 = arith.truncf %511 : vector<16x8xf32> to vector<16x8xbf16>
      %513 = vector.extract_strided_slice %462 {offsets = [0, 8], sizes = [16, 8], strides = [1, 1]} : vector<16x96xbf16> to vector<16x8xbf16>
      %cst_215 = arith.constant -1.000000e+30 : f32
      %514 = vector.broadcast %cst_215 : f32 to vector<16x1xf32>
      %cst_216 = arith.constant 0.000000e+00 : f32
      %515 = vector.broadcast %cst_216 : f32 to vector<16x1xf32>
      %cst_217 = arith.constant 0.000000e+00 : f32
      %516 = vector.broadcast %cst_217 : f32 to vector<16x8xf32>
      %c0_i32_218 = arith.constant 0 : i32
      %c16_i32_219 = arith.constant 16 : i32
      %517 = arith.muli %c0_i32_218, %c16_i32_219 : i32
      %518 = tpu.assume_multiple %517, 16 : i32
      %519 = arith.index_cast %518 : i32 to index
      %c40_220 = arith.constant 40 : index
      %520 = vector.load %arg24[%519, %c40_220] : memref<16x96xbf16, #tpu.memory_space<vmem>>, vector<16x8xbf16>
      %521 = arith.index_cast %518 : i32 to index
      %c72_221 = arith.constant 72 : index
      %522 = vector.load %arg24[%521, %c72_221] : memref<16x96xbf16, #tpu.memory_space<vmem>>, vector<16x8xbf16>
      %cst_222 = arith.constant dense<0.000000e+00> : vector<16x16xf32>
      %523 = tpu.matmul %513, %520, %cst_222 {dimension_numbers = #tpu.dot_dimension_numbers<[1], [1], [0], [0], [0, 0, 1, 0], [], []>} : vector<16x8xbf16>, vector<16x8xbf16>, vector<16x16xf32> -> vector<16x16xf32>
      %cst_223 = arith.constant 0.353553385 : f32
      %524 = vector.broadcast %cst_223 : f32 to vector<16x16xf32>
      %525 = arith.mulf %523, %524 : vector<16x16xf32>
      %526 = tpu.iota {dimensions = array<i32: 1>} : vector<1x16xi32>
      %527 = vector.broadcast %518 : i32 to vector<1x16xi32>
      %528 = arith.addi %526, %527 : vector<1x16xi32>
      %c0_i32_224 = arith.constant 0 : i32
      %529 = vector.broadcast %c0_i32_224 : i32 to vector<1x16xi32>
      %530 = arith.cmpi eq, %528, %529 : vector<1x16xi32>
      %c8_i32_225 = arith.constant 8 : i32
      %531 = vector.broadcast %c8_i32_225 : i32 to vector<1x16xi32>
      %532 = arith.cmpi sge, %528, %531 : vector<1x16xi32>
      %c15_i32_226 = arith.constant 15 : i32
      %533 = vector.broadcast %c15_i32_226 : i32 to vector<1x16xi32>
      %534 = arith.cmpi slt, %528, %533 : vector<1x16xi32>
      %535 = arith.andi %532, %534 : vector<1x16xi1>
      %536 = arith.ori %530, %535 : vector<1x16xi1>
      %cst_227 = arith.constant 0.000000e+00 : f32
      %cst_228 = arith.constant -1.000000e+30 : f32
      %537 = vector.broadcast %cst_227 : f32 to vector<1x16xf32>
      %538 = vector.broadcast %cst_228 : f32 to vector<1x16xf32>
      %539 = arith.select %536, %537, %538 : vector<1x16xi1>, vector<1x16xf32>
      %540 = vector.broadcast %539 : vector<1x16xf32> to vector<16x16xf32>
      %541 = arith.addf %525, %540 : vector<16x16xf32>
      %cst_229 = arith.constant dense<0xFF800000> : vector<16xf32>
      %542 = vector.multi_reduction <maximumf>, %541, %cst_229 [1] : vector<16x16xf32> to vector<16xf32>
      %543 = vector.shape_cast %542 : vector<16xf32> to vector<16x1xf32>
      %544 = arith.maximumf %514, %543 : vector<16x1xf32>
      %545 = arith.subf %514, %544 : vector<16x1xf32>
      %546 = math.exp %545 : vector<16x1xf32>
      %547 = vector.broadcast %544 : vector<16x1xf32> to vector<16x16xf32>
      %548 = arith.subf %541, %547 : vector<16x16xf32>
      %549 = math.exp %548 : vector<16x16xf32>
      %550 = arith.mulf %546, %515 : vector<16x1xf32>
      %cst_230 = arith.constant dense<0.000000e+00> : vector<16xf32>
      %551 = vector.multi_reduction <add>, %549, %cst_230 [1] : vector<16x16xf32> to vector<16xf32>
      %552 = vector.shape_cast %551 : vector<16xf32> to vector<16x1xf32>
      %553 = arith.addf %550, %552 : vector<16x1xf32>
      %554 = vector.broadcast %546 : vector<16x1xf32> to vector<16x8xf32>
      %555 = arith.mulf %554, %516 : vector<16x8xf32>
      %556 = arith.truncf %549 : vector<16x16xf32> to vector<16x16xbf16>
      %cst_231 = arith.constant dense<0.000000e+00> : vector<16x8xf32>
      %557 = tpu.matmul %556, %522, %cst_231 {dimension_numbers = #tpu.dot_dimension_numbers<[1], [0], [0], [1], [0, 0, 1, 1], [], []>} : vector<16x16xbf16>, vector<16x8xbf16>, vector<16x8xf32> -> vector<16x8xf32>
      %558 = arith.addf %555, %557 : vector<16x8xf32>
      %c1_i32_232 = arith.constant 1 : i32
      %559 = tpu.reciprocal %553 {approx = true} : vector<16x1xf32> -> vector<16x1xf32>
      %560 = vector.broadcast %559 : vector<16x1xf32> to vector<16x8xf32>
      %561 = arith.mulf %558, %560 : vector<16x8xf32>
      %562 = arith.truncf %561 : vector<16x8xf32> to vector<16x8xbf16>
      %563 = vector.extract_strided_slice %462 {offsets = [0, 16], sizes = [16, 8], strides = [1, 1]} : vector<16x96xbf16> to vector<16x8xbf16>
      %cst_233 = arith.constant -1.000000e+30 : f32
      %564 = vector.broadcast %cst_233 : f32 to vector<16x1xf32>
      %cst_234 = arith.constant 0.000000e+00 : f32
      %565 = vector.broadcast %cst_234 : f32 to vector<16x1xf32>
      %cst_235 = arith.constant 0.000000e+00 : f32
      %566 = vector.broadcast %cst_235 : f32 to vector<16x8xf32>
      %c0_i32_236 = arith.constant 0 : i32
      %c16_i32_237 = arith.constant 16 : i32
      %567 = arith.muli %c0_i32_236, %c16_i32_237 : i32
      %568 = tpu.assume_multiple %567, 16 : i32
      %569 = arith.index_cast %568 : i32 to index
      %c48_238 = arith.constant 48 : index
      %570 = vector.load %arg24[%569, %c48_238] : memref<16x96xbf16, #tpu.memory_space<vmem>>, vector<16x8xbf16>
      %571 = arith.index_cast %568 : i32 to index
      %c80_239 = arith.constant 80 : index
      %572 = vector.load %arg24[%571, %c80_239] : memref<16x96xbf16, #tpu.memory_space<vmem>>, vector<16x8xbf16>
      %cst_240 = arith.constant dense<0.000000e+00> : vector<16x16xf32>
      %573 = tpu.matmul %563, %570, %cst_240 {dimension_numbers = #tpu.dot_dimension_numbers<[1], [1], [0], [0], [0, 0, 1, 0], [], []>} : vector<16x8xbf16>, vector<16x8xbf16>, vector<16x16xf32> -> vector<16x16xf32>
      %cst_241 = arith.constant 0.353553385 : f32
      %574 = vector.broadcast %cst_241 : f32 to vector<16x16xf32>
      %575 = arith.mulf %573, %574 : vector<16x16xf32>
      %576 = tpu.iota {dimensions = array<i32: 1>} : vector<1x16xi32>
      %577 = vector.broadcast %568 : i32 to vector<1x16xi32>
      %578 = arith.addi %576, %577 : vector<1x16xi32>
      %c0_i32_242 = arith.constant 0 : i32
      %579 = vector.broadcast %c0_i32_242 : i32 to vector<1x16xi32>
      %580 = arith.cmpi eq, %578, %579 : vector<1x16xi32>
      %c8_i32_243 = arith.constant 8 : i32
      %581 = vector.broadcast %c8_i32_243 : i32 to vector<1x16xi32>
      %582 = arith.cmpi sge, %578, %581 : vector<1x16xi32>
      %c15_i32_244 = arith.constant 15 : i32
      %583 = vector.broadcast %c15_i32_244 : i32 to vector<1x16xi32>
      %584 = arith.cmpi slt, %578, %583 : vector<1x16xi32>
      %585 = arith.andi %582, %584 : vector<1x16xi1>
      %586 = arith.ori %580, %585 : vector<1x16xi1>
      %cst_245 = arith.constant 0.000000e+00 : f32
      %cst_246 = arith.constant -1.000000e+30 : f32
      %587 = vector.broadcast %cst_245 : f32 to vector<1x16xf32>
      %588 = vector.broadcast %cst_246 : f32 to vector<1x16xf32>
      %589 = arith.select %586, %587, %588 : vector<1x16xi1>, vector<1x16xf32>
      %590 = vector.broadcast %589 : vector<1x16xf32> to vector<16x16xf32>
      %591 = arith.addf %575, %590 : vector<16x16xf32>
      %cst_247 = arith.constant dense<0xFF800000> : vector<16xf32>
      %592 = vector.multi_reduction <maximumf>, %591, %cst_247 [1] : vector<16x16xf32> to vector<16xf32>
      %593 = vector.shape_cast %592 : vector<16xf32> to vector<16x1xf32>
      %594 = arith.maximumf %564, %593 : vector<16x1xf32>
      %595 = arith.subf %564, %594 : vector<16x1xf32>
      %596 = math.exp %595 : vector<16x1xf32>
      %597 = vector.broadcast %594 : vector<16x1xf32> to vector<16x16xf32>
      %598 = arith.subf %591, %597 : vector<16x16xf32>
      %599 = math.exp %598 : vector<16x16xf32>
      %600 = arith.mulf %596, %565 : vector<16x1xf32>
      %cst_248 = arith.constant dense<0.000000e+00> : vector<16xf32>
      %601 = vector.multi_reduction <add>, %599, %cst_248 [1] : vector<16x16xf32> to vector<16xf32>
      %602 = vector.shape_cast %601 : vector<16xf32> to vector<16x1xf32>
      %603 = arith.addf %600, %602 : vector<16x1xf32>
      %604 = vector.broadcast %596 : vector<16x1xf32> to vector<16x8xf32>
      %605 = arith.mulf %604, %566 : vector<16x8xf32>
      %606 = arith.truncf %599 : vector<16x16xf32> to vector<16x16xbf16>
      %cst_249 = arith.constant dense<0.000000e+00> : vector<16x8xf32>
      %607 = tpu.matmul %606, %572, %cst_249 {dimension_numbers = #tpu.dot_dimension_numbers<[1], [0], [0], [1], [0, 0, 1, 1], [], []>} : vector<16x16xbf16>, vector<16x8xbf16>, vector<16x8xf32> -> vector<16x8xf32>
      %608 = arith.addf %605, %607 : vector<16x8xf32>
      %c1_i32_250 = arith.constant 1 : i32
      %609 = tpu.reciprocal %603 {approx = true} : vector<16x1xf32> -> vector<16x1xf32>
      %610 = vector.broadcast %609 : vector<16x1xf32> to vector<16x8xf32>
      %611 = arith.mulf %608, %610 : vector<16x8xf32>
      %612 = arith.truncf %611 : vector<16x8xf32> to vector<16x8xbf16>
      %613 = vector.extract_strided_slice %462 {offsets = [0, 24], sizes = [16, 8], strides = [1, 1]} : vector<16x96xbf16> to vector<16x8xbf16>
      %cst_251 = arith.constant -1.000000e+30 : f32
      %614 = vector.broadcast %cst_251 : f32 to vector<16x1xf32>
      %cst_252 = arith.constant 0.000000e+00 : f32
      %615 = vector.broadcast %cst_252 : f32 to vector<16x1xf32>
      %cst_253 = arith.constant 0.000000e+00 : f32
      %616 = vector.broadcast %cst_253 : f32 to vector<16x8xf32>
      %c0_i32_254 = arith.constant 0 : i32
      %c16_i32_255 = arith.constant 16 : i32
      %617 = arith.muli %c0_i32_254, %c16_i32_255 : i32
      %618 = tpu.assume_multiple %617, 16 : i32
      %619 = arith.index_cast %618 : i32 to index
      %c56_256 = arith.constant 56 : index
      %620 = vector.load %arg24[%619, %c56_256] : memref<16x96xbf16, #tpu.memory_space<vmem>>, vector<16x8xbf16>
      %621 = arith.index_cast %618 : i32 to index
      %c88_257 = arith.constant 88 : index
      %622 = vector.load %arg24[%621, %c88_257] : memref<16x96xbf16, #tpu.memory_space<vmem>>, vector<16x8xbf16>
      %cst_258 = arith.constant dense<0.000000e+00> : vector<16x16xf32>
      %623 = tpu.matmul %613, %620, %cst_258 {dimension_numbers = #tpu.dot_dimension_numbers<[1], [1], [0], [0], [0, 0, 1, 0], [], []>} : vector<16x8xbf16>, vector<16x8xbf16>, vector<16x16xf32> -> vector<16x16xf32>
      %cst_259 = arith.constant 0.353553385 : f32
      %624 = vector.broadcast %cst_259 : f32 to vector<16x16xf32>
      %625 = arith.mulf %623, %624 : vector<16x16xf32>
      %626 = tpu.iota {dimensions = array<i32: 1>} : vector<1x16xi32>
      %627 = vector.broadcast %618 : i32 to vector<1x16xi32>
      %628 = arith.addi %626, %627 : vector<1x16xi32>
      %c0_i32_260 = arith.constant 0 : i32
      %629 = vector.broadcast %c0_i32_260 : i32 to vector<1x16xi32>
      %630 = arith.cmpi eq, %628, %629 : vector<1x16xi32>
      %c8_i32_261 = arith.constant 8 : i32
      %631 = vector.broadcast %c8_i32_261 : i32 to vector<1x16xi32>
      %632 = arith.cmpi sge, %628, %631 : vector<1x16xi32>
      %c15_i32_262 = arith.constant 15 : i32
      %633 = vector.broadcast %c15_i32_262 : i32 to vector<1x16xi32>
      %634 = arith.cmpi slt, %628, %633 : vector<1x16xi32>
      %635 = arith.andi %632, %634 : vector<1x16xi1>
      %636 = arith.ori %630, %635 : vector<1x16xi1>
      %cst_263 = arith.constant 0.000000e+00 : f32
      %cst_264 = arith.constant -1.000000e+30 : f32
      %637 = vector.broadcast %cst_263 : f32 to vector<1x16xf32>
      %638 = vector.broadcast %cst_264 : f32 to vector<1x16xf32>
      %639 = arith.select %636, %637, %638 : vector<1x16xi1>, vector<1x16xf32>
      %640 = vector.broadcast %639 : vector<1x16xf32> to vector<16x16xf32>
      %641 = arith.addf %625, %640 : vector<16x16xf32>
      %cst_265 = arith.constant dense<0xFF800000> : vector<16xf32>
      %642 = vector.multi_reduction <maximumf>, %641, %cst_265 [1] : vector<16x16xf32> to vector<16xf32>
      %643 = vector.shape_cast %642 : vector<16xf32> to vector<16x1xf32>
      %644 = arith.maximumf %614, %643 : vector<16x1xf32>
      %645 = arith.subf %614, %644 : vector<16x1xf32>
      %646 = math.exp %645 : vector<16x1xf32>
      %647 = vector.broadcast %644 : vector<16x1xf32> to vector<16x16xf32>
      %648 = arith.subf %641, %647 : vector<16x16xf32>
      %649 = math.exp %648 : vector<16x16xf32>
      %650 = arith.mulf %646, %615 : vector<16x1xf32>
      %cst_266 = arith.constant dense<0.000000e+00> : vector<16xf32>
      %651 = vector.multi_reduction <add>, %649, %cst_266 [1] : vector<16x16xf32> to vector<16xf32>
      %652 = vector.shape_cast %651 : vector<16xf32> to vector<16x1xf32>
      %653 = arith.addf %650, %652 : vector<16x1xf32>
      %654 = vector.broadcast %646 : vector<16x1xf32> to vector<16x8xf32>
      %655 = arith.mulf %654, %616 : vector<16x8xf32>
      %656 = arith.truncf %649 : vector<16x16xf32> to vector<16x16xbf16>
      %cst_267 = arith.constant dense<0.000000e+00> : vector<16x8xf32>
      %657 = tpu.matmul %656, %622, %cst_267 {dimension_numbers = #tpu.dot_dimension_numbers<[1], [0], [0], [1], [0, 0, 1, 1], [], []>} : vector<16x16xbf16>, vector<16x8xbf16>, vector<16x8xf32> -> vector<16x8xf32>
      %658 = arith.addf %655, %657 : vector<16x8xf32>
      %c1_i32_268 = arith.constant 1 : i32
      %659 = tpu.reciprocal %653 {approx = true} : vector<16x1xf32> -> vector<16x1xf32>
      %660 = vector.broadcast %659 : vector<16x1xf32> to vector<16x8xf32>
      %661 = arith.mulf %658, %660 : vector<16x8xf32>
      %662 = arith.truncf %661 : vector<16x8xf32> to vector<16x8xbf16>
      %663 = tpu.concatenate %512, %562, %612, %662 in 1 : vector<16x8xbf16>, vector<16x8xbf16>, vector<16x8xbf16>, vector<16x8xbf16> -> vector<16x32xbf16>
      %c1_269 = arith.constant 1 : index
      %c0_270 = arith.constant 0 : index
      %c0_271 = arith.constant 0 : index
      %664 = vector.load %arg10[%c1_269, %c0_270, %c0_271] : memref<2x32x32xbf16, #tpu.memory_space<vmem>>, vector<1x32x32xbf16>
      %665 = vector.shape_cast %664 : vector<1x32x32xbf16> to vector<32x32xbf16>
      %cst_272 = arith.constant dense<0.000000e+00> : vector<16x32xf32>
      %666 = tpu.matmul %663, %665, %cst_272 {dimension_numbers = #tpu.dot_dimension_numbers<[1], [0], [0], [1], [0, 0, 1, 1], [], []>} : vector<16x32xbf16>, vector<32x32xbf16>, vector<16x32xf32> -> vector<16x32xf32>
      %c1_273 = arith.constant 1 : index
      %c0_274 = arith.constant 0 : index
      %c0_275 = arith.constant 0 : index
      %667 = vector.load %arg11[%c1_273, %c0_274, %c0_275] : memref<2x1x32xf32, #tpu.memory_space<vmem>>, vector<1x1x32xf32>
      %668 = vector.shape_cast %667 : vector<1x1x32xf32> to vector<1x32xf32>
      %669 = vector.broadcast %668 : vector<1x32xf32> to vector<16x32xf32>
      %670 = arith.addf %666, %669 : vector<16x32xf32>
      %671 = arith.addf %460, %670 : vector<16x32xf32>
      %c1_276 = arith.constant 1 : index
      %c0_277 = arith.constant 0 : index
      %c0_278 = arith.constant 0 : index
      %672 = vector.load %arg12[%c1_276, %c0_277, %c0_278] : memref<2x1x32xf32, #tpu.memory_space<vmem>>, vector<1x1x32xf32>
      %673 = vector.shape_cast %672 : vector<1x1x32xf32> to vector<1x32xf32>
      %c1_279 = arith.constant 1 : index
      %c0_280 = arith.constant 0 : index
      %c0_281 = arith.constant 0 : index
      %674 = vector.load %arg13[%c1_279, %c0_280, %c0_281] : memref<2x1x32xf32, #tpu.memory_space<vmem>>, vector<1x1x32xf32>
      %675 = vector.shape_cast %674 : vector<1x1x32xf32> to vector<1x32xf32>
      %cst_282 = arith.constant dense<0.000000e+00> : vector<16xf32>
      %676 = vector.multi_reduction <add>, %671, %cst_282 [1] : vector<16x32xf32> to vector<16xf32>
      %677 = vector.shape_cast %676 : vector<16xf32> to vector<16x1xf32>
      %cst_283 = arith.constant 3.200000e+01 : f32
      %678 = vector.broadcast %cst_283 : f32 to vector<16x1xf32>
      %679 = arith.divf %677, %678 : vector<16x1xf32>
      %680 = vector.broadcast %679 : vector<16x1xf32> to vector<16x32xf32>
      %681 = arith.subf %671, %680 : vector<16x32xf32>
      %682 = arith.mulf %681, %681 : vector<16x32xf32>
      %cst_284 = arith.constant dense<0.000000e+00> : vector<16xf32>
      %683 = vector.multi_reduction <add>, %682, %cst_284 [1] : vector<16x32xf32> to vector<16xf32>
      %684 = vector.shape_cast %683 : vector<16xf32> to vector<16x1xf32>
      %cst_285 = arith.constant 3.200000e+01 : f32
      %685 = vector.broadcast %cst_285 : f32 to vector<16x1xf32>
      %686 = arith.divf %684, %685 : vector<16x1xf32>
      %687 = vector.broadcast %679 : vector<16x1xf32> to vector<16x32xf32>
      %688 = arith.subf %671, %687 : vector<16x32xf32>
      %cst_286 = arith.constant 9.99999974E-6 : f32
      %689 = vector.broadcast %cst_286 : f32 to vector<16x1xf32>
      %690 = arith.addf %686, %689 : vector<16x1xf32>
      %691 = math.rsqrt %690 : vector<16x1xf32>
      %692 = vector.broadcast %691 : vector<16x1xf32> to vector<16x32xf32>
      %693 = arith.mulf %688, %692 : vector<16x32xf32>
      %694 = vector.broadcast %673 : vector<1x32xf32> to vector<16x32xf32>
      %695 = arith.mulf %693, %694 : vector<16x32xf32>
      %696 = vector.broadcast %675 : vector<1x32xf32> to vector<16x32xf32>
      %697 = arith.addf %695, %696 : vector<16x32xf32>
      %698 = arith.truncf %697 : vector<16x32xf32> to vector<16x32xbf16>
      %c1_287 = arith.constant 1 : index
      %c0_288 = arith.constant 0 : index
      %c0_289 = arith.constant 0 : index
      %699 = vector.load %arg14[%c1_287, %c0_288, %c0_289] : memref<2x32x64xbf16, #tpu.memory_space<vmem>>, vector<1x32x64xbf16>
      %700 = vector.shape_cast %699 : vector<1x32x64xbf16> to vector<32x64xbf16>
      %cst_290 = arith.constant dense<0.000000e+00> : vector<16x64xf32>
      %701 = tpu.matmul %698, %700, %cst_290 {dimension_numbers = #tpu.dot_dimension_numbers<[1], [0], [0], [1], [0, 0, 1, 1], [], []>} : vector<16x32xbf16>, vector<32x64xbf16>, vector<16x64xf32> -> vector<16x64xf32>
      %c1_291 = arith.constant 1 : index
      %c0_292 = arith.constant 0 : index
      %c0_293 = arith.constant 0 : index
      %702 = vector.load %arg15[%c1_291, %c0_292, %c0_293] : memref<2x1x64xf32, #tpu.memory_space<vmem>>, vector<1x1x64xf32>
      %703 = vector.shape_cast %702 : vector<1x1x64xf32> to vector<1x64xf32>
      %704 = vector.broadcast %703 : vector<1x64xf32> to vector<16x64xf32>
      %705 = arith.addf %701, %704 : vector<16x64xf32>
      %cst_294 = arith.constant 5.000000e-01 : f32
      %706 = vector.broadcast %cst_294 : f32 to vector<16x64xf32>
      %707 = arith.mulf %706, %705 : vector<16x64xf32>
      %cst_295 = arith.constant 0.707106769 : f32
      %708 = vector.broadcast %cst_295 : f32 to vector<16x64xf32>
      %709 = arith.mulf %705, %708 : vector<16x64xf32>
      %710 = math.absf %709 : vector<16x64xf32>
      %cst_296 = arith.constant 0.327591091 : f32
      %711 = vector.broadcast %cst_296 : f32 to vector<16x64xf32>
      %712 = arith.mulf %711, %710 : vector<16x64xf32>
      %cst_297 = arith.constant 1.000000e+00 : f32
      %713 = vector.broadcast %cst_297 : f32 to vector<16x64xf32>
      %714 = arith.addf %713, %712 : vector<16x64xf32>
      %715 = tpu.reciprocal %714 {approx = true} : vector<16x64xf32> -> vector<16x64xf32>
      %cst_298 = arith.constant 1.06140542 : f32
      %716 = vector.broadcast %cst_298 : f32 to vector<16x64xf32>
      %717 = arith.mulf %716, %715 : vector<16x64xf32>
      %cst_299 = arith.constant -1.45315206 : f32
      %718 = vector.broadcast %cst_299 : f32 to vector<16x64xf32>
      %719 = arith.addf %717, %718 : vector<16x64xf32>
      %720 = arith.mulf %719, %715 : vector<16x64xf32>
      %cst_300 = arith.constant 1.42141378 : f32
      %721 = vector.broadcast %cst_300 : f32 to vector<16x64xf32>
      %722 = arith.addf %720, %721 : vector<16x64xf32>
      %723 = arith.mulf %722, %715 : vector<16x64xf32>
      %cst_301 = arith.constant -0.284496725 : f32
      %724 = vector.broadcast %cst_301 : f32 to vector<16x64xf32>
      %725 = arith.addf %723, %724 : vector<16x64xf32>
      %726 = arith.mulf %725, %715 : vector<16x64xf32>
      %cst_302 = arith.constant 0.254829586 : f32
      %727 = vector.broadcast %cst_302 : f32 to vector<16x64xf32>
      %728 = arith.addf %726, %727 : vector<16x64xf32>
      %729 = arith.mulf %728, %715 : vector<16x64xf32>
      %cst_303 = arith.constant 0.000000e+00 : f32
      %730 = vector.broadcast %cst_303 : f32 to vector<16x64xf32>
      %731 = arith.subf %730, %710 : vector<16x64xf32>
      %732 = arith.mulf %731, %710 : vector<16x64xf32>
      %733 = math.exp %732 : vector<16x64xf32>
      %734 = arith.mulf %729, %733 : vector<16x64xf32>
      %cst_304 = arith.constant 1.000000e+00 : f32
      %735 = vector.broadcast %cst_304 : f32 to vector<16x64xf32>
      %736 = arith.subf %735, %734 : vector<16x64xf32>
      %cst_305 = arith.constant 0.000000e+00 : f32
      %737 = vector.broadcast %cst_305 : f32 to vector<16x64xf32>
      %738 = arith.cmpf oge, %709, %737 : vector<16x64xf32>
      %cst_306 = arith.constant 0.000000e+00 : f32
      %739 = vector.broadcast %cst_306 : f32 to vector<16x64xf32>
      %740 = arith.subf %739, %736 : vector<16x64xf32>
      %741 = arith.select %738, %736, %740 : vector<16x64xi1>, vector<16x64xf32>
      %cst_307 = arith.constant 1.000000e+00 : f32
      %742 = vector.broadcast %cst_307 : f32 to vector<16x64xf32>
      %743 = arith.addf %742, %741 : vector<16x64xf32>
      %744 = arith.mulf %707, %743 : vector<16x64xf32>
      %745 = arith.truncf %744 : vector<16x64xf32> to vector<16x64xbf16>
      %c1_308 = arith.constant 1 : index
      %c0_309 = arith.constant 0 : index
      %c0_310 = arith.constant 0 : index
      %746 = vector.load %arg16[%c1_308, %c0_309, %c0_310] : memref<2x64x32xbf16, #tpu.memory_space<vmem>>, vector<1x64x32xbf16>
      %747 = vector.shape_cast %746 : vector<1x64x32xbf16> to vector<64x32xbf16>
      %cst_311 = arith.constant dense<0.000000e+00> : vector<16x32xf32>
      %748 = tpu.matmul %745, %747, %cst_311 {dimension_numbers = #tpu.dot_dimension_numbers<[1], [0], [0], [1], [0, 0, 1, 1], [], []>} : vector<16x64xbf16>, vector<64x32xbf16>, vector<16x32xf32> -> vector<16x32xf32>
      %c1_312 = arith.constant 1 : index
      %c0_313 = arith.constant 0 : index
      %c0_314 = arith.constant 0 : index
      %749 = vector.load %arg17[%c1_312, %c0_313, %c0_314] : memref<2x1x32xf32, #tpu.memory_space<vmem>>, vector<1x1x32xf32>
      %750 = vector.shape_cast %749 : vector<1x1x32xf32> to vector<1x32xf32>
      %751 = vector.broadcast %750 : vector<1x32xf32> to vector<16x32xf32>
      %752 = arith.addf %748, %751 : vector<16x32xf32>
      %753 = arith.addf %671, %752 : vector<16x32xf32>
      %754 = arith.index_cast %458 : i32 to index
      %c0_315 = arith.constant 0 : index
      %755 = vector.load %arg23[%754, %c0_315] : memref<16x32xf32, #tpu.memory_space<vmem>>, vector<16x32xf32>
      tpu.vector_store %arg23[%754, %c0_315], %753 {strides = array<i32>} : memref<16x32xf32, #tpu.memory_space<vmem>>, vector<16x32xf32>,
      %c1_i32_316 = arith.constant 1 : i32
      %c0_317 = arith.constant 0 : index
      %c0_318 = arith.constant 0 : index
      %756 = vector.load %arg23[%c0_317, %c0_318] : memref<16x32xf32, #tpu.memory_space<vmem>>, vector<8x32xf32>
      %c0_319 = arith.constant 0 : index
      %c0_320 = arith.constant 0 : index
      %757 = vector.load %arg18[%c0_319, %c0_320] : memref<1x32xf32, #tpu.memory_space<vmem>>, vector<1x32xf32>
      %c0_321 = arith.constant 0 : index
      %c0_322 = arith.constant 0 : index
      %758 = vector.load %arg19[%c0_321, %c0_322] : memref<1x32xf32, #tpu.memory_space<vmem>>, vector<1x32xf32>
      %cst_323 = arith.constant dense<0.000000e+00> : vector<8xf32>
      %759 = vector.multi_reduction <add>, %756, %cst_323 [1] : vector<8x32xf32> to vector<8xf32>
      %760 = vector.shape_cast %759 : vector<8xf32> to vector<8x1xf32>
      %cst_324 = arith.constant 3.200000e+01 : f32
      %761 = vector.broadcast %cst_324 : f32 to vector<8x1xf32>
      %762 = arith.divf %760, %761 : vector<8x1xf32>
      %763 = vector.broadcast %762 : vector<8x1xf32> to vector<8x32xf32>
      %764 = arith.subf %756, %763 : vector<8x32xf32>
      %765 = arith.mulf %764, %764 : vector<8x32xf32>
      %cst_325 = arith.constant dense<0.000000e+00> : vector<8xf32>
      %766 = vector.multi_reduction <add>, %765, %cst_325 [1] : vector<8x32xf32> to vector<8xf32>
      %767 = vector.shape_cast %766 : vector<8xf32> to vector<8x1xf32>
      %cst_326 = arith.constant 3.200000e+01 : f32
      %768 = vector.broadcast %cst_326 : f32 to vector<8x1xf32>
      %769 = arith.divf %767, %768 : vector<8x1xf32>
      %770 = vector.broadcast %762 : vector<8x1xf32> to vector<8x32xf32>
      %771 = arith.subf %756, %770 : vector<8x32xf32>
      %cst_327 = arith.constant 9.99999974E-6 : f32
      %772 = vector.broadcast %cst_327 : f32 to vector<8x1xf32>
      %773 = arith.addf %769, %772 : vector<8x1xf32>
      %774 = math.rsqrt %773 : vector<8x1xf32>
      %775 = vector.broadcast %774 : vector<8x1xf32> to vector<8x32xf32>
      %776 = arith.mulf %771, %775 : vector<8x32xf32>
      %777 = vector.broadcast %757 : vector<1x32xf32> to vector<8x32xf32>
      %778 = arith.mulf %776, %777 : vector<8x32xf32>
      %779 = vector.broadcast %758 : vector<1x32xf32> to vector<8x32xf32>
      %780 = arith.addf %778, %779 : vector<8x32xf32>
      %781 = arith.truncf %780 : vector<8x32xf32> to vector<8x32xbf16>
      %c0_328 = arith.constant 0 : index
      %c0_329 = arith.constant 0 : index
      %782 = vector.load %arg20[%c0_328, %c0_329] : memref<32x3xbf16, #tpu.memory_space<vmem>>, vector<32x3xbf16>
      %cst_330 = arith.constant dense<0.000000e+00> : vector<8x3xf32>
      %783 = tpu.matmul %781, %782, %cst_330 {dimension_numbers = #tpu.dot_dimension_numbers<[1], [0], [0], [1], [0, 0, 1, 1], [], []>} : vector<8x32xbf16>, vector<32x3xbf16>, vector<8x3xf32> -> vector<8x3xf32>
      %c0_331 = arith.constant 0 : index
      %c0_332 = arith.constant 0 : index
      %784 = vector.load %arg21[%c0_331, %c0_332] : memref<1x3xf32, #tpu.memory_space<vmem>>, vector<1x3xf32>
      %785 = vector.broadcast %784 : vector<1x3xf32> to vector<8x3xf32>
      %786 = arith.addf %783, %785 : vector<8x3xf32>
      %787 = vector.extract_strided_slice %786 {offsets = [0, 0], sizes = [1, 3], strides = [1, 1]} : vector<8x3xf32> to vector<1x3xf32>
      %c0_333 = arith.constant 0 : index
      %c0_334 = arith.constant 0 : index
      %c0_335 = arith.constant 0 : index
      %788 = vector.load %arg22[%c0_333, %c0_334, %c0_335] : memref<1x1x3xf32, #tpu.memory_space<vmem>>, vector<1x1x3xf32>
      %789 = vector.shape_cast %788 : vector<1x1x3xf32> to vector<1x3xf32>
      %790 = vector.shape_cast %787 : vector<1x3xf32> to vector<1x1x3xf32>
      tpu.vector_store %arg22[%c0_333, %c0_334, %c0_335], %790 {strides = array<i32>} : memref<1x1x3xf32, #tpu.memory_space<vmem>>, vector<1x1x3xf32>,
    } else {
    }
    return
  }
  func.func @transform_0(%arg0: i32, %arg1: i32) -> (i32, i32, i32) {
    %c0_i32 = arith.constant 0 : i32
    %c0_i32_0 = arith.constant 0 : i32
    return %arg0, %arg1, %c0_i32 : i32, i32, i32
  }
  func.func @transform_1(%arg0: i32, %arg1: i32) -> (i32, i32) {
    %c0_i32 = arith.constant 0 : i32
    %c0_i32_0 = arith.constant 0 : i32
    %c0_i32_1 = arith.constant 0 : i32
    return %c0_i32, %c0_i32_0 : i32, i32
  }
  func.func @transform_2(%arg0: i32, %arg1: i32) -> (i32, i32) {
    %c0_i32 = arith.constant 0 : i32
    %c0_i32_0 = arith.constant 0 : i32
    %c0_i32_1 = arith.constant 0 : i32
    return %c0_i32, %c0_i32_0 : i32, i32
  }
  func.func @transform_3(%arg0: i32, %arg1: i32) -> (i32, i32) {
    %c0_i32 = arith.constant 0 : i32
    %c0_i32_0 = arith.constant 0 : i32
    %c0_i32_1 = arith.constant 0 : i32
    return %c0_i32, %c0_i32_0 : i32, i32
  }
  func.func @transform_4(%arg0: i32, %arg1: i32) -> (i32, i32, i32) {
    %c0_i32 = arith.constant 0 : i32
    %c0_i32_0 = arith.constant 0 : i32
    %c0_i32_1 = arith.constant 0 : i32
    %c0_i32_2 = arith.constant 0 : i32
    return %c0_i32, %c0_i32_0, %c0_i32_1 : i32, i32, i32
  }
  func.func @transform_5(%arg0: i32, %arg1: i32) -> (i32, i32, i32) {
    %c0_i32 = arith.constant 0 : i32
    %c0_i32_0 = arith.constant 0 : i32
    %c0_i32_1 = arith.constant 0 : i32
    %c0_i32_2 = arith.constant 0 : i32
    return %c0_i32, %c0_i32_0, %c0_i32_1 : i32, i32, i32
  }
  func.func @transform_6(%arg0: i32, %arg1: i32) -> (i32, i32, i32) {
    %c0_i32 = arith.constant 0 : i32
    %c0_i32_0 = arith.constant 0 : i32
    %c0_i32_1 = arith.constant 0 : i32
    %c0_i32_2 = arith.constant 0 : i32
    return %c0_i32, %c0_i32_0, %c0_i32_1 : i32, i32, i32
  }
  func.func @transform_7(%arg0: i32, %arg1: i32) -> (i32, i32, i32) {
    %c0_i32 = arith.constant 0 : i32
    %c0_i32_0 = arith.constant 0 : i32
    %c0_i32_1 = arith.constant 0 : i32
    %c0_i32_2 = arith.constant 0 : i32
    return %c0_i32, %c0_i32_0, %c0_i32_1 : i32, i32, i32
  }
  func.func @transform_8(%arg0: i32, %arg1: i32) -> (i32, i32, i32) {
    %c0_i32 = arith.constant 0 : i32
    %c0_i32_0 = arith.constant 0 : i32
    %c0_i32_1 = arith.constant 0 : i32
    %c0_i32_2 = arith.constant 0 : i32
    return %c0_i32, %c0_i32_0, %c0_i32_1 : i32, i32, i32
  }
  func.func @transform_9(%arg0: i32, %arg1: i32) -> (i32, i32, i32) {
    %c0_i32 = arith.constant 0 : i32
    %c0_i32_0 = arith.constant 0 : i32
    %c0_i32_1 = arith.constant 0 : i32
    %c0_i32_2 = arith.constant 0 : i32
    return %c0_i32, %c0_i32_0, %c0_i32_1 : i32, i32, i32
  }
  func.func @transform_10(%arg0: i32, %arg1: i32) -> (i32, i32, i32) {
    %c0_i32 = arith.constant 0 : i32
    %c0_i32_0 = arith.constant 0 : i32
    %c0_i32_1 = arith.constant 0 : i32
    %c0_i32_2 = arith.constant 0 : i32
    return %c0_i32, %c0_i32_0, %c0_i32_1 : i32, i32, i32
  }
  func.func @transform_11(%arg0: i32, %arg1: i32) -> (i32, i32, i32) {
    %c0_i32 = arith.constant 0 : i32
    %c0_i32_0 = arith.constant 0 : i32
    %c0_i32_1 = arith.constant 0 : i32
    %c0_i32_2 = arith.constant 0 : i32
    return %c0_i32, %c0_i32_0, %c0_i32_1 : i32, i32, i32
  }
  func.func @transform_12(%arg0: i32, %arg1: i32) -> (i32, i32, i32) {
    %c0_i32 = arith.constant 0 : i32
    %c0_i32_0 = arith.constant 0 : i32
    %c0_i32_1 = arith.constant 0 : i32
    %c0_i32_2 = arith.constant 0 : i32
    return %c0_i32, %c0_i32_0, %c0_i32_1 : i32, i32, i32
  }
  func.func @transform_13(%arg0: i32, %arg1: i32) -> (i32, i32, i32) {
    %c0_i32 = arith.constant 0 : i32
    %c0_i32_0 = arith.constant 0 : i32
    %c0_i32_1 = arith.constant 0 : i32
    %c0_i32_2 = arith.constant 0 : i32
    return %c0_i32, %c0_i32_0, %c0_i32_1 : i32, i32, i32
  }
  func.func @transform_14(%arg0: i32, %arg1: i32) -> (i32, i32, i32) {
    %c0_i32 = arith.constant 0 : i32
    %c0_i32_0 = arith.constant 0 : i32
    %c0_i32_1 = arith.constant 0 : i32
    %c0_i32_2 = arith.constant 0 : i32
    return %c0_i32, %c0_i32_0, %c0_i32_1 : i32, i32, i32
  }
  func.func @transform_15(%arg0: i32, %arg1: i32) -> (i32, i32, i32) {
    %c0_i32 = arith.constant 0 : i32
    %c0_i32_0 = arith.constant 0 : i32
    %c0_i32_1 = arith.constant 0 : i32
    %c0_i32_2 = arith.constant 0 : i32
    return %c0_i32, %c0_i32_0, %c0_i32_1 : i32, i32, i32
  }
  func.func @transform_16(%arg0: i32, %arg1: i32) -> (i32, i32) {
    %c0_i32 = arith.constant 0 : i32
    %c0_i32_0 = arith.constant 0 : i32
    %c0_i32_1 = arith.constant 0 : i32
    return %c0_i32, %c0_i32_0 : i32, i32
  }
  func.func @transform_17(%arg0: i32, %arg1: i32) -> (i32, i32) {
    %c0_i32 = arith.constant 0 : i32
    %c0_i32_0 = arith.constant 0 : i32
    %c0_i32_1 = arith.constant 0 : i32
    return %c0_i32, %c0_i32_0 : i32, i32
  }
  func.func @transform_18(%arg0: i32, %arg1: i32) -> (i32, i32) {
    %c0_i32 = arith.constant 0 : i32
    %c0_i32_0 = arith.constant 0 : i32
    %c0_i32_1 = arith.constant 0 : i32
    return %c0_i32, %c0_i32_0 : i32, i32
  }
  func.func @transform_19(%arg0: i32, %arg1: i32) -> (i32, i32) {
    %c0_i32 = arith.constant 0 : i32
    %c0_i32_0 = arith.constant 0 : i32
    %c0_i32_1 = arith.constant 0 : i32
    return %c0_i32, %c0_i32_0 : i32, i32
  }
  func.func @transform_20(%arg0: i32, %arg1: i32) -> (i32, i32, i32) {
    %c0_i32 = arith.constant 0 : i32
    %c0_i32_0 = arith.constant 0 : i32
    %c0_i32_1 = arith.constant 0 : i32
    return %arg0, %c0_i32, %c0_i32_0 : i32, i32, i32
  }
}

</mosaic_0001>

<llo_original>
// kernel: tpu_custom_call.1
$region0: #{tpu_custom_call.1}
  #allocation0 [shape = 'u32[]', space=smem, size = 0x4, offset = 0x4, fixed_abs, tag = 'smem constant byte address 0x4 - core index']
  #allocation1 [shape = 'u32[144,128]{1,0:T(1,128)}', space=vmem, size = 0x12000, scoped, tag = 'internal scratch']
  #allocation2 [shape = 'f32[16,32]{1,0:T(8,128)}', space=vmem, size = 0x2000, scoped, tag = 'scratch operand']
  #allocation3 [shape = 'bf16[16,96]{1,0:T(16,128)(2,1)}', space=vmem, size = 0x1000, scoped, tag = 'scratch operand']
  %s0 = inlined_call_operand.vmem [shape: f32[2,7,32], index: 0, kind: input, shape index: {}]
  %s1 = inlined_call_operand.vmem [shape: bf16[32,32], index: 1, kind: input, shape index: {}]
  %s2 = inlined_call_operand.hbm [shape: f32[1,32], index: 2, kind: input, shape index: {}]
  %s3 = inlined_call_operand.hbm [shape: f32[1,32], index: 3, kind: input, shape index: {}]
  %s4 = inlined_call_operand.vmem [shape: f32[2,1,32], index: 4, kind: input, shape index: {}]
  %s5 = inlined_call_operand.vmem [shape: f32[2,1,32], index: 5, kind: input, shape index: {}]
  %s6 = inlined_call_operand.vmem [shape: bf16[2,32,96], index: 6, kind: input, shape index: {}]
  %s7 = inlined_call_operand.vmem [shape: f32[2,1,96], index: 7, kind: input, shape index: {}]
  %s8 = inlined_call_operand.vmem [shape: bf16[2,32,32], index: 8, kind: input, shape index: {}]
  %s9 = inlined_call_operand.vmem [shape: f32[2,1,32], index: 9, kind: input, shape index: {}]
  %s10 = inlined_call_operand.vmem [shape: f32[2,1,32], index: 10, kind: input, shape index: {}]
  %s11 = inlined_call_operand.vmem [shape: f32[2,1,32], index: 11, kind: input, shape index: {}]
  %s12 = inlined_call_operand.vmem [shape: bf16[2,32,64], index: 12, kind: input, shape index: {}]
  %s13 = inlined_call_operand.vmem [shape: f32[2,1,64], index: 13, kind: input, shape index: {}]
  %s14 = inlined_call_operand.vmem [shape: bf16[2,64,32], index: 14, kind: input, shape index: {}]
  %s15 = inlined_call_operand.vmem [shape: f32[2,1,32], index: 15, kind: input, shape index: {}]
  %s16 = inlined_call_operand.vmem [shape: f32[1,32], index: 16, kind: input, shape index: {}]
  %s17 = inlined_call_operand.vmem [shape: f32[1,32], index: 17, kind: input, shape index: {}]
  %s18 = inlined_call_operand.vmem [shape: bf16[32,3], index: 18, kind: input, shape index: {}]
  %s19 = inlined_call_operand.vmem [shape: f32[1,3], index: 19, kind: input, shape index: {}]
  %s20 = inlined_call_operand.hbm [shape: f32[2,1,3], index: 20, kind: output, shape index: {}]
  %s21 = sld [smem:[#allocation0]]
  $region125: #{tpu_custom_call.1} parent=0
    _
  %s23 = ssub.s32 1, %s21
  %s24 = scalar_select 0, %s23, %s21
  $region1: #{tpu_custom_call.1} parent=0
    #allocation4 [shape = 'u8[512]{0}', space=vmem, size = 0x400, scoped, tag = 'input window, operand 2, single buffered']
    #allocation5 [shape = 's32[2]{0}', space=sflag, size = 0x8, scoped, tag = 'scoped memory for tpu_custom_call.1']
    #allocation6 [shape = 's32[2]{0}', space=sflag, size = 0x8, scoped, tag = 'scoped memory for tpu_custom_call.1']
    #allocation7 [shape = 'u8[512]{0}', space=vmem, size = 0x400, scoped, tag = 'input window, operand 3, single buffered']
    #allocation8 [shape = 's32[1]{0}', space=sflag, size = 0x4, scoped, tag = 'scoped memory for tpu_custom_call.1']
    #allocation9 [shape = 'u8[1024]{0}', space=vmem, size = 0x400, scoped, tag = 'output window, operand 0']
    %25 = vsyncpa [#allocation5], 0
    %26 = vsyncpa [#allocation8], 0
    %27 = vsyncpa [#allocation6], 0
    %s28 = scalar_lea.sflag [#allocation6], 1
    %29 = vsyncpa %s28, 0
    loop: start=0, step=1, limit=4
    $region2: #{tpu_custom_call.1} parent=1 // loop_pre_header
      _
    $region3: #{tpu_custom_call.1} parent=1 // loop_header
      %s31 = sphi 0, %s35
      %p32 = scmp.ge.s32.totalorder %s31, 4
      %s38 = sphi 0, %s50
      %s39 = sphi 0, %s46
      %s40 = sphi 0, %s38
      %s41 = sphi 0, %s39
      %s42 = sphi 0, %s40
      %s43 = sphi 0, %s41
      %s55 = sphi 0, %s57
      %s58 = sphi 0, %s55
      %s59 = sphi 0, %s58
      %s75 = sphi 0, %s59
      %s79 = sphi 0, %s79
      %s81 = sphi 0, %s79
      %s82 = sphi 0, %s81
      %s96 = sphi 0, %s82
      %s100 = sphi 0, %s100
      %s102 = sphi 0, %s100
      %s103 = sphi 0, %s102
      %s117 = sphi 0, %s103
      %s121 = sphi 0, %s121
      %s123 = sphi 0, %s121
      %s124 = sphi 0, %s123
      %s138 = sphi 0, %s124
      %s142 = sphi 0, %s142
      %s144 = sphi 0, %s142
      %s145 = sphi 0, %s144
      %s159 = sphi 0, %s145
      %s163 = sphi 0, %s163
      %s165 = sphi 0, %s163
      %s166 = sphi 0, %s165
      %s180 = sphi 0, %s166
      %s184 = sphi 0, %s184
      %s186 = sphi 0, %s184
      %s187 = sphi 0, %s186
      %s201 = sphi 0, %s187
      %s205 = sphi 0, %s205
      %s207 = sphi 0, %s205
      %s208 = sphi 0, %s207
      %s222 = sphi 0, %s208
      %s226 = sphi 0, %s226
      %s228 = sphi 0, %s226
      %s229 = sphi 0, %s228
      %s243 = sphi 0, %s229
      %s247 = sphi 0, %s247
      %s249 = sphi 0, %s247
      %s250 = sphi 0, %s249
      %s264 = sphi 0, %s250
      %s268 = sphi 0, %s268
      %s270 = sphi 0, %s268
      %s271 = sphi 0, %s270
      %s285 = sphi 0, %s271
      %s289 = sphi 0, %s289
      %s291 = sphi 0, %s289
      %s292 = sphi 0, %s291
      %s306 = sphi 0, %s292
      %s310 = sphi 0, %s310
      %s312 = sphi 0, %s310
      %s313 = sphi 0, %s312
      %s327 = sphi 0, %s313
      %s331 = sphi 0, %s331
      %s333 = sphi 0, %s331
      %s334 = sphi 0, %s333
      %s348 = sphi 0, %s334
      %s352 = sphi 0, %s352
      %s354 = sphi 0, %s352
      %s355 = sphi 0, %s354
      %s369 = sphi 0, %s355
      %s373 = sphi 0, %s373
      %s375 = sphi 0, %s373
      %s376 = sphi 0, %s375
      %s390 = sphi 0, %s376
      %s394 = sphi 0, %s394
      %s396 = sphi 0, %s394
      %s397 = sphi 0, %s396
      %s411 = sphi 0, %s397
      %s415 = sphi 0, %s415
      %s417 = sphi 0, %s415
      %s418 = sphi 0, %s417
      %s432 = sphi 0, %s418
      %s436 = sphi 0, %s436
      %s438 = sphi 0, %s436
      %s439 = sphi 0, %s438
      %s453 = sphi 0, %s439
      %s457 = sphi 0, %s457
      %s459 = sphi 0, %s457
      %s460 = sphi 0, %s459
      %s474 = sphi 0, %s460
      %s480 = sphi 0, %s482
      %s483 = sphi 0, %s480
      %s484 = sphi 0, %s483
      %s500 = sphi 0, %s484
    $region4: #{tpu_custom_call.1} parent=1 // loop_header_branch
      %34 = sbr.rel (%p32) target = $region8
    $region5: #{tpu_custom_call.1} parent=1 // loop_body
      %s36 = ssub.s32 %s31, 1
      %s37 = ssub.s32 %s31, 2
      %s44 = sadd.s32 1, %s39
      %p45 = scmp.ge.s32.totalorder %s44, 1
      %s46 = scalar_select %p45, 0, %s44
      %s47 = sadd.s32 1, %s38
      %s48 = scalar_select %p45, %s47, %s38
      %p49 = scmp.ge.s32.totalorder %s48, 2
      %s50 = scalar_select %p49, 0, %s48
      %s51 = ssub.s32 %s38, %s50
      %s52 = ssub.s32 %s39, %s46
      %s53 = sor.u32 %s51, %s52
      %p54 = scmp.eq.s32.totalorder %s53, 0
      %s56 = sadd.s32 %s55, 1
      %s57 = scalar_select %p54, %s55, %s56
      %p60 = pneg %p54
      %p61 = scmp.eq.s32.totalorder %s31, 1
      %p62 = por %p60, %p61
      %p63 = scmp.ne.s32.totalorder %s55, %s58
      %p64 = scmp.eq.s32.totalorder %s31, 0
      %p65 = por %p63, %p64
      %p66 = scmp.ne.s32.totalorder %s55, %s58
      %p67 = scmp.eq.s32.totalorder %s36, 1
      %p68 = por %p66, %p67
      %p69 = scmp.ne.s32.totalorder %s58, %s59
      %p70 = scmp.eq.s32.totalorder %s36, 0
      %p71 = por %p69, %p70
      %p72 = scmp.ne.s32.totalorder %s58, %s59
      %p73 = scmp.eq.s32.totalorder %s37, 1
      %p74 = por %p72, %p73
      %p76 = scmp.ne.s32.totalorder %s59, %s75
      %p77 = scmp.eq.s32.totalorder %s37, 0
      %p78 = por %p76, %p77
      %s80 = sadd.s32 %s79, 1
      %p83 = scmp.eq.s32.totalorder %s31, 1
      %p84 = scmp.ne.s32.totalorder %s79, %s81
      %p85 = scmp.eq.s32.totalorder %s31, 0
      %p86 = por %p84, %p85
      %p87 = scmp.ne.s32.totalorder %s79, %s81
      %p88 = scmp.eq.s32.totalorder %s36, 1
      %p89 = por %p87, %p88
      %p90 = scmp.ne.s32.totalorder %s81, %s82
      %p91 = scmp.eq.s32.totalorder %s36, 0
      %p92 = por %p90, %p91
      %p93 = scmp.ne.s32.totalorder %s81, %s82
      %p94 = scmp.eq.s32.totalorder %s37, 1
      %p95 = por %p93, %p94
      %p97 = scmp.ne.s32.totalorder %s82, %s96
      %p98 = scmp.eq.s32.totalorder %s37, 0
      %p99 = por %p97, %p98
      %s101 = sadd.s32 %s100, 1
      %p104 = scmp.eq.s32.totalorder %s31, 1
      %p105 = scmp.ne.s32.totalorder %s100, %s102
      %p106 = scmp.eq.s32.totalorder %s31, 0
      %p107 = por %p105, %p106
      %p108 = scmp.ne.s32.totalorder %s100, %s102
      %p109 = scmp.eq.s32.totalorder %s36, 1
      %p110 = por %p108, %p109
      %p111 = scmp.ne.s32.totalorder %s102, %s103
      %p112 = scmp.eq.s32.totalorder %s36, 0
      %p113 = por %p111, %p112
      %p114 = scmp.ne.s32.totalorder %s102, %s103
      %p115 = scmp.eq.s32.totalorder %s37, 1
      %p116 = por %p114, %p115
      %p118 = scmp.ne.s32.totalorder %s103, %s117
      %p119 = scmp.eq.s32.totalorder %s37, 0
      %p120 = por %p118, %p119
      %s122 = sadd.s32 %s121, 1
      %p125 = scmp.eq.s32.totalorder %s31, 1
      %p126 = scmp.ne.s32.totalorder %s121, %s123
      %p127 = scmp.eq.s32.totalorder %s31, 0
      %p128 = por %p126, %p127
      %p129 = scmp.ne.s32.totalorder %s121, %s123
      %p130 = scmp.eq.s32.totalorder %s36, 1
      %p131 = por %p129, %p130
      %p132 = scmp.ne.s32.totalorder %s123, %s124
      %p133 = scmp.eq.s32.totalorder %s36, 0
      %p134 = por %p132, %p133
      %p135 = scmp.ne.s32.totalorder %s123, %s124
      %p136 = scmp.eq.s32.totalorder %s37, 1
      %p137 = por %p135, %p136
      %p139 = scmp.ne.s32.totalorder %s124, %s138
      %p140 = scmp.eq.s32.totalorder %s37, 0
      %p141 = por %p139, %p140
      %s143 = sadd.s32 %s142, 1
      %p146 = scmp.eq.s32.totalorder %s31, 1
      %p147 = scmp.ne.s32.totalorder %s142, %s144
      %p148 = scmp.eq.s32.totalorder %s31, 0
      %p149 = por %p147, %p148
      %p150 = scmp.ne.s32.totalorder %s142, %s144
      %p151 = scmp.eq.s32.totalorder %s36, 1
      %p152 = por %p150, %p151
      %p153 = scmp.ne.s32.totalorder %s144, %s145
      %p154 = scmp.eq.s32.totalorder %s36, 0
      %p155 = por %p153, %p154
      %p156 = scmp.ne.s32.totalorder %s144, %s145
      %p157 = scmp.eq.s32.totalorder %s37, 1
      %p158 = por %p156, %p157
      %p160 = scmp.ne.s32.totalorder %s145, %s159
      %p161 = scmp.eq.s32.totalorder %s37, 0
      %p162 = por %p160, %p161
      %s164 = sadd.s32 %s163, 1
      %p167 = scmp.eq.s32.totalorder %s31, 1
      %p168 = scmp.ne.s32.totalorder %s163, %s165
      %p169 = scmp.eq.s32.totalorder %s31, 0
      %p170 = por %p168, %p169
      %p171 = scmp.ne.s32.totalorder %s163, %s165
      %p172 = scmp.eq.s32.totalorder %s36, 1
      %p173 = por %p171, %p172
      %p174 = scmp.ne.s32.totalorder %s165, %s166
      %p175 = scmp.eq.s32.totalorder %s36, 0
      %p176 = por %p174, %p175
      %p177 = scmp.ne.s32.totalorder %s165, %s166
      %p178 = scmp.eq.s32.totalorder %s37, 1
      %p179 = por %p177, %p178
      %p181 = scmp.ne.s32.totalorder %s166, %s180
      %p182 = scmp.eq.s32.totalorder %s37, 0
      %p183 = por %p181, %p182
      %s185 = sadd.s32 %s184, 1
      %p188 = scmp.eq.s32.totalorder %s31, 1
      %p189 = scmp.ne.s32.totalorder %s184, %s186
      %p190 = scmp.eq.s32.totalorder %s31, 0
      %p191 = por %p189, %p190
      %p192 = scmp.ne.s32.totalorder %s184, %s186
      %p193 = scmp.eq.s32.totalorder %s36, 1
      %p194 = por %p192, %p193
      %p195 = scmp.ne.s32.totalorder %s186, %s187
      %p196 = scmp.eq.s32.totalorder %s36, 0
      %p197 = por %p195, %p196
      %p198 = scmp.ne.s32.totalorder %s186, %s187
      %p199 = scmp.eq.s32.totalorder %s37, 1
      %p200 = por %p198, %p199
      %p202 = scmp.ne.s32.totalorder %s187, %s201
      %p203 = scmp.eq.s32.totalorder %s37, 0
      %p204 = por %p202, %p203
      %s206 = sadd.s32 %s205, 1
      %p209 = scmp.eq.s32.totalorder %s31, 1
      %p210 = scmp.ne.s32.totalorder %s205, %s207
      %p211 = scmp.eq.s32.totalorder %s31, 0
      %p212 = por %p210, %p211
      %p213 = scmp.ne.s32.totalorder %s205, %s207
      %p214 = scmp.eq.s32.totalorder %s36, 1
      %p215 = por %p213, %p214
      %p216 = scmp.ne.s32.totalorder %s207, %s208
      %p217 = scmp.eq.s32.totalorder %s36, 0
      %p218 = por %p216, %p217
      %p219 = scmp.ne.s32.totalorder %s207, %s208
      %p220 = scmp.eq.s32.totalorder %s37, 1
      %p221 = por %p219, %p220
      %p223 = scmp.ne.s32.totalorder %s208, %s222
      %p224 = scmp.eq.s32.totalorder %s37, 0
      %p225 = por %p223, %p224
      %s227 = sadd.s32 %s226, 1
      %p230 = scmp.eq.s32.totalorder %s31, 1
      %p231 = scmp.ne.s32.totalorder %s226, %s228
      %p232 = scmp.eq.s32.totalorder %s31, 0
      %p233 = por %p231, %p232
      %p234 = scmp.ne.s32.totalorder %s226, %s228
      %p235 = scmp.eq.s32.totalorder %s36, 1
      %p236 = por %p234, %p235
      %p237 = scmp.ne.s32.totalorder %s228, %s229
      %p238 = scmp.eq.s32.totalorder %s36, 0
      %p239 = por %p237, %p238
      %p240 = scmp.ne.s32.totalorder %s228, %s229
      %p241 = scmp.eq.s32.totalorder %s37, 1
      %p242 = por %p240, %p241
      %p244 = scmp.ne.s32.totalorder %s229, %s243
      %p245 = scmp.eq.s32.totalorder %s37, 0
      %p246 = por %p244, %p245
      %s248 = sadd.s32 %s247, 1
      %p251 = scmp.eq.s32.totalorder %s31, 1
      %p252 = scmp.ne.s32.totalorder %s247, %s249
      %p253 = scmp.eq.s32.totalorder %s31, 0
      %p254 = por %p252, %p253
      %p255 = scmp.ne.s32.totalorder %s247, %s249
      %p256 = scmp.eq.s32.totalorder %s36, 1
      %p257 = por %p255, %p256
      %p258 = scmp.ne.s32.totalorder %s249, %s250
      %p259 = scmp.eq.s32.totalorder %s36, 0
      %p260 = por %p258, %p259
      %p261 = scmp.ne.s32.totalorder %s249, %s250
      %p262 = scmp.eq.s32.totalorder %s37, 1
      %p263 = por %p261, %p262
      %p265 = scmp.ne.s32.totalorder %s250, %s264
      %p266 = scmp.eq.s32.totalorder %s37, 0
      %p267 = por %p265, %p266
      %s269 = sadd.s32 %s268, 1
      %p272 = scmp.eq.s32.totalorder %s31, 1
      %p273 = scmp.ne.s32.totalorder %s268, %s270
      %p274 = scmp.eq.s32.totalorder %s31, 0
      %p275 = por %p273, %p274
      %p276 = scmp.ne.s32.totalorder %s268, %s270
      %p277 = scmp.eq.s32.totalorder %s36, 1
      %p278 = por %p276, %p277
      %p279 = scmp.ne.s32.totalorder %s270, %s271
      %p280 = scmp.eq.s32.totalorder %s36, 0
      %p281 = por %p279, %p280
      %p282 = scmp.ne.s32.totalorder %s270, %s271
      %p283 = scmp.eq.s32.totalorder %s37, 1
      %p284 = por %p282, %p283
      %p286 = scmp.ne.s32.totalorder %s271, %s285
      %p287 = scmp.eq.s32.totalorder %s37, 0
      %p288 = por %p286, %p287
      %s290 = sadd.s32 %s289, 1
      %p293 = scmp.eq.s32.totalorder %s31, 1
      %p294 = scmp.ne.s32.totalorder %s289, %s291
      %p295 = scmp.eq.s32.totalorder %s31, 0
      %p296 = por %p294, %p295
      %p297 = scmp.ne.s32.totalorder %s289, %s291
      %p298 = scmp.eq.s32.totalorder %s36, 1
      %p299 = por %p297, %p298
      %p300 = scmp.ne.s32.totalorder %s291, %s292
      %p301 = scmp.eq.s32.totalorder %s36, 0
      %p302 = por %p300, %p301
      %p303 = scmp.ne.s32.totalorder %s291, %s292
      %p304 = scmp.eq.s32.totalorder %s37, 1
      %p305 = por %p303, %p304
      %p307 = scmp.ne.s32.totalorder %s292, %s306
      %p308 = scmp.eq.s32.totalorder %s37, 0
      %p309 = por %p307, %p308
      %s311 = sadd.s32 %s310, 1
      %p314 = scmp.eq.s32.totalorder %s31, 1
      %p315 = scmp.ne.s32.totalorder %s310, %s312
      %p316 = scmp.eq.s32.totalorder %s31, 0
      %p317 = por %p315, %p316
      %p318 = scmp.ne.s32.totalorder %s310, %s312
      %p319 = scmp.eq.s32.totalorder %s36, 1
      %p320 = por %p318, %p319
      %p321 = scmp.ne.s32.totalorder %s312, %s313
      %p322 = scmp.eq.s32.totalorder %s36, 0
      %p323 = por %p321, %p322
      %p324 = scmp.ne.s32.totalorder %s312, %s313
      %p325 = scmp.eq.s32.totalorder %s37, 1
      %p326 = por %p324, %p325
      %p328 = scmp.ne.s32.totalorder %s313, %s327
      %p329 = scmp.eq.s32.totalorder %s37, 0
      %p330 = por %p328, %p329
      %s332 = sadd.s32 %s331, 1
      %p335 = scmp.eq.s32.totalorder %s31, 1
      %p336 = scmp.ne.s32.totalorder %s331, %s333
      %p337 = scmp.eq.s32.totalorder %s31, 0
      %p338 = por %p336, %p337
      %p339 = scmp.ne.s32.totalorder %s331, %s333
      %p340 = scmp.eq.s32.totalorder %s36, 1
      %p341 = por %p339, %p340
      %p342 = scmp.ne.s32.totalorder %s333, %s334
      %p343 = scmp.eq.s32.totalorder %s36, 0
      %p344 = por %p342, %p343
      %p345 = scmp.ne.s32.totalorder %s333, %s334
      %p346 = scmp.eq.s32.totalorder %s37, 1
      %p347 = por %p345, %p346
      %p349 = scmp.ne.s32.totalorder %s334, %s348
      %p350 = scmp.eq.s32.totalorder %s37, 0
      %p351 = por %p349, %p350
      %s353 = sadd.s32 %s352, 1
      %p356 = scmp.eq.s32.totalorder %s31, 1
      %p357 = scmp.ne.s32.totalorder %s352, %s354
      %p358 = scmp.eq.s32.totalorder %s31, 0
      %p359 = por %p357, %p358
      %p360 = scmp.ne.s32.totalorder %s352, %s354
      %p361 = scmp.eq.s32.totalorder %s36, 1
      %p362 = por %p360, %p361
      %p363 = scmp.ne.s32.totalorder %s354, %s355
      %p364 = scmp.eq.s32.totalorder %s36, 0
      %p365 = por %p363, %p364
      %p366 = scmp.ne.s32.totalorder %s354, %s355
      %p367 = scmp.eq.s32.totalorder %s37, 1
      %p368 = por %p366, %p367
      %p370 = scmp.ne.s32.totalorder %s355, %s369
      %p371 = scmp.eq.s32.totalorder %s37, 0
      %p372 = por %p370, %p371
      %s374 = sadd.s32 %s373, 1
      %p377 = scmp.eq.s32.totalorder %s31, 1
      %p378 = scmp.ne.s32.totalorder %s373, %s375
      %p379 = scmp.eq.s32.totalorder %s31, 0
      %p380 = por %p378, %p379
      %p381 = scmp.ne.s32.totalorder %s373, %s375
      %p382 = scmp.eq.s32.totalorder %s36, 1
      %p383 = por %p381, %p382
      %p384 = scmp.ne.s32.totalorder %s375, %s376
      %p385 = scmp.eq.s32.totalorder %s36, 0
      %p386 = por %p384, %p385
      %p387 = scmp.ne.s32.totalorder %s375, %s376
      %p388 = scmp.eq.s32.totalorder %s37, 1
      %p389 = por %p387, %p388
      %p391 = scmp.ne.s32.totalorder %s376, %s390
      %p392 = scmp.eq.s32.totalorder %s37, 0
      %p393 = por %p391, %p392
      %s395 = sadd.s32 %s394, 1
      %p398 = scmp.eq.s32.totalorder %s31, 1
      %p399 = scmp.ne.s32.totalorder %s394, %s396
      %p400 = scmp.eq.s32.totalorder %s31, 0
      %p401 = por %p399, %p400
      %p402 = scmp.ne.s32.totalorder %s394, %s396
      %p403 = scmp.eq.s32.totalorder %s36, 1
      %p404 = por %p402, %p403
      %p405 = scmp.ne.s32.totalorder %s396, %s397
      %p406 = scmp.eq.s32.totalorder %s36, 0
      %p407 = por %p405, %p406
      %p408 = scmp.ne.s32.totalorder %s396, %s397
      %p409 = scmp.eq.s32.totalorder %s37, 1
      %p410 = por %p408, %p409
      %p412 = scmp.ne.s32.totalorder %s397, %s411
      %p413 = scmp.eq.s32.totalorder %s37, 0
      %p414 = por %p412, %p413
      %s416 = sadd.s32 %s415, 1
      %p419 = scmp.eq.s32.totalorder %s31, 1
      %p420 = scmp.ne.s32.totalorder %s415, %s417
      %p421 = scmp.eq.s32.totalorder %s31, 0
      %p422 = por %p420, %p421
      %p423 = scmp.ne.s32.totalorder %s415, %s417
      %p424 = scmp.eq.s32.totalorder %s36, 1
      %p425 = por %p423, %p424
      %p426 = scmp.ne.s32.totalorder %s417, %s418
      %p427 = scmp.eq.s32.totalorder %s36, 0
      %p428 = por %p426, %p427
      %p429 = scmp.ne.s32.totalorder %s417, %s418
      %p430 = scmp.eq.s32.totalorder %s37, 1
      %p431 = por %p429, %p430
      %p433 = scmp.ne.s32.totalorder %s418, %s432
      %p434 = scmp.eq.s32.totalorder %s37, 0
      %p435 = por %p433, %p434
      %s437 = sadd.s32 %s436, 1
      %p440 = scmp.eq.s32.totalorder %s31, 1
      %p441 = scmp.ne.s32.totalorder %s436, %s438
      %p442 = scmp.eq.s32.totalorder %s31, 0
      %p443 = por %p441, %p442
      %p444 = scmp.ne.s32.totalorder %s436, %s438
      %p445 = scmp.eq.s32.totalorder %s36, 1
      %p446 = por %p444, %p445
      %p447 = scmp.ne.s32.totalorder %s438, %s439
      %p448 = scmp.eq.s32.totalorder %s36, 0
      %p449 = por %p447, %p448
      %p450 = scmp.ne.s32.totalorder %s438, %s439
      %p451 = scmp.eq.s32.totalorder %s37, 1
      %p452 = por %p450, %p451
      %p454 = scmp.ne.s32.totalorder %s439, %s453
      %p455 = scmp.eq.s32.totalorder %s37, 0
      %p456 = por %p454, %p455
      %s458 = sadd.s32 %s457, 1
      %p461 = scmp.eq.s32.totalorder %s31, 1
      %p462 = scmp.ne.s32.totalorder %s457, %s459
      %p463 = scmp.eq.s32.totalorder %s31, 0
      %p464 = por %p462, %p463
      %p465 = scmp.ne.s32.totalorder %s457, %s459
      %p466 = scmp.eq.s32.totalorder %s36, 1
      %p467 = por %p465, %p466
      %p468 = scmp.ne.s32.totalorder %s459, %s460
      %p469 = scmp.eq.s32.totalorder %s36, 0
      %p470 = por %p468, %p469
      %p471 = scmp.ne.s32.totalorder %s459, %s460
      %p472 = scmp.eq.s32.totalorder %s37, 1
      %p473 = por %p471, %p472
      %p475 = scmp.ne.s32.totalorder %s460, %s474
      %p476 = scmp.eq.s32.totalorder %s37, 0
      %p477 = por %p475, %p476
      %s478 = ssub.s32 %s38, %s50
      %p479 = scmp.eq.s32.totalorder %s478, 0
      %s481 = sadd.s32 %s480, 1
      %s482 = scalar_select %p479, %s480, %s481
      %p485 = pneg %p479
      %p486 = scmp.eq.s32.totalorder %s31, 1
      %p487 = por %p485, %p486
      %p488 = scmp.ne.s32.totalorder %s480, %s483
      %p489 = scmp.eq.s32.totalorder %s31, 0
      %p490 = por %p488, %p489
      %p491 = scmp.ne.s32.totalorder %s480, %s483
      %p492 = scmp.eq.s32.totalorder %s36, 1
      %p493 = por %p491, %p492
      %p494 = scmp.ne.s32.totalorder %s483, %s484
      %p495 = scmp.eq.s32.totalorder %s36, 0
      %p496 = por %p494, %p495
      %p497 = scmp.ne.s32.totalorder %s483, %s484
      %p498 = scmp.eq.s32.totalorder %s37, 1
      %p499 = por %p497, %p498
      %p501 = scmp.ne.s32.totalorder %s484, %s500
      %p502 = scmp.eq.s32.totalorder %s37, 0
      %p503 = por %p501, %p502
      %p504 = scmp.le.s32.totalorder 1, %s31
      %p505 = scmp.lt.s32.totalorder %s31, 3
      %p506 = pnand %p504, %p505
      %p507 = pneg %p506
      // Predicated region
      $region9: #{tpu_custom_call.1} parent=5 // pred_check
        _
      $region10: #{tpu_custom_call.1} parent=5 // pred_check_branch
        %509 = sbr.rel (%p506) target = $region12
      $region11: #{tpu_custom_call.1} parent=5 // pred_region
        %s510 = ssub.s32 %s31, 1
        // Predicated region
        $region13: #{tpu_custom_call.1} parent=11 // pred_check
          %p511 = pneg %p92
        $region14: #{tpu_custom_call.1} parent=11 // pred_check_branch
          %513 = sbr.rel (%p511) target = $region16
        $region15: #{tpu_custom_call.1} parent=11 // pred_region
          _
        $region16: #{tpu_custom_call.1} parent=11 // pred_fallthru
          _
        // Predicated region
        $region17: #{tpu_custom_call.1} parent=11 // pred_check
          %p514 = pneg %p113
        $region18: #{tpu_custom_call.1} parent=11 // pred_check_branch
          %516 = sbr.rel (%p514) target = $region20
        $region19: #{tpu_custom_call.1} parent=11 // pred_region
          %s518 = ssub.s32 16, 16
          %519 = vsyncadd [#allocation5], %s518
          %s521 = sshll.u32 [#allocation4], 4
          %s522 = int_to_ptr.vmem [resolvable:$true] %s521
          %524 = dma.hbm_to_vmem [thread:$0]  %s2, 16, %s522, [#allocation5]
        $region20: #{tpu_custom_call.1} parent=11 // pred_fallthru
          _
        // Predicated region
        $region21: #{tpu_custom_call.1} parent=11 // pred_check
          %p525 = pneg %p134
        $region22: #{tpu_custom_call.1} parent=11 // pred_check_branch
          %527 = sbr.rel (%p525) target = $region24
        $region23: #{tpu_custom_call.1} parent=11 // pred_region
          %s529 = ssub.s32 16, 16
          %530 = vsyncadd [#allocation8], %s529
          %s532 = sshll.u32 [#allocation7], 4
          %s533 = int_to_ptr.vmem [resolvable:$true] %s532
          %535 = dma.hbm_to_vmem [thread:$0]  %s3, 16, %s533, [#allocation8]
        $region24: #{tpu_custom_call.1} parent=11 // pred_fallthru
          _
        // Predicated region
        $region25: #{tpu_custom_call.1} parent=11 // pred_check
          %p536 = pneg %p155
        $region26: #{tpu_custom_call.1} parent=11 // pred_check_branch
          %538 = sbr.rel (%p536) target = $region28
        $region27: #{tpu_custom_call.1} parent=11 // pred_region
          _
        $region28: #{tpu_custom_call.1} parent=11 // pred_fallthru
          _
        // Predicated region
        $region29: #{tpu_custom_call.1} parent=11 // pred_check
          %p539 = pneg %p176
        $region30: #{tpu_custom_call.1} parent=11 // pred_check_branch
          %541 = sbr.rel (%p539) target = $region32
        $region31: #{tpu_custom_call.1} parent=11 // pred_region
          _
        $region32: #{tpu_custom_call.1} parent=11 // pred_fallthru
          _
        // Predicated region
        $region33: #{tpu_custom_call.1} parent=11 // pred_check
          %p542 = pneg %p197
        $region34: #{tpu_custom_call.1} parent=11 // pred_check_branch
          %544 = sbr.rel (%p542) target = $region36
        $region35: #{tpu_custom_call.1} parent=11 // pred_region
          _
        $region36: #{tpu_custom_call.1} parent=11 // pred_fallthru
          _
        // Predicated region
        $region37: #{tpu_custom_call.1} parent=11 // pred_check
          %p545 = pneg %p218
        $region38: #{tpu_custom_call.1} parent=11 // pred_check_branch
          %547 = sbr.rel (%p545) target = $region40
        $region39: #{tpu_custom_call.1} parent=11 // pred_region
          _
        $region40: #{tpu_custom_call.1} parent=11 // pred_fallthru
          _
        // Predicated region
        $region41: #{tpu_custom_call.1} parent=11 // pred_check
          %p548 = pneg %p239
        $region42: #{tpu_custom_call.1} parent=11 // pred_check_branch
          %550 = sbr.rel (%p548) target = $region44
        $region43: #{tpu_custom_call.1} parent=11 // pred_region
          _
        $region44: #{tpu_custom_call.1} parent=11 // pred_fallthru
          _
        // Predicated region
        $region45: #{tpu_custom_call.1} parent=11 // pred_check
          %p551 = pneg %p260
        $region46: #{tpu_custom_call.1} parent=11 // pred_check_branch
          %553 = sbr.rel (%p551) target = $region48
        $region47: #{tpu_custom_call.1} parent=11 // pred_region
          _
        $region48: #{tpu_custom_call.1} parent=11 // pred_fallthru
          _
        // Predicated region
        $region49: #{tpu_custom_call.1} parent=11 // pred_check
          %p554 = pneg %p281
        $region50: #{tpu_custom_call.1} parent=11 // pred_check_branch
          %556 = sbr.rel (%p554) target = $region52
        $region51: #{tpu_custom_call.1} parent=11 // pred_region
          _
        $region52: #{tpu_custom_call.1} parent=11 // pred_fallthru
          _
        // Predicated region
        $region53: #{tpu_custom_call.1} parent=11 // pred_check
          %p557 = pneg %p302
        $region54: #{tpu_custom_call.1} parent=11 // pred_check_branch
          %559 = sbr.rel (%p557) target = $region56
        $region55: #{tpu_custom_call.1} parent=11 // pred_region
          _
        $region56: #{tpu_custom_call.1} parent=11 // pred_fallthru
          _
        // Predicated region
        $region57: #{tpu_custom_call.1} parent=11 // pred_check
          %p560 = pneg %p323
        $region58: #{tpu_custom_call.1} parent=11 // pred_check_branch
          %562 = sbr.rel (%p560) target = $region60
        $region59: #{tpu_custom_call.1} parent=11 // pred_region
          _
        $region60: #{tpu_custom_call.1} parent=11 // pred_fallthru
          _
        // Predicated region
        $region61: #{tpu_custom_call.1} parent=11 // pred_check
          %p563 = pneg %p344
        $region62: #{tpu_custom_call.1} parent=11 // pred_check_branch
          %565 = sbr.rel (%p563) target = $region64
        $region63: #{tpu_custom_call.1} parent=11 // pred_region
          _
        $region64: #{tpu_custom_call.1} parent=11 // pred_fallthru
          _
        // Predicated region
        $region65: #{tpu_custom_call.1} parent=11 // pred_check
          %p566 = pneg %p365
        $region66: #{tpu_custom_call.1} parent=11 // pred_check_branch
          %568 = sbr.rel (%p566) target = $region68
        $region67: #{tpu_custom_call.1} parent=11 // pred_region
          _
        $region68: #{tpu_custom_call.1} parent=11 // pred_fallthru
          _
        // Predicated region
        $region69: #{tpu_custom_call.1} parent=11 // pred_check
          %p569 = pneg %p386
        $region70: #{tpu_custom_call.1} parent=11 // pred_check_branch
          %571 = sbr.rel (%p569) target = $region72
        $region71: #{tpu_custom_call.1} parent=11 // pred_region
          _
        $region72: #{tpu_custom_call.1} parent=11 // pred_fallthru
          _
        // Predicated region
        $region73: #{tpu_custom_call.1} parent=11 // pred_check
          %p572 = pneg %p407
        $region74: #{tpu_custom_call.1} parent=11 // pred_check_branch
          %574 = sbr.rel (%p572) target = $region76
        $region75: #{tpu_custom_call.1} parent=11 // pred_region
          _
        $region76: #{tpu_custom_call.1} parent=11 // pred_fallthru
          _
        // Predicated region
        $region77: #{tpu_custom_call.1} parent=11 // pred_check
          %p575 = pneg %p428
        $region78: #{tpu_custom_call.1} parent=11 // pred_check_branch
          %577 = sbr.rel (%p575) target = $region80
        $region79: #{tpu_custom_call.1} parent=11 // pred_region
          _
        $region80: #{tpu_custom_call.1} parent=11 // pred_fallthru
          _
        // Predicated region
        $region81: #{tpu_custom_call.1} parent=11 // pred_check
          %p578 = pneg %p449
        $region82: #{tpu_custom_call.1} parent=11 // pred_check_branch
          %580 = sbr.rel (%p578) target = $region84
        $region83: #{tpu_custom_call.1} parent=11 // pred_region
          _
        $region84: #{tpu_custom_call.1} parent=11 // pred_fallthru
          _
        // Predicated region
        $region85: #{tpu_custom_call.1} parent=11 // pred_check
          %p581 = pneg %p470
        $region86: #{tpu_custom_call.1} parent=11 // pred_check_branch
          %583 = sbr.rel (%p581) target = $region88
        $region87: #{tpu_custom_call.1} parent=11 // pred_region
          _
        $region88: #{tpu_custom_call.1} parent=11 // pred_fallthru
          _
      $region12: #{tpu_custom_call.1} parent=5 // pred_fallthru
        _
      %p584 = scmp.lt.s32.totalorder %s31, 2
      // Predicated region
      $region89: #{tpu_custom_call.1} parent=5 // pred_check
        %p585 = pneg %p584
      $region90: #{tpu_custom_call.1} parent=5 // pred_check_branch
        %587 = sbr.rel (%p585) target = $region92
      $region91: #{tpu_custom_call.1} parent=5 // pred_region
        // Predicated region
        $region93: #{tpu_custom_call.1} parent=91 // pred_check
          %p588 = pneg %p65
        $region94: #{tpu_custom_call.1} parent=91 // pred_check_branch
          %590 = sbr.rel (%p588) target = $region96
        $region95: #{tpu_custom_call.1} parent=91 // pred_region
          %p591 = scmp.lt.s32.totalorder %s38, 1
          %s592 = scalar_select %p591, %s38, 1
          %p593 = scmp.lt.s32.totalorder %s39, 0
          %s594 = scalar_select %p593, %s39, 0
          %s595 = sadd.s32 %s594, %s592
          %s596 = smul.addr %s595, 8
          %s597 = scalar_lea.vmem %s0, %s596
        $region96: #{tpu_custom_call.1} parent=91 // pred_fallthru
          _
      $region92: #{tpu_custom_call.1} parent=5 // pred_fallthru
        _
      %p598 = scmp.le.s32.totalorder 1, %s31
      %p599 = scmp.lt.s32.totalorder %s31, 3
      %p600 = pnand %p598, %p599
      %p601 = pneg %p600
      // Predicated region
      $region97: #{tpu_custom_call.1} parent=5 // pred_check
        _
      $region98: #{tpu_custom_call.1} parent=5 // pred_check_branch
        %603 = sbr.rel (%p600) target = $region100
      $region99: #{tpu_custom_call.1} parent=5 // pred_region
        %s604 = ssub.s32 %s31, 1
        // Predicated region
        $region101: #{tpu_custom_call.1} parent=99 // pred_check
          %p605 = pneg %p113
        $region102: #{tpu_custom_call.1} parent=99 // pred_check_branch
          %607 = sbr.rel (%p605) target = $region104
        $region103: #{tpu_custom_call.1} parent=99 // pred_region
          %608 = dma.done [#allocation5], 16
        $region104: #{tpu_custom_call.1} parent=99 // pred_fallthru
          _
        // Predicated region
        $region105: #{tpu_custom_call.1} parent=99 // pred_check
          %p609 = pneg %p134
        $region106: #{tpu_custom_call.1} parent=99 // pred_check_branch
          %611 = sbr.rel (%p609) target = $region108
        $region107: #{tpu_custom_call.1} parent=99 // pred_region
          %612 = dma.done [#allocation8], 16
        $region108: #{tpu_custom_call.1} parent=99 // pred_fallthru
          _
        %p613 = scmp.lt.s32.totalorder %s40, 1
        %s614 = scalar_select %p613, %s40, 1
        %p615 = scmp.lt.s32.totalorder %s41, 0
        %s616 = scalar_select %p615, %s41, 0
        %s617 = sadd.s32 %s616, %s614
        %s618 = smul.addr %s617, 8
        %s619 = scalar_lea.vmem %s0, %s618
        %p620 = pneg %p71
        %p621 = pneg %p68
        %p622 = pneg %p92
        %p623 = pneg %p89
        %p624 = pneg %p113
        %p625 = pneg %p110
        %p626 = pneg %p134
        %p627 = pneg %p131
        %p628 = pneg %p155
        %p629 = pneg %p152
        %p630 = pneg %p176
        %p631 = pneg %p173
        %p632 = pneg %p197
        %p633 = pneg %p194
        %p634 = pneg %p218
        %p635 = pneg %p215
        %p636 = pneg %p239
        %p637 = pneg %p236
        %p638 = pneg %p260
        %p639 = pneg %p257
        %p640 = pneg %p281
        %p641 = pneg %p278
        %p642 = pneg %p302
        %p643 = pneg %p299
        %p644 = pneg %p323
        %p645 = pneg %p320
        %p646 = pneg %p344
        %p647 = pneg %p341
        %p648 = pneg %p365
        %p649 = pneg %p362
        %p650 = pneg %p386
        %p651 = pneg %p383
        %p652 = pneg %p407
        %p653 = pneg %p404
        %p654 = pneg %p428
        %p655 = pneg %p425
        %p656 = pneg %p449
        %p657 = pneg %p446
        %p658 = pneg %p470
        %p659 = pneg %p467
        %p660 = pneg %p496
        %p661 = pneg %p493
        %s662 = sand.u32 %s483, 1
        %s663 = scalar_lea.sflag [#allocation6], %s662
        %s664 = sand.u32 %s483, 1
        %s665 = scalar_lea.vmem [#allocation9], %s664
        %p666 = scmp.lt.s32.totalorder %s40, 1
        %s667 = scalar_select %p666, %s40, 1
        %p668 = scmp.lt.s32.totalorder %s41, 0
        %s669 = scalar_select %p668, %s41, 0
        %s670 = sadd.s32 %s669, %s667
        %s671 = smul.addr %s670, 8
        %s672 = scalar_lea.vmem %s0, %s671
        %v674 = vld [vmem:[%s672] sm:$0xff]
        %v675 = vpack.c.bf16 %v674, %v674
        %v676 = vld [vmem:[%s1] sm:$0xf]
        %v677 = vld [vmem:[%s1 + $0x4] sm:$0xf]
        %v678 = vld [vmem:[%s1 + $0x8] sm:$0xf]
        %v679 = vld [vmem:[%s1 + $0xc] sm:$0xf]
        %v680 = vld [vmem:[#allocation4] sm:$0x1]
        %v682 = vlaneseq
        %v683 = vshrl.u32 %v682, 7
        %v684 = vsub.s32 0, %v683
        %v685 = vrot.slane %v680, %v684
        %v691 = vunpack.c.l.b16 %v676
        %v692 = vunpack.c.l.b16 %v677
        %v693 = vunpack.c.l.b16 %v678
        %v694 = vunpack.c.l.b16 %v679
        %v695 = vpack.c.b16 %v692, %v691
        %v696 = vpack.c.b16 %v694, %v693
        %vm699 = vcmask 261120
        %v701 = vsel %vm699, %v675, 0
        %703 = vmatprep.subr.bf16.mxu0 0
        %704 = vmatpush1.bf16.msra.mxu0 %v695
        %705 = vmatprep.subr.bf16.mxu0 0
        %706 = vmatpush1.bf16.msra.mxu0 %v696
        %707 = vmatprep.subr.bf16.mxu0 0
        %708 = vmatpush1.bf16.msra.mxu0 0
        %709 = vmatprep.subr.bf16.mxu0 0
        %710 = vmatpush1.bf16.msra.mxu0 0
        %711 = vmatprep.subr.bf16.mxu0 0
        %712 = vmatpush1.bf16.msra.mxu0 0
        %713 = vmatprep.subr.bf16.mxu0 0
        %714 = vmatpush1.bf16.msra.mxu0 0
        %715 = vmatprep.subr.bf16.mxu0 0
        %716 = vmatpush1.bf16.msra.mxu0 0
        %717 = vmatprep.subr.bf16.mxu0 0
        %718 = vmatpush1.bf16.msra.mxu0 0
        %719 = vmatprep.subr.bf16.mxu0 0
        %720 = vmatpush1.bf16.msra.mxu0 0
        %721 = vmatprep.subr.bf16.mxu0 0
        %722 = vmatpush1.bf16.msra.mxu0 0
        %723 = vmatprep.subr.bf16.mxu0 0
        %724 = vmatpush1.bf16.msra.mxu0 0
        %725 = vmatprep.subr.bf16.mxu0 0
        %726 = vmatpush1.bf16.msra.mxu0 0
        %727 = vmatprep.subr.bf16.mxu0 0
        %728 = vmatpush1.bf16.msra.mxu0 0
        %729 = vmatprep.subr.bf16.mxu0 0
        %730 = vmatpush1.bf16.msra.mxu0 0
        %731 = vmatprep.subr.bf16.mxu0 0
        %732 = vmatpush1.bf16.msra.mxu0 0
        %733 = vmatprep.subr.bf16.mxu0 0
        %734 = vmatpush1.bf16.msra.mxu0 0
        %735 = vmatprep.mubr.bf16.mxu0 0
        %736 = vmatmul.mubr.bf16.gmra.mrb[0].mxu0 %v701
        %v737 = vpop.f32.mrb[0].mxu0
        %v738 = vadd.f32 %v685, %v737
        %v739 = vpop.f32.mrb[0].mxu0
        %v740 = vpop.f32.mrb[0].mxu0
        %v741 = vpop.f32.mrb[0].mxu0
        %742 = vdwg.mxu0
        %v743 = vmul.f32 %v738, 0.5
        %v744 = vmul.f32 %v738, 0.70710677
        %v745 = vand.u32 2147483647, %v744
        %v746 = vmul.f32 %v745, 0.3275911
        %v747 = vadd.f32 %v746, 1.0
        %v748 = vrcp.pop %v747
        %v749 = vmul.f32 %v748, 1.0614054
        %v750 = vadd.f32 %v749, -1.4531521
        %v751 = vmul.f32 %v750, %v748
        %v752 = vadd.f32 %v751, 1.4214138
        %v753 = vmul.f32 %v752, %v748
        %v754 = vadd.f32 %v753, -0.28449672
        %v755 = vmul.f32 %v754, %v748
        %v756 = vadd.f32 %v755, 0.2548296
        %v757 = vmul.f32 %v756, %v748
        %v758 = vsub.f32 0.0, %v745
        %v759 = vmul.f32 %v758, %v745
        %v760 = vmul.f32 %v759, 1.442695
        %v761 = vpow.pop %v760
        %v762 = vmul.f32 %v757, %v761
        %v763 = vsub.f32 1.0, %v762
        %vm764 = vcmp.ge.f32.partialorder %v744, 0.0
        %v765 = vsub.f32 0.0, %v763
        %v766 = vsel %vm764, %v763, %v765
        %v767 = vadd.f32 %v766, 1.0
        %v768 = vmul.f32 %v743, %v767
        %v769 = vlaneseq
        %v770 = vshrl.u32 %v769, 7
        %s771 = smul.u32 %s41, 8
        %v772 = vstv %s771
        %v773 = vadd.s32 %v770, %v772
        %vm774 = vcmp.lt.s32.totalorder %v773, 7
        %v775 = vsel %vm774, 1, 0
        %vm776 = vcmp.eq.s32.totalorder %v775, 1
        %v777 = vsel %vm776, %v768, 0.0
        %s778 = sadd.s32 %s771, 8
        %s779 = scalar_lea.vmem [#allocation2], %s778
        %780 = vst.msk [vmem:[%s779] sm:$0xff] %vm699, %v777
        %p781 = scmp.eq.s32.totalorder %s41, 0
        // Predicated region
        $region109: #{tpu_custom_call.1} parent=99 // pred_check
          %p782 = pneg %p781
        $region110: #{tpu_custom_call.1} parent=99 // pred_check_branch
          %784 = sbr.rel (%p782) target = $region112
        $region111: #{tpu_custom_call.1} parent=99 // pred_region
          %vm785 = vcmp.eq.s32.totalorder %v770, 0
          %v786 = vld [vmem:[#allocation7] sm:$0x1]
          %v787 = vsel %vm785, 1, 0
          %vm788 = vcmp.eq.s32.totalorder %v787, 1
          %v790 = vlaneseq
          %v791 = vshrl.u32 %v790, 7
          %v792 = vsub.s32 0, %v791
          %v793 = vrot.slane %v786, %v792
          %v795 = vsel %vm788, %v793, 0.0
          %796 = vst.msk [vmem:[#allocation2] sm:$0xff] %vm699, %v795
          %v797 = vld [vmem:[#allocation2] sm:$0xff]
          %v798 = vld [vmem:[#allocation2 + $0x8] sm:$0xff]
          %v799 = vld [vmem:[%s4] sm:$0x1]
          %v800 = vld [vmem:[%s5] sm:$0x1]
          %v801 = vsel %vm699, %v797, 0.0
          %802 = vadd.xlane.f32.xlu0 %v801
          %v803 = vpop.xlane.xlu0 %802
          %v804 = vsel %vm699, %v798, 0.0
          %805 = vadd.xlane.f32.xlu0 %v804
          %v806 = vpop.xlane.xlu0 %805
          %v807 = vrcp.pop 32.0
          %v808 = vmul.f32 %v803, %v807
          %v809 = vmul.f32 %v806, %v807
          %v810 = vsub.f32 %v797, %v808
          %v811 = vsub.f32 %v798, %v809
          %v812 = vmul.f32 %v810, %v810
          %v813 = vmul.f32 %v811, %v811
          %v814 = vsel %vm699, %v812, 0.0
          %815 = vadd.xlane.f32.xlu0 %v814
          %v816 = vpop.xlane.xlu0 %815
          %v817 = vsel %vm699, %v813, 0.0
          %818 = vadd.xlane.f32.xlu0 %v817
          %v819 = vpop.xlane.xlu0 %818
          %v820 = vmul.f32 %v816, %v807
          %v821 = vmul.f32 %v819, %v807
          %v822 = vadd.f32 %v820, 1e-05
          %v823 = vadd.f32 %v821, 1e-05
          %v824 = vrsqrt.pop %v822
          %v825 = vrsqrt.pop %v823
          %v826 = vmul.f32 %v810, %v824
          %v827 = vmul.f32 %v811, %v825
          %v829 = vlaneseq
          %v830 = vshrl.u32 %v829, 7
          %v831 = vsub.s32 0, %v830
          %v832 = vrot.slane %v799, %v831
          %v834 = vmul.f32 %v826, %v832
          %v835 = vmul.f32 %v827, %v832
          %v837 = vlaneseq
          %v838 = vshrl.u32 %v837, 7
          %v839 = vsub.s32 0, %v838
          %v840 = vrot.slane %v800, %v839
          %v842 = vadd.f32 %v834, %v840
          %v843 = vadd.f32 %v835, %v840
          %v844 = vpack.c.bf16 %v843, %v842
          %v845 = vld [vmem:[%s6] sm:$0xf]
          %v846 = vld [vmem:[%s6 + $0x4] sm:$0xf]
          %v847 = vld [vmem:[%s6 + $0x8] sm:$0xf]
          %v848 = vld [vmem:[%s6 + $0xc] sm:$0xf]
          %v849 = vld [vmem:[%s7] sm:$0x1]
          %v851 = vlaneseq
          %v852 = vshrl.u32 %v851, 7
          %v853 = vsub.s32 0, %v852
          %v854 = vrot.slane %v849, %v853
          %v860 = vunpack.c.l.b16 %v845
          %v861 = vunpack.c.l.b16 %v846
          %v862 = vunpack.c.l.b16 %v847
          %v863 = vunpack.c.l.b16 %v848
          %v864 = vpack.c.b16 %v861, %v860
          %v865 = vpack.c.b16 %v863, %v862
          %v869 = vsel %vm699, %v844, 0
          %871 = vmatprep.subr.bf16.mxu0 0
          %872 = vmatpush1.bf16.msra.mxu0 %v864
          %873 = vmatprep.subr.bf16.mxu0 0
          %874 = vmatpush1.bf16.msra.mxu0 %v865
          %875 = vmatprep.subr.bf16.mxu0 0
          %876 = vmatpush1.bf16.msra.mxu0 0
          %877 = vmatprep.subr.bf16.mxu0 0
          %878 = vmatpush1.bf16.msra.mxu0 0
          %879 = vmatprep.subr.bf16.mxu0 0
          %880 = vmatpush1.bf16.msra.mxu0 0
          %881 = vmatprep.subr.bf16.mxu0 0
          %882 = vmatpush1.bf16.msra.mxu0 0
          %883 = vmatprep.subr.bf16.mxu0 0
          %884 = vmatpush1.bf16.msra.mxu0 0
          %885 = vmatprep.subr.bf16.mxu0 0
          %886 = vmatpush1.bf16.msra.mxu0 0
          %887 = vmatprep.subr.bf16.mxu0 0
          %888 = vmatpush1.bf16.msra.mxu0 0
          %889 = vmatprep.subr.bf16.mxu0 0
          %890 = vmatpush1.bf16.msra.mxu0 0
          %891 = vmatprep.subr.bf16.mxu0 0
          %892 = vmatpush1.bf16.msra.mxu0 0
          %893 = vmatprep.subr.bf16.mxu0 0
          %894 = vmatpush1.bf16.msra.mxu0 0
          %895 = vmatprep.subr.bf16.mxu0 0
          %896 = vmatpush1.bf16.msra.mxu0 0
          %897 = vmatprep.subr.bf16.mxu0 0
          %898 = vmatpush1.bf16.msra.mxu0 0
          %899 = vmatprep.subr.bf16.mxu0 0
          %900 = vmatpush1.bf16.msra.mxu0 0
          %901 = vmatprep.subr.bf16.mxu0 0
          %902 = vmatpush1.bf16.msra.mxu0 0
          %903 = vmatprep.mubr.bf16.mxu0 0
          %904 = vmatmul.mubr.bf16.gmra.mrb[0].mxu0 %v869
          %v905 = vpop.f32.mrb[0].mxu0
          %v906 = vadd.f32 %v854, %v905
          %v907 = vpop.f32.mrb[0].mxu0
          %v908 = vpop.f32.mrb[0].mxu0
          %v909 = vadd.f32 %v854, %v908
          %v910 = vpop.f32.mrb[0].mxu0
          %911 = vdwg.mxu0
          %v912 = vpack.c.bf16 %v909, %v906
          %vm913 = vcmask 785408
          %914 = vst.msk [vmem:[#allocation3] sm:$0xff] %vm913, %v912
          %v915 = vld [vmem:[#allocation2] sm:$0xff]
          %v916 = vld [vmem:[#allocation2 + $0x8] sm:$0xff]
          %v917 = vld [vmem:[#allocation3] sm:$0xff]
          %919 = vrot.lane.b32.xlu0 %v917, 96
          %v920 = vpop.permute.xlu0 %919
          %vm921 = vcmask 64512
          %v923 = vsel %vm921, %v917, 0
          %v926 = vsel %vm921, %v920, 0
          %928 = vmatprep.subr.bf16.mxu0 0
          %929 = vmatpush1.bf16.xpose.msra.mxu0 %v926
          %930 = vmatprep.subr.bf16.mxu0 0
          %931 = vmatpush1.bf16.xpose.msra.mxu0 0
          %932 = vmatprep.subr.bf16.mxu0 0
          %933 = vmatpush1.bf16.xpose.msra.mxu0 0
          %934 = vmatprep.subr.bf16.mxu0 0
          %935 = vmatpush1.bf16.xpose.msra.mxu0 0
          %936 = vmatprep.subr.bf16.mxu0 0
          %937 = vmatpush1.bf16.xpose.msra.mxu0 0
          %938 = vmatprep.subr.bf16.mxu0 0
          %939 = vmatpush1.bf16.xpose.msra.mxu0 0
          %940 = vmatprep.subr.bf16.mxu0 0
          %941 = vmatpush1.bf16.xpose.msra.mxu0 0
          %942 = vmatprep.subr.bf16.mxu0 0
          %943 = vmatpush1.bf16.xpose.msra.mxu0 0
          %944 = vmatprep.subr.bf16.mxu0 0
          %945 = vmatpush1.bf16.xpose.msra.mxu0 0
          %946 = vmatprep.subr.bf16.mxu0 0
          %947 = vmatpush1.bf16.xpose.msra.mxu0 0
          %948 = vmatprep.subr.bf16.mxu0 0
          %949 = vmatpush1.bf16.xpose.msra.mxu0 0
          %950 = vmatprep.subr.bf16.mxu0 0
          %951 = vmatpush1.bf16.xpose.msra.mxu0 0
          %952 = vmatprep.subr.bf16.mxu0 0
          %953 = vmatpush1.bf16.xpose.msra.mxu0 0
          %954 = vmatprep.subr.bf16.mxu0 0
          %955 = vmatpush1.bf16.xpose.msra.mxu0 0
          %956 = vmatprep.subr.bf16.mxu0 0
          %957 = vmatpush1.bf16.xpose.msra.mxu0 0
          %958 = vmatprep.subr.bf16.mxu0 0
          %959 = vmatpush1.bf16.xpose.msra.mxu0 0
          %960 = vmatprep.mubr.bf16.mxu0 0
          %961 = vmatmul.mubr.bf16.gmra.mrb[0].mxu0 %v923
          %v962 = vpop.f32.mrb[0].mxu0
          %v963 = vadd.f32 0.0, %v962
          %v964 = vpop.f32.mrb[0].mxu0
          %v965 = vpop.f32.mrb[0].mxu0
          %v966 = vadd.f32 0.0, %v965
          %v967 = vpop.f32.mrb[0].mxu0
          %968 = vdwg.mxu0
          %v969 = vmul.f32 %v963, 0.35355338
          %v970 = vmul.f32 %v966, 0.35355338
          %v971 = vlaneseq
          %v972 = vand.u32 %v971, 127
          %v973 = vstv 0
          %v974 = vadd.s32 %v972, %v973
          %vm975 = vcmp.eq.s32.totalorder %v974, 0
          %vm976 = vcmp.ge.s32.totalorder %v974, 8
          %vm977 = vcmp.lt.s32.totalorder %v974, 15
          %vm978 = vmand %vm976, %vm977
          %vm979 = vmor %vm975, %vm978
          %v980 = vsel %vm979, 0.0, -1e+30
          %v981 = vadd.f32 %v969, %v980
          %v982 = vadd.f32 %v970, %v980
          %vm983 = vcmask 130048
          %v984 = vsel %vm983, %v981, -inf
          %985 = vmax.xlane.f32.xlu0 %v984
          %v986 = vpop.xlane.xlu0 %985
          %v987 = vsel %vm983, %v982, -inf
          %988 = vmax.xlane.f32.xlu0 %v987
          %v989 = vpop.xlane.xlu0 %988
          %v990 = vmax.f32 %v986, -1e+30
          %v991 = vmax.f32 %v989, -1e+30
          %v992 = vsub.f32 -1e+30, %v990
          %v993 = vsub.f32 -1e+30, %v991
          %v994 = vmul.f32 %v992, 1.442695
          %v995 = vpow.pop %v994
          %v996 = vmul.f32 %v993, 1.442695
          %v997 = vpow.pop %v996
          %v998 = vsub.f32 %v981, %v990
          %v999 = vsub.f32 %v982, %v991
          %v1000 = vmul.f32 %v998, 1.442695
          %v1001 = vpow.pop %v1000
          %v1002 = vmul.f32 %v999, 1.442695
          %v1003 = vpow.pop %v1002
          %v1004 = vmul.f32 %v995, 0.0
          %v1005 = vmul.f32 %v997, 0.0
          %v1006 = vsel %vm983, %v1001, 0.0
          %1007 = vadd.xlane.f32.xlu0 %v1006
          %v1008 = vpop.xlane.xlu0 %1007
          %v1009 = vsel %vm983, %v1003, 0.0
          %1010 = vadd.xlane.f32.xlu0 %v1009
          %v1011 = vpop.xlane.xlu0 %1010
          %v1012 = vadd.f32 %v1004, %v1008
          %v1013 = vadd.f32 %v1005, %v1011
          %v1014 = vpack.c.bf16 %v1003, %v1001
          %1015 = vrot.lane.b32.xlu0 %v917, 64
          %v1016 = vpop.permute.xlu0 %1015
          %v1019 = vsel %vm983, %v1014, 0
          %1021 = vmatprep.subr.bf16.mxu0 0
          %1022 = vmatpush1.bf16.msra.mxu0 %v1016
          %1023 = vmatprep.subr.bf16.mxu0 0
          %1024 = vmatpush1.bf16.msra.mxu0 0
          %1025 = vmatprep.subr.bf16.mxu0 0
          %1026 = vmatpush1.bf16.msra.mxu0 0
          %1027 = vmatprep.subr.bf16.mxu0 0
          %1028 = vmatpush1.bf16.msra.mxu0 0
          %1029 = vmatprep.subr.bf16.mxu0 0
          %1030 = vmatpush1.bf16.msra.mxu0 0
          %1031 = vmatprep.subr.bf16.mxu0 0
          %1032 = vmatpush1.bf16.msra.mxu0 0
          %1033 = vmatprep.subr.bf16.mxu0 0
          %1034 = vmatpush1.bf16.msra.mxu0 0
          %1035 = vmatprep.subr.bf16.mxu0 0
          %1036 = vmatpush1.bf16.msra.mxu0 0
          %1037 = vmatprep.subr.bf16.mxu0 0
          %1038 = vmatpush1.bf16.msra.mxu0 0
          %1039 = vmatprep.subr.bf16.mxu0 0
          %1040 = vmatpush1.bf16.msra.mxu0 0
          %1041 = vmatprep.subr.bf16.mxu0 0
          %1042 = vmatpush1.bf16.msra.mxu0 0
          %1043 = vmatprep.subr.bf16.mxu0 0
          %1044 = vmatpush1.bf16.msra.mxu0 0
          %1045 = vmatprep.subr.bf16.mxu0 0
          %1046 = vmatpush1.bf16.msra.mxu0 0
          %1047 = vmatprep.subr.bf16.mxu0 0
          %1048 = vmatpush1.bf16.msra.mxu0 0
          %1049 = vmatprep.subr.bf16.mxu0 0
          %1050 = vmatpush1.bf16.msra.mxu0 0
          %1051 = vmatprep.subr.bf16.mxu0 0
          %1052 = vmatpush1.bf16.msra.mxu0 0
          %1053 = vmatprep.mubr.bf16.mxu0 0
          %1054 = vmatmul.mubr.bf16.gmra.mrb[0].mxu0 %v1019
          %v1055 = vpop.f32.mrb[0].mxu0
          %v1056 = vadd.f32 0.0, %v1055
          %v1057 = vpop.f32.mrb[0].mxu0
          %v1058 = vpop.f32.mrb[0].mxu0
          %v1059 = vadd.f32 0.0, %v1058
          %v1060 = vpop.f32.mrb[0].mxu0
          %1061 = vdwg.mxu0
          %v1062 = vadd.f32 %v1004, %v1056
          %v1063 = vadd.f32 %v1005, %v1059
          %v1064 = vrcp.pop %v1012
          %v1065 = vrcp.pop %v1013
          %v1066 = vmul.f32 %v1062, %v1064
          %v1067 = vmul.f32 %v1063, %v1065
          %v1068 = vpack.c.bf16 %v1067, %v1066
          %1069 = vrot.lane.b32.xlu0 %v917, 120
          %v1070 = vpop.permute.xlu0 %1069
          %1071 = vrot.lane.b32.xlu0 %v917, 88
          %v1072 = vpop.permute.xlu0 %1071
          %v1074 = vsel %vm921, %v1070, 0
          %v1077 = vsel %vm921, %v1072, 0
          %1079 = vmatprep.subr.bf16.mxu0 0
          %1080 = vmatpush1.bf16.xpose.msra.mxu0 %v1077
          %1081 = vmatprep.subr.bf16.mxu0 0
          %1082 = vmatpush1.bf16.xpose.msra.mxu0 0
          %1083 = vmatprep.subr.bf16.mxu0 0
          %1084 = vmatpush1.bf16.xpose.msra.mxu0 0
          %1085 = vmatprep.subr.bf16.mxu0 0
          %1086 = vmatpush1.bf16.xpose.msra.mxu0 0
          %1087 = vmatprep.subr.bf16.mxu0 0
          %1088 = vmatpush1.bf16.xpose.msra.mxu0 0
          %1089 = vmatprep.subr.bf16.mxu0 0
          %1090 = vmatpush1.bf16.xpose.msra.mxu0 0
          %1091 = vmatprep.subr.bf16.mxu0 0
          %1092 = vmatpush1.bf16.xpose.msra.mxu0 0
          %1093 = vmatprep.subr.bf16.mxu0 0
          %1094 = vmatpush1.bf16.xpose.msra.mxu0 0
          %1095 = vmatprep.subr.bf16.mxu0 0
          %1096 = vmatpush1.bf16.xpose.msra.mxu0 0
          %1097 = vmatprep.subr.bf16.mxu0 0
          %1098 = vmatpush1.bf16.xpose.msra.mxu0 0
          %1099 = vmatprep.subr.bf16.mxu0 0
          %1100 = vmatpush1.bf16.xpose.msra.mxu0 0
          %1101 = vmatprep.subr.bf16.mxu0 0
          %1102 = vmatpush1.bf16.xpose.msra.mxu0 0
          %1103 = vmatprep.subr.bf16.mxu0 0
          %1104 = vmatpush1.bf16.xpose.msra.mxu0 0
          %1105 = vmatprep.subr.bf16.mxu0 0
          %1106 = vmatpush1.bf16.xpose.msra.mxu0 0
          %1107 = vmatprep.subr.bf16.mxu0 0
          %1108 = vmatpush1.bf16.xpose.msra.mxu0 0
          %1109 = vmatprep.subr.bf16.mxu0 0
          %1110 = vmatpush1.bf16.xpose.msra.mxu0 0
          %1111 = vmatprep.mubr.bf16.mxu0 0
          %1112 = vmatmul.mubr.bf16.gmra.mrb[0].mxu0 %v1074
          %v1113 = vpop.f32.mrb[0].mxu0
          %v1114 = vadd.f32 0.0, %v1113
          %v1115 = vpop.f32.mrb[0].mxu0
          %v1116 = vpop.f32.mrb[0].mxu0
          %v1117 = vadd.f32 0.0, %v1116
          %v1118 = vpop.f32.mrb[0].mxu0
          %1119 = vdwg.mxu0
          %v1120 = vmul.f32 %v1114, 0.35355338
          %v1121 = vmul.f32 %v1117, 0.35355338
          %v1122 = vadd.f32 %v1120, %v980
          %v1123 = vadd.f32 %v1121, %v980
          %v1124 = vsel %vm983, %v1122, -inf
          %1125 = vmax.xlane.f32.xlu0 %v1124
          %v1126 = vpop.xlane.xlu0 %1125
          %v1127 = vsel %vm983, %v1123, -inf
          %1128 = vmax.xlane.f32.xlu0 %v1127
          %v1129 = vpop.xlane.xlu0 %1128
          %v1130 = vmax.f32 %v1126, -1e+30
          %v1131 = vmax.f32 %v1129, -1e+30
          %v1132 = vsub.f32 -1e+30, %v1130
          %v1133 = vsub.f32 -1e+30, %v1131
          %v1134 = vmul.f32 %v1132, 1.442695
          %v1135 = vpow.pop %v1134
          %v1136 = vmul.f32 %v1133, 1.442695
          %v1137 = vpow.pop %v1136
          %v1138 = vsub.f32 %v1122, %v1130
          %v1139 = vsub.f32 %v1123, %v1131
          %v1140 = vmul.f32 %v1138, 1.442695
          %v1141 = vpow.pop %v1140
          %v1142 = vmul.f32 %v1139, 1.442695
          %v1143 = vpow.pop %v1142
          %v1144 = vmul.f32 %v1135, 0.0
          %v1145 = vmul.f32 %v1137, 0.0
          %v1146 = vsel %vm983, %v1141, 0.0
          %1147 = vadd.xlane.f32.xlu0 %v1146
          %v1148 = vpop.xlane.xlu0 %1147
          %v1149 = vsel %vm983, %v1143, 0.0
          %1150 = vadd.xlane.f32.xlu0 %v1149
          %v1151 = vpop.xlane.xlu0 %1150
          %v1152 = vadd.f32 %v1144, %v1148
          %v1153 = vadd.f32 %v1145, %v1151
          %v1154 = vpack.c.bf16 %v1143, %v1141
          %1155 = vrot.lane.b32.xlu0 %v917, 56
          %v1156 = vpop.permute.xlu0 %1155
          %v1159 = vsel %vm983, %v1154, 0
          %1161 = vmatprep.subr.bf16.mxu0 0
          %1162 = vmatpush1.bf16.msra.mxu0 %v1156
          %1163 = vmatprep.subr.bf16.mxu0 0
          %1164 = vmatpush1.bf16.msra.mxu0 0
          %1165 = vmatprep.subr.bf16.mxu0 0
          %1166 = vmatpush1.bf16.msra.mxu0 0
          %1167 = vmatprep.subr.bf16.mxu0 0
          %1168 = vmatpush1.bf16.msra.mxu0 0
          %1169 = vmatprep.subr.bf16.mxu0 0
          %1170 = vmatpush1.bf16.msra.mxu0 0
          %1171 = vmatprep.subr.bf16.mxu0 0
          %1172 = vmatpush1.bf16.msra.mxu0 0
          %1173 = vmatprep.subr.bf16.mxu0 0
          %1174 = vmatpush1.bf16.msra.mxu0 0
          %1175 = vmatprep.subr.bf16.mxu0 0
          %1176 = vmatpush1.bf16.msra.mxu0 0
          %1177 = vmatprep.subr.bf16.mxu0 0
          %1178 = vmatpush1.bf16.msra.mxu0 0
          %1179 = vmatprep.subr.bf16.mxu0 0
          %1180 = vmatpush1.bf16.msra.mxu0 0
          %1181 = vmatprep.subr.bf16.mxu0 0
          %1182 = vmatpush1.bf16.msra.mxu0 0
          %1183 = vmatprep.subr.bf16.mxu0 0
          %1184 = vmatpush1.bf16.msra.mxu0 0
          %1185 = vmatprep.subr.bf16.mxu0 0
          %1186 = vmatpush1.bf16.msra.mxu0 0
          %1187 = vmatprep.subr.bf16.mxu0 0
          %1188 = vmatpush1.bf16.msra.mxu0 0
          %1189 = vmatprep.subr.bf16.mxu0 0
          %1190 = vmatpush1.bf16.msra.mxu0 0
          %1191 = vmatprep.subr.bf16.mxu0 0
          %1192 = vmatpush1.bf16.msra.mxu0 0
          %1193 = vmatprep.mubr.bf16.mxu0 0
          %1194 = vmatmul.mubr.bf16.gmra.mrb[0].mxu0 %v1159
          %v1195 = vpop.f32.mrb[0].mxu0
          %v1196 = vadd.f32 0.0, %v1195
          %v1197 = vpop.f32.mrb[0].mxu0
          %v1198 = vpop.f32.mrb[0].mxu0
          %v1199 = vadd.f32 0.0, %v1198
          %v1200 = vpop.f32.mrb[0].mxu0
          %1201 = vdwg.mxu0
          %v1202 = vadd.f32 %v1144, %v1196
          %v1203 = vadd.f32 %v1145, %v1199
          %v1204 = vrcp.pop %v1152
          %v1205 = vrcp.pop %v1153
          %v1206 = vmul.f32 %v1202, %v1204
          %v1207 = vmul.f32 %v1203, %v1205
          %v1208 = vpack.c.bf16 %v1207, %v1206
          %1209 = vrot.lane.b32.xlu0 %v917, 112
          %v1210 = vpop.permute.xlu0 %1209
          %1211 = vrot.lane.b32.xlu0 %v917, 80
          %v1212 = vpop.permute.xlu0 %1211
          %v1214 = vsel %vm921, %v1210, 0
          %v1217 = vsel %vm921, %v1212, 0
          %1219 = vmatprep.subr.bf16.mxu0 0
          %1220 = vmatpush1.bf16.xpose.msra.mxu0 %v1217
          %1221 = vmatprep.subr.bf16.mxu0 0
          %1222 = vmatpush1.bf16.xpose.msra.mxu0 0
          %1223 = vmatprep.subr.bf16.mxu0 0
          %1224 = vmatpush1.bf16.xpose.msra.mxu0 0
          %1225 = vmatprep.subr.bf16.mxu0 0
          %1226 = vmatpush1.bf16.xpose.msra.mxu0 0
          %1227 = vmatprep.subr.bf16.mxu0 0
          %1228 = vmatpush1.bf16.xpose.msra.mxu0 0
          %1229 = vmatprep.subr.bf16.mxu0 0
          %1230 = vmatpush1.bf16.xpose.msra.mxu0 0
          %1231 = vmatprep.subr.bf16.mxu0 0
          %1232 = vmatpush1.bf16.xpose.msra.mxu0 0
          %1233 = vmatprep.subr.bf16.mxu0 0
          %1234 = vmatpush1.bf16.xpose.msra.mxu0 0
          %1235 = vmatprep.subr.bf16.mxu0 0
          %1236 = vmatpush1.bf16.xpose.msra.mxu0 0
          %1237 = vmatprep.subr.bf16.mxu0 0
          %1238 = vmatpush1.bf16.xpose.msra.mxu0 0
          %1239 = vmatprep.subr.bf16.mxu0 0
          %1240 = vmatpush1.bf16.xpose.msra.mxu0 0
          %1241 = vmatprep.subr.bf16.mxu0 0
          %1242 = vmatpush1.bf16.xpose.msra.mxu0 0
          %1243 = vmatprep.subr.bf16.mxu0 0
          %1244 = vmatpush1.bf16.xpose.msra.mxu0 0
          %1245 = vmatprep.subr.bf16.mxu0 0
          %1246 = vmatpush1.bf16.xpose.msra.mxu0 0
          %1247 = vmatprep.subr.bf16.mxu0 0
          %1248 = vmatpush1.bf16.xpose.msra.mxu0 0
          %1249 = vmatprep.subr.bf16.mxu0 0
          %1250 = vmatpush1.bf16.xpose.msra.mxu0 0
          %1251 = vmatprep.mubr.bf16.mxu0 0
          %1252 = vmatmul.mubr.bf16.gmra.mrb[0].mxu0 %v1214
          %v1253 = vpop.f32.mrb[0].mxu0
          %v1254 = vadd.f32 0.0, %v1253
          %v1255 = vpop.f32.mrb[0].mxu0
          %v1256 = vpop.f32.mrb[0].mxu0
          %v1257 = vadd.f32 0.0, %v1256
          %v1258 = vpop.f32.mrb[0].mxu0
          %1259 = vdwg.mxu0
          %v1260 = vmul.f32 %v1254, 0.35355338
          %v1261 = vmul.f32 %v1257, 0.35355338
          %v1262 = vadd.f32 %v1260, %v980
          %v1263 = vadd.f32 %v1261, %v980
          %v1264 = vsel %vm983, %v1262, -inf
          %1265 = vmax.xlane.f32.xlu0 %v1264
          %v1266 = vpop.xlane.xlu0 %1265
          %v1267 = vsel %vm983, %v1263, -inf
          %1268 = vmax.xlane.f32.xlu0 %v1267
          %v1269 = vpop.xlane.xlu0 %1268
          %v1270 = vmax.f32 %v1266, -1e+30
          %v1271 = vmax.f32 %v1269, -1e+30
          %v1272 = vsub.f32 -1e+30, %v1270
          %v1273 = vsub.f32 -1e+30, %v1271
          %v1274 = vmul.f32 %v1272, 1.442695
          %v1275 = vpow.pop %v1274
          %v1276 = vmul.f32 %v1273, 1.442695
          %v1277 = vpow.pop %v1276
          %v1278 = vsub.f32 %v1262, %v1270
          %v1279 = vsub.f32 %v1263, %v1271
          %v1280 = vmul.f32 %v1278, 1.442695
          %v1281 = vpow.pop %v1280
          %v1282 = vmul.f32 %v1279, 1.442695
          %v1283 = vpow.pop %v1282
          %v1284 = vmul.f32 %v1275, 0.0
          %v1285 = vmul.f32 %v1277, 0.0
          %v1286 = vsel %vm983, %v1281, 0.0
          %1287 = vadd.xlane.f32.xlu0 %v1286
          %v1288 = vpop.xlane.xlu0 %1287
          %v1289 = vsel %vm983, %v1283, 0.0
          %1290 = vadd.xlane.f32.xlu0 %v1289
          %v1291 = vpop.xlane.xlu0 %1290
          %v1292 = vadd.f32 %v1284, %v1288
          %v1293 = vadd.f32 %v1285, %v1291
          %v1294 = vpack.c.bf16 %v1283, %v1281
          %1295 = vrot.lane.b32.xlu0 %v917, 48
          %v1296 = vpop.permute.xlu0 %1295
          %v1299 = vsel %vm983, %v1294, 0
          %1301 = vmatprep.subr.bf16.mxu0 0
          %1302 = vmatpush1.bf16.msra.mxu0 %v1296
          %1303 = vmatprep.subr.bf16.mxu0 0
          %1304 = vmatpush1.bf16.msra.mxu0 0
          %1305 = vmatprep.subr.bf16.mxu0 0
          %1306 = vmatpush1.bf16.msra.mxu0 0
          %1307 = vmatprep.subr.bf16.mxu0 0
          %1308 = vmatpush1.bf16.msra.mxu0 0
          %1309 = vmatprep.subr.bf16.mxu0 0
          %1310 = vmatpush1.bf16.msra.mxu0 0
          %1311 = vmatprep.subr.bf16.mxu0 0
          %1312 = vmatpush1.bf16.msra.mxu0 0
          %1313 = vmatprep.subr.bf16.mxu0 0
          %1314 = vmatpush1.bf16.msra.mxu0 0
          %1315 = vmatprep.subr.bf16.mxu0 0
          %1316 = vmatpush1.bf16.msra.mxu0 0
          %1317 = vmatprep.subr.bf16.mxu0 0
          %1318 = vmatpush1.bf16.msra.mxu0 0
          %1319 = vmatprep.subr.bf16.mxu0 0
          %1320 = vmatpush1.bf16.msra.mxu0 0
          %1321 = vmatprep.subr.bf16.mxu0 0
          %1322 = vmatpush1.bf16.msra.mxu0 0
          %1323 = vmatprep.subr.bf16.mxu0 0
          %1324 = vmatpush1.bf16.msra.mxu0 0
          %1325 = vmatprep.subr.bf16.mxu0 0
          %1326 = vmatpush1.bf16.msra.mxu0 0
          %1327 = vmatprep.subr.bf16.mxu0 0
          %1328 = vmatpush1.bf16.msra.mxu0 0
          %1329 = vmatprep.subr.bf16.mxu0 0
          %1330 = vmatpush1.bf16.msra.mxu0 0
          %1331 = vmatprep.subr.bf16.mxu0 0
          %1332 = vmatpush1.bf16.msra.mxu0 0
          %1333 = vmatprep.mubr.bf16.mxu0 0
          %1334 = vmatmul.mubr.bf16.gmra.mrb[0].mxu0 %v1299
          %v1335 = vpop.f32.mrb[0].mxu0
          %v1336 = vadd.f32 0.0, %v1335
          %v1337 = vpop.f32.mrb[0].mxu0
          %v1338 = vpop.f32.mrb[0].mxu0
          %v1339 = vadd.f32 0.0, %v1338
          %v1340 = vpop.f32.mrb[0].mxu0
          %1341 = vdwg.mxu0
          %v1342 = vadd.f32 %v1284, %v1336
          %v1343 = vadd.f32 %v1285, %v1339
          %v1344 = vrcp.pop %v1292
          %v1345 = vrcp.pop %v1293
          %v1346 = vmul.f32 %v1342, %v1344
          %v1347 = vmul.f32 %v1343, %v1345
          %v1348 = vpack.c.bf16 %v1347, %v1346
          %1349 = vrot.lane.b32.xlu0 %v917, 104
          %v1350 = vpop.permute.xlu0 %1349
          %1351 = vrot.lane.b32.xlu0 %v917, 72
          %v1352 = vpop.permute.xlu0 %1351
          %v1354 = vsel %vm921, %v1350, 0
          %v1357 = vsel %vm921, %v1352, 0
          %1359 = vmatprep.subr.bf16.mxu0 0
          %1360 = vmatpush1.bf16.xpose.msra.mxu0 %v1357
          %1361 = vmatprep.subr.bf16.mxu0 0
          %1362 = vmatpush1.bf16.xpose.msra.mxu0 0
          %1363 = vmatprep.subr.bf16.mxu0 0
          %1364 = vmatpush1.bf16.xpose.msra.mxu0 0
          %1365 = vmatprep.subr.bf16.mxu0 0
          %1366 = vmatpush1.bf16.xpose.msra.mxu0 0
          %1367 = vmatprep.subr.bf16.mxu0 0
          %1368 = vmatpush1.bf16.xpose.msra.mxu0 0
          %1369 = vmatprep.subr.bf16.mxu0 0
          %1370 = vmatpush1.bf16.xpose.msra.mxu0 0
          %1371 = vmatprep.subr.bf16.mxu0 0
          %1372 = vmatpush1.bf16.xpose.msra.mxu0 0
          %1373 = vmatprep.subr.bf16.mxu0 0
          %1374 = vmatpush1.bf16.xpose.msra.mxu0 0
          %1375 = vmatprep.subr.bf16.mxu0 0
          %1376 = vmatpush1.bf16.xpose.msra.mxu0 0
          %1377 = vmatprep.subr.bf16.mxu0 0
          %1378 = vmatpush1.bf16.xpose.msra.mxu0 0
          %1379 = vmatprep.subr.bf16.mxu0 0
          %1380 = vmatpush1.bf16.xpose.msra.mxu0 0
          %1381 = vmatprep.subr.bf16.mxu0 0
          %1382 = vmatpush1.bf16.xpose.msra.mxu0 0
          %1383 = vmatprep.subr.bf16.mxu0 0
          %1384 = vmatpush1.bf16.xpose.msra.mxu0 0
          %1385 = vmatprep.subr.bf16.mxu0 0
          %1386 = vmatpush1.bf16.xpose.msra.mxu0 0
          %1387 = vmatprep.subr.bf16.mxu0 0
          %1388 = vmatpush1.bf16.xpose.msra.mxu0 0
          %1389 = vmatprep.subr.bf16.mxu0 0
          %1390 = vmatpush1.bf16.xpose.msra.mxu0 0
          %1391 = vmatprep.mubr.bf16.mxu0 0
          %1392 = vmatmul.mubr.bf16.gmra.mrb[0].mxu0 %v1354
          %v1393 = vpop.f32.mrb[0].mxu0
          %v1394 = vadd.f32 0.0, %v1393
          %v1395 = vpop.f32.mrb[0].mxu0
          %v1396 = vpop.f32.mrb[0].mxu0
          %v1397 = vadd.f32 0.0, %v1396
          %v1398 = vpop.f32.mrb[0].mxu0
          %1399 = vdwg.mxu0
          %v1400 = vmul.f32 %v1394, 0.35355338
          %v1401 = vmul.f32 %v1397, 0.35355338
          %v1402 = vadd.f32 %v1400, %v980
          %v1403 = vadd.f32 %v1401, %v980
          %v1404 = vsel %vm983, %v1402, -inf
          %1405 = vmax.xlane.f32.xlu0 %v1404
          %v1406 = vpop.xlane.xlu0 %1405
          %v1407 = vsel %vm983, %v1403, -inf
          %1408 = vmax.xlane.f32.xlu0 %v1407
          %v1409 = vpop.xlane.xlu0 %1408
          %v1410 = vmax.f32 %v1406, -1e+30
          %v1411 = vmax.f32 %v1409, -1e+30
          %v1412 = vsub.f32 -1e+30, %v1410
          %v1413 = vsub.f32 -1e+30, %v1411
          %v1414 = vmul.f32 %v1412, 1.442695
          %v1415 = vpow.pop %v1414
          %v1416 = vmul.f32 %v1413, 1.442695
          %v1417 = vpow.pop %v1416
          %v1418 = vsub.f32 %v1402, %v1410
          %v1419 = vsub.f32 %v1403, %v1411
          %v1420 = vmul.f32 %v1418, 1.442695
          %v1421 = vpow.pop %v1420
          %v1422 = vmul.f32 %v1419, 1.442695
          %v1423 = vpow.pop %v1422
          %v1424 = vmul.f32 %v1415, 0.0
          %v1425 = vmul.f32 %v1417, 0.0
          %v1426 = vsel %vm983, %v1421, 0.0
          %1427 = vadd.xlane.f32.xlu0 %v1426
          %v1428 = vpop.xlane.xlu0 %1427
          %v1429 = vsel %vm983, %v1423, 0.0
          %1430 = vadd.xlane.f32.xlu0 %v1429
          %v1431 = vpop.xlane.xlu0 %1430
          %v1432 = vadd.f32 %v1424, %v1428
          %v1433 = vadd.f32 %v1425, %v1431
          %v1434 = vpack.c.bf16 %v1423, %v1421
          %1435 = vrot.lane.b32.xlu0 %v917, 40
          %v1436 = vpop.permute.xlu0 %1435
          %v1439 = vsel %vm983, %v1434, 0
          %1441 = vmatprep.subr.bf16.mxu0 0
          %1442 = vmatpush1.bf16.msra.mxu0 %v1436
          %1443 = vmatprep.subr.bf16.mxu0 0
          %1444 = vmatpush1.bf16.msra.mxu0 0
          %1445 = vmatprep.subr.bf16.mxu0 0
          %1446 = vmatpush1.bf16.msra.mxu0 0
          %1447 = vmatprep.subr.bf16.mxu0 0
          %1448 = vmatpush1.bf16.msra.mxu0 0
          %1449 = vmatprep.subr.bf16.mxu0 0
          %1450 = vmatpush1.bf16.msra.mxu0 0
          %1451 = vmatprep.subr.bf16.mxu0 0
          %1452 = vmatpush1.bf16.msra.mxu0 0
          %1453 = vmatprep.subr.bf16.mxu0 0
          %1454 = vmatpush1.bf16.msra.mxu0 0
          %1455 = vmatprep.subr.bf16.mxu0 0
          %1456 = vmatpush1.bf16.msra.mxu0 0
          %1457 = vmatprep.subr.bf16.mxu0 0
          %1458 = vmatpush1.bf16.msra.mxu0 0
          %1459 = vmatprep.subr.bf16.mxu0 0
          %1460 = vmatpush1.bf16.msra.mxu0 0
          %1461 = vmatprep.subr.bf16.mxu0 0
          %1462 = vmatpush1.bf16.msra.mxu0 0
          %1463 = vmatprep.subr.bf16.mxu0 0
          %1464 = vmatpush1.bf16.msra.mxu0 0
          %1465 = vmatprep.subr.bf16.mxu0 0
          %1466 = vmatpush1.bf16.msra.mxu0 0
          %1467 = vmatprep.subr.bf16.mxu0 0
          %1468 = vmatpush1.bf16.msra.mxu0 0
          %1469 = vmatprep.subr.bf16.mxu0 0
          %1470 = vmatpush1.bf16.msra.mxu0 0
          %1471 = vmatprep.subr.bf16.mxu0 0
          %1472 = vmatpush1.bf16.msra.mxu0 0
          %1473 = vmatprep.mubr.bf16.mxu0 0
          %1474 = vmatmul.mubr.bf16.gmra.mrb[0].mxu0 %v1439
          %v1475 = vpop.f32.mrb[0].mxu0
          %v1476 = vadd.f32 0.0, %v1475
          %v1477 = vpop.f32.mrb[0].mxu0
          %v1478 = vpop.f32.mrb[0].mxu0
          %v1479 = vadd.f32 0.0, %v1478
          %v1480 = vpop.f32.mrb[0].mxu0
          %1481 = vdwg.mxu0
          %v1482 = vadd.f32 %v1424, %v1476
          %v1483 = vadd.f32 %v1425, %v1479
          %v1484 = vrcp.pop %v1432
          %v1485 = vrcp.pop %v1433
          %v1486 = vmul.f32 %v1482, %v1484
          %v1487 = vmul.f32 %v1483, %v1485
          %v1488 = vpack.c.bf16 %v1487, %v1486
          %1490 = vrot.lane.b32.xlu0 %v1208, 8
          %v1491 = vpop.permute.xlu0 %1490
          %1493 = vrot.lane.b32.xlu0 %v1348, 16
          %v1494 = vpop.permute.xlu0 %1493
          %1496 = vrot.lane.b32.xlu0 %v1488, 24
          %v1497 = vpop.permute.xlu0 %1496
          %v1500 = vsel %vm921, %v1068, %v1491
          %v1502 = vsel %vm983, %v1500, %v1494
          %vm1503 = vcmask 195584
          %v1505 = vsel %vm1503, %v1502, %v1497
          %v1506 = vld [vmem:[%s8] sm:$0xf]
          %v1507 = vld [vmem:[%s8 + $0x4] sm:$0xf]
          %v1508 = vld [vmem:[%s8 + $0x8] sm:$0xf]
          %v1509 = vld [vmem:[%s8 + $0xc] sm:$0xf]
          %v1510 = vld [vmem:[%s9] sm:$0x1]
          %v1512 = vlaneseq
          %v1513 = vshrl.u32 %v1512, 7
          %v1514 = vsub.s32 0, %v1513
          %v1515 = vrot.slane %v1510, %v1514
          %v1521 = vunpack.c.l.b16 %v1506
          %v1522 = vunpack.c.l.b16 %v1507
          %v1523 = vunpack.c.l.b16 %v1508
          %v1524 = vunpack.c.l.b16 %v1509
          %v1525 = vpack.c.b16 %v1522, %v1521
          %v1526 = vpack.c.b16 %v1524, %v1523
          %v1529 = vsel %vm699, %v1505, 0
          %1531 = vmatprep.subr.bf16.mxu0 0
          %1532 = vmatpush1.bf16.msra.mxu0 %v1525
          %1533 = vmatprep.subr.bf16.mxu0 0
          %1534 = vmatpush1.bf16.msra.mxu0 %v1526
          %1535 = vmatprep.subr.bf16.mxu0 0
          %1536 = vmatpush1.bf16.msra.mxu0 0
          %1537 = vmatprep.subr.bf16.mxu0 0
          %1538 = vmatpush1.bf16.msra.mxu0 0
          %1539 = vmatprep.subr.bf16.mxu0 0
          %1540 = vmatpush1.bf16.msra.mxu0 0
          %1541 = vmatprep.subr.bf16.mxu0 0
          %1542 = vmatpush1.bf16.msra.mxu0 0
          %1543 = vmatprep.subr.bf16.mxu0 0
          %1544 = vmatpush1.bf16.msra.mxu0 0
          %1545 = vmatprep.subr.bf16.mxu0 0
          %1546 = vmatpush1.bf16.msra.mxu0 0
          %1547 = vmatprep.subr.bf16.mxu0 0
          %1548 = vmatpush1.bf16.msra.mxu0 0
          %1549 = vmatprep.subr.bf16.mxu0 0
          %1550 = vmatpush1.bf16.msra.mxu0 0
          %1551 = vmatprep.subr.bf16.mxu0 0
          %1552 = vmatpush1.bf16.msra.mxu0 0
          %1553 = vmatprep.subr.bf16.mxu0 0
          %1554 = vmatpush1.bf16.msra.mxu0 0
          %1555 = vmatprep.subr.bf16.mxu0 0
          %1556 = vmatpush1.bf16.msra.mxu0 0
          %1557 = vmatprep.subr.bf16.mxu0 0
          %1558 = vmatpush1.bf16.msra.mxu0 0
          %1559 = vmatprep.subr.bf16.mxu0 0
          %1560 = vmatpush1.bf16.msra.mxu0 0
          %1561 = vmatprep.subr.bf16.mxu0 0
          %1562 = vmatpush1.bf16.msra.mxu0 0
          %1563 = vmatprep.mubr.bf16.mxu0 0
          %1564 = vmatmul.mubr.bf16.gmra.mrb[0].mxu0 %v1529
          %v1565 = vpop.f32.mrb[0].mxu0
          %v1566 = vadd.f32 %v1515, %v1565
          %v1567 = vpop.f32.mrb[0].mxu0
          %v1568 = vpop.f32.mrb[0].mxu0
          %v1569 = vadd.f32 %v1515, %v1568
          %v1570 = vpop.f32.mrb[0].mxu0
          %1571 = vdwg.mxu0
          %v1572 = vadd.f32 %v915, %v1566
          %v1573 = vadd.f32 %v916, %v1569
          %v1574 = vld [vmem:[%s10] sm:$0x1]
          %v1575 = vld [vmem:[%s11] sm:$0x1]
          %v1576 = vsel %vm699, %v1572, 0.0
          %1577 = vadd.xlane.f32.xlu0 %v1576
          %v1578 = vpop.xlane.xlu0 %1577
          %v1579 = vsel %vm699, %v1573, 0.0
          %1580 = vadd.xlane.f32.xlu0 %v1579
          %v1581 = vpop.xlane.xlu0 %1580
          %v1582 = vmul.f32 %v1578, %v807
          %v1583 = vmul.f32 %v1581, %v807
          %v1584 = vsub.f32 %v1572, %v1582
          %v1585 = vsub.f32 %v1573, %v1583
          %v1586 = vmul.f32 %v1584, %v1584
          %v1587 = vmul.f32 %v1585, %v1585
          %v1588 = vsel %vm699, %v1586, 0.0
          %1589 = vadd.xlane.f32.xlu0 %v1588
          %v1590 = vpop.xlane.xlu0 %1589
          %v1591 = vsel %vm699, %v1587, 0.0
          %1592 = vadd.xlane.f32.xlu0 %v1591
          %v1593 = vpop.xlane.xlu0 %1592
          %v1594 = vmul.f32 %v1590, %v807
          %v1595 = vmul.f32 %v1593, %v807
          %v1596 = vadd.f32 %v1594, 1e-05
          %v1597 = vadd.f32 %v1595, 1e-05
          %v1598 = vrsqrt.pop %v1596
          %v1599 = vrsqrt.pop %v1597
          %v1600 = vmul.f32 %v1584, %v1598
          %v1601 = vmul.f32 %v1585, %v1599
          %v1603 = vlaneseq
          %v1604 = vshrl.u32 %v1603, 7
          %v1605 = vsub.s32 0, %v1604
          %v1606 = vrot.slane %v1574, %v1605
          %v1608 = vmul.f32 %v1600, %v1606
          %v1609 = vmul.f32 %v1601, %v1606
          %v1611 = vlaneseq
          %v1612 = vshrl.u32 %v1611, 7
          %v1613 = vsub.s32 0, %v1612
          %v1614 = vrot.slane %v1575, %v1613
          %v1616 = vadd.f32 %v1608, %v1614
          %v1617 = vadd.f32 %v1609, %v1614
          %v1618 = vpack.c.bf16 %v1617, %v1616
          %v1619 = vld [vmem:[%s12] sm:$0xf]
          %v1620 = vld [vmem:[%s12 + $0x4] sm:$0xf]
          %v1621 = vld [vmem:[%s12 + $0x8] sm:$0xf]
          %v1622 = vld [vmem:[%s12 + $0xc] sm:$0xf]
          %v1623 = vld [vmem:[%s13] sm:$0x1]
          %v1625 = vlaneseq
          %v1626 = vshrl.u32 %v1625, 7
          %v1627 = vsub.s32 0, %v1626
          %v1628 = vrot.slane %v1623, %v1627
          %v1634 = vunpack.c.l.b16 %v1619
          %v1635 = vunpack.c.l.b16 %v1620
          %v1636 = vunpack.c.l.b16 %v1621
          %v1637 = vunpack.c.l.b16 %v1622
          %v1638 = vpack.c.b16 %v1635, %v1634
          %v1639 = vpack.c.b16 %v1637, %v1636
          %v1643 = vsel %vm699, %v1618, 0
          %1645 = vmatprep.subr.bf16.mxu0 0
          %1646 = vmatpush1.bf16.msra.mxu0 %v1638
          %1647 = vmatprep.subr.bf16.mxu0 0
          %1648 = vmatpush1.bf16.msra.mxu0 %v1639
          %1649 = vmatprep.subr.bf16.mxu0 0
          %1650 = vmatpush1.bf16.msra.mxu0 0
          %1651 = vmatprep.subr.bf16.mxu0 0
          %1652 = vmatpush1.bf16.msra.mxu0 0
          %1653 = vmatprep.subr.bf16.mxu0 0
          %1654 = vmatpush1.bf16.msra.mxu0 0
          %1655 = vmatprep.subr.bf16.mxu0 0
          %1656 = vmatpush1.bf16.msra.mxu0 0
          %1657 = vmatprep.subr.bf16.mxu0 0
          %1658 = vmatpush1.bf16.msra.mxu0 0
          %1659 = vmatprep.subr.bf16.mxu0 0
          %1660 = vmatpush1.bf16.msra.mxu0 0
          %1661 = vmatprep.subr.bf16.mxu0 0
          %1662 = vmatpush1.bf16.msra.mxu0 0
          %1663 = vmatprep.subr.bf16.mxu0 0
          %1664 = vmatpush1.bf16.msra.mxu0 0
          %1665 = vmatprep.subr.bf16.mxu0 0
          %1666 = vmatpush1.bf16.msra.mxu0 0
          %1667 = vmatprep.subr.bf16.mxu0 0
          %1668 = vmatpush1.bf16.msra.mxu0 0
          %1669 = vmatprep.subr.bf16.mxu0 0
          %1670 = vmatpush1.bf16.msra.mxu0 0
          %1671 = vmatprep.subr.bf16.mxu0 0
          %1672 = vmatpush1.bf16.msra.mxu0 0
          %1673 = vmatprep.subr.bf16.mxu0 0
          %1674 = vmatpush1.bf16.msra.mxu0 0
          %1675 = vmatprep.subr.bf16.mxu0 0
          %1676 = vmatpush1.bf16.msra.mxu0 0
          %1677 = vmatprep.mubr.bf16.mxu0 0
          %1678 = vmatmul.mubr.bf16.gmra.mrb[0].mxu0 %v1643
          %v1679 = vpop.f32.mrb[0].mxu0
          %v1680 = vadd.f32 %v1628, %v1679
          %v1681 = vpop.f32.mrb[0].mxu0
          %v1682 = vpop.f32.mrb[0].mxu0
          %v1683 = vadd.f32 %v1628, %v1682
          %v1684 = vpop.f32.mrb[0].mxu0
          %1685 = vdwg.mxu0
          %v1686 = vmul.f32 %v1680, 0.5
          %v1687 = vmul.f32 %v1683, 0.5
          %v1688 = vmul.f32 %v1680, 0.70710677
          %v1689 = vmul.f32 %v1683, 0.70710677
          %v1690 = vand.u32 2147483647, %v1688
          %v1691 = vand.u32 2147483647, %v1689
          %v1692 = vmul.f32 %v1690, 0.3275911
          %v1693 = vmul.f32 %v1691, 0.3275911
          %v1694 = vadd.f32 %v1692, 1.0
          %v1695 = vadd.f32 %v1693, 1.0
          %v1696 = vrcp.pop %v1694
          %v1697 = vrcp.pop %v1695
          %v1698 = vmul.f32 %v1696, 1.0614054
          %v1699 = vmul.f32 %v1697, 1.0614054
          %v1700 = vadd.f32 %v1698, -1.4531521
          %v1701 = vadd.f32 %v1699, -1.4531521
          %v1702 = vmul.f32 %v1700, %v1696
          %v1703 = vmul.f32 %v1701, %v1697
          %v1704 = vadd.f32 %v1702, 1.4214138
          %v1705 = vadd.f32 %v1703, 1.4214138
          %v1706 = vmul.f32 %v1704, %v1696
          %v1707 = vmul.f32 %v1705, %v1697
          %v1708 = vadd.f32 %v1706, -0.28449672
          %v1709 = vadd.f32 %v1707, -0.28449672
          %v1710 = vmul.f32 %v1708, %v1696
          %v1711 = vmul.f32 %v1709, %v1697
          %v1712 = vadd.f32 %v1710, 0.2548296
          %v1713 = vadd.f32 %v1711, 0.2548296
          %v1714 = vmul.f32 %v1712, %v1696
          %v1715 = vmul.f32 %v1713, %v1697
          %v1716 = vsub.f32 0.0, %v1690
          %v1717 = vsub.f32 0.0, %v1691
          %v1718 = vmul.f32 %v1716, %v1690
          %v1719 = vmul.f32 %v1717, %v1691
          %v1720 = vmul.f32 %v1718, 1.442695
          %v1721 = vpow.pop %v1720
          %v1722 = vmul.f32 %v1719, 1.442695
          %v1723 = vpow.pop %v1722
          %v1724 = vmul.f32 %v1714, %v1721
          %v1725 = vmul.f32 %v1715, %v1723
          %v1726 = vsub.f32 1.0, %v1724
          %v1727 = vsub.f32 1.0, %v1725
          %vm1728 = vcmp.ge.f32.partialorder %v1688, 0.0
          %vm1729 = vcmp.ge.f32.partialorder %v1689, 0.0
          %v1730 = vsub.f32 0.0, %v1726
          %v1731 = vsub.f32 0.0, %v1727
          %v1732 = vsel %vm1728, %v1726, %v1730
          %v1733 = vsel %vm1729, %v1727, %v1731
          %v1734 = vadd.f32 %v1732, 1.0
          %v1735 = vadd.f32 %v1733, 1.0
          %v1736 = vmul.f32 %v1686, %v1734
          %v1737 = vmul.f32 %v1687, %v1735
          %v1738 = vpack.c.bf16 %v1737, %v1736
          %v1739 = vld [vmem:[%s14] sm:$0xf]
          %v1740 = vld [vmem:[%s14 + $0x4] sm:$0xf]
          %v1741 = vld [vmem:[%s14 + $0x8] sm:$0xf]
          %v1742 = vld [vmem:[%s14 + $0xc] sm:$0xf]
          %v1743 = vld [vmem:[%s14 + $0x10] sm:$0xf]
          %v1744 = vld [vmem:[%s14 + $0x14] sm:$0xf]
          %v1745 = vld [vmem:[%s14 + $0x18] sm:$0xf]
          %v1746 = vld [vmem:[%s14 + $0x1c] sm:$0xf]
          %v1747 = vld [vmem:[%s15] sm:$0x1]
          %v1749 = vlaneseq
          %v1750 = vshrl.u32 %v1749, 7
          %v1751 = vsub.s32 0, %v1750
          %v1752 = vrot.slane %v1747, %v1751
          %v1762 = vunpack.c.l.b16 %v1739
          %v1763 = vunpack.c.l.b16 %v1740
          %v1764 = vunpack.c.l.b16 %v1741
          %v1765 = vunpack.c.l.b16 %v1742
          %v1766 = vunpack.c.l.b16 %v1743
          %v1767 = vunpack.c.l.b16 %v1744
          %v1768 = vunpack.c.l.b16 %v1745
          %v1769 = vunpack.c.l.b16 %v1746
          %v1770 = vpack.c.b16 %v1763, %v1762
          %v1771 = vpack.c.b16 %v1765, %v1764
          %v1772 = vpack.c.b16 %v1767, %v1766
          %v1773 = vpack.c.b16 %v1769, %v1768
          %vm1778 = vcmask 523264
          %v1780 = vsel %vm1778, %v1738, 0
          %1782 = vmatprep.subr.bf16.mxu0 0
          %1783 = vmatpush1.bf16.msra.mxu0 %v1770
          %1784 = vmatprep.subr.bf16.mxu0 0
          %1785 = vmatpush1.bf16.msra.mxu0 %v1771
          %1786 = vmatprep.subr.bf16.mxu0 0
          %1787 = vmatpush1.bf16.msra.mxu0 %v1772
          %1788 = vmatprep.subr.bf16.mxu0 0
          %1789 = vmatpush1.bf16.msra.mxu0 %v1773
          %1790 = vmatprep.subr.bf16.mxu0 0
          %1791 = vmatpush1.bf16.msra.mxu0 0
          %1792 = vmatprep.subr.bf16.mxu0 0
          %1793 = vmatpush1.bf16.msra.mxu0 0
          %1794 = vmatprep.subr.bf16.mxu0 0
          %1795 = vmatpush1.bf16.msra.mxu0 0
          %1796 = vmatprep.subr.bf16.mxu0 0
          %1797 = vmatpush1.bf16.msra.mxu0 0
          %1798 = vmatprep.subr.bf16.mxu0 0
          %1799 = vmatpush1.bf16.msra.mxu0 0
          %1800 = vmatprep.subr.bf16.mxu0 0
          %1801 = vmatpush1.bf16.msra.mxu0 0
          %1802 = vmatprep.subr.bf16.mxu0 0
          %1803 = vmatpush1.bf16.msra.mxu0 0
          %1804 = vmatprep.subr.bf16.mxu0 0
          %1805 = vmatpush1.bf16.msra.mxu0 0
          %1806 = vmatprep.subr.bf16.mxu0 0
          %1807 = vmatpush1.bf16.msra.mxu0 0
          %1808 = vmatprep.subr.bf16.mxu0 0
          %1809 = vmatpush1.bf16.msra.mxu0 0
          %1810 = vmatprep.subr.bf16.mxu0 0
          %1811 = vmatpush1.bf16.msra.mxu0 0
          %1812 = vmatprep.subr.bf16.mxu0 0
          %1813 = vmatpush1.bf16.msra.mxu0 0
          %1814 = vmatprep.mubr.bf16.mxu0 0
          %1815 = vmatmul.mubr.bf16.gmra.mrb[0].mxu0 %v1780
          %v1816 = vpop.f32.mrb[0].mxu0
          %v1817 = vadd.f32 %v1752, %v1816
          %v1818 = vpop.f32.mrb[0].mxu0
          %v1819 = vpop.f32.mrb[0].mxu0
          %v1820 = vadd.f32 %v1752, %v1819
          %v1821 = vpop.f32.mrb[0].mxu0
          %1822 = vdwg.mxu0
          %v1823 = vadd.f32 %v1572, %v1817
          %v1824 = vadd.f32 %v1573, %v1820
          %1825 = vst.msk [vmem:[#allocation2] sm:$0xff] %vm699, %v1823
          %1826 = vst.msk [vmem:[#allocation2 + $0x8] sm:$0xff] %vm699, %v1824
          %v1827 = vld [vmem:[#allocation2] sm:$0xff]
          %v1828 = vld [vmem:[#allocation2 + $0x8] sm:$0xff]
          %s1829 = scalar_lea.vmem %s4, 1
          %v1830 = vld [vmem:[%s1829] sm:$0x1]
          %s1831 = scalar_lea.vmem %s5, 1
          %v1832 = vld [vmem:[%s1831] sm:$0x1]
          %v1833 = vsel %vm699, %v1827, 0.0
          %1834 = vadd.xlane.f32.xlu0 %v1833
          %v1835 = vpop.xlane.xlu0 %1834
          %v1836 = vsel %vm699, %v1828, 0.0
          %1837 = vadd.xlane.f32.xlu0 %v1836
          %v1838 = vpop.xlane.xlu0 %1837
          %v1839 = vmul.f32 %v1835, %v807
          %v1840 = vmul.f32 %v1838, %v807
          %v1841 = vsub.f32 %v1827, %v1839
          %v1842 = vsub.f32 %v1828, %v1840
          %v1843 = vmul.f32 %v1841, %v1841
          %v1844 = vmul.f32 %v1842, %v1842
          %v1845 = vsel %vm699, %v1843, 0.0
          %1846 = vadd.xlane.f32.xlu0 %v1845
          %v1847 = vpop.xlane.xlu0 %1846
          %v1848 = vsel %vm699, %v1844, 0.0
          %1849 = vadd.xlane.f32.xlu0 %v1848
          %v1850 = vpop.xlane.xlu0 %1849
          %v1851 = vmul.f32 %v1847, %v807
          %v1852 = vmul.f32 %v1850, %v807
          %v1853 = vadd.f32 %v1851, 1e-05
          %v1854 = vadd.f32 %v1852, 1e-05
          %v1855 = vrsqrt.pop %v1853
          %v1856 = vrsqrt.pop %v1854
          %v1857 = vmul.f32 %v1841, %v1855
          %v1858 = vmul.f32 %v1842, %v1856
          %v1860 = vlaneseq
          %v1861 = vshrl.u32 %v1860, 7
          %v1862 = vsub.s32 0, %v1861
          %v1863 = vrot.slane %v1830, %v1862
          %v1865 = vmul.f32 %v1857, %v1863
          %v1866 = vmul.f32 %v1858, %v1863
          %v1868 = vlaneseq
          %v1869 = vshrl.u32 %v1868, 7
          %v1870 = vsub.s32 0, %v1869
          %v1871 = vrot.slane %v1832, %v1870
          %v1873 = vadd.f32 %v1865, %v1871
          %v1874 = vadd.f32 %v1866, %v1871
          %v1875 = vpack.c.bf16 %v1874, %v1873
          %s1876 = scalar_lea.vmem %s6, 16
          %v1877 = vld [vmem:[%s1876] sm:$0xf]
          %v1878 = vld [vmem:[%s1876 + $0x4] sm:$0xf]
          %v1879 = vld [vmem:[%s1876 + $0x8] sm:$0xf]
          %v1880 = vld [vmem:[%s1876 + $0xc] sm:$0xf]
          %s1881 = scalar_lea.vmem %s7, 1
          %v1882 = vld [vmem:[%s1881] sm:$0x1]
          %v1884 = vlaneseq
          %v1885 = vshrl.u32 %v1884, 7
          %v1886 = vsub.s32 0, %v1885
          %v1887 = vrot.slane %v1882, %v1886
          %v1893 = vunpack.c.l.b16 %v1877
          %v1894 = vunpack.c.l.b16 %v1878
          %v1895 = vunpack.c.l.b16 %v1879
          %v1896 = vunpack.c.l.b16 %v1880
          %v1897 = vpack.c.b16 %v1894, %v1893
          %v1898 = vpack.c.b16 %v1896, %v1895
          %v1902 = vsel %vm699, %v1875, 0
          %1904 = vmatprep.subr.bf16.mxu0 0
          %1905 = vmatpush1.bf16.msra.mxu0 %v1897
          %1906 = vmatprep.subr.bf16.mxu0 0
          %1907 = vmatpush1.bf16.msra.mxu0 %v1898
          %1908 = vmatprep.subr.bf16.mxu0 0
          %1909 = vmatpush1.bf16.msra.mxu0 0
          %1910 = vmatprep.subr.bf16.mxu0 0
          %1911 = vmatpush1.bf16.msra.mxu0 0
          %1912 = vmatprep.subr.bf16.mxu0 0
          %1913 = vmatpush1.bf16.msra.mxu0 0
          %1914 = vmatprep.subr.bf16.mxu0 0
          %1915 = vmatpush1.bf16.msra.mxu0 0
          %1916 = vmatprep.subr.bf16.mxu0 0
          %1917 = vmatpush1.bf16.msra.mxu0 0
          %1918 = vmatprep.subr.bf16.mxu0 0
          %1919 = vmatpush1.bf16.msra.mxu0 0
          %1920 = vmatprep.subr.bf16.mxu0 0
          %1921 = vmatpush1.bf16.msra.mxu0 0
          %1922 = vmatprep.subr.bf16.mxu0 0
          %1923 = vmatpush1.bf16.msra.mxu0 0
          %1924 = vmatprep.subr.bf16.mxu0 0
          %1925 = vmatpush1.bf16.msra.mxu0 0
          %1926 = vmatprep.subr.bf16.mxu0 0
          %1927 = vmatpush1.bf16.msra.mxu0 0
          %1928 = vmatprep.subr.bf16.mxu0 0
          %1929 = vmatpush1.bf16.msra.mxu0 0
          %1930 = vmatprep.subr.bf16.mxu0 0
          %1931 = vmatpush1.bf16.msra.mxu0 0
          %1932 = vmatprep.subr.bf16.mxu0 0
          %1933 = vmatpush1.bf16.msra.mxu0 0
          %1934 = vmatprep.subr.bf16.mxu0 0
          %1935 = vmatpush1.bf16.msra.mxu0 0
          %1936 = vmatprep.mubr.bf16.mxu0 0
          %1937 = vmatmul.mubr.bf16.gmra.mrb[0].mxu0 %v1902
          %v1938 = vpop.f32.mrb[0].mxu0
          %v1939 = vadd.f32 %v1887, %v1938
          %v1940 = vpop.f32.mrb[0].mxu0
          %v1941 = vpop.f32.mrb[0].mxu0
          %v1942 = vadd.f32 %v1887, %v1941
          %v1943 = vpop.f32.mrb[0].mxu0
          %1944 = vdwg.mxu0
          %v1945 = vpack.c.bf16 %v1942, %v1939
          %1946 = vst.msk [vmem:[#allocation3] sm:$0xff] %vm913, %v1945
          %v1947 = vld [vmem:[#allocation2] sm:$0xff]
          %v1948 = vld [vmem:[#allocation2 + $0x8] sm:$0xff]
          %v1949 = vld [vmem:[#allocation3] sm:$0xff]
          %1951 = vrot.lane.b32.xlu0 %v1949, 96
          %v1952 = vpop.permute.xlu0 %1951
          %v1954 = vsel %vm921, %v1949, 0
          %v1957 = vsel %vm921, %v1952, 0
          %1959 = vmatprep.subr.bf16.mxu0 0
          %1960 = vmatpush1.bf16.xpose.msra.mxu0 %v1957
          %1961 = vmatprep.subr.bf16.mxu0 0
          %1962 = vmatpush1.bf16.xpose.msra.mxu0 0
          %1963 = vmatprep.subr.bf16.mxu0 0
          %1964 = vmatpush1.bf16.xpose.msra.mxu0 0
          %1965 = vmatprep.subr.bf16.mxu0 0
          %1966 = vmatpush1.bf16.xpose.msra.mxu0 0
          %1967 = vmatprep.subr.bf16.mxu0 0
          %1968 = vmatpush1.bf16.xpose.msra.mxu0 0
          %1969 = vmatprep.subr.bf16.mxu0 0
          %1970 = vmatpush1.bf16.xpose.msra.mxu0 0
          %1971 = vmatprep.subr.bf16.mxu0 0
          %1972 = vmatpush1.bf16.xpose.msra.mxu0 0
          %1973 = vmatprep.subr.bf16.mxu0 0
          %1974 = vmatpush1.bf16.xpose.msra.mxu0 0
          %1975 = vmatprep.subr.bf16.mxu0 0
          %1976 = vmatpush1.bf16.xpose.msra.mxu0 0
          %1977 = vmatprep.subr.bf16.mxu0 0
          %1978 = vmatpush1.bf16.xpose.msra.mxu0 0
          %1979 = vmatprep.subr.bf16.mxu0 0
          %1980 = vmatpush1.bf16.xpose.msra.mxu0 0
          %1981 = vmatprep.subr.bf16.mxu0 0
          %1982 = vmatpush1.bf16.xpose.msra.mxu0 0
          %1983 = vmatprep.subr.bf16.mxu0 0
          %1984 = vmatpush1.bf16.xpose.msra.mxu0 0
          %1985 = vmatprep.subr.bf16.mxu0 0
          %1986 = vmatpush1.bf16.xpose.msra.mxu0 0
          %1987 = vmatprep.subr.bf16.mxu0 0
          %1988 = vmatpush1.bf16.xpose.msra.mxu0 0
          %1989 = vmatprep.subr.bf16.mxu0 0
          %1990 = vmatpush1.bf16.xpose.msra.mxu0 0
          %1991 = vmatprep.mubr.bf16.mxu0 0
          %1992 = vmatmul.mubr.bf16.gmra.mrb[0].mxu0 %v1954
          %v1993 = vpop.f32.mrb[0].mxu0
          %v1994 = vadd.f32 0.0, %v1993
          %v1995 = vpop.f32.mrb[0].mxu0
          %v1996 = vpop.f32.mrb[0].mxu0
          %v1997 = vadd.f32 0.0, %v1996
          %v1998 = vpop.f32.mrb[0].mxu0
          %1999 = vdwg.mxu0
          %v2000 = vmul.f32 %v1994, 0.35355338
          %v2001 = vmul.f32 %v1997, 0.35355338
          %v2002 = vadd.f32 %v2000, %v980
          %v2003 = vadd.f32 %v2001, %v980
          %v2004 = vsel %vm983, %v2002, -inf
          %2005 = vmax.xlane.f32.xlu0 %v2004
          %v2006 = vpop.xlane.xlu0 %2005
          %v2007 = vsel %vm983, %v2003, -inf
          %2008 = vmax.xlane.f32.xlu0 %v2007
          %v2009 = vpop.xlane.xlu0 %2008
          %v2010 = vmax.f32 %v2006, -1e+30
          %v2011 = vmax.f32 %v2009, -1e+30
          %v2012 = vsub.f32 -1e+30, %v2010
          %v2013 = vsub.f32 -1e+30, %v2011
          %v2014 = vmul.f32 %v2012, 1.442695
          %v2015 = vpow.pop %v2014
          %v2016 = vmul.f32 %v2013, 1.442695
          %v2017 = vpow.pop %v2016
          %v2018 = vsub.f32 %v2002, %v2010
          %v2019 = vsub.f32 %v2003, %v2011
          %v2020 = vmul.f32 %v2018, 1.442695
          %v2021 = vpow.pop %v2020
          %v2022 = vmul.f32 %v2019, 1.442695
          %v2023 = vpow.pop %v2022
          %v2024 = vmul.f32 %v2015, 0.0
          %v2025 = vmul.f32 %v2017, 0.0
          %v2026 = vsel %vm983, %v2021, 0.0
          %2027 = vadd.xlane.f32.xlu0 %v2026
          %v2028 = vpop.xlane.xlu0 %2027
          %v2029 = vsel %vm983, %v2023, 0.0
          %2030 = vadd.xlane.f32.xlu0 %v2029
          %v2031 = vpop.xlane.xlu0 %2030
          %v2032 = vadd.f32 %v2024, %v2028
          %v2033 = vadd.f32 %v2025, %v2031
          %v2034 = vpack.c.bf16 %v2023, %v2021
          %2035 = vrot.lane.b32.xlu0 %v1949, 64
          %v2036 = vpop.permute.xlu0 %2035
          %v2039 = vsel %vm983, %v2034, 0
          %2041 = vmatprep.subr.bf16.mxu0 0
          %2042 = vmatpush1.bf16.msra.mxu0 %v2036
          %2043 = vmatprep.subr.bf16.mxu0 0
          %2044 = vmatpush1.bf16.msra.mxu0 0
          %2045 = vmatprep.subr.bf16.mxu0 0
          %2046 = vmatpush1.bf16.msra.mxu0 0
          %2047 = vmatprep.subr.bf16.mxu0 0
          %2048 = vmatpush1.bf16.msra.mxu0 0
          %2049 = vmatprep.subr.bf16.mxu0 0
          %2050 = vmatpush1.bf16.msra.mxu0 0
          %2051 = vmatprep.subr.bf16.mxu0 0
          %2052 = vmatpush1.bf16.msra.mxu0 0
          %2053 = vmatprep.subr.bf16.mxu0 0
          %2054 = vmatpush1.bf16.msra.mxu0 0
          %2055 = vmatprep.subr.bf16.mxu0 0
          %2056 = vmatpush1.bf16.msra.mxu0 0
          %2057 = vmatprep.subr.bf16.mxu0 0
          %2058 = vmatpush1.bf16.msra.mxu0 0
          %2059 = vmatprep.subr.bf16.mxu0 0
          %2060 = vmatpush1.bf16.msra.mxu0 0
          %2061 = vmatprep.subr.bf16.mxu0 0
          %2062 = vmatpush1.bf16.msra.mxu0 0
          %2063 = vmatprep.subr.bf16.mxu0 0
          %2064 = vmatpush1.bf16.msra.mxu0 0
          %2065 = vmatprep.subr.bf16.mxu0 0
          %2066 = vmatpush1.bf16.msra.mxu0 0
          %2067 = vmatprep.subr.bf16.mxu0 0
          %2068 = vmatpush1.bf16.msra.mxu0 0
          %2069 = vmatprep.subr.bf16.mxu0 0
          %2070 = vmatpush1.bf16.msra.mxu0 0
          %2071 = vmatprep.subr.bf16.mxu0 0
          %2072 = vmatpush1.bf16.msra.mxu0 0
          %2073 = vmatprep.mubr.bf16.mxu0 0
          %2074 = vmatmul.mubr.bf16.gmra.mrb[0].mxu0 %v2039
          %v2075 = vpop.f32.mrb[0].mxu0
          %v2076 = vadd.f32 0.0, %v2075
          %v2077 = vpop.f32.mrb[0].mxu0
          %v2078 = vpop.f32.mrb[0].mxu0
          %v2079 = vadd.f32 0.0, %v2078
          %v2080 = vpop.f32.mrb[0].mxu0
          %2081 = vdwg.mxu0
          %v2082 = vadd.f32 %v2024, %v2076
          %v2083 = vadd.f32 %v2025, %v2079
          %v2084 = vrcp.pop %v2032
          %v2085 = vrcp.pop %v2033
          %v2086 = vmul.f32 %v2082, %v2084
          %v2087 = vmul.f32 %v2083, %v2085
          %v2088 = vpack.c.bf16 %v2087, %v2086
          %2089 = vrot.lane.b32.xlu0 %v1949, 120
          %v2090 = vpop.permute.xlu0 %2089
          %2091 = vrot.lane.b32.xlu0 %v1949, 88
          %v2092 = vpop.permute.xlu0 %2091
          %v2094 = vsel %vm921, %v2090, 0
          %v2097 = vsel %vm921, %v2092, 0
          %2099 = vmatprep.subr.bf16.mxu0 0
          %2100 = vmatpush1.bf16.xpose.msra.mxu0 %v2097
          %2101 = vmatprep.subr.bf16.mxu0 0
          %2102 = vmatpush1.bf16.xpose.msra.mxu0 0
          %2103 = vmatprep.subr.bf16.mxu0 0
          %2104 = vmatpush1.bf16.xpose.msra.mxu0 0
          %2105 = vmatprep.subr.bf16.mxu0 0
          %2106 = vmatpush1.bf16.xpose.msra.mxu0 0
          %2107 = vmatprep.subr.bf16.mxu0 0
          %2108 = vmatpush1.bf16.xpose.msra.mxu0 0
          %2109 = vmatprep.subr.bf16.mxu0 0
          %2110 = vmatpush1.bf16.xpose.msra.mxu0 0
          %2111 = vmatprep.subr.bf16.mxu0 0
          %2112 = vmatpush1.bf16.xpose.msra.mxu0 0
          %2113 = vmatprep.subr.bf16.mxu0 0
          %2114 = vmatpush1.bf16.xpose.msra.mxu0 0
          %2115 = vmatprep.subr.bf16.mxu0 0
          %2116 = vmatpush1.bf16.xpose.msra.mxu0 0
          %2117 = vmatprep.subr.bf16.mxu0 0
          %2118 = vmatpush1.bf16.xpose.msra.mxu0 0
          %2119 = vmatprep.subr.bf16.mxu0 0
          %2120 = vmatpush1.bf16.xpose.msra.mxu0 0
          %2121 = vmatprep.subr.bf16.mxu0 0
          %2122 = vmatpush1.bf16.xpose.msra.mxu0 0
          %2123 = vmatprep.subr.bf16.mxu0 0
          %2124 = vmatpush1.bf16.xpose.msra.mxu0 0
          %2125 = vmatprep.subr.bf16.mxu0 0
          %2126 = vmatpush1.bf16.xpose.msra.mxu0 0
          %2127 = vmatprep.subr.bf16.mxu0 0
          %2128 = vmatpush1.bf16.xpose.msra.mxu0 0
          %2129 = vmatprep.subr.bf16.mxu0 0
          %2130 = vmatpush1.bf16.xpose.msra.mxu0 0
          %2131 = vmatprep.mubr.bf16.mxu0 0
          %2132 = vmatmul.mubr.bf16.gmra.mrb[0].mxu0 %v2094
          %v2133 = vpop.f32.mrb[0].mxu0
          %v2134 = vadd.f32 0.0, %v2133
          %v2135 = vpop.f32.mrb[0].mxu0
          %v2136 = vpop.f32.mrb[0].mxu0
          %v2137 = vadd.f32 0.0, %v2136
          %v2138 = vpop.f32.mrb[0].mxu0
          %2139 = vdwg.mxu0
          %v2140 = vmul.f32 %v2134, 0.35355338
          %v2141 = vmul.f32 %v2137, 0.35355338
          %v2142 = vadd.f32 %v2140, %v980
          %v2143 = vadd.f32 %v2141, %v980
          %v2144 = vsel %vm983, %v2142, -inf
          %2145 = vmax.xlane.f32.xlu0 %v2144
          %v2146 = vpop.xlane.xlu0 %2145
          %v2147 = vsel %vm983, %v2143, -inf
          %2148 = vmax.xlane.f32.xlu0 %v2147
          %v2149 = vpop.xlane.xlu0 %2148
          %v2150 = vmax.f32 %v2146, -1e+30
          %v2151 = vmax.f32 %v2149, -1e+30
          %v2152 = vsub.f32 -1e+30, %v2150
          %v2153 = vsub.f32 -1e+30, %v2151
          %v2154 = vmul.f32 %v2152, 1.442695
          %v2155 = vpow.pop %v2154
          %v2156 = vmul.f32 %v2153, 1.442695
          %v2157 = vpow.pop %v2156
          %v2158 = vsub.f32 %v2142, %v2150
          %v2159 = vsub.f32 %v2143, %v2151
          %v2160 = vmul.f32 %v2158, 1.442695
          %v2161 = vpow.pop %v2160
          %v2162 = vmul.f32 %v2159, 1.442695
          %v2163 = vpow.pop %v2162
          %v2164 = vmul.f32 %v2155, 0.0
          %v2165 = vmul.f32 %v2157, 0.0
          %v2166 = vsel %vm983, %v2161, 0.0
          %2167 = vadd.xlane.f32.xlu0 %v2166
          %v2168 = vpop.xlane.xlu0 %2167
          %v2169 = vsel %vm983, %v2163, 0.0
          %2170 = vadd.xlane.f32.xlu0 %v2169
          %v2171 = vpop.xlane.xlu0 %2170
          %v2172 = vadd.f32 %v2164, %v2168
          %v2173 = vadd.f32 %v2165, %v2171
          %v2174 = vpack.c.bf16 %v2163, %v2161
          %2175 = vrot.lane.b32.xlu0 %v1949, 56
          %v2176 = vpop.permute.xlu0 %2175
          %v2179 = vsel %vm983, %v2174, 0
          %2181 = vmatprep.subr.bf16.mxu0 0
          %2182 = vmatpush1.bf16.msra.mxu0 %v2176
          %2183 = vmatprep.subr.bf16.mxu0 0
          %2184 = vmatpush1.bf16.msra.mxu0 0
          %2185 = vmatprep.subr.bf16.mxu0 0
          %2186 = vmatpush1.bf16.msra.mxu0 0
          %2187 = vmatprep.subr.bf16.mxu0 0
          %2188 = vmatpush1.bf16.msra.mxu0 0
          %2189 = vmatprep.subr.bf16.mxu0 0
          %2190 = vmatpush1.bf16.msra.mxu0 0
          %2191 = vmatprep.subr.bf16.mxu0 0
          %2192 = vmatpush1.bf16.msra.mxu0 0
          %2193 = vmatprep.subr.bf16.mxu0 0
          %2194 = vmatpush1.bf16.msra.mxu0 0
          %2195 = vmatprep.subr.bf16.mxu0 0
          %2196 = vmatpush1.bf16.msra.mxu0 0
          %2197 = vmatprep.subr.bf16.mxu0 0
          %2198 = vmatpush1.bf16.msra.mxu0 0
          %2199 = vmatprep.subr.bf16.mxu0 0
          %2200 = vmatpush1.bf16.msra.mxu0 0
          %2201 = vmatprep.subr.bf16.mxu0 0
          %2202 = vmatpush1.bf16.msra.mxu0 0
          %2203 = vmatprep.subr.bf16.mxu0 0
          %2204 = vmatpush1.bf16.msra.mxu0 0
          %2205 = vmatprep.subr.bf16.mxu0 0
          %2206 = vmatpush1.bf16.msra.mxu0 0
          %2207 = vmatprep.subr.bf16.mxu0 0
          %2208 = vmatpush1.bf16.msra.mxu0 0
          %2209 = vmatprep.subr.bf16.mxu0 0
          %2210 = vmatpush1.bf16.msra.mxu0 0
          %2211 = vmatprep.subr.bf16.mxu0 0
          %2212 = vmatpush1.bf16.msra.mxu0 0
          %2213 = vmatprep.mubr.bf16.mxu0 0
          %2214 = vmatmul.mubr.bf16.gmra.mrb[0].mxu0 %v2179
          %v2215 = vpop.f32.mrb[0].mxu0
          %v2216 = vadd.f32 0.0, %v2215
          %v2217 = vpop.f32.mrb[0].mxu0
          %v2218 = vpop.f32.mrb[0].mxu0
          %v2219 = vadd.f32 0.0, %v2218
          %v2220 = vpop.f32.mrb[0].mxu0
          %2221 = vdwg.mxu0
          %v2222 = vadd.f32 %v2164, %v2216
          %v2223 = vadd.f32 %v2165, %v2219
          %v2224 = vrcp.pop %v2172
          %v2225 = vrcp.pop %v2173
          %v2226 = vmul.f32 %v2222, %v2224
          %v2227 = vmul.f32 %v2223, %v2225
          %v2228 = vpack.c.bf16 %v2227, %v2226
          %2229 = vrot.lane.b32.xlu0 %v1949, 112
          %v2230 = vpop.permute.xlu0 %2229
          %2231 = vrot.lane.b32.xlu0 %v1949, 80
          %v2232 = vpop.permute.xlu0 %2231
          %v2234 = vsel %vm921, %v2230, 0
          %v2237 = vsel %vm921, %v2232, 0
          %2239 = vmatprep.subr.bf16.mxu0 0
          %2240 = vmatpush1.bf16.xpose.msra.mxu0 %v2237
          %2241 = vmatprep.subr.bf16.mxu0 0
          %2242 = vmatpush1.bf16.xpose.msra.mxu0 0
          %2243 = vmatprep.subr.bf16.mxu0 0
          %2244 = vmatpush1.bf16.xpose.msra.mxu0 0
          %2245 = vmatprep.subr.bf16.mxu0 0
          %2246 = vmatpush1.bf16.xpose.msra.mxu0 0
          %2247 = vmatprep.subr.bf16.mxu0 0
          %2248 = vmatpush1.bf16.xpose.msra.mxu0 0
          %2249 = vmatprep.subr.bf16.mxu0 0
          %2250 = vmatpush1.bf16.xpose.msra.mxu0 0
          %2251 = vmatprep.subr.bf16.mxu0 0
          %2252 = vmatpush1.bf16.xpose.msra.mxu0 0
          %2253 = vmatprep.subr.bf16.mxu0 0
          %2254 = vmatpush1.bf16.xpose.msra.mxu0 0
          %2255 = vmatprep.subr.bf16.mxu0 0
          %2256 = vmatpush1.bf16.xpose.msra.mxu0 0
          %2257 = vmatprep.subr.bf16.mxu0 0
          %2258 = vmatpush1.bf16.xpose.msra.mxu0 0
          %2259 = vmatprep.subr.bf16.mxu0 0
          %2260 = vmatpush1.bf16.xpose.msra.mxu0 0
          %2261 = vmatprep.subr.bf16.mxu0 0
          %2262 = vmatpush1.bf16.xpose.msra.mxu0 0
          %2263 = vmatprep.subr.bf16.mxu0 0
          %2264 = vmatpush1.bf16.xpose.msra.mxu0 0
          %2265 = vmatprep.subr.bf16.mxu0 0
          %2266 = vmatpush1.bf16.xpose.msra.mxu0 0
          %2267 = vmatprep.subr.bf16.mxu0 0
          %2268 = vmatpush1.bf16.xpose.msra.mxu0 0
          %2269 = vmatprep.subr.bf16.mxu0 0
          %2270 = vmatpush1.bf16.xpose.msra.mxu0 0
          %2271 = vmatprep.mubr.bf16.mxu0 0
          %2272 = vmatmul.mubr.bf16.gmra.mrb[0].mxu0 %v2234
          %v2273 = vpop.f32.mrb[0].mxu0
          %v2274 = vadd.f32 0.0, %v2273
          %v2275 = vpop.f32.mrb[0].mxu0
          %v2276 = vpop.f32.mrb[0].mxu0
          %v2277 = vadd.f32 0.0, %v2276
          %v2278 = vpop.f32.mrb[0].mxu0
          %2279 = vdwg.mxu0
          %v2280 = vmul.f32 %v2274, 0.35355338
          %v2281 = vmul.f32 %v2277, 0.35355338
          %v2282 = vadd.f32 %v2280, %v980
          %v2283 = vadd.f32 %v2281, %v980
          %v2284 = vsel %vm983, %v2282, -inf
          %2285 = vmax.xlane.f32.xlu0 %v2284
          %v2286 = vpop.xlane.xlu0 %2285
          %v2287 = vsel %vm983, %v2283, -inf
          %2288 = vmax.xlane.f32.xlu0 %v2287
          %v2289 = vpop.xlane.xlu0 %2288
          %v2290 = vmax.f32 %v2286, -1e+30
          %v2291 = vmax.f32 %v2289, -1e+30
          %v2292 = vsub.f32 -1e+30, %v2290
          %v2293 = vsub.f32 -1e+30, %v2291
          %v2294 = vmul.f32 %v2292, 1.442695
          %v2295 = vpow.pop %v2294
          %v2296 = vmul.f32 %v2293, 1.442695
          %v2297 = vpow.pop %v2296
          %v2298 = vsub.f32 %v2282, %v2290
          %v2299 = vsub.f32 %v2283, %v2291
          %v2300 = vmul.f32 %v2298, 1.442695
          %v2301 = vpow.pop %v2300
          %v2302 = vmul.f32 %v2299, 1.442695
          %v2303 = vpow.pop %v2302
          %v2304 = vmul.f32 %v2295, 0.0
          %v2305 = vmul.f32 %v2297, 0.0
          %v2306 = vsel %vm983, %v2301, 0.0
          %2307 = vadd.xlane.f32.xlu0 %v2306
          %v2308 = vpop.xlane.xlu0 %2307
          %v2309 = vsel %vm983, %v2303, 0.0
          %2310 = vadd.xlane.f32.xlu0 %v2309
          %v2311 = vpop.xlane.xlu0 %2310
          %v2312 = vadd.f32 %v2304, %v2308
          %v2313 = vadd.f32 %v2305, %v2311
          %v2314 = vpack.c.bf16 %v2303, %v2301
          %2315 = vrot.lane.b32.xlu0 %v1949, 48
          %v2316 = vpop.permute.xlu0 %2315
          %v2319 = vsel %vm983, %v2314, 0
          %2321 = vmatprep.subr.bf16.mxu0 0
          %2322 = vmatpush1.bf16.msra.mxu0 %v2316
          %2323 = vmatprep.subr.bf16.mxu0 0
          %2324 = vmatpush1.bf16.msra.mxu0 0
          %2325 = vmatprep.subr.bf16.mxu0 0
          %2326 = vmatpush1.bf16.msra.mxu0 0
          %2327 = vmatprep.subr.bf16.mxu0 0
          %2328 = vmatpush1.bf16.msra.mxu0 0
          %2329 = vmatprep.subr.bf16.mxu0 0
          %2330 = vmatpush1.bf16.msra.mxu0 0
          %2331 = vmatprep.subr.bf16.mxu0 0
          %2332 = vmatpush1.bf16.msra.mxu0 0
          %2333 = vmatprep.subr.bf16.mxu0 0
          %2334 = vmatpush1.bf16.msra.mxu0 0
          %2335 = vmatprep.subr.bf16.mxu0 0
          %2336 = vmatpush1.bf16.msra.mxu0 0
          %2337 = vmatprep.subr.bf16.mxu0 0
          %2338 = vmatpush1.bf16.msra.mxu0 0
          %2339 = vmatprep.subr.bf16.mxu0 0
          %2340 = vmatpush1.bf16.msra.mxu0 0
          %2341 = vmatprep.subr.bf16.mxu0 0
          %2342 = vmatpush1.bf16.msra.mxu0 0
          %2343 = vmatprep.subr.bf16.mxu0 0
          %2344 = vmatpush1.bf16.msra.mxu0 0
          %2345 = vmatprep.subr.bf16.mxu0 0
          %2346 = vmatpush1.bf16.msra.mxu0 0
          %2347 = vmatprep.subr.bf16.mxu0 0
          %2348 = vmatpush1.bf16.msra.mxu0 0
          %2349 = vmatprep.subr.bf16.mxu0 0
          %2350 = vmatpush1.bf16.msra.mxu0 0
          %2351 = vmatprep.subr.bf16.mxu0 0
          %2352 = vmatpush1.bf16.msra.mxu0 0
          %2353 = vmatprep.mubr.bf16.mxu0 0
          %2354 = vmatmul.mubr.bf16.gmra.mrb[0].mxu0 %v2319
          %v2355 = vpop.f32.mrb[0].mxu0
          %v2356 = vadd.f32 0.0, %v2355
          %v2357 = vpop.f32.mrb[0].mxu0
          %v2358 = vpop.f32.mrb[0].mxu0
          %v2359 = vadd.f32 0.0, %v2358
          %v2360 = vpop.f32.mrb[0].mxu0
          %2361 = vdwg.mxu0
          %v2362 = vadd.f32 %v2304, %v2356
          %v2363 = vadd.f32 %v2305, %v2359
          %v2364 = vrcp.pop %v2312
          %v2365 = vrcp.pop %v2313
          %v2366 = vmul.f32 %v2362, %v2364
          %v2367 = vmul.f32 %v2363, %v2365
          %v2368 = vpack.c.bf16 %v2367, %v2366
          %2369 = vrot.lane.b32.xlu0 %v1949, 104
          %v2370 = vpop.permute.xlu0 %2369
          %2371 = vrot.lane.b32.xlu0 %v1949, 72
          %v2372 = vpop.permute.xlu0 %2371
          %v2374 = vsel %vm921, %v2370, 0
          %v2377 = vsel %vm921, %v2372, 0
          %2379 = vmatprep.subr.bf16.mxu0 0
          %2380 = vmatpush1.bf16.xpose.msra.mxu0 %v2377
          %2381 = vmatprep.subr.bf16.mxu0 0
          %2382 = vmatpush1.bf16.xpose.msra.mxu0 0
          %2383 = vmatprep.subr.bf16.mxu0 0
          %2384 = vmatpush1.bf16.xpose.msra.mxu0 0
          %2385 = vmatprep.subr.bf16.mxu0 0
          %2386 = vmatpush1.bf16.xpose.msra.mxu0 0
          %2387 = vmatprep.subr.bf16.mxu0 0
          %2388 = vmatpush1.bf16.xpose.msra.mxu0 0
          %2389 = vmatprep.subr.bf16.mxu0 0
          %2390 = vmatpush1.bf16.xpose.msra.mxu0 0
          %2391 = vmatprep.subr.bf16.mxu0 0
          %2392 = vmatpush1.bf16.xpose.msra.mxu0 0
          %2393 = vmatprep.subr.bf16.mxu0 0
          %2394 = vmatpush1.bf16.xpose.msra.mxu0 0
          %2395 = vmatprep.subr.bf16.mxu0 0
          %2396 = vmatpush1.bf16.xpose.msra.mxu0 0
          %2397 = vmatprep.subr.bf16.mxu0 0
          %2398 = vmatpush1.bf16.xpose.msra.mxu0 0
          %2399 = vmatprep.subr.bf16.mxu0 0
          %2400 = vmatpush1.bf16.xpose.msra.mxu0 0
          %2401 = vmatprep.subr.bf16.mxu0 0
          %2402 = vmatpush1.bf16.xpose.msra.mxu0 0
          %2403 = vmatprep.subr.bf16.mxu0 0
          %2404 = vmatpush1.bf16.xpose.msra.mxu0 0
          %2405 = vmatprep.subr.bf16.mxu0 0
          %2406 = vmatpush1.bf16.xpose.msra.mxu0 0
          %2407 = vmatprep.subr.bf16.mxu0 0
          %2408 = vmatpush1.bf16.xpose.msra.mxu0 0
          %2409 = vmatprep.subr.bf16.mxu0 0
          %2410 = vmatpush1.bf16.xpose.msra.mxu0 0
          %2411 = vmatprep.mubr.bf16.mxu0 0
          %2412 = vmatmul.mubr.bf16.gmra.mrb[0].mxu0 %v2374
          %v2413 = vpop.f32.mrb[0].mxu0
          %v2414 = vadd.f32 0.0, %v2413
          %v2415 = vpop.f32.mrb[0].mxu0
          %v2416 = vpop.f32.mrb[0].mxu0
          %v2417 = vadd.f32 0.0, %v2416
          %v2418 = vpop.f32.mrb[0].mxu0
          %2419 = vdwg.mxu0
          %v2420 = vmul.f32 %v2414, 0.35355338
          %v2421 = vmul.f32 %v2417, 0.35355338
          %v2422 = vadd.f32 %v2420, %v980
          %v2423 = vadd.f32 %v2421, %v980
          %v2424 = vsel %vm983, %v2422, -inf
          %2425 = vmax.xlane.f32.xlu0 %v2424
          %v2426 = vpop.xlane.xlu0 %2425
          %v2427 = vsel %vm983, %v2423, -inf
          %2428 = vmax.xlane.f32.xlu0 %v2427
          %v2429 = vpop.xlane.xlu0 %2428
          %v2430 = vmax.f32 %v2426, -1e+30
          %v2431 = vmax.f32 %v2429, -1e+30
          %v2432 = vsub.f32 -1e+30, %v2430
          %v2433 = vsub.f32 -1e+30, %v2431
          %v2434 = vmul.f32 %v2432, 1.442695
          %v2435 = vpow.pop %v2434
          %v2436 = vmul.f32 %v2433, 1.442695
          %v2437 = vpow.pop %v2436
          %v2438 = vsub.f32 %v2422, %v2430
          %v2439 = vsub.f32 %v2423, %v2431
          %v2440 = vmul.f32 %v2438, 1.442695
          %v2441 = vpow.pop %v2440
          %v2442 = vmul.f32 %v2439, 1.442695
          %v2443 = vpow.pop %v2442
          %v2444 = vmul.f32 %v2435, 0.0
          %v2445 = vmul.f32 %v2437, 0.0
          %v2446 = vsel %vm983, %v2441, 0.0
          %2447 = vadd.xlane.f32.xlu0 %v2446
          %v2448 = vpop.xlane.xlu0 %2447
          %v2449 = vsel %vm983, %v2443, 0.0
          %2450 = vadd.xlane.f32.xlu0 %v2449
          %v2451 = vpop.xlane.xlu0 %2450
          %v2452 = vadd.f32 %v2444, %v2448
          %v2453 = vadd.f32 %v2445, %v2451
          %v2454 = vpack.c.bf16 %v2443, %v2441
          %2455 = vrot.lane.b32.xlu0 %v1949, 40
          %v2456 = vpop.permute.xlu0 %2455
          %v2459 = vsel %vm983, %v2454, 0
          %2461 = vmatprep.subr.bf16.mxu0 0
          %2462 = vmatpush1.bf16.msra.mxu0 %v2456
          %2463 = vmatprep.subr.bf16.mxu0 0
          %2464 = vmatpush1.bf16.msra.mxu0 0
          %2465 = vmatprep.subr.bf16.mxu0 0
          %2466 = vmatpush1.bf16.msra.mxu0 0
          %2467 = vmatprep.subr.bf16.mxu0 0
          %2468 = vmatpush1.bf16.msra.mxu0 0
          %2469 = vmatprep.subr.bf16.mxu0 0
          %2470 = vmatpush1.bf16.msra.mxu0 0
          %2471 = vmatprep.subr.bf16.mxu0 0
          %2472 = vmatpush1.bf16.msra.mxu0 0
          %2473 = vmatprep.subr.bf16.mxu0 0
          %2474 = vmatpush1.bf16.msra.mxu0 0
          %2475 = vmatprep.subr.bf16.mxu0 0
          %2476 = vmatpush1.bf16.msra.mxu0 0
          %2477 = vmatprep.subr.bf16.mxu0 0
          %2478 = vmatpush1.bf16.msra.mxu0 0
          %2479 = vmatprep.subr.bf16.mxu0 0
          %2480 = vmatpush1.bf16.msra.mxu0 0
          %2481 = vmatprep.subr.bf16.mxu0 0
          %2482 = vmatpush1.bf16.msra.mxu0 0
          %2483 = vmatprep.subr.bf16.mxu0 0
          %2484 = vmatpush1.bf16.msra.mxu0 0
          %2485 = vmatprep.subr.bf16.mxu0 0
          %2486 = vmatpush1.bf16.msra.mxu0 0
          %2487 = vmatprep.subr.bf16.mxu0 0
          %2488 = vmatpush1.bf16.msra.mxu0 0
          %2489 = vmatprep.subr.bf16.mxu0 0
          %2490 = vmatpush1.bf16.msra.mxu0 0
          %2491 = vmatprep.subr.bf16.mxu0 0
          %2492 = vmatpush1.bf16.msra.mxu0 0
          %2493 = vmatprep.mubr.bf16.mxu0 0
          %2494 = vmatmul.mubr.bf16.gmra.mrb[0].mxu0 %v2459
          %v2495 = vpop.f32.mrb[0].mxu0
          %v2496 = vadd.f32 0.0, %v2495
          %v2497 = vpop.f32.mrb[0].mxu0
          %v2498 = vpop.f32.mrb[0].mxu0
          %v2499 = vadd.f32 0.0, %v2498
          %v2500 = vpop.f32.mrb[0].mxu0
          %2501 = vdwg.mxu0
          %v2502 = vadd.f32 %v2444, %v2496
          %v2503 = vadd.f32 %v2445, %v2499
          %v2504 = vrcp.pop %v2452
          %v2505 = vrcp.pop %v2453
          %v2506 = vmul.f32 %v2502, %v2504
          %v2507 = vmul.f32 %v2503, %v2505
          %v2508 = vpack.c.bf16 %v2507, %v2506
          %2510 = vrot.lane.b32.xlu0 %v2228, 8
          %v2511 = vpop.permute.xlu0 %2510
          %2513 = vrot.lane.b32.xlu0 %v2368, 16
          %v2514 = vpop.permute.xlu0 %2513
          %2516 = vrot.lane.b32.xlu0 %v2508, 24
          %v2517 = vpop.permute.xlu0 %2516
          %v2520 = vsel %vm921, %v2088, %v2511
          %v2522 = vsel %vm983, %v2520, %v2514
          %v2524 = vsel %vm1503, %v2522, %v2517
          %s2525 = scalar_lea.vmem %s8, 16
          %v2526 = vld [vmem:[%s2525] sm:$0xf]
          %v2527 = vld [vmem:[%s2525 + $0x4] sm:$0xf]
          %v2528 = vld [vmem:[%s2525 + $0x8] sm:$0xf]
          %v2529 = vld [vmem:[%s2525 + $0xc] sm:$0xf]
          %s2530 = scalar_lea.vmem %s9, 1
          %v2531 = vld [vmem:[%s2530] sm:$0x1]
          %v2533 = vlaneseq
          %v2534 = vshrl.u32 %v2533, 7
          %v2535 = vsub.s32 0, %v2534
          %v2536 = vrot.slane %v2531, %v2535
          %v2542 = vunpack.c.l.b16 %v2526
          %v2543 = vunpack.c.l.b16 %v2527
          %v2544 = vunpack.c.l.b16 %v2528
          %v2545 = vunpack.c.l.b16 %v2529
          %v2546 = vpack.c.b16 %v2543, %v2542
          %v2547 = vpack.c.b16 %v2545, %v2544
          %v2550 = vsel %vm699, %v2524, 0
          %2552 = vmatprep.subr.bf16.mxu0 0
          %2553 = vmatpush1.bf16.msra.mxu0 %v2546
          %2554 = vmatprep.subr.bf16.mxu0 0
          %2555 = vmatpush1.bf16.msra.mxu0 %v2547
          %2556 = vmatprep.subr.bf16.mxu0 0
          %2557 = vmatpush1.bf16.msra.mxu0 0
          %2558 = vmatprep.subr.bf16.mxu0 0
          %2559 = vmatpush1.bf16.msra.mxu0 0
          %2560 = vmatprep.subr.bf16.mxu0 0
          %2561 = vmatpush1.bf16.msra.mxu0 0
          %2562 = vmatprep.subr.bf16.mxu0 0
          %2563 = vmatpush1.bf16.msra.mxu0 0
          %2564 = vmatprep.subr.bf16.mxu0 0
          %2565 = vmatpush1.bf16.msra.mxu0 0
          %2566 = vmatprep.subr.bf16.mxu0 0
          %2567 = vmatpush1.bf16.msra.mxu0 0
          %2568 = vmatprep.subr.bf16.mxu0 0
          %2569 = vmatpush1.bf16.msra.mxu0 0
          %2570 = vmatprep.subr.bf16.mxu0 0
          %2571 = vmatpush1.bf16.msra.mxu0 0
          %2572 = vmatprep.subr.bf16.mxu0 0
          %2573 = vmatpush1.bf16.msra.mxu0 0
          %2574 = vmatprep.subr.bf16.mxu0 0
          %2575 = vmatpush1.bf16.msra.mxu0 0
          %2576 = vmatprep.subr.bf16.mxu0 0
          %2577 = vmatpush1.bf16.msra.mxu0 0
          %2578 = vmatprep.subr.bf16.mxu0 0
          %2579 = vmatpush1.bf16.msra.mxu0 0
          %2580 = vmatprep.subr.bf16.mxu0 0
          %2581 = vmatpush1.bf16.msra.mxu0 0
          %2582 = vmatprep.subr.bf16.mxu0 0
          %2583 = vmatpush1.bf16.msra.mxu0 0
          %2584 = vmatprep.mubr.bf16.mxu0 0
          %2585 = vmatmul.mubr.bf16.gmra.mrb[0].mxu0 %v2550
          %v2586 = vpop.f32.mrb[0].mxu0
          %v2587 = vadd.f32 %v2536, %v2586
          %v2588 = vpop.f32.mrb[0].mxu0
          %v2589 = vpop.f32.mrb[0].mxu0
          %v2590 = vadd.f32 %v2536, %v2589
          %v2591 = vpop.f32.mrb[0].mxu0
          %2592 = vdwg.mxu0
          %v2593 = vadd.f32 %v1947, %v2587
          %v2594 = vadd.f32 %v1948, %v2590
          %s2595 = scalar_lea.vmem %s10, 1
          %v2596 = vld [vmem:[%s2595] sm:$0x1]
          %s2597 = scalar_lea.vmem %s11, 1
          %v2598 = vld [vmem:[%s2597] sm:$0x1]
          %v2599 = vsel %vm699, %v2593, 0.0
          %2600 = vadd.xlane.f32.xlu0 %v2599
          %v2601 = vpop.xlane.xlu0 %2600
          %v2602 = vsel %vm699, %v2594, 0.0
          %2603 = vadd.xlane.f32.xlu0 %v2602
          %v2604 = vpop.xlane.xlu0 %2603
          %v2605 = vmul.f32 %v2601, %v807
          %v2606 = vmul.f32 %v2604, %v807
          %v2607 = vsub.f32 %v2593, %v2605
          %v2608 = vsub.f32 %v2594, %v2606
          %v2609 = vmul.f32 %v2607, %v2607
          %v2610 = vmul.f32 %v2608, %v2608
          %v2611 = vsel %vm699, %v2609, 0.0
          %2612 = vadd.xlane.f32.xlu0 %v2611
          %v2613 = vpop.xlane.xlu0 %2612
          %v2614 = vsel %vm699, %v2610, 0.0
          %2615 = vadd.xlane.f32.xlu0 %v2614
          %v2616 = vpop.xlane.xlu0 %2615
          %v2617 = vmul.f32 %v2613, %v807
          %v2618 = vmul.f32 %v2616, %v807
          %v2619 = vadd.f32 %v2617, 1e-05
          %v2620 = vadd.f32 %v2618, 1e-05
          %v2621 = vrsqrt.pop %v2619
          %v2622 = vrsqrt.pop %v2620
          %v2623 = vmul.f32 %v2607, %v2621
          %v2624 = vmul.f32 %v2608, %v2622
          %v2626 = vlaneseq
          %v2627 = vshrl.u32 %v2626, 7
          %v2628 = vsub.s32 0, %v2627
          %v2629 = vrot.slane %v2596, %v2628
          %v2631 = vmul.f32 %v2623, %v2629
          %v2632 = vmul.f32 %v2624, %v2629
          %v2634 = vlaneseq
          %v2635 = vshrl.u32 %v2634, 7
          %v2636 = vsub.s32 0, %v2635
          %v2637 = vrot.slane %v2598, %v2636
          %v2639 = vadd.f32 %v2631, %v2637
          %v2640 = vadd.f32 %v2632, %v2637
          %v2641 = vpack.c.bf16 %v2640, %v2639
          %s2642 = scalar_lea.vmem %s12, 16
          %v2643 = vld [vmem:[%s2642] sm:$0xf]
          %v2644 = vld [vmem:[%s2642 + $0x4] sm:$0xf]
          %v2645 = vld [vmem:[%s2642 + $0x8] sm:$0xf]
          %v2646 = vld [vmem:[%s2642 + $0xc] sm:$0xf]
          %s2647 = scalar_lea.vmem %s13, 1
          %v2648 = vld [vmem:[%s2647] sm:$0x1]
          %v2650 = vlaneseq
          %v2651 = vshrl.u32 %v2650, 7
          %v2652 = vsub.s32 0, %v2651
          %v2653 = vrot.slane %v2648, %v2652
          %v2659 = vunpack.c.l.b16 %v2643
          %v2660 = vunpack.c.l.b16 %v2644
          %v2661 = vunpack.c.l.b16 %v2645
          %v2662 = vunpack.c.l.b16 %v2646
          %v2663 = vpack.c.b16 %v2660, %v2659
          %v2664 = vpack.c.b16 %v2662, %v2661
          %v2668 = vsel %vm699, %v2641, 0
          %2670 = vmatprep.subr.bf16.mxu0 0
          %2671 = vmatpush1.bf16.msra.mxu0 %v2663
          %2672 = vmatprep.subr.bf16.mxu0 0
          %2673 = vmatpush1.bf16.msra.mxu0 %v2664
          %2674 = vmatprep.subr.bf16.mxu0 0
          %2675 = vmatpush1.bf16.msra.mxu0 0
          %2676 = vmatprep.subr.bf16.mxu0 0
          %2677 = vmatpush1.bf16.msra.mxu0 0
          %2678 = vmatprep.subr.bf16.mxu0 0
          %2679 = vmatpush1.bf16.msra.mxu0 0
          %2680 = vmatprep.subr.bf16.mxu0 0
          %2681 = vmatpush1.bf16.msra.mxu0 0
          %2682 = vmatprep.subr.bf16.mxu0 0
          %2683 = vmatpush1.bf16.msra.mxu0 0
          %2684 = vmatprep.subr.bf16.mxu0 0
          %2685 = vmatpush1.bf16.msra.mxu0 0
          %2686 = vmatprep.subr.bf16.mxu0 0
          %2687 = vmatpush1.bf16.msra.mxu0 0
          %2688 = vmatprep.subr.bf16.mxu0 0
          %2689 = vmatpush1.bf16.msra.mxu0 0
          %2690 = vmatprep.subr.bf16.mxu0 0
          %2691 = vmatpush1.bf16.msra.mxu0 0
          %2692 = vmatprep.subr.bf16.mxu0 0
          %2693 = vmatpush1.bf16.msra.mxu0 0
          %2694 = vmatprep.subr.bf16.mxu0 0
          %2695 = vmatpush1.bf16.msra.mxu0 0
          %2696 = vmatprep.subr.bf16.mxu0 0
          %2697 = vmatpush1.bf16.msra.mxu0 0
          %2698 = vmatprep.subr.bf16.mxu0 0
          %2699 = vmatpush1.bf16.msra.mxu0 0
          %2700 = vmatprep.subr.bf16.mxu0 0
          %2701 = vmatpush1.bf16.msra.mxu0 0
          %2702 = vmatprep.mubr.bf16.mxu0 0
          %2703 = vmatmul.mubr.bf16.gmra.mrb[0].mxu0 %v2668
          %v2704 = vpop.f32.mrb[0].mxu0
          %v2705 = vadd.f32 %v2653, %v2704
          %v2706 = vpop.f32.mrb[0].mxu0
          %v2707 = vpop.f32.mrb[0].mxu0
          %v2708 = vadd.f32 %v2653, %v2707
          %v2709 = vpop.f32.mrb[0].mxu0
          %2710 = vdwg.mxu0
          %v2711 = vmul.f32 %v2705, 0.5
          %v2712 = vmul.f32 %v2708, 0.5
          %v2713 = vmul.f32 %v2705, 0.70710677
          %v2714 = vmul.f32 %v2708, 0.70710677
          %v2715 = vand.u32 2147483647, %v2713
          %v2716 = vand.u32 2147483647, %v2714
          %v2717 = vmul.f32 %v2715, 0.3275911
          %v2718 = vmul.f32 %v2716, 0.3275911
          %v2719 = vadd.f32 %v2717, 1.0
          %v2720 = vadd.f32 %v2718, 1.0
          %v2721 = vrcp.pop %v2719
          %v2722 = vrcp.pop %v2720
          %v2723 = vmul.f32 %v2721, 1.0614054
          %v2724 = vmul.f32 %v2722, 1.0614054
          %v2725 = vadd.f32 %v2723, -1.4531521
          %v2726 = vadd.f32 %v2724, -1.4531521
          %v2727 = vmul.f32 %v2725, %v2721
          %v2728 = vmul.f32 %v2726, %v2722
          %v2729 = vadd.f32 %v2727, 1.4214138
          %v2730 = vadd.f32 %v2728, 1.4214138
          %v2731 = vmul.f32 %v2729, %v2721
          %v2732 = vmul.f32 %v2730, %v2722
          %v2733 = vadd.f32 %v2731, -0.28449672
          %v2734 = vadd.f32 %v2732, -0.28449672
          %v2735 = vmul.f32 %v2733, %v2721
          %v2736 = vmul.f32 %v2734, %v2722
          %v2737 = vadd.f32 %v2735, 0.2548296
          %v2738 = vadd.f32 %v2736, 0.2548296
          %v2739 = vmul.f32 %v2737, %v2721
          %v2740 = vmul.f32 %v2738, %v2722
          %v2741 = vsub.f32 0.0, %v2715
          %v2742 = vsub.f32 0.0, %v2716
          %v2743 = vmul.f32 %v2741, %v2715
          %v2744 = vmul.f32 %v2742, %v2716
          %v2745 = vmul.f32 %v2743, 1.442695
          %v2746 = vpow.pop %v2745
          %v2747 = vmul.f32 %v2744, 1.442695
          %v2748 = vpow.pop %v2747
          %v2749 = vmul.f32 %v2739, %v2746
          %v2750 = vmul.f32 %v2740, %v2748
          %v2751 = vsub.f32 1.0, %v2749
          %v2752 = vsub.f32 1.0, %v2750
          %vm2753 = vcmp.ge.f32.partialorder %v2713, 0.0
          %vm2754 = vcmp.ge.f32.partialorder %v2714, 0.0
          %v2755 = vsub.f32 0.0, %v2751
          %v2756 = vsub.f32 0.0, %v2752
          %v2757 = vsel %vm2753, %v2751, %v2755
          %v2758 = vsel %vm2754, %v2752, %v2756
          %v2759 = vadd.f32 %v2757, 1.0
          %v2760 = vadd.f32 %v2758, 1.0
          %v2761 = vmul.f32 %v2711, %v2759
          %v2762 = vmul.f32 %v2712, %v2760
          %v2763 = vpack.c.bf16 %v2762, %v2761
          %s2764 = scalar_lea.vmem %s14, 32
          %v2765 = vld [vmem:[%s2764] sm:$0xf]
          %v2766 = vld [vmem:[%s2764 + $0x4] sm:$0xf]
          %v2767 = vld [vmem:[%s2764 + $0x8] sm:$0xf]
          %v2768 = vld [vmem:[%s2764 + $0xc] sm:$0xf]
          %v2769 = vld [vmem:[%s2764 + $0x10] sm:$0xf]
          %v2770 = vld [vmem:[%s2764 + $0x14] sm:$0xf]
          %v2771 = vld [vmem:[%s2764 + $0x18] sm:$0xf]
          %v2772 = vld [vmem:[%s2764 + $0x1c] sm:$0xf]
          %s2773 = scalar_lea.vmem %s15, 1
          %v2774 = vld [vmem:[%s2773] sm:$0x1]
          %v2776 = vlaneseq
          %v2777 = vshrl.u32 %v2776, 7
          %v2778 = vsub.s32 0, %v2777
          %v2779 = vrot.slane %v2774, %v2778
          %v2789 = vunpack.c.l.b16 %v2765
          %v2790 = vunpack.c.l.b16 %v2766
          %v2791 = vunpack.c.l.b16 %v2767
          %v2792 = vunpack.c.l.b16 %v2768
          %v2793 = vunpack.c.l.b16 %v2769
          %v2794 = vunpack.c.l.b16 %v2770
          %v2795 = vunpack.c.l.b16 %v2771
          %v2796 = vunpack.c.l.b16 %v2772
          %v2797 = vpack.c.b16 %v2790, %v2789
          %v2798 = vpack.c.b16 %v2792, %v2791
          %v2799 = vpack.c.b16 %v2794, %v2793
          %v2800 = vpack.c.b16 %v2796, %v2795
          %v2806 = vsel %vm1778, %v2763, 0
          %2808 = vmatprep.subr.bf16.mxu0 0
          %2809 = vmatpush1.bf16.msra.mxu0 %v2797
          %2810 = vmatprep.subr.bf16.mxu0 0
          %2811 = vmatpush1.bf16.msra.mxu0 %v2798
          %2812 = vmatprep.subr.bf16.mxu0 0
          %2813 = vmatpush1.bf16.msra.mxu0 %v2799
          %2814 = vmatprep.subr.bf16.mxu0 0
          %2815 = vmatpush1.bf16.msra.mxu0 %v2800
          %2816 = vmatprep.subr.bf16.mxu0 0
          %2817 = vmatpush1.bf16.msra.mxu0 0
          %2818 = vmatprep.subr.bf16.mxu0 0
          %2819 = vmatpush1.bf16.msra.mxu0 0
          %2820 = vmatprep.subr.bf16.mxu0 0
          %2821 = vmatpush1.bf16.msra.mxu0 0
          %2822 = vmatprep.subr.bf16.mxu0 0
          %2823 = vmatpush1.bf16.msra.mxu0 0
          %2824 = vmatprep.subr.bf16.mxu0 0
          %2825 = vmatpush1.bf16.msra.mxu0 0
          %2826 = vmatprep.subr.bf16.mxu0 0
          %2827 = vmatpush1.bf16.msra.mxu0 0
          %2828 = vmatprep.subr.bf16.mxu0 0
          %2829 = vmatpush1.bf16.msra.mxu0 0
          %2830 = vmatprep.subr.bf16.mxu0 0
          %2831 = vmatpush1.bf16.msra.mxu0 0
          %2832 = vmatprep.subr.bf16.mxu0 0
          %2833 = vmatpush1.bf16.msra.mxu0 0
          %2834 = vmatprep.subr.bf16.mxu0 0
          %2835 = vmatpush1.bf16.msra.mxu0 0
          %2836 = vmatprep.subr.bf16.mxu0 0
          %2837 = vmatpush1.bf16.msra.mxu0 0
          %2838 = vmatprep.subr.bf16.mxu0 0
          %2839 = vmatpush1.bf16.msra.mxu0 0
          %2840 = vmatprep.mubr.bf16.mxu0 0
          %2841 = vmatmul.mubr.bf16.gmra.mrb[0].mxu0 %v2806
          %v2842 = vpop.f32.mrb[0].mxu0
          %v2843 = vadd.f32 %v2779, %v2842
          %v2844 = vpop.f32.mrb[0].mxu0
          %v2845 = vpop.f32.mrb[0].mxu0
          %v2846 = vadd.f32 %v2779, %v2845
          %v2847 = vpop.f32.mrb[0].mxu0
          %2848 = vdwg.mxu0
          %v2849 = vadd.f32 %v2593, %v2843
          %v2850 = vadd.f32 %v2594, %v2846
          %2851 = vst.msk [vmem:[#allocation2] sm:$0xff] %vm699, %v2849
          %2852 = vst.msk [vmem:[#allocation2 + $0x8] sm:$0xff] %vm699, %v2850
          %v2853 = vld [vmem:[#allocation2] sm:$0xff]
          %v2854 = vld [vmem:[%s16] sm:$0x1]
          %v2855 = vld [vmem:[%s17] sm:$0x1]
          %v2856 = vsel %vm699, %v2853, 0.0
          %2857 = vadd.xlane.f32.xlu0 %v2856
          %v2858 = vpop.xlane.xlu0 %2857
          %v2859 = vmul.f32 %v2858, %v807
          %v2860 = vsub.f32 %v2853, %v2859
          %v2861 = vmul.f32 %v2860, %v2860
          %v2862 = vsel %vm699, %v2861, 0.0
          %2863 = vadd.xlane.f32.xlu0 %v2862
          %v2864 = vpop.xlane.xlu0 %2863
          %v2865 = vmul.f32 %v2864, %v807
          %v2866 = vadd.f32 %v2865, 1e-05
          %v2867 = vrsqrt.pop %v2866
          %v2868 = vmul.f32 %v2860, %v2867
          %v2870 = vlaneseq
          %v2871 = vshrl.u32 %v2870, 7
          %v2872 = vsub.s32 0, %v2871
          %v2873 = vrot.slane %v2854, %v2872
          %v2875 = vmul.f32 %v2868, %v2873
          %v2877 = vlaneseq
          %v2878 = vshrl.u32 %v2877, 7
          %v2879 = vsub.s32 0, %v2878
          %v2880 = vrot.slane %v2855, %v2879
          %v2882 = vadd.f32 %v2875, %v2880
          %v2883 = vpack.c.bf16 %v2882, %v2882
          %v2884 = vld [vmem:[%s18] sm:$0xf]
          %v2885 = vld [vmem:[%s18 + $0x4] sm:$0xf]
          %v2886 = vld [vmem:[%s18 + $0x8] sm:$0xf]
          %v2887 = vld [vmem:[%s18 + $0xc] sm:$0xf]
          %v2888 = vld [vmem:[%s19] sm:$0x1]
          %v2890 = vlaneseq
          %v2891 = vshrl.u32 %v2890, 7
          %v2892 = vsub.s32 0, %v2891
          %v2893 = vrot.slane %v2888, %v2892
          %v2899 = vunpack.c.l.b16 %v2884
          %v2900 = vunpack.c.l.b16 %v2885
          %v2901 = vunpack.c.l.b16 %v2886
          %v2902 = vunpack.c.l.b16 %v2887
          %v2903 = vpack.c.b16 %v2900, %v2899
          %v2904 = vpack.c.b16 %v2902, %v2901
          %v2908 = vsel %vm699, %v2883, 0
          %2910 = vmatprep.subr.bf16.mxu0 0
          %2911 = vmatpush1.bf16.msra.mxu0 %v2903
          %2912 = vmatprep.subr.bf16.mxu0 0
          %2913 = vmatpush1.bf16.msra.mxu0 %v2904
          %2914 = vmatprep.subr.bf16.mxu0 0
          %2915 = vmatpush1.bf16.msra.mxu0 0
          %2916 = vmatprep.subr.bf16.mxu0 0
          %2917 = vmatpush1.bf16.msra.mxu0 0
          %2918 = vmatprep.subr.bf16.mxu0 0
          %2919 = vmatpush1.bf16.msra.mxu0 0
          %2920 = vmatprep.subr.bf16.mxu0 0
          %2921 = vmatpush1.bf16.msra.mxu0 0
          %2922 = vmatprep.subr.bf16.mxu0 0
          %2923 = vmatpush1.bf16.msra.mxu0 0
          %2924 = vmatprep.subr.bf16.mxu0 0
          %2925 = vmatpush1.bf16.msra.mxu0 0
          %2926 = vmatprep.subr.bf16.mxu0 0
          %2927 = vmatpush1.bf16.msra.mxu0 0
          %2928 = vmatprep.subr.bf16.mxu0 0
          %2929 = vmatpush1.bf16.msra.mxu0 0
          %2930 = vmatprep.subr.bf16.mxu0 0
          %2931 = vmatpush1.bf16.msra.mxu0 0
          %2932 = vmatprep.subr.bf16.mxu0 0
          %2933 = vmatpush1.bf16.msra.mxu0 0
          %2934 = vmatprep.subr.bf16.mxu0 0
          %2935 = vmatpush1.bf16.msra.mxu0 0
          %2936 = vmatprep.subr.bf16.mxu0 0
          %2937 = vmatpush1.bf16.msra.mxu0 0
          %2938 = vmatprep.subr.bf16.mxu0 0
          %2939 = vmatpush1.bf16.msra.mxu0 0
          %2940 = vmatprep.subr.bf16.mxu0 0
          %2941 = vmatpush1.bf16.msra.mxu0 0
          %2942 = vmatprep.mubr.bf16.mxu0 0
          %2943 = vmatmul.mubr.bf16.gmra.mrb[0].mxu0 %v2908
          %v2944 = vpop.f32.mrb[0].mxu0
          %v2945 = vadd.f32 %v2893, %v2944
          %v2946 = vpop.f32.mrb[0].mxu0
          %v2947 = vpop.f32.mrb[0].mxu0
          %v2948 = vpop.f32.mrb[0].mxu0
          %2949 = vdwg.mxu0
          %vm2950 = vcmask 16384
          %2951 = vst.msk [vmem:[%s665] sm:$0x1] %vm2950, %v2945
        $region112: #{tpu_custom_call.1} parent=99 // pred_fallthru
          _
        %s2952 = sand.u32 %s483, 1
        %s2953 = scalar_lea.sflag [#allocation6], %s2952
        %s2954 = sand.u32 %s483, 1
        %s2955 = scalar_lea.vmem [#allocation9], %s2954
        // Predicated region
        $region113: #{tpu_custom_call.1} parent=99 // pred_check
          %p2956 = pneg %p493
        $region114: #{tpu_custom_call.1} parent=99 // pred_check_branch
          %2958 = sbr.rel (%p2956) target = $region116
        $region115: #{tpu_custom_call.1} parent=99 // pred_region
          %s2960 = ssub.s32 16, 16
          %2961 = vsyncadd %s2953, %s2960
          %s2962 = smul.addr %s40, 16
          %s2963 = scalar_lea.hbm %s20, %s2962
          %s2965 = sshll.u32 %s2955, 4
          %s2966 = int_to_ptr.vmem [resolvable:$true] %s2965
          %2968 = dma.vmem_to_hbm [thread:$0]  %s2966, 16, %s2963, %s2953
        $region116: #{tpu_custom_call.1} parent=99 // pred_fallthru
          _
      $region100: #{tpu_custom_call.1} parent=5 // pred_fallthru
        _
      %p2969 = scmp.le.s32.totalorder 2, %s31
      // Predicated region
      $region117: #{tpu_custom_call.1} parent=5 // pred_check
        %p2970 = pneg %p2969
      $region118: #{tpu_custom_call.1} parent=5 // pred_check_branch
        %2972 = sbr.rel (%p2970) target = $region120
      $region119: #{tpu_custom_call.1} parent=5 // pred_region
        %s2973 = ssub.s32 %s31, 2
        // Predicated region
        $region121: #{tpu_custom_call.1} parent=119 // pred_check
          %p2974 = pneg %p499
        $region122: #{tpu_custom_call.1} parent=119 // pred_check_branch
          %2976 = sbr.rel (%p2974) target = $region124
        $region123: #{tpu_custom_call.1} parent=119 // pred_region
          %s2977 = sand.u32 %s484, 1
          %s2978 = scalar_lea.sflag [#allocation6], %s2977
          %s2979 = sand.u32 %s484, 1
          %s2980 = scalar_lea.vmem [#allocation9], %s2979
          %2981 = dma.done %s2978, 16
        $region124: #{tpu_custom_call.1} parent=119 // pred_fallthru
          _
      $region120: #{tpu_custom_call.1} parent=5 // pred_fallthru
        _
    $region6: #{tpu_custom_call.1} parent=1 // loop_footer
      %s35 = sadd.s32 1, %s31
    $region7: #{tpu_custom_call.1} parent=1 // loop_footer_branch
      %30 = sbr.rel target = $region3
    $region8: #{tpu_custom_call.1} parent=1 // loop_exit
      _
    %2982 = vsyncpa [#allocation5], 1
    %s2983 = scalar_lea.sflag [#allocation5], 1
    %2984 = vsyncpa %s2983, 1
    %2985 = vsyncpa [#allocation8], 1
    %2986 = vsyncpa [#allocation6], 1
    %s2987 = scalar_lea.sflag [#allocation6], 1
    %2988 = vsyncpa %s2987, 1

// kernel: tpu_custom_call.1
$region0: #{tpu_custom_call.1}
  #allocation0 [shape = 'u32[]', space=smem, size = 0x4, offset = 0x4, fixed_abs, tag = 'smem constant byte address 0x4 - core index']
  #allocation1 [shape = 'u32[144,128]{1,0:T(1,128)}', space=vmem, size = 0x12000, scoped, tag = 'internal scratch']
  #allocation2 [shape = 'f32[16,32]{1,0:T(8,128)}', space=vmem, size = 0x2000, scoped, tag = 'scratch operand']
  #allocation3 [shape = 'bf16[16,96]{1,0:T(16,128)(2,1)}', space=vmem, size = 0x1000, scoped, tag = 'scratch operand']
  %s0 = inlined_call_operand.vmem [shape: f32[2,7,32], index: 0, kind: input, shape index: {}]
  %s1 = inlined_call_operand.vmem [shape: bf16[32,32], index: 1, kind: input, shape index: {}]
  %s2 = inlined_call_operand.hbm [shape: f32[1,32], index: 2, kind: input, shape index: {}]
  %s3 = inlined_call_operand.hbm [shape: f32[1,32], index: 3, kind: input, shape index: {}]
  %s4 = inlined_call_operand.vmem [shape: f32[2,1,32], index: 4, kind: input, shape index: {}]
  %s5 = inlined_call_operand.vmem [shape: f32[2,1,32], index: 5, kind: input, shape index: {}]
  %s6 = inlined_call_operand.vmem [shape: bf16[2,32,96], index: 6, kind: input, shape index: {}]
  %s7 = inlined_call_operand.vmem [shape: f32[2,1,96], index: 7, kind: input, shape index: {}]
  %s8 = inlined_call_operand.vmem [shape: bf16[2,32,32], index: 8, kind: input, shape index: {}]
  %s9 = inlined_call_operand.vmem [shape: f32[2,1,32], index: 9, kind: input, shape index: {}]
  %s10 = inlined_call_operand.vmem [shape: f32[2,1,32], index: 10, kind: input, shape index: {}]
  %s11 = inlined_call_operand.vmem [shape: f32[2,1,32], index: 11, kind: input, shape index: {}]
  %s12 = inlined_call_operand.vmem [shape: bf16[2,32,64], index: 12, kind: input, shape index: {}]
  %s13 = inlined_call_operand.vmem [shape: f32[2,1,64], index: 13, kind: input, shape index: {}]
  %s14 = inlined_call_operand.vmem [shape: bf16[2,64,32], index: 14, kind: input, shape index: {}]
  %s15 = inlined_call_operand.vmem [shape: f32[2,1,32], index: 15, kind: input, shape index: {}]
  %s16 = inlined_call_operand.vmem [shape: f32[1,32], index: 16, kind: input, shape index: {}]
  %s17 = inlined_call_operand.vmem [shape: f32[1,32], index: 17, kind: input, shape index: {}]
  %s18 = inlined_call_operand.vmem [shape: bf16[32,3], index: 18, kind: input, shape index: {}]
  %s19 = inlined_call_operand.vmem [shape: f32[1,3], index: 19, kind: input, shape index: {}]
  %s20 = inlined_call_operand.hbm [shape: f32[2,1,3], index: 20, kind: output, shape index: {}]
  %s21 = sld [smem:[#allocation0]]
  $region125: #{tpu_custom_call.1} parent=0
    _
  %s23 = ssub.s32 1, %s21
  %s24 = scalar_select 0, %s23, %s21
  $region1: #{tpu_custom_call.1} parent=0
    #allocation4 [shape = 'u8[512]{0}', space=vmem, size = 0x400, scoped, tag = 'input window, operand 2, single buffered']
    #allocation5 [shape = 's32[2]{0}', space=sflag, size = 0x8, scoped, tag = 'scoped memory for tpu_custom_call.1']
    #allocation6 [shape = 's32[2]{0}', space=sflag, size = 0x8, scoped, tag = 'scoped memory for tpu_custom_call.1']
    #allocation7 [shape = 'u8[512]{0}', space=vmem, size = 0x400, scoped, tag = 'input window, operand 3, single buffered']
    #allocation8 [shape = 's32[1]{0}', space=sflag, size = 0x4, scoped, tag = 'scoped memory for tpu_custom_call.1']
    #allocation9 [shape = 'u8[1024]{0}', space=vmem, size = 0x400, scoped, tag = 'output window, operand 0']
    %25 = vsyncpa [#allocation5], 0
    %26 = vsyncpa [#allocation8], 0
    %27 = vsyncpa [#allocation6], 0
    %s28 = scalar_lea.sflag [#allocation6], 1
    %29 = vsyncpa %s28, 0
    loop: start=0, step=1, limit=4
    $region2: #{tpu_custom_call.1} parent=1 // loop_pre_header
      _
    $region3: #{tpu_custom_call.1} parent=1 // loop_header
      %s31 = sphi 0, %s35
      %p32 = scmp.ge.s32.totalorder %s31, 4
      %s38 = sphi 0, %s50
      %s39 = sphi 0, %s46
      %s40 = sphi 0, %s38
      %s41 = sphi 0, %s39
      %s42 = sphi 0, %s40
      %s43 = sphi 0, %s41
      %s55 = sphi 0, %s57
      %s58 = sphi 0, %s55
      %s59 = sphi 0, %s58
      %s75 = sphi 0, %s59
      %s79 = sphi 0, %s79
      %s81 = sphi 0, %s79
      %s82 = sphi 0, %s81
      %s96 = sphi 0, %s82
      %s100 = sphi 0, %s100
      %s102 = sphi 0, %s100
      %s103 = sphi 0, %s102
      %s117 = sphi 0, %s103
      %s121 = sphi 0, %s121
      %s123 = sphi 0, %s121
      %s124 = sphi 0, %s123
      %s138 = sphi 0, %s124
      %s142 = sphi 0, %s142
      %s144 = sphi 0, %s142
      %s145 = sphi 0, %s144
      %s159 = sphi 0, %s145
      %s163 = sphi 0, %s163
      %s165 = sphi 0, %s163
      %s166 = sphi 0, %s165
      %s180 = sphi 0, %s166
      %s184 = sphi 0, %s184
      %s186 = sphi 0, %s184
      %s187 = sphi 0, %s186
      %s201 = sphi 0, %s187
      %s205 = sphi 0, %s205
      %s207 = sphi 0, %s205
      %s208 = sphi 0, %s207
      %s222 = sphi 0, %s208
      %s226 = sphi 0, %s226
      %s228 = sphi 0, %s226
      %s229 = sphi 0, %s228
      %s243 = sphi 0, %s229
      %s247 = sphi 0, %s247
      %s249 = sphi 0, %s247
      %s250 = sphi 0, %s249
      %s264 = sphi 0, %s250
      %s268 = sphi 0, %s268
      %s270 = sphi 0, %s268
      %s271 = sphi 0, %s270
      %s285 = sphi 0, %s271
      %s289 = sphi 0, %s289
      %s291 = sphi 0, %s289
      %s292 = sphi 0, %s291
      %s306 = sphi 0, %s292
      %s310 = sphi 0, %s310
      %s312 = sphi 0, %s310
      %s313 = sphi 0, %s312
      %s327 = sphi 0, %s313
      %s331 = sphi 0, %s331
      %s333 = sphi 0, %s331
      %s334 = sphi 0, %s333
      %s348 = sphi 0, %s334
      %s352 = sphi 0, %s352
      %s354 = sphi 0, %s352
      %s355 = sphi 0, %s354
      %s369 = sphi 0, %s355
      %s373 = sphi 0, %s373
      %s375 = sphi 0, %s373
      %s376 = sphi 0, %s375
      %s390 = sphi 0, %s376
      %s394 = sphi 0, %s394
      %s396 = sphi 0, %s394
      %s397 = sphi 0, %s396
      %s411 = sphi 0, %s397
      %s415 = sphi 0, %s415
      %s417 = sphi 0, %s415
      %s418 = sphi 0, %s417
      %s432 = sphi 0, %s418
      %s436 = sphi 0, %s436
      %s438 = sphi 0, %s436
      %s439 = sphi 0, %s438
      %s453 = sphi 0, %s439
      %s457 = sphi 0, %s457
      %s459 = sphi 0, %s457
      %s460 = sphi 0, %s459
      %s474 = sphi 0, %s460
      %s480 = sphi 0, %s482
      %s483 = sphi 0, %s480
      %s484 = sphi 0, %s483
      %s500 = sphi 0, %s484
    $region4: #{tpu_custom_call.1} parent=1 // loop_header_branch
      %34 = sbr.rel (%p32) target = $region8
    $region5: #{tpu_custom_call.1} parent=1 // loop_body
      %s36 = ssub.s32 %s31, 1
      %s37 = ssub.s32 %s31, 2
      %s44 = sadd.s32 1, %s39
      %p45 = scmp.ge.s32.totalorder %s44, 1
      %s46 = scalar_select %p45, 0, %s44
      %s47 = sadd.s32 1, %s38
      %s48 = scalar_select %p45, %s47, %s38
      %p49 = scmp.ge.s32.totalorder %s48, 2
      %s50 = scalar_select %p49, 0, %s48
      %s51 = ssub.s32 %s38, %s50
      %s52 = ssub.s32 %s39, %s46
      %s53 = sor.u32 %s51, %s52
      %p54 = scmp.eq.s32.totalorder %s53, 0
      %s56 = sadd.s32 %s55, 1
      %s57 = scalar_select %p54, %s55, %s56
      %p60 = pneg %p54
      %p61 = scmp.eq.s32.totalorder %s31, 1
      %p62 = por %p60, %p61
      %p63 = scmp.ne.s32.totalorder %s55, %s58
      %p64 = scmp.eq.s32.totalorder %s31, 0
      %p65 = por %p63, %p64
      %p66 = scmp.ne.s32.totalorder %s55, %s58
      %p67 = scmp.eq.s32.totalorder %s36, 1
      %p68 = por %p66, %p67
      %p69 = scmp.ne.s32.totalorder %s58, %s59
      %p70 = scmp.eq.s32.totalorder %s36, 0
      %p71 = por %p69, %p70
      %p72 = scmp.ne.s32.totalorder %s58, %s59
      %p73 = scmp.eq.s32.totalorder %s37, 1
      %p74 = por %p72, %p73
      %p76 = scmp.ne.s32.totalorder %s59, %s75
      %p77 = scmp.eq.s32.totalorder %s37, 0
      %p78 = por %p76, %p77
      %s80 = sadd.s32 %s79, 1
      %p83 = scmp.eq.s32.totalorder %s31, 1
      %p84 = scmp.ne.s32.totalorder %s79, %s81
      %p85 = scmp.eq.s32.totalorder %s31, 0
      %p86 = por %p84, %p85
      %p87 = scmp.ne.s32.totalorder %s79, %s81
      %p88 = scmp.eq.s32.totalorder %s36, 1
      %p89 = por %p87, %p88
      %p90 = scmp.ne.s32.totalorder %s81, %s82
      %p91 = scmp.eq.s32.totalorder %s36, 0
      %p92 = por %p90, %p91
      %p93 = scmp.ne.s32.totalorder %s81, %s82
      %p94 = scmp.eq.s32.totalorder %s37, 1
      %p95 = por %p93, %p94
      %p97 = scmp.ne.s32.totalorder %s82, %s96
      %p98 = scmp.eq.s32.totalorder %s37, 0
      %p99 = por %p97, %p98
      %s101 = sadd.s32 %s100, 1
      %p104 = scmp.eq.s32.totalorder %s31, 1
      %p105 = scmp.ne.s32.totalorder %s100, %s102
      %p106 = scmp.eq.s32.totalorder %s31, 0
      %p107 = por %p105, %p106
      %p108 = scmp.ne.s32.totalorder %s100, %s102
      %p109 = scmp.eq.s32.totalorder %s36, 1
      %p110 = por %p108, %p109
      %p111 = scmp.ne.s32.totalorder %s102, %s103
      %p112 = scmp.eq.s32.totalorder %s36, 0
      %p113 = por %p111, %p112
      %p114 = scmp.ne.s32.totalorder %s102, %s103
      %p115 = scmp.eq.s32.totalorder %s37, 1
      %p116 = por %p114, %p115
      %p118 = scmp.ne.s32.totalorder %s103, %s117
      %p119 = scmp.eq.s32.totalorder %s37, 0
      %p120 = por %p118, %p119
      %s122 = sadd.s32 %s121, 1
      %p125 = scmp.eq.s32.totalorder %s31, 1
      %p126 = scmp.ne.s32.totalorder %s121, %s123
      %p127 = scmp.eq.s32.totalorder %s31, 0
      %p128 = por %p126, %p127
      %p129 = scmp.ne.s32.totalorder %s121, %s123
      %p130 = scmp.eq.s32.totalorder %s36, 1
      %p131 = por %p129, %p130
      %p132 = scmp.ne.s32.totalorder %s123, %s124
      %p133 = scmp.eq.s32.totalorder %s36, 0
      %p134 = por %p132, %p133
      %p135 = scmp.ne.s32.totalorder %s123, %s124
      %p136 = scmp.eq.s32.totalorder %s37, 1
      %p137 = por %p135, %p136
      %p139 = scmp.ne.s32.totalorder %s124, %s138
      %p140 = scmp.eq.s32.totalorder %s37, 0
      %p141 = por %p139, %p140
      %s143 = sadd.s32 %s142, 1
      %p146 = scmp.eq.s32.totalorder %s31, 1
      %p147 = scmp.ne.s32.totalorder %s142, %s144
      %p148 = scmp.eq.s32.totalorder %s31, 0
      %p149 = por %p147, %p148
      %p150 = scmp.ne.s32.totalorder %s142, %s144
      %p151 = scmp.eq.s32.totalorder %s36, 1
      %p152 = por %p150, %p151
      %p153 = scmp.ne.s32.totalorder %s144, %s145
      %p154 = scmp.eq.s32.totalorder %s36, 0
      %p155 = por %p153, %p154
      %p156 = scmp.ne.s32.totalorder %s144, %s145
      %p157 = scmp.eq.s32.totalorder %s37, 1
      %p158 = por %p156, %p157
      %p160 = scmp.ne.s32.totalorder %s145, %s159
      %p161 = scmp.eq.s32.totalorder %s37, 0
      %p162 = por %p160, %p161
      %s164 = sadd.s32 %s163, 1
      %p167 = scmp.eq.s32.totalorder %s31, 1
      %p168 = scmp.ne.s32.totalorder %s163, %s165
      %p169 = scmp.eq.s32.totalorder %s31, 0
      %p170 = por %p168, %p169
      %p171 = scmp.ne.s32.totalorder %s163, %s165
      %p172 = scmp.eq.s32.totalorder %s36, 1
      %p173 = por %p171, %p172
      %p174 = scmp.ne.s32.totalorder %s165, %s166
      %p175 = scmp.eq.s32.totalorder %s36, 0
      %p176 = por %p174, %p175
      %p177 = scmp.ne.s32.totalorder %s165, %s166
      %p178 = scmp.eq.s32.totalorder %s37, 1
      %p179 = por %p177, %p178
      %p181 = scmp.ne.s32.totalorder %s166, %s180
      %p182 = scmp.eq.s32.totalorder %s37, 0
      %p183 = por %p181, %p182
      %s185 = sadd.s32 %s184, 1
      %p188 = scmp.eq.s32.totalorder %s31, 1
      %p189 = scmp.ne.s32.totalorder %s184, %s186
      %p190 = scmp.eq.s32.totalorder %s31, 0
      %p191 = por %p189, %p190
      %p192 = scmp.ne.s32.totalorder %s184, %s186
      %p193 = scmp.eq.s32.totalorder %s36, 1
      %p194 = por %p192, %p193
      %p195 = scmp.ne.s32.totalorder %s186, %s187
      %p196 = scmp.eq.s32.totalorder %s36, 0
      %p197 = por %p195, %p196
      %p198 = scmp.ne.s32.totalorder %s186, %s187
      %p199 = scmp.eq.s32.totalorder %s37, 1
      %p200 = por %p198, %p199
      %p202 = scmp.ne.s32.totalorder %s187, %s201
      %p203 = scmp.eq.s32.totalorder %s37, 0
      %p204 = por %p202, %p203
      %s206 = sadd.s32 %s205, 1
      %p209 = scmp.eq.s32.totalorder %s31, 1
      %p210 = scmp.ne.s32.totalorder %s205, %s207
      %p211 = scmp.eq.s32.totalorder %s31, 0
      %p212 = por %p210, %p211
      %p213 = scmp.ne.s32.totalorder %s205, %s207
      %p214 = scmp.eq.s32.totalorder %s36, 1
      %p215 = por %p213, %p214
      %p216 = scmp.ne.s32.totalorder %s207, %s208
      %p217 = scmp.eq.s32.totalorder %s36, 0
      %p218 = por %p216, %p217
      %p219 = scmp.ne.s32.totalorder %s207, %s208
      %p220 = scmp.eq.s32.totalorder %s37, 1
      %p221 = por %p219, %p220
      %p223 = scmp.ne.s32.totalorder %s208, %s222
      %p224 = scmp.eq.s32.totalorder %s37, 0
      %p225 = por %p223, %p224
      %s227 = sadd.s32 %s226, 1
      %p230 = scmp.eq.s32.totalorder %s31, 1
      %p231 = scmp.ne.s32.totalorder %s226, %s228
      %p232 = scmp.eq.s32.totalorder %s31, 0
      %p233 = por %p231, %p232
      %p234 = scmp.ne.s32.totalorder %s226, %s228
      %p235 = scmp.eq.s32.totalorder %s36, 1
      %p236 = por %p234, %p235
      %p237 = scmp.ne.s32.totalorder %s228, %s229
      %p238 = scmp.eq.s32.totalorder %s36, 0
      %p239 = por %p237, %p238
      %p240 = scmp.ne.s32.totalorder %s228, %s229
      %p241 = scmp.eq.s32.totalorder %s37, 1
      %p242 = por %p240, %p241
      %p244 = scmp.ne.s32.totalorder %s229, %s243
      %p245 = scmp.eq.s32.totalorder %s37, 0
      %p246 = por %p244, %p245
      %s248 = sadd.s32 %s247, 1
      %p251 = scmp.eq.s32.totalorder %s31, 1
      %p252 = scmp.ne.s32.totalorder %s247, %s249
      %p253 = scmp.eq.s32.totalorder %s31, 0
      %p254 = por %p252, %p253
      %p255 = scmp.ne.s32.totalorder %s247, %s249
      %p256 = scmp.eq.s32.totalorder %s36, 1
      %p257 = por %p255, %p256
      %p258 = scmp.ne.s32.totalorder %s249, %s250
      %p259 = scmp.eq.s32.totalorder %s36, 0
      %p260 = por %p258, %p259
      %p261 = scmp.ne.s32.totalorder %s249, %s250
      %p262 = scmp.eq.s32.totalorder %s37, 1
      %p263 = por %p261, %p262
      %p265 = scmp.ne.s32.totalorder %s250, %s264
      %p266 = scmp.eq.s32.totalorder %s37, 0
      %p267 = por %p265, %p266
      %s269 = sadd.s32 %s268, 1
      %p272 = scmp.eq.s32.totalorder %s31, 1
      %p273 = scmp.ne.s32.totalorder %s268, %s270
      %p274 = scmp.eq.s32.totalorder %s31, 0
      %p275 = por %p273, %p274
      %p276 = scmp.ne.s32.totalorder %s268, %s270
      %p277 = scmp.eq.s32.totalorder %s36, 1
      %p278 = por %p276, %p277
      %p279 = scmp.ne.s32.totalorder %s270, %s271
      %p280 = scmp.eq.s32.totalorder %s36, 0
      %p281 = por %p279, %p280
      %p282 = scmp.ne.s32.totalorder %s270, %s271
      %p283 = scmp.eq.s32.totalorder %s37, 1
      %p284 = por %p282, %p283
      %p286 = scmp.ne.s32.totalorder %s271, %s285
      %p287 = scmp.eq.s32.totalorder %s37, 0
      %p288 = por %p286, %p287
      %s290 = sadd.s32 %s289, 1
      %p293 = scmp.eq.s32.totalorder %s31, 1
      %p294 = scmp.ne.s32.totalorder %s289, %s291
      %p295 = scmp.eq.s32.totalorder %s31, 0
      %p296 = por %p294, %p295
      %p297 = scmp.ne.s32.totalorder %s289, %s291
      %p298 = scmp.eq.s32.totalorder %s36, 1
      %p299 = por %p297, %p298
      %p300 = scmp.ne.s32.totalorder %s291, %s292
      %p301 = scmp.eq.s32.totalorder %s36, 0
      %p302 = por %p300, %p301
      %p303 = scmp.ne.s32.totalorder %s291, %s292
      %p304 = scmp.eq.s32.totalorder %s37, 1
      %p305 = por %p303, %p304
      %p307 = scmp.ne.s32.totalorder %s292, %s306
      %p308 = scmp.eq.s32.totalorder %s37, 0
      %p309 = por %p307, %p308
      %s311 = sadd.s32 %s310, 1
      %p314 = scmp.eq.s32.totalorder %s31, 1
      %p315 = scmp.ne.s32.totalorder %s310, %s312
      %p316 = scmp.eq.s32.totalorder %s31, 0
      %p317 = por %p315, %p316
      %p318 = scmp.ne.s32.totalorder %s310, %s312
      %p319 = scmp.eq.s32.totalorder %s36, 1
      %p320 = por %p318, %p319
      %p321 = scmp.ne.s32.totalorder %s312, %s313
      %p322 = scmp.eq.s32.totalorder %s36, 0
      %p323 = por %p321, %p322
      %p324 = scmp.ne.s32.totalorder %s312, %s313
      %p325 = scmp.eq.s32.totalorder %s37, 1
      %p326 = por %p324, %p325
      %p328 = scmp.ne.s32.totalorder %s313, %s327
      %p329 = scmp.eq.s32.totalorder %s37, 0
      %p330 = por %p328, %p329
      %s332 = sadd.s32 %s331, 1
      %p335 = scmp.eq.s32.totalorder %s31, 1
      %p336 = scmp.ne.s32.totalorder %s331, %s333
      %p337 = scmp.eq.s32.totalorder %s31, 0
      %p338 = por %p336, %p337
      %p339 = scmp.ne.s32.totalorder %s331, %s333
      %p340 = scmp.eq.s32.totalorder %s36, 1
      %p341 = por %p339, %p340
      %p342 = scmp.ne.s32.totalorder %s333, %s334
      %p343 = scmp.eq.s32.totalorder %s36, 0
      %p344 = por %p342, %p343
      %p345 = scmp.ne.s32.totalorder %s333, %s334
      %p346 = scmp.eq.s32.totalorder %s37, 1
      %p347 = por %p345, %p346
      %p349 = scmp.ne.s32.totalorder %s334, %s348
      %p350 = scmp.eq.s32.totalorder %s37, 0
      %p351 = por %p349, %p350
      %s353 = sadd.s32 %s352, 1
      %p356 = scmp.eq.s32.totalorder %s31, 1
      %p357 = scmp.ne.s32.totalorder %s352, %s354
      %p358 = scmp.eq.s32.totalorder %s31, 0
      %p359 = por %p357, %p358
      %p360 = scmp.ne.s32.totalorder %s352, %s354
      %p361 = scmp.eq.s32.totalorder %s36, 1
      %p362 = por %p360, %p361
      %p363 = scmp.ne.s32.totalorder %s354, %s355
      %p364 = scmp.eq.s32.totalorder %s36, 0
      %p365 = por %p363, %p364
      %p366 = scmp.ne.s32.totalorder %s354, %s355
      %p367 = scmp.eq.s32.totalorder %s37, 1
      %p368 = por %p366, %p367
      %p370 = scmp.ne.s32.totalorder %s355, %s369
      %p371 = scmp.eq.s32.totalorder %s37, 0
      %p372 = por %p370, %p371
      %s374 = sadd.s32 %s373, 1
      %p377 = scmp.eq.s32.totalorder %s31, 1
      %p378 = scmp.ne.s32.totalorder %s373, %s375
      %p379 = scmp.eq.s32.totalorder %s31, 0
      %p380 = por %p378, %p379
      %p381 = scmp.ne.s32.totalorder %s373, %s375
      %p382 = scmp.eq.s32.totalorder %s36, 1
      %p383 = por %p381, %p382
      %p384 = scmp.ne.s32.totalorder %s375, %s376
      %p385 = scmp.eq.s32.totalorder %s36, 0
      %p386 = por %p384, %p385
      %p387 = scmp.ne.s32.totalorder %s375, %s376
      %p388 = scmp.eq.s32.totalorder %s37, 1
      %p389 = por %p387, %p388
      %p391 = scmp.ne.s32.totalorder %s376, %s390
      %p392 = scmp.eq.s32.totalorder %s37, 0
      %p393 = por %p391, %p392
      %s395 = sadd.s32 %s394, 1
      %p398 = scmp.eq.s32.totalorder %s31, 1
      %p399 = scmp.ne.s32.totalorder %s394, %s396
      %p400 = scmp.eq.s32.totalorder %s31, 0
      %p401 = por %p399, %p400
      %p402 = scmp.ne.s32.totalorder %s394, %s396
      %p403 = scmp.eq.s32.totalorder %s36, 1
      %p404 = por %p402, %p403
      %p405 = scmp.ne.s32.totalorder %s396, %s397
      %p406 = scmp.eq.s32.totalorder %s36, 0
      %p407 = por %p405, %p406
      %p408 = scmp.ne.s32.totalorder %s396, %s397
      %p409 = scmp.eq.s32.totalorder %s37, 1
      %p410 = por %p408, %p409
      %p412 = scmp.ne.s32.totalorder %s397, %s411
      %p413 = scmp.eq.s32.totalorder %s37, 0
      %p414 = por %p412, %p413
      %s416 = sadd.s32 %s415, 1
      %p419 = scmp.eq.s32.totalorder %s31, 1
      %p420 = scmp.ne.s32.totalorder %s415, %s417
      %p421 = scmp.eq.s32.totalorder %s31, 0
      %p422 = por %p420, %p421
      %p423 = scmp.ne.s32.totalorder %s415, %s417
      %p424 = scmp.eq.s32.totalorder %s36, 1
      %p425 = por %p423, %p424
      %p426 = scmp.ne.s32.totalorder %s417, %s418
      %p427 = scmp.eq.s32.totalorder %s36, 0
      %p428 = por %p426, %p427
      %p429 = scmp.ne.s32.totalorder %s417, %s418
      %p430 = scmp.eq.s32.totalorder %s37, 1
      %p431 = por %p429, %p430
      %p433 = scmp.ne.s32.totalorder %s418, %s432
      %p434 = scmp.eq.s32.totalorder %s37, 0
      %p435 = por %p433, %p434
      %s437 = sadd.s32 %s436, 1
      %p440 = scmp.eq.s32.totalorder %s31, 1
      %p441 = scmp.ne.s32.totalorder %s436, %s438
      %p442 = scmp.eq.s32.totalorder %s31, 0
      %p443 = por %p441, %p442
      %p444 = scmp.ne.s32.totalorder %s436, %s438
      %p445 = scmp.eq.s32.totalorder %s36, 1
      %p446 = por %p444, %p445
      %p447 = scmp.ne.s32.totalorder %s438, %s439
      %p448 = scmp.eq.s32.totalorder %s36, 0
      %p449 = por %p447, %p448
      %p450 = scmp.ne.s32.totalorder %s438, %s439
      %p451 = scmp.eq.s32.totalorder %s37, 1
      %p452 = por %p450, %p451
      %p454 = scmp.ne.s32.totalorder %s439, %s453
      %p455 = scmp.eq.s32.totalorder %s37, 0
      %p456 = por %p454, %p455
      %s458 = sadd.s32 %s457, 1
      %p461 = scmp.eq.s32.totalorder %s31, 1
      %p462 = scmp.ne.s32.totalorder %s457, %s459
      %p463 = scmp.eq.s32.totalorder %s31, 0
      %p464 = por %p462, %p463
      %p465 = scmp.ne.s32.totalorder %s457, %s459
      %p466 = scmp.eq.s32.totalorder %s36, 1
      %p467 = por %p465, %p466
      %p468 = scmp.ne.s32.totalorder %s459, %s460
      %p469 = scmp.eq.s32.totalorder %s36, 0
      %p470 = por %p468, %p469
      %p471 = scmp.ne.s32.totalorder %s459, %s460
      %p472 = scmp.eq.s32.totalorder %s37, 1
      %p473 = por %p471, %p472
      %p475 = scmp.ne.s32.totalorder %s460, %s474
      %p476 = scmp.eq.s32.totalorder %s37, 0
      %p477 = por %p475, %p476
      %s478 = ssub.s32 %s38, %s50
      %p479 = scmp.eq.s32.totalorder %s478, 0
      %s481 = sadd.s32 %s480, 1
      %s482 = scalar_select %p479, %s480, %s481
      %p485 = pneg %p479
      %p486 = scmp.eq.s32.totalorder %s31, 1
      %p487 = por %p485, %p486
      %p488 = scmp.ne.s32.totalorder %s480, %s483
      %p489 = scmp.eq.s32.totalorder %s31, 0
      %p490 = por %p488, %p489
      %p491 = scmp.ne.s32.totalorder %s480, %s483
      %p492 = scmp.eq.s32.totalorder %s36, 1
      %p493 = por %p491, %p492
      %p494 = scmp.ne.s32.totalorder %s483, %s484
      %p495 = scmp.eq.s32.totalorder %s36, 0
      %p496 = por %p494, %p495
      %p497 = scmp.ne.s32.totalorder %s483, %s484
      %p498 = scmp.eq.s32.totalorder %s37, 1
      %p499 = por %p497, %p498
      %p501 = scmp.ne.s32.totalorder %s484, %s500
      %p502 = scmp.eq.s32.totalorder %s37, 0
      %p503 = por %p501, %p502
      %p504 = scmp.le.s32.totalorder 1, %s31
      %p505 = scmp.lt.s32.totalorder %s31, 3
      %p506 = pnand %p504, %p505
      %p507 = pneg %p506
      // Predicated region
      $region9: #{tpu_custom_call.1} parent=5 // pred_check
        _
      $region10: #{tpu_custom_call.1} parent=5 // pred_check_branch
        %509 = sbr.rel (%p506) target = $region12
      $region11: #{tpu_custom_call.1} parent=5 // pred_region
        %s510 = ssub.s32 %s31, 1
        // Predicated region
        $region13: #{tpu_custom_call.1} parent=11 // pred_check
          %p511 = pneg %p92
        $region14: #{tpu_custom_call.1} parent=11 // pred_check_branch
          %513 = sbr.rel (%p511) target = $region16
        $region15: #{tpu_custom_call.1} parent=11 // pred_region
          _
        $region16: #{tpu_custom_call.1} parent=11 // pred_fallthru
          _
        // Predicated region
        $region17: #{tpu_custom_call.1} parent=11 // pred_check
          %p514 = pneg %p113
        $region18: #{tpu_custom_call.1} parent=11 // pred_check_branch
          %516 = sbr.rel (%p514) target = $region20
        $region19: #{tpu_custom_call.1} parent=11 // pred_region
          %s518 = ssub.s32 16, 16
          %519 = vsyncadd [#allocation5], %s518
          %s521 = sshll.u32 [#allocation4], 4
          %s522 = int_to_ptr.vmem [resolvable:$true] %s521
          %524 = dma.hbm_to_vmem [thread:$0]  %s2, 16, %s522, [#allocation5]
        $region20: #{tpu_custom_call.1} parent=11 // pred_fallthru
          _
        // Predicated region
        $region21: #{tpu_custom_call.1} parent=11 // pred_check
          %p525 = pneg %p134
        $region22: #{tpu_custom_call.1} parent=11 // pred_check_branch
          %527 = sbr.rel (%p525) target = $region24
        $region23: #{tpu_custom_call.1} parent=11 // pred_region
          %s529 = ssub.s32 16, 16
          %530 = vsyncadd [#allocation8], %s529
          %s532 = sshll.u32 [#allocation7], 4
          %s533 = int_to_ptr.vmem [resolvable:$true] %s532
          %535 = dma.hbm_to_vmem [thread:$0]  %s3, 16, %s533, [#allocation8]
        $region24: #{tpu_custom_call.1} parent=11 // pred_fallthru
          _
        // Predicated region
        $region25: #{tpu_custom_call.1} parent=11 // pred_check
          %p536 = pneg %p155
        $region26: #{tpu_custom_call.1} parent=11 // pred_check_branch
          %538 = sbr.rel (%p536) target = $region28
        $region27: #{tpu_custom_call.1} parent=11 // pred_region
          _
        $region28: #{tpu_custom_call.1} parent=11 // pred_fallthru
          _
        // Predicated region
        $region29: #{tpu_custom_call.1} parent=11 // pred_check
          %p539 = pneg %p176
        $region30: #{tpu_custom_call.1} parent=11 // pred_check_branch
          %541 = sbr.rel (%p539) target = $region32
        $region31: #{tpu_custom_call.1} parent=11 // pred_region
          _
        $region32: #{tpu_custom_call.1} parent=11 // pred_fallthru
          _
        // Predicated region
        $region33: #{tpu_custom_call.1} parent=11 // pred_check
          %p542 = pneg %p197
        $region34: #{tpu_custom_call.1} parent=11 // pred_check_branch
          %544 = sbr.rel (%p542) target = $region36
        $region35: #{tpu_custom_call.1} parent=11 // pred_region
          _
        $region36: #{tpu_custom_call.1} parent=11 // pred_fallthru
          _
        // Predicated region
        $region37: #{tpu_custom_call.1} parent=11 // pred_check
          %p545 = pneg %p218
        $region38: #{tpu_custom_call.1} parent=11 // pred_check_branch
          %547 = sbr.rel (%p545) target = $region40
        $region39: #{tpu_custom_call.1} parent=11 // pred_region
          _
        $region40: #{tpu_custom_call.1} parent=11 // pred_fallthru
          _
        // Predicated region
        $region41: #{tpu_custom_call.1} parent=11 // pred_check
          %p548 = pneg %p239
        $region42: #{tpu_custom_call.1} parent=11 // pred_check_branch
          %550 = sbr.rel (%p548) target = $region44
        $region43: #{tpu_custom_call.1} parent=11 // pred_region
          _
        $region44: #{tpu_custom_call.1} parent=11 // pred_fallthru
          _
        // Predicated region
        $region45: #{tpu_custom_call.1} parent=11 // pred_check
          %p551 = pneg %p260
        $region46: #{tpu_custom_call.1} parent=11 // pred_check_branch
          %553 = sbr.rel (%p551) target = $region48
        $region47: #{tpu_custom_call.1} parent=11 // pred_region
          _
        $region48: #{tpu_custom_call.1} parent=11 // pred_fallthru
          _
        // Predicated region
        $region49: #{tpu_custom_call.1} parent=11 // pred_check
          %p554 = pneg %p281
        $region50: #{tpu_custom_call.1} parent=11 // pred_check_branch
          %556 = sbr.rel (%p554) target = $region52
        $region51: #{tpu_custom_call.1} parent=11 // pred_region
          _
        $region52: #{tpu_custom_call.1} parent=11 // pred_fallthru
          _
        // Predicated region
        $region53: #{tpu_custom_call.1} parent=11 // pred_check
          %p557 = pneg %p302
        $region54: #{tpu_custom_call.1} parent=11 // pred_check_branch
          %559 = sbr.rel (%p557) target = $region56
        $region55: #{tpu_custom_call.1} parent=11 // pred_region
          _
        $region56: #{tpu_custom_call.1} parent=11 // pred_fallthru
          _
        // Predicated region
        $region57: #{tpu_custom_call.1} parent=11 // pred_check
          %p560 = pneg %p323
        $region58: #{tpu_custom_call.1} parent=11 // pred_check_branch
          %562 = sbr.rel (%p560) target = $region60
        $region59: #{tpu_custom_call.1} parent=11 // pred_region
          _
        $region60: #{tpu_custom_call.1} parent=11 // pred_fallthru
          _
        // Predicated region
        $region61: #{tpu_custom_call.1} parent=11 // pred_check
          %p563 = pneg %p344
        $region62: #{tpu_custom_call.1} parent=11 // pred_check_branch
          %565 = sbr.rel (%p563) target = $region64
        $region63: #{tpu_custom_call.1} parent=11 // pred_region
          _
        $region64: #{tpu_custom_call.1} parent=11 // pred_fallthru
          _
        // Predicated region
        $region65: #{tpu_custom_call.1} parent=11 // pred_check
          %p566 = pneg %p365
        $region66: #{tpu_custom_call.1} parent=11 // pred_check_branch
          %568 = sbr.rel (%p566) target = $region68
        $region67: #{tpu_custom_call.1} parent=11 // pred_region
          _
        $region68: #{tpu_custom_call.1} parent=11 // pred_fallthru
          _
        // Predicated region
        $region69: #{tpu_custom_call.1} parent=11 // pred_check
          %p569 = pneg %p386
        $region70: #{tpu_custom_call.1} parent=11 // pred_check_branch
          %571 = sbr.rel (%p569) target = $region72
        $region71: #{tpu_custom_call.1} parent=11 // pred_region
          _
        $region72: #{tpu_custom_call.1} parent=11 // pred_fallthru
          _
        // Predicated region
        $region73: #{tpu_custom_call.1} parent=11 // pred_check
          %p572 = pneg %p407
        $region74: #{tpu_custom_call.1} parent=11 // pred_check_branch
          %574 = sbr.rel (%p572) target = $region76
        $region75: #{tpu_custom_call.1} parent=11 // pred_region
          _
        $region76: #{tpu_custom_call.1} parent=11 // pred_fallthru
          _
        // Predicated region
        $region77: #{tpu_custom_call.1} parent=11 // pred_check
          %p575 = pneg %p428
        $region78: #{tpu_custom_call.1} parent=11 // pred_check_branch
          %577 = sbr.rel (%p575) target = $region80
        $region79: #{tpu_custom_call.1} parent=11 // pred_region
          _
        $region80: #{tpu_custom_call.1} parent=11 // pred_fallthru
          _
        // Predicated region
        $region81: #{tpu_custom_call.1} parent=11 // pred_check
          %p578 = pneg %p449
        $region82: #{tpu_custom_call.1} parent=11 // pred_check_branch
          %580 = sbr.rel (%p578) target = $region84
        $region83: #{tpu_custom_call.1} parent=11 // pred_region
          _
        $region84: #{tpu_custom_call.1} parent=11 // pred_fallthru
          _
        // Predicated region
        $region85: #{tpu_custom_call.1} parent=11 // pred_check
          %p581 = pneg %p470
        $region86: #{tpu_custom_call.1} parent=11 // pred_check_branch
          %583 = sbr.rel (%p581) target = $region88
        $region87: #{tpu_custom_call.1} parent=11 // pred_region
          _
        $region88: #{tpu_custom_call.1} parent=11 // pred_fallthru
          _
      $region12: #{tpu_custom_call.1} parent=5 // pred_fallthru
        _
      %p584 = scmp.lt.s32.totalorder %s31, 2
      // Predicated region
      $region89: #{tpu_custom_call.1} parent=5 // pred_check
        %p585 = pneg %p584
      $region90: #{tpu_custom_call.1} parent=5 // pred_check_branch
        %587 = sbr.rel (%p585) target = $region92
      $region91: #{tpu_custom_call.1} parent=5 // pred_region
        // Predicated region
        $region93: #{tpu_custom_call.1} parent=91 // pred_check
          %p588 = pneg %p65
        $region94: #{tpu_custom_call.1} parent=91 // pred_check_branch
          %590 = sbr.rel (%p588) target = $region96
        $region95: #{tpu_custom_call.1} parent=91 // pred_region
          %p591 = scmp.lt.s32.totalorder %s38, 1
          %s592 = scalar_select %p591, %s38, 1
          %p593 = scmp.lt.s32.totalorder %s39, 0
          %s594 = scalar_select %p593, %s39, 0
          %s595 = sadd.s32 %s594, %s592
          %s596 = smul.addr %s595, 8
          %s597 = scalar_lea.vmem %s0, %s596
        $region96: #{tpu_custom_call.1} parent=91 // pred_fallthru
          _
      $region92: #{tpu_custom_call.1} parent=5 // pred_fallthru
        _
      %p598 = scmp.le.s32.totalorder 1, %s31
      %p599 = scmp.lt.s32.totalorder %s31, 3
      %p600 = pnand %p598, %p599
      %p601 = pneg %p600
      // Predicated region
      $region97: #{tpu_custom_call.1} parent=5 // pred_check
        _
      $region98: #{tpu_custom_call.1} parent=5 // pred_check_branch
        %603 = sbr.rel (%p600) target = $region100
      $region99: #{tpu_custom_call.1} parent=5 // pred_region
        %s604 = ssub.s32 %s31, 1
        // Predicated region
        $region101: #{tpu_custom_call.1} parent=99 // pred_check
          %p605 = pneg %p113
        $region102: #{tpu_custom_call.1} parent=99 // pred_check_branch
          %607 = sbr.rel (%p605) target = $region104
        $region103: #{tpu_custom_call.1} parent=99 // pred_region
          %608 = dma.done [#allocation5], 16
        $region104: #{tpu_custom_call.1} parent=99 // pred_fallthru
          _
        // Predicated region
        $region105: #{tpu_custom_call.1} parent=99 // pred_check
          %p609 = pneg %p134
        $region106: #{tpu_custom_call.1} parent=99 // pred_check_branch
          %611 = sbr.rel (%p609) target = $region108
        $region107: #{tpu_custom_call.1} parent=99 // pred_region
          %612 = dma.done [#allocation8], 16
        $region108: #{tpu_custom_call.1} parent=99 // pred_fallthru
          _
        %p613 = scmp.lt.s32.totalorder %s40, 1
        %s614 = scalar_select %p613, %s40, 1
        %p615 = scmp.lt.s32.totalorder %s41, 0
        %s616 = scalar_select %p615, %s41, 0
        %s617 = sadd.s32 %s616, %s614
        %s618 = smul.addr %s617, 8
        %s619 = scalar_lea.vmem %s0, %s618
        %p620 = pneg %p71
        %p621 = pneg %p68
        %p622 = pneg %p92
        %p623 = pneg %p89
        %p624 = pneg %p113
        %p625 = pneg %p110
        %p626 = pneg %p134
        %p627 = pneg %p131
        %p628 = pneg %p155
        %p629 = pneg %p152
        %p630 = pneg %p176
        %p631 = pneg %p173
        %p632 = pneg %p197
        %p633 = pneg %p194
        %p634 = pneg %p218
        %p635 = pneg %p215
        %p636 = pneg %p239
        %p637 = pneg %p236
        %p638 = pneg %p260
        %p639 = pneg %p257
        %p640 = pneg %p281
        %p641 = pneg %p278
        %p642 = pneg %p302
        %p643 = pneg %p299
        %p644 = pneg %p323
        %p645 = pneg %p320
        %p646 = pneg %p344
        %p647 = pneg %p341
        %p648 = pneg %p365
        %p649 = pneg %p362
        %p650 = pneg %p386
        %p651 = pneg %p383
        %p652 = pneg %p407
        %p653 = pneg %p404
        %p654 = pneg %p428
        %p655 = pneg %p425
        %p656 = pneg %p449
        %p657 = pneg %p446
        %p658 = pneg %p470
        %p659 = pneg %p467
        %p660 = pneg %p496
        %p661 = pneg %p493
        %s662 = sand.u32 %s483, 1
        %s663 = scalar_lea.sflag [#allocation6], %s662
        %s664 = sand.u32 %s483, 1
        %s665 = scalar_lea.vmem [#allocation9], %s664
        %p666 = scmp.lt.s32.totalorder %s40, 1
        %s667 = scalar_select %p666, %s40, 1
        %p668 = scmp.lt.s32.totalorder %s41, 0
        %s669 = scalar_select %p668, %s41, 0
        %s670 = sadd.s32 %s669, %s667
        %s671 = smul.addr %s670, 8
        %s672 = scalar_lea.vmem %s0, %s671
        %v674 = vld [vmem:[%s672] sm:$0xff]
        %v675 = vpack.c.bf16 %v674, %v674
        %v676 = vld [vmem:[%s1] sm:$0xf]
        %v677 = vld [vmem:[%s1 + $0x4] sm:$0xf]
        %v678 = vld [vmem:[%s1 + $0x8] sm:$0xf]
        %v679 = vld [vmem:[%s1 + $0xc] sm:$0xf]
        %v680 = vld [vmem:[#allocation4] sm:$0x1]
        %v682 = vlaneseq
        %v683 = vshrl.u32 %v682, 7
        %v684 = vsub.s32 0, %v683
        %v685 = vrot.slane %v680, %v684
        %v691 = vunpack.c.l.b16 %v676
        %v692 = vunpack.c.l.b16 %v677
        %v693 = vunpack.c.l.b16 %v678
        %v694 = vunpack.c.l.b16 %v679
        %v695 = vpack.c.b16 %v692, %v691
        %v696 = vpack.c.b16 %v694, %v693
        %vm699 = vcmask 261120
        %v701 = vsel %vm699, %v675, 0
        %703 = vmatprep.subr.bf16.mxu0 0
        %704 = vmatpush1.bf16.msra.mxu0 %v695
        %705 = vmatprep.subr.bf16.mxu0 0
        %706 = vmatpush1.bf16.msra.mxu0 %v696
        %707 = vmatprep.subr.bf16.mxu0 0
        %708 = vmatpush1.bf16.msra.mxu0 0
        %709 = vmatprep.subr.bf16.mxu0 0
        %710 = vmatpush1.bf16.msra.mxu0 0
        %711 = vmatprep.subr.bf16.mxu0 0
        %712 = vmatpush1.bf16.msra.mxu0 0
        %713 = vmatprep.subr.bf16.mxu0 0
        %714 = vmatpush1.bf16.msra.mxu0 0
        %715 = vmatprep.subr.bf16.mxu0 0
        %716 = vmatpush1.bf16.msra.mxu0 0
        %717 = vmatprep.subr.bf16.mxu0 0
        %718 = vmatpush1.bf16.msra.mxu0 0
        %719 = vmatprep.subr.bf16.mxu0 0
        %720 = vmatpush1.bf16.msra.mxu0 0
        %721 = vmatprep.subr.bf16.mxu0 0
        %722 = vmatpush1.bf16.msra.mxu0 0
        %723 = vmatprep.subr.bf16.mxu0 0
        %724 = vmatpush1.bf16.msra.mxu0 0
        %725 = vmatprep.subr.bf16.mxu0 0
        %726 = vmatpush1.bf16.msra.mxu0 0
        %727 = vmatprep.subr.bf16.mxu0 0
        %728 = vmatpush1.bf16.msra.mxu0 0
        %729 = vmatprep.subr.bf16.mxu0 0
        %730 = vmatpush1.bf16.msra.mxu0 0
        %731 = vmatprep.subr.bf16.mxu0 0
        %732 = vmatpush1.bf16.msra.mxu0 0
        %733 = vmatprep.subr.bf16.mxu0 0
        %734 = vmatpush1.bf16.msra.mxu0 0
        %735 = vmatprep.mubr.bf16.mxu0 0
        %736 = vmatmul.mubr.bf16.gmra.mrb[0].mxu0 %v701
        %v737 = vpop.f32.mrb[0].mxu0
        %v738 = vadd.f32 %v685, %v737
        %v739 = vpop.f32.mrb[0].mxu0
        %v740 = vpop.f32.mrb[0].mxu0
        %v741 = vpop.f32.mrb[0].mxu0
        %742 = vdwg.mxu0
        %v743 = vmul.f32 %v738, 0.5
        %v744 = vmul.f32 %v738, 0.70710677
        %v745 = vand.u32 2147483647, %v744
        %v746 = vmul.f32 %v745, 0.3275911
        %v747 = vadd.f32 %v746, 1.0
        %v748 = vrcp.pop %v747
        %v749 = vmul.f32 %v748, 1.0614054
        %v750 = vadd.f32 %v749, -1.4531521
        %v751 = vmul.f32 %v750, %v748
        %v752 = vadd.f32 %v751, 1.4214138
        %v753 = vmul.f32 %v752, %v748
        %v754 = vadd.f32 %v753, -0.28449672
        %v755 = vmul.f32 %v754, %v748
        %v756 = vadd.f32 %v755, 0.2548296
        %v757 = vmul.f32 %v756, %v748
        %v758 = vsub.f32 0.0, %v745
        %v759 = vmul.f32 %v758, %v745
        %v760 = vmul.f32 %v759, 1.442695
        %v761 = vpow.pop %v760
        %v762 = vmul.f32 %v757, %v761
        %v763 = vsub.f32 1.0, %v762
        %vm764 = vcmp.ge.f32.partialorder %v744, 0.0
        %v765 = vsub.f32 0.0, %v763
        %v766 = vsel %vm764, %v763, %v765
        %v767 = vadd.f32 %v766, 1.0
        %v768 = vmul.f32 %v743, %v767
        %v769 = vlaneseq
        %v770 = vshrl.u32 %v769, 7
        %s771 = smul.u32 %s41, 8
        %v772 = vstv %s771
        %v773 = vadd.s32 %v770, %v772
        %vm774 = vcmp.lt.s32.totalorder %v773, 7
        %v775 = vsel %vm774, 1, 0
        %vm776 = vcmp.eq.s32.totalorder %v775, 1
        %v777 = vsel %vm776, %v768, 0.0
        %s778 = sadd.s32 %s771, 8
        %s779 = scalar_lea.vmem [#allocation2], %s778
        %780 = vst.msk [vmem:[%s779] sm:$0xff] %vm699, %v777
        %p781 = scmp.eq.s32.totalorder %s41, 0
        // Predicated region
        $region109: #{tpu_custom_call.1} parent=99 // pred_check
          %p782 = pneg %p781
        $region110: #{tpu_custom_call.1} parent=99 // pred_check_branch
          %784 = sbr.rel (%p782) target = $region112
        $region111: #{tpu_custom_call.1} parent=99 // pred_region
          %vm785 = vcmp.eq.s32.totalorder %v770, 0
          %v786 = vld [vmem:[#allocation7] sm:$0x1]
          %v787 = vsel %vm785, 1, 0
          %vm788 = vcmp.eq.s32.totalorder %v787, 1
          %v790 = vlaneseq
          %v791 = vshrl.u32 %v790, 7
          %v792 = vsub.s32 0, %v791
          %v793 = vrot.slane %v786, %v792
          %v795 = vsel %vm788, %v793, 0.0
          %796 = vst.msk [vmem:[#allocation2] sm:$0xff] %vm699, %v795
          %v797 = vld [vmem:[#allocation2] sm:$0xff]
          %v798 = vld [vmem:[#allocation2 + $0x8] sm:$0xff]
          %v799 = vld [vmem:[%s4] sm:$0x1]
          %v800 = vld [vmem:[%s5] sm:$0x1]
          %v801 = vsel %vm699, %v797, 0.0
          %802 = vadd.xlane.f32.xlu0 %v801
          %v803 = vpop.xlane.xlu0 %802
          %v804 = vsel %vm699, %v798, 0.0
          %805 = vadd.xlane.f32.xlu0 %v804
          %v806 = vpop.xlane.xlu0 %805
          %v807 = vrcp.pop 32.0
          %v808 = vmul.f32 %v803, %v807
          %v809 = vmul.f32 %v806, %v807
          %v810 = vsub.f32 %v797, %v808
          %v811 = vsub.f32 %v798, %v809
          %v812 = vmul.f32 %v810, %v810
          %v813 = vmul.f32 %v811, %v811
          %v814 = vsel %vm699, %v812, 0.0
          %815 = vadd.xlane.f32.xlu0 %v814
          %v816 = vpop.xlane.xlu0 %815
          %v817 = vsel %vm699, %v813, 0.0
          %818 = vadd.xlane.f32.xlu0 %v817
          %v819 = vpop.xlane.xlu0 %818
          %v820 = vmul.f32 %v816, %v807
          %v821 = vmul.f32 %v819, %v807
          %v822 = vadd.f32 %v820, 1e-05
          %v823 = vadd.f32 %v821, 1e-05
          %v824 = vrsqrt.pop %v822
          %v825 = vrsqrt.pop %v823
          %v826 = vmul.f32 %v810, %v824
          %v827 = vmul.f32 %v811, %v825
          %v829 = vlaneseq
          %v830 = vshrl.u32 %v829, 7
          %v831 = vsub.s32 0, %v830
          %v832 = vrot.slane %v799, %v831
          %v834 = vmul.f32 %v826, %v832
          %v835 = vmul.f32 %v827, %v832
          %v837 = vlaneseq
          %v838 = vshrl.u32 %v837, 7
          %v839 = vsub.s32 0, %v838
          %v840 = vrot.slane %v800, %v839
          %v842 = vadd.f32 %v834, %v840
          %v843 = vadd.f32 %v835, %v840
          %v844 = vpack.c.bf16 %v843, %v842
          %v845 = vld [vmem:[%s6] sm:$0xf]
          %v846 = vld [vmem:[%s6 + $0x4] sm:$0xf]
          %v847 = vld [vmem:[%s6 + $0x8] sm:$0xf]
          %v848 = vld [vmem:[%s6 + $0xc] sm:$0xf]
          %v849 = vld [vmem:[%s7] sm:$0x1]
          %v851 = vlaneseq
          %v852 = vshrl.u32 %v851, 7
          %v853 = vsub.s32 0, %v852
          %v854 = vrot.slane %v849, %v853
          %v860 = vunpack.c.l.b16 %v845
          %v861 = vunpack.c.l.b16 %v846
          %v862 = vunpack.c.l.b16 %v847
          %v863 = vunpack.c.l.b16 %v848
          %v864 = vpack.c.b16 %v861, %v860
          %v865 = vpack.c.b16 %v863, %v862
          %v869 = vsel %vm699, %v844, 0
          %871 = vmatprep.subr.bf16.mxu0 0
          %872 = vmatpush1.bf16.msra.mxu0 %v864
          %873 = vmatprep.subr.bf16.mxu0 0
          %874 = vmatpush1.bf16.msra.mxu0 %v865
          %875 = vmatprep.subr.bf16.mxu0 0
          %876 = vmatpush1.bf16.msra.mxu0 0
          %877 = vmatprep.subr.bf16.mxu0 0
          %878 = vmatpush1.bf16.msra.mxu0 0
          %879 = vmatprep.subr.bf16.mxu0 0
          %880 = vmatpush1.bf16.msra.mxu0 0
          %881 = vmatprep.subr.bf16.mxu0 0
          %882 = vmatpush1.bf16.msra.mxu0 0
          %883 = vmatprep.subr.bf16.mxu0 0
          %884 = vmatpush1.bf16.msra.mxu0 0
          %885 = vmatprep.subr.bf16.mxu0 0
          %886 = vmatpush1.bf16.msra.mxu0 0
          %887 = vmatprep.subr.bf16.mxu0 0
          %888 = vmatpush1.bf16.msra.mxu0 0
          %889 = vmatprep.subr.bf16.mxu0 0
          %890 = vmatpush1.bf16.msra.mxu0 0
          %891 = vmatprep.subr.bf16.mxu0 0
          %892 = vmatpush1.bf16.msra.mxu0 0
          %893 = vmatprep.subr.bf16.mxu0 0
          %894 = vmatpush1.bf16.msra.mxu0 0
          %895 = vmatprep.subr.bf16.mxu0 0
          %896 = vmatpush1.bf16.msra.mxu0 0
          %897 = vmatprep.subr.bf16.mxu0 0
          %898 = vmatpush1.bf16.msra.mxu0 0
          %899 = vmatprep.subr.bf16.mxu0 0
          %900 = vmatpush1.bf16.msra.mxu0 0
          %901 = vmatprep.subr.bf16.mxu0 0
          %902 = vmatpush1.bf16.msra.mxu0 0
          %903 = vmatprep.mubr.bf16.mxu0 0
          %904 = vmatmul.mubr.bf16.gmra.mrb[0].mxu0 %v869
          %v905 = vpop.f32.mrb[0].mxu0
          %v906 = vadd.f32 %v854, %v905
          %v907 = vpop.f32.mrb[0].mxu0
          %v908 = vpop.f32.mrb[0].mxu0
          %v909 = vadd.f32 %v854, %v908
          %v910 = vpop.f32.mrb[0].mxu0
          %911 = vdwg.mxu0
          %v912 = vpack.c.bf16 %v909, %v906
          %vm913 = vcmask 785408
          %914 = vst.msk [vmem:[#allocation3] sm:$0xff] %vm913, %v912
          %v915 = vld [vmem:[#allocation2] sm:$0xff]
          %v916 = vld [vmem:[#allocation2 + $0x8] sm:$0xff]
          %v917 = vld [vmem:[#allocation3] sm:$0xff]
          %919 = vrot.lane.b32.xlu0 %v917, 96
          %v920 = vpop.permute.xlu0 %919
          %vm921 = vcmask 64512
          %v923 = vsel %vm921, %v917, 0
          %v926 = vsel %vm921, %v920, 0
          %928 = vmatprep.subr.bf16.mxu0 0
          %929 = vmatpush1.bf16.xpose.msra.mxu0 %v926
          %930 = vmatprep.subr.bf16.mxu0 0
          %931 = vmatpush1.bf16.xpose.msra.mxu0 0
          %932 = vmatprep.subr.bf16.mxu0 0
          %933 = vmatpush1.bf16.xpose.msra.mxu0 0
          %934 = vmatprep.subr.bf16.mxu0 0
          %935 = vmatpush1.bf16.xpose.msra.mxu0 0
          %936 = vmatprep.subr.bf16.mxu0 0
          %937 = vmatpush1.bf16.xpose.msra.mxu0 0
          %938 = vmatprep.subr.bf16.mxu0 0
          %939 = vmatpush1.bf16.xpose.msra.mxu0 0
          %940 = vmatprep.subr.bf16.mxu0 0
          %941 = vmatpush1.bf16.xpose.msra.mxu0 0
          %942 = vmatprep.subr.bf16.mxu0 0
          %943 = vmatpush1.bf16.xpose.msra.mxu0 0
          %944 = vmatprep.subr.bf16.mxu0 0
          %945 = vmatpush1.bf16.xpose.msra.mxu0 0
          %946 = vmatprep.subr.bf16.mxu0 0
          %947 = vmatpush1.bf16.xpose.msra.mxu0 0
          %948 = vmatprep.subr.bf16.mxu0 0
          %949 = vmatpush1.bf16.xpose.msra.mxu0 0
          %950 = vmatprep.subr.bf16.mxu0 0
          %951 = vmatpush1.bf16.xpose.msra.mxu0 0
          %952 = vmatprep.subr.bf16.mxu0 0
          %953 = vmatpush1.bf16.xpose.msra.mxu0 0
          %954 = vmatprep.subr.bf16.mxu0 0
          %955 = vmatpush1.bf16.xpose.msra.mxu0 0
          %956 = vmatprep.subr.bf16.mxu0 0
          %957 = vmatpush1.bf16.xpose.msra.mxu0 0
          %958 = vmatprep.subr.bf16.mxu0 0
          %959 = vmatpush1.bf16.xpose.msra.mxu0 0
          %960 = vmatprep.mubr.bf16.mxu0 0
          %961 = vmatmul.mubr.bf16.gmra.mrb[0].mxu0 %v923
          %v962 = vpop.f32.mrb[0].mxu0
          %v963 = vadd.f32 0.0, %v962
          %v964 = vpop.f32.mrb[0].mxu0
          %v965 = vpop.f32.mrb[0].mxu0
          %v966 = vadd.f32 0.0, %v965
          %v967 = vpop.f32.mrb[0].mxu0
          %968 = vdwg.mxu0
          %v969 = vmul.f32 %v963, 0.35355338
          %v970 = vmul.f32 %v966, 0.35355338
          %v971 = vlaneseq
          %v972 = vand.u32 %v971, 127
          %v973 = vstv 0
          %v974 = vadd.s32 %v972, %v973
          %vm975 = vcmp.eq.s32.totalorder %v974, 0
          %vm976 = vcmp.ge.s32.totalorder %v974, 8
          %vm977 = vcmp.lt.s32.totalorder %v974, 15
          %vm978 = vmand %vm976, %vm977
          %vm979 = vmor %vm975, %vm978
          %v980 = vsel %vm979, 0.0, -1e+30
          %v981 = vadd.f32 %v969, %v980
          %v982 = vadd.f32 %v970, %v980
          %vm983 = vcmask 130048
          %v984 = vsel %vm983, %v981, -inf
          %985 = vmax.xlane.f32.xlu0 %v984
          %v986 = vpop.xlane.xlu0 %985
          %v987 = vsel %vm983, %v982, -inf
          %988 = vmax.xlane.f32.xlu0 %v987
          %v989 = vpop.xlane.xlu0 %988
          %v990 = vmax.f32 %v986, -1e+30
          %v991 = vmax.f32 %v989, -1e+30
          %v992 = vsub.f32 -1e+30, %v990
          %v993 = vsub.f32 -1e+30, %v991
          %v994 = vmul.f32 %v992, 1.442695
          %v995 = vpow.pop %v994
          %v996 = vmul.f32 %v993, 1.442695
          %v997 = vpow.pop %v996
          %v998 = vsub.f32 %v981, %v990
          %v999 = vsub.f32 %v982, %v991
          %v1000 = vmul.f32 %v998, 1.442695
          %v1001 = vpow.pop %v1000
          %v1002 = vmul.f32 %v999, 1.442695
          %v1003 = vpow.pop %v1002
          %v1004 = vmul.f32 %v995, 0.0
          %v1005 = vmul.f32 %v997, 0.0
          %v1006 = vsel %vm983, %v1001, 0.0
          %1007 = vadd.xlane.f32.xlu0 %v1006
          %v1008 = vpop.xlane.xlu0 %1007
          %v1009 = vsel %vm983, %v1003, 0.0
          %1010 = vadd.xlane.f32.xlu0 %v1009
          %v1011 = vpop.xlane.xlu0 %1010
          %v1012 = vadd.f32 %v1004, %v1008
          %v1013 = vadd.f32 %v1005, %v1011
          %v1014 = vpack.c.bf16 %v1003, %v1001
          %1015 = vrot.lane.b32.xlu0 %v917, 64
          %v1016 = vpop.permute.xlu0 %1015
          %v1019 = vsel %vm983, %v1014, 0
          %1021 = vmatprep.subr.bf16.mxu0 0
          %1022 = vmatpush1.bf16.msra.mxu0 %v1016
          %1023 = vmatprep.subr.bf16.mxu0 0
          %1024 = vmatpush1.bf16.msra.mxu0 0
          %1025 = vmatprep.subr.bf16.mxu0 0
          %1026 = vmatpush1.bf16.msra.mxu0 0
          %1027 = vmatprep.subr.bf16.mxu0 0
          %1028 = vmatpush1.bf16.msra.mxu0 0
          %1029 = vmatprep.subr.bf16.mxu0 0
          %1030 = vmatpush1.bf16.msra.mxu0 0
          %1031 = vmatprep.subr.bf16.mxu0 0
          %1032 = vmatpush1.bf16.msra.mxu0 0
          %1033 = vmatprep.subr.bf16.mxu0 0
          %1034 = vmatpush1.bf16.msra.mxu0 0
          %1035 = vmatprep.subr.bf16.mxu0 0
          %1036 = vmatpush1.bf16.msra.mxu0 0
          %1037 = vmatprep.subr.bf16.mxu0 0
          %1038 = vmatpush1.bf16.msra.mxu0 0
          %1039 = vmatprep.subr.bf16.mxu0 0
          %1040 = vmatpush1.bf16.msra.mxu0 0
          %1041 = vmatprep.subr.bf16.mxu0 0
          %1042 = vmatpush1.bf16.msra.mxu0 0
          %1043 = vmatprep.subr.bf16.mxu0 0
          %1044 = vmatpush1.bf16.msra.mxu0 0
          %1045 = vmatprep.subr.bf16.mxu0 0
          %1046 = vmatpush1.bf16.msra.mxu0 0
          %1047 = vmatprep.subr.bf16.mxu0 0
          %1048 = vmatpush1.bf16.msra.mxu0 0
          %1049 = vmatprep.subr.bf16.mxu0 0
          %1050 = vmatpush1.bf16.msra.mxu0 0
          %1051 = vmatprep.subr.bf16.mxu0 0
          %1052 = vmatpush1.bf16.msra.mxu0 0
          %1053 = vmatprep.mubr.bf16.mxu0 0
          %1054 = vmatmul.mubr.bf16.gmra.mrb[0].mxu0 %v1019
          %v1055 = vpop.f32.mrb[0].mxu0
          %v1056 = vadd.f32 0.0, %v1055
          %v1057 = vpop.f32.mrb[0].mxu0
          %v1058 = vpop.f32.mrb[0].mxu0
          %v1059 = vadd.f32 0.0, %v1058
          %v1060 = vpop.f32.mrb[0].mxu0
          %1061 = vdwg.mxu0
          %v1062 = vadd.f32 %v1004, %v1056
          %v1063 = vadd.f32 %v1005, %v1059
          %v1064 = vrcp.pop %v1012
          %v1065 = vrcp.pop %v1013
          %v1066 = vmul.f32 %v1062, %v1064
          %v1067 = vmul.f32 %v1063, %v1065
          %v1068 = vpack.c.bf16 %v1067, %v1066
          %1069 = vrot.lane.b32.xlu0 %v917, 120
          %v1070 = vpop.permute.xlu0 %1069
          %1071 = vrot.lane.b32.xlu0 %v917, 88
          %v1072 = vpop.permute.xlu0 %1071
          %v1074 = vsel %vm921, %v1070, 0
          %v1077 = vsel %vm921, %v1072, 0
          %1079 = vmatprep.subr.bf16.mxu0 0
          %1080 = vmatpush1.bf16.xpose.msra.mxu0 %v1077
          %1081 = vmatprep.subr.bf16.mxu0 0
          %1082 = vmatpush1.bf16.xpose.msra.mxu0 0
          %1083 = vmatprep.subr.bf16.mxu0 0
          %1084 = vmatpush1.bf16.xpose.msra.mxu0 0
          %1085 = vmatprep.subr.bf16.mxu0 0
          %1086 = vmatpush1.bf16.xpose.msra.mxu0 0
          %1087 = vmatprep.subr.bf16.mxu0 0
          %1088 = vmatpush1.bf16.xpose.msra.mxu0 0
          %1089 = vmatprep.subr.bf16.mxu0 0
          %1090 = vmatpush1.bf16.xpose.msra.mxu0 0
          %1091 = vmatprep.subr.bf16.mxu0 0
          %1092 = vmatpush1.bf16.xpose.msra.mxu0 0
          %1093 = vmatprep.subr.bf16.mxu0 0
          %1094 = vmatpush1.bf16.xpose.msra.mxu0 0
          %1095 = vmatprep.subr.bf16.mxu0 0
          %1096 = vmatpush1.bf16.xpose.msra.mxu0 0
          %1097 = vmatprep.subr.bf16.mxu0 0
          %1098 = vmatpush1.bf16.xpose.msra.mxu0 0
          %1099 = vmatprep.subr.bf16.mxu0 0
          %1100 = vmatpush1.bf16.xpose.msra.mxu0 0
          %1101 = vmatprep.subr.bf16.mxu0 0
          %1102 = vmatpush1.bf16.xpose.msra.mxu0 0
          %1103 = vmatprep.subr.bf16.mxu0 0
          %1104 = vmatpush1.bf16.xpose.msra.mxu0 0
          %1105 = vmatprep.subr.bf16.mxu0 0
          %1106 = vmatpush1.bf16.xpose.msra.mxu0 0
          %1107 = vmatprep.subr.bf16.mxu0 0
          %1108 = vmatpush1.bf16.xpose.msra.mxu0 0
          %1109 = vmatprep.subr.bf16.mxu0 0
          %1110 = vmatpush1.bf16.xpose.msra.mxu0 0
          %1111 = vmatprep.mubr.bf16.mxu0 0
          %1112 = vmatmul.mubr.bf16.gmra.mrb[0].mxu0 %v1074
          %v1113 = vpop.f32.mrb[0].mxu0
          %v1114 = vadd.f32 0.0, %v1113
          %v1115 = vpop.f32.mrb[0].mxu0
          %v1116 = vpop.f32.mrb[0].mxu0
          %v1117 = vadd.f32 0.0, %v1116
          %v1118 = vpop.f32.mrb[0].mxu0
          %1119 = vdwg.mxu0
          %v1120 = vmul.f32 %v1114, 0.35355338
          %v1121 = vmul.f32 %v1117, 0.35355338
          %v1122 = vadd.f32 %v1120, %v980
          %v1123 = vadd.f32 %v1121, %v980
          %v1124 = vsel %vm983, %v1122, -inf
          %1125 = vmax.xlane.f32.xlu0 %v1124
          %v1126 = vpop.xlane.xlu0 %1125
          %v1127 = vsel %vm983, %v1123, -inf
          %1128 = vmax.xlane.f32.xlu0 %v1127
          %v1129 = vpop.xlane.xlu0 %1128
          %v1130 = vmax.f32 %v1126, -1e+30
          %v1131 = vmax.f32 %v1129, -1e+30
          %v1132 = vsub.f32 -1e+30, %v1130
          %v1133 = vsub.f32 -1e+30, %v1131
          %v1134 = vmul.f32 %v1132, 1.442695
          %v1135 = vpow.pop %v1134
          %v1136 = vmul.f32 %v1133, 1.442695
          %v1137 = vpow.pop %v1136
          %v1138 = vsub.f32 %v1122, %v1130
          %v1139 = vsub.f32 %v1123, %v1131
          %v1140 = vmul.f32 %v1138, 1.442695
          %v1141 = vpow.pop %v1140
          %v1142 = vmul.f32 %v1139, 1.442695
          %v1143 = vpow.pop %v1142
          %v1144 = vmul.f32 %v1135, 0.0
          %v1145 = vmul.f32 %v1137, 0.0
          %v1146 = vsel %vm983, %v1141, 0.0
          %1147 = vadd.xlane.f32.xlu0 %v1146
          %v1148 = vpop.xlane.xlu0 %1147
          %v1149 = vsel %vm983, %v1143, 0.0
          %1150 = vadd.xlane.f32.xlu0 %v1149
          %v1151 = vpop.xlane.xlu0 %1150
          %v1152 = vadd.f32 %v1144, %v1148
          %v1153 = vadd.f32 %v1145, %v1151
          %v1154 = vpack.c.bf16 %v1143, %v1141
          %1155 = vrot.lane.b32.xlu0 %v917, 56
          %v1156 = vpop.permute.xlu0 %1155
          %v1159 = vsel %vm983, %v1154, 0
          %1161 = vmatprep.subr.bf16.mxu0 0
          %1162 = vmatpush1.bf16.msra.mxu0 %v1156
          %1163 = vmatprep.subr.bf16.mxu0 0
          %1164 = vmatpush1.bf16.msra.mxu0 0
          %1165 = vmatprep.subr.bf16.mxu0 0
          %1166 = vmatpush1.bf16.msra.mxu0 0
          %1167 = vmatprep.subr.bf16.mxu0 0
          %1168 = vmatpush1.bf16.msra.mxu0 0
          %1169 = vmatprep.subr.bf16.mxu0 0
          %1170 = vmatpush1.bf16.msra.mxu0 0
          %1171 = vmatprep.subr.bf16.mxu0 0
          %1172 = vmatpush1.bf16.msra.mxu0 0
          %1173 = vmatprep.subr.bf16.mxu0 0
          %1174 = vmatpush1.bf16.msra.mxu0 0
          %1175 = vmatprep.subr.bf16.mxu0 0
          %1176 = vmatpush1.bf16.msra.mxu0 0
          %1177 = vmatprep.subr.bf16.mxu0 0
          %1178 = vmatpush1.bf16.msra.mxu0 0
          %1179 = vmatprep.subr.bf16.mxu0 0
          %1180 = vmatpush1.bf16.msra.mxu0 0
          %1181 = vmatprep.subr.bf16.mxu0 0
          %1182 = vmatpush1.bf16.msra.mxu0 0
          %1183 = vmatprep.subr.bf16.mxu0 0
          %1184 = vmatpush1.bf16.msra.mxu0 0
          %1185 = vmatprep.subr.bf16.mxu0 0
          %1186 = vmatpush1.bf16.msra.mxu0 0
          %1187 = vmatprep.subr.bf16.mxu0 0
          %1188 = vmatpush1.bf16.msra.mxu0 0
          %1189 = vmatprep.subr.bf16.mxu0 0
          %1190 = vmatpush1.bf16.msra.mxu0 0
          %1191 = vmatprep.subr.bf16.mxu0 0
          %1192 = vmatpush1.bf16.msra.mxu0 0
          %1193 = vmatprep.mubr.bf16.mxu0 0
          %1194 = vmatmul.mubr.bf16.gmra.mrb[0].mxu0 %v1159
          %v1195 = vpop.f32.mrb[0].mxu0
          %v1196 = vadd.f32 0.0, %v1195
          %v1197 = vpop.f32.mrb[0].mxu0
          %v1198 = vpop.f32.mrb[0].mxu0
          %v1199 = vadd.f32 0.0, %v1198
          %v1200 = vpop.f32.mrb[0].mxu0
          %1201 = vdwg.mxu0
          %v1202 = vadd.f32 %v1144, %v1196
          %v1203 = vadd.f32 %v1145, %v1199
          %v1204 = vrcp.pop %v1152
          %v1205 = vrcp.pop %v1153
          %v1206 = vmul.f32 %v1202, %v1204
          %v1207 = vmul.f32 %v1203, %v1205
          %v1208 = vpack.c.bf16 %v1207, %v1206
          %1209 = vrot.lane.b32.xlu0 %v917, 112
          %v1210 = vpop.permute.xlu0 %1209
          %1211 = vrot.lane.b32.xlu0 %v917, 80
          %v1212 = vpop.permute.xlu0 %1211
          %v1214 = vsel %vm921, %v1210, 0
          %v1217 = vsel %vm921, %v1212, 0
          %1219 = vmatprep.subr.bf16.mxu0 0
          %1220 = vmatpush1.bf16.xpose.msra.mxu0 %v1217
          %1221 = vmatprep.subr.bf16.mxu0 0
          %1222 = vmatpush1.bf16.xpose.msra.mxu0 0
          %1223 = vmatprep.subr.bf16.mxu0 0
          %1224 = vmatpush1.bf16.xpose.msra.mxu0 0
          %1225 = vmatprep.subr.bf16.mxu0 0
          %1226 = vmatpush1.bf16.xpose.msra.mxu0 0
          %1227 = vmatprep.subr.bf16.mxu0 0
          %1228 = vmatpush1.bf16.xpose.msra.mxu0 0
          %1229 = vmatprep.subr.bf16.mxu0 0
          %1230 = vmatpush1.bf16.xpose.msra.mxu0 0
          %1231 = vmatprep.subr.bf16.mxu0 0
          %1232 = vmatpush1.bf16.xpose.msra.mxu0 0
          %1233 = vmatprep.subr.bf16.mxu0 0
          %1234 = vmatpush1.bf16.xpose.msra.mxu0 0
          %1235 = vmatprep.subr.bf16.mxu0 0
          %1236 = vmatpush1.bf16.xpose.msra.mxu0 0
          %1237 = vmatprep.subr.bf16.mxu0 0
          %1238 = vmatpush1.bf16.xpose.msra.mxu0 0
          %1239 = vmatprep.subr.bf16.mxu0 0
          %1240 = vmatpush1.bf16.xpose.msra.mxu0 0
          %1241 = vmatprep.subr.bf16.mxu0 0
          %1242 = vmatpush1.bf16.xpose.msra.mxu0 0
          %1243 = vmatprep.subr.bf16.mxu0 0
          %1244 = vmatpush1.bf16.xpose.msra.mxu0 0
          %1245 = vmatprep.subr.bf16.mxu0 0
          %1246 = vmatpush1.bf16.xpose.msra.mxu0 0
          %1247 = vmatprep.subr.bf16.mxu0 0
          %1248 = vmatpush1.bf16.xpose.msra.mxu0 0
          %1249 = vmatprep.subr.bf16.mxu0 0
          %1250 = vmatpush1.bf16.xpose.msra.mxu0 0
          %1251 = vmatprep.mubr.bf16.mxu0 0
          %1252 = vmatmul.mubr.bf16.gmra.mrb[0].mxu0 %v1214
          %v1253 = vpop.f32.mrb[0].mxu0
          %v1254 = vadd.f32 0.0, %v1253
          %v1255 = vpop.f32.mrb[0].mxu0
          %v1256 = vpop.f32.mrb[0].mxu0
          %v1257 = vadd.f32 0.0, %v1256
          %v1258 = vpop.f32.mrb[0].mxu0
          %1259 = vdwg.mxu0
          %v1260 = vmul.f32 %v1254, 0.35355338
          %v1261 = vmul.f32 %v1257, 0.35355338
          %v1262 = vadd.f32 %v1260, %v980
          %v1263 = vadd.f32 %v1261, %v980
          %v1264 = vsel %vm983, %v1262, -inf
          %1265 = vmax.xlane.f32.xlu0 %v1264
          %v1266 = vpop.xlane.xlu0 %1265
          %v1267 = vsel %vm983, %v1263, -inf
          %1268 = vmax.xlane.f32.xlu0 %v1267
          %v1269 = vpop.xlane.xlu0 %1268
          %v1270 = vmax.f32 %v1266, -1e+30
          %v1271 = vmax.f32 %v1269, -1e+30
          %v1272 = vsub.f32 -1e+30, %v1270
          %v1273 = vsub.f32 -1e+30, %v1271
          %v1274 = vmul.f32 %v1272, 1.442695
          %v1275 = vpow.pop %v1274
          %v1276 = vmul.f32 %v1273, 1.442695
          %v1277 = vpow.pop %v1276
          %v1278 = vsub.f32 %v1262, %v1270
          %v1279 = vsub.f32 %v1263, %v1271
          %v1280 = vmul.f32 %v1278, 1.442695
          %v1281 = vpow.pop %v1280
          %v1282 = vmul.f32 %v1279, 1.442695
          %v1283 = vpow.pop %v1282
          %v1284 = vmul.f32 %v1275, 0.0
          %v1285 = vmul.f32 %v1277, 0.0
          %v1286 = vsel %vm983, %v1281, 0.0
          %1287 = vadd.xlane.f32.xlu0 %v1286
          %v1288 = vpop.xlane.xlu0 %1287
          %v1289 = vsel %vm983, %v1283, 0.0
          %1290 = vadd.xlane.f32.xlu0 %v1289
          %v1291 = vpop.xlane.xlu0 %1290
          %v1292 = vadd.f32 %v1284, %v1288
          %v1293 = vadd.f32 %v1285, %v1291
          %v1294 = vpack.c.bf16 %v1283, %v1281
          %1295 = vrot.lane.b32.xlu0 %v917, 48
          %v1296 = vpop.permute.xlu0 %1295
          %v1299 = vsel %vm983, %v1294, 0
          %1301 = vmatprep.subr.bf16.mxu0 0
          %1302 = vmatpush1.bf16.msra.mxu0 %v1296
          %1303 = vmatprep.subr.bf16.mxu0 0
          %1304 = vmatpush1.bf16.msra.mxu0 0
          %1305 = vmatprep.subr.bf16.mxu0 0
          %1306 = vmatpush1.bf16.msra.mxu0 0
          %1307 = vmatprep.subr.bf16.mxu0 0
          %1308 = vmatpush1.bf16.msra.mxu0 0
          %1309 = vmatprep.subr.bf16.mxu0 0
          %1310 = vmatpush1.bf16.msra.mxu0 0
          %1311 = vmatprep.subr.bf16.mxu0 0
          %1312 = vmatpush1.bf16.msra.mxu0 0
          %1313 = vmatprep.subr.bf16.mxu0 0
          %1314 = vmatpush1.bf16.msra.mxu0 0
          %1315 = vmatprep.subr.bf16.mxu0 0
          %1316 = vmatpush1.bf16.msra.mxu0 0
          %1317 = vmatprep.subr.bf16.mxu0 0
          %1318 = vmatpush1.bf16.msra.mxu0 0
          %1319 = vmatprep.subr.bf16.mxu0 0
          %1320 = vmatpush1.bf16.msra.mxu0 0
          %1321 = vmatprep.subr.bf16.mxu0 0
          %1322 = vmatpush1.bf16.msra.mxu0 0
          %1323 = vmatprep.subr.bf16.mxu0 0
          %1324 = vmatpush1.bf16.msra.mxu0 0
          %1325 = vmatprep.subr.bf16.mxu0 0
          %1326 = vmatpush1.bf16.msra.mxu0 0
          %1327 = vmatprep.subr.bf16.mxu0 0
          %1328 = vmatpush1.bf16.msra.mxu0 0
          %1329 = vmatprep.subr.bf16.mxu0 0
          %1330 = vmatpush1.bf16.msra.mxu0 0
          %1331 = vmatprep.subr.bf16.mxu0 0
          %1332 = vmatpush1.bf16.msra.mxu0 0
          %1333 = vmatprep.mubr.bf16.mxu0 0
          %1334 = vmatmul.mubr.bf16.gmra.mrb[0].mxu0 %v1299
          %v1335 = vpop.f32.mrb[0].mxu0
          %v1336 = vadd.f32 0.0, %v1335
          %v1337 = vpop.f32.mrb[0].mxu0
          %v1338 = vpop.f32.mrb[0].mxu0
          %v1339 = vadd.f32 0.0, %v1338
          %v1340 = vpop.f32.mrb[0].mxu0
          %1341 = vdwg.mxu0
          %v1342 = vadd.f32 %v1284, %v1336
          %v1343 = vadd.f32 %v1285, %v1339
          %v1344 = vrcp.pop %v1292
          %v1345 = vrcp.pop %v1293
          %v1346 = vmul.f32 %v1342, %v1344
          %v1347 = vmul.f32 %v1343, %v1345
          %v1348 = vpack.c.bf16 %v1347, %v1346
          %1349 = vrot.lane.b32.xlu0 %v917, 104
          %v1350 = vpop.permute.xlu0 %1349
          %1351 = vrot.lane.b32.xlu0 %v917, 72
          %v1352 = vpop.permute.xlu0 %1351
          %v1354 = vsel %vm921, %v1350, 0
          %v1357 = vsel %vm921, %v1352, 0
          %1359 = vmatprep.subr.bf16.mxu0 0
          %1360 = vmatpush1.bf16.xpose.msra.mxu0 %v1357
          %1361 = vmatprep.subr.bf16.mxu0 0
          %1362 = vmatpush1.bf16.xpose.msra.mxu0 0
          %1363 = vmatprep.subr.bf16.mxu0 0
          %1364 = vmatpush1.bf16.xpose.msra.mxu0 0
          %1365 = vmatprep.subr.bf16.mxu0 0
          %1366 = vmatpush1.bf16.xpose.msra.mxu0 0
          %1367 = vmatprep.subr.bf16.mxu0 0
          %1368 = vmatpush1.bf16.xpose.msra.mxu0 0
          %1369 = vmatprep.subr.bf16.mxu0 0
          %1370 = vmatpush1.bf16.xpose.msra.mxu0 0
          %1371 = vmatprep.subr.bf16.mxu0 0
          %1372 = vmatpush1.bf16.xpose.msra.mxu0 0
          %1373 = vmatprep.subr.bf16.mxu0 0
          %1374 = vmatpush1.bf16.xpose.msra.mxu0 0
          %1375 = vmatprep.subr.bf16.mxu0 0
          %1376 = vmatpush1.bf16.xpose.msra.mxu0 0
          %1377 = vmatprep.subr.bf16.mxu0 0
          %1378 = vmatpush1.bf16.xpose.msra.mxu0 0
          %1379 = vmatprep.subr.bf16.mxu0 0
          %1380 = vmatpush1.bf16.xpose.msra.mxu0 0
          %1381 = vmatprep.subr.bf16.mxu0 0
          %1382 = vmatpush1.bf16.xpose.msra.mxu0 0
          %1383 = vmatprep.subr.bf16.mxu0 0
          %1384 = vmatpush1.bf16.xpose.msra.mxu0 0
          %1385 = vmatprep.subr.bf16.mxu0 0
          %1386 = vmatpush1.bf16.xpose.msra.mxu0 0
          %1387 = vmatprep.subr.bf16.mxu0 0
          %1388 = vmatpush1.bf16.xpose.msra.mxu0 0
          %1389 = vmatprep.subr.bf16.mxu0 0
          %1390 = vmatpush1.bf16.xpose.msra.mxu0 0
          %1391 = vmatprep.mubr.bf16.mxu0 0
          %1392 = vmatmul.mubr.bf16.gmra.mrb[0].mxu0 %v1354
          %v1393 = vpop.f32.mrb[0].mxu0
          %v1394 = vadd.f32 0.0, %v1393
          %v1395 = vpop.f32.mrb[0].mxu0
          %v1396 = vpop.f32.mrb[0].mxu0
          %v1397 = vadd.f32 0.0, %v1396
          %v1398 = vpop.f32.mrb[0].mxu0
          %1399 = vdwg.mxu0
          %v1400 = vmul.f32 %v1394, 0.35355338
          %v1401 = vmul.f32 %v1397, 0.35355338
          %v1402 = vadd.f32 %v1400, %v980
          %v1403 = vadd.f32 %v1401, %v980
          %v1404 = vsel %vm983, %v1402, -inf
          %1405 = vmax.xlane.f32.xlu0 %v1404
          %v1406 = vpop.xlane.xlu0 %1405
          %v1407 = vsel %vm983, %v1403, -inf
          %1408 = vmax.xlane.f32.xlu0 %v1407
          %v1409 = vpop.xlane.xlu0 %1408
          %v1410 = vmax.f32 %v1406, -1e+30
          %v1411 = vmax.f32 %v1409, -1e+30
          %v1412 = vsub.f32 -1e+30, %v1410
          %v1413 = vsub.f32 -1e+30, %v1411
          %v1414 = vmul.f32 %v1412, 1.442695
          %v1415 = vpow.pop %v1414
          %v1416 = vmul.f32 %v1413, 1.442695
          %v1417 = vpow.pop %v1416
          %v1418 = vsub.f32 %v1402, %v1410
          %v1419 = vsub.f32 %v1403, %v1411
          %v1420 = vmul.f32 %v1418, 1.442695
          %v1421 = vpow.pop %v1420
          %v1422 = vmul.f32 %v1419, 1.442695
          %v1423 = vpow.pop %v1422
          %v1424 = vmul.f32 %v1415, 0.0
          %v1425 = vmul.f32 %v1417, 0.0
          %v1426 = vsel %vm983, %v1421, 0.0
          %1427 = vadd.xlane.f32.xlu0 %v1426
          %v1428 = vpop.xlane.xlu0 %1427
          %v1429 = vsel %vm983, %v1423, 0.0
          %1430 = vadd.xlane.f32.xlu0 %v1429
          %v1431 = vpop.xlane.xlu0 %1430
          %v1432 = vadd.f32 %v1424, %v1428
          %v1433 = vadd.f32 %v1425, %v1431
          %v1434 = vpack.c.bf16 %v1423, %v1421
          %1435 = vrot.lane.b32.xlu0 %v917, 40
          %v1436 = vpop.permute.xlu0 %1435
          %v1439 = vsel %vm983, %v1434, 0
          %1441 = vmatprep.subr.bf16.mxu0 0
          %1442 = vmatpush1.bf16.msra.mxu0 %v1436
          %1443 = vmatprep.subr.bf16.mxu0 0
          %1444 = vmatpush1.bf16.msra.mxu0 0
          %1445 = vmatprep.subr.bf16.mxu0 0
          %1446 = vmatpush1.bf16.msra.mxu0 0
          %1447 = vmatprep.subr.bf16.mxu0 0
          %1448 = vmatpush1.bf16.msra.mxu0 0
          %1449 = vmatprep.subr.bf16.mxu0 0
          %1450 = vmatpush1.bf16.msra.mxu0 0
          %1451 = vmatprep.subr.bf16.mxu0 0
          %1452 = vmatpush1.bf16.msra.mxu0 0
          %1453 = vmatprep.subr.bf16.mxu0 0
          %1454 = vmatpush1.bf16.msra.mxu0 0
          %1455 = vmatprep.subr.bf16.mxu0 0
          %1456 = vmatpush1.bf16.msra.mxu0 0
          %1457 = vmatprep.subr.bf16.mxu0 0
          %1458 = vmatpush1.bf16.msra.mxu0 0
          %1459 = vmatprep.subr.bf16.mxu0 0
          %1460 = vmatpush1.bf16.msra.mxu0 0
          %1461 = vmatprep.subr.bf16.mxu0 0
          %1462 = vmatpush1.bf16.msra.mxu0 0
          %1463 = vmatprep.subr.bf16.mxu0 0
          %1464 = vmatpush1.bf16.msra.mxu0 0
          %1465 = vmatprep.subr.bf16.mxu0 0
          %1466 = vmatpush1.bf16.msra.mxu0 0
          %1467 = vmatprep.subr.bf16.mxu0 0
          %1468 = vmatpush1.bf16.msra.mxu0 0
          %1469 = vmatprep.subr.bf16.mxu0 0
          %1470 = vmatpush1.bf16.msra.mxu0 0
          %1471 = vmatprep.subr.bf16.mxu0 0
          %1472 = vmatpush1.bf16.msra.mxu0 0
          %1473 = vmatprep.mubr.bf16.mxu0 0
          %1474 = vmatmul.mubr.bf16.gmra.mrb[0].mxu0 %v1439
          %v1475 = vpop.f32.mrb[0].mxu0
          %v1476 = vadd.f32 0.0, %v1475
          %v1477 = vpop.f32.mrb[0].mxu0
          %v1478 = vpop.f32.mrb[0].mxu0
          %v1479 = vadd.f32 0.0, %v1478
          %v1480 = vpop.f32.mrb[0].mxu0
          %1481 = vdwg.mxu0
          %v1482 = vadd.f32 %v1424, %v1476
          %v1483 = vadd.f32 %v1425, %v1479
          %v1484 = vrcp.pop %v1432
          %v1485 = vrcp.pop %v1433
          %v1486 = vmul.f32 %v1482, %v1484
          %v1487 = vmul.f32 %v1483, %v1485
          %v1488 = vpack.c.bf16 %v1487, %v1486
          %1490 = vrot.lane.b32.xlu0 %v1208, 8
          %v1491 = vpop.permute.xlu0 %1490
          %1493 = vrot.lane.b32.xlu0 %v1348, 16
          %v1494 = vpop.permute.xlu0 %1493
          %1496 = vrot.lane.b32.xlu0 %v1488, 24
          %v1497 = vpop.permute.xlu0 %1496
          %v1500 = vsel %vm921, %v1068, %v1491
          %v1502 = vsel %vm983, %v1500, %v1494
          %vm1503 = vcmask 195584
          %v1505 = vsel %vm1503, %v1502, %v1497
          %v1506 = vld [vmem:[%s8] sm:$0xf]
          %v1507 = vld [vmem:[%s8 + $0x4] sm:$0xf]
          %v1508 = vld [vmem:[%s8 + $0x8] sm:$0xf]
          %v1509 = vld [vmem:[%s8 + $0xc] sm:$0xf]
          %v1510 = vld [vmem:[%s9] sm:$0x1]
          %v1512 = vlaneseq
          %v1513 = vshrl.u32 %v1512, 7
          %v1514 = vsub.s32 0, %v1513
          %v1515 = vrot.slane %v1510, %v1514
          %v1521 = vunpack.c.l.b16 %v1506
          %v1522 = vunpack.c.l.b16 %v1507
          %v1523 = vunpack.c.l.b16 %v1508
          %v1524 = vunpack.c.l.b16 %v1509
          %v1525 = vpack.c.b16 %v1522, %v1521
          %v1526 = vpack.c.b16 %v1524, %v1523
          %v1529 = vsel %vm699, %v1505, 0
          %1531 = vmatprep.subr.bf16.mxu0 0
          %1532 = vmatpush1.bf16.msra.mxu0 %v1525
          %1533 = vmatprep.subr.bf16.mxu0 0
          %1534 = vmatpush1.bf16.msra.mxu0 %v1526
          %1535 = vmatprep.subr.bf16.mxu0 0
          %1536 = vmatpush1.bf16.msra.mxu0 0
          %1537 = vmatprep.subr.bf16.mxu0 0
          %1538 = vmatpush1.bf16.msra.mxu0 0
          %1539 = vmatprep.subr.bf16.mxu0 0
          %1540 = vmatpush1.bf16.msra.mxu0 0
          %1541 = vmatprep.subr.bf16.mxu0 0
          %1542 = vmatpush1.bf16.msra.mxu0 0
          %1543 = vmatprep.subr.bf16.mxu0 0
          %1544 = vmatpush1.bf16.msra.mxu0 0
          %1545 = vmatprep.subr.bf16.mxu0 0
          %1546 = vmatpush1.bf16.msra.mxu0 0
          %1547 = vmatprep.subr.bf16.mxu0 0
          %1548 = vmatpush1.bf16.msra.mxu0 0
          %1549 = vmatprep.subr.bf16.mxu0 0
          %1550 = vmatpush1.bf16.msra.mxu0 0
          %1551 = vmatprep.subr.bf16.mxu0 0
          %1552 = vmatpush1.bf16.msra.mxu0 0
          %1553 = vmatprep.subr.bf16.mxu0 0
          %1554 = vmatpush1.bf16.msra.mxu0 0
          %1555 = vmatprep.subr.bf16.mxu0 0
          %1556 = vmatpush1.bf16.msra.mxu0 0
          %1557 = vmatprep.subr.bf16.mxu0 0
          %1558 = vmatpush1.bf16.msra.mxu0 0
          %1559 = vmatprep.subr.bf16.mxu0 0
          %1560 = vmatpush1.bf16.msra.mxu0 0
          %1561 = vmatprep.subr.bf16.mxu0 0
          %1562 = vmatpush1.bf16.msra.mxu0 0
          %1563 = vmatprep.mubr.bf16.mxu0 0
          %1564 = vmatmul.mubr.bf16.gmra.mrb[0].mxu0 %v1529
          %v1565 = vpop.f32.mrb[0].mxu0
          %v1566 = vadd.f32 %v1515, %v1565
          %v1567 = vpop.f32.mrb[0].mxu0
          %v1568 = vpop.f32.mrb[0].mxu0
          %v1569 = vadd.f32 %v1515, %v1568
          %v1570 = vpop.f32.mrb[0].mxu0
          %1571 = vdwg.mxu0
          %v1572 = vadd.f32 %v915, %v1566
          %v1573 = vadd.f32 %v916, %v1569
          %v1574 = vld [vmem:[%s10] sm:$0x1]
          %v1575 = vld [vmem:[%s11] sm:$0x1]
          %v1576 = vsel %vm699, %v1572, 0.0
          %1577 = vadd.xlane.f32.xlu0 %v1576
          %v1578 = vpop.xlane.xlu0 %1577
          %v1579 = vsel %vm699, %v1573, 0.0
          %1580 = vadd.xlane.f32.xlu0 %v1579
          %v1581 = vpop.xlane.xlu0 %1580
          %v1582 = vmul.f32 %v1578, %v807
          %v1583 = vmul.f32 %v1581, %v807
          %v1584 = vsub.f32 %v1572, %v1582
          %v1585 = vsub.f32 %v1573, %v1583
          %v1586 = vmul.f32 %v1584, %v1584
          %v1587 = vmul.f32 %v1585, %v1585
          %v1588 = vsel %vm699, %v1586, 0.0
          %1589 = vadd.xlane.f32.xlu0 %v1588
          %v1590 = vpop.xlane.xlu0 %1589
          %v1591 = vsel %vm699, %v1587, 0.0
          %1592 = vadd.xlane.f32.xlu0 %v1591
          %v1593 = vpop.xlane.xlu0 %1592
          %v1594 = vmul.f32 %v1590, %v807
          %v1595 = vmul.f32 %v1593, %v807
          %v1596 = vadd.f32 %v1594, 1e-05
          %v1597 = vadd.f32 %v1595, 1e-05
          %v1598 = vrsqrt.pop %v1596
          %v1599 = vrsqrt.pop %v1597
          %v1600 = vmul.f32 %v1584, %v1598
          %v1601 = vmul.f32 %v1585, %v1599
          %v1603 = vlaneseq
          %v1604 = vshrl.u32 %v1603, 7
          %v1605 = vsub.s32 0, %v1604
          %v1606 = vrot.slane %v1574, %v1605
          %v1608 = vmul.f32 %v1600, %v1606
          %v1609 = vmul.f32 %v1601, %v1606
          %v1611 = vlaneseq
          %v1612 = vshrl.u32 %v1611, 7
          %v1613 = vsub.s32 0, %v1612
          %v1614 = vrot.slane %v1575, %v1613
          %v1616 = vadd.f32 %v1608, %v1614
          %v1617 = vadd.f32 %v1609, %v1614
          %v1618 = vpack.c.bf16 %v1617, %v1616
          %v1619 = vld [vmem:[%s12] sm:$0xf]
          %v1620 = vld [vmem:[%s12 + $0x4] sm:$0xf]
          %v1621 = vld [vmem:[%s12 + $0x8] sm:$0xf]
          %v1622 = vld [vmem:[%s12 + $0xc] sm:$0xf]
          %v1623 = vld [vmem:[%s13] sm:$0x1]
          %v1625 = vlaneseq
          %v1626 = vshrl.u32 %v1625, 7
          %v1627 = vsub.s32 0, %v1626
          %v1628 = vrot.slane %v1623, %v1627
          %v1634 = vunpack.c.l.b16 %v1619
          %v1635 = vunpack.c.l.b16 %v1620
          %v1636 = vunpack.c.l.b16 %v1621
          %v1637 = vunpack.c.l.b16 %v1622
          %v1638 = vpack.c.b16 %v1635, %v1634
          %v1639 = vpack.c.b16 %v1637, %v1636
          %v1643 = vsel %vm699, %v1618, 0
          %1645 = vmatprep.subr.bf16.mxu0 0
          %1646 = vmatpush1.bf16.msra.mxu0 %v1638
          %1647 = vmatprep.subr.bf16.mxu0 0
          %1648 = vmatpush1.bf16.msra.mxu0 %v1639
          %1649 = vmatprep.subr.bf16.mxu0 0
          %1650 = vmatpush1.bf16.msra.mxu0 0
          %1651 = vmatprep.subr.bf16.mxu0 0
          %1652 = vmatpush1.bf16.msra.mxu0 0
          %1653 = vmatprep.subr.bf16.mxu0 0
          %1654 = vmatpush1.bf16.msra.mxu0 0
          %1655 = vmatprep.subr.bf16.mxu0 0
          %1656 = vmatpush1.bf16.msra.mxu0 0
          %1657 = vmatprep.subr.bf16.mxu0 0
          %1658 = vmatpush1.bf16.msra.mxu0 0
          %1659 = vmatprep.subr.bf16.mxu0 0
          %1660 = vmatpush1.bf16.msra.mxu0 0
          %1661 = vmatprep.subr.bf16.mxu0 0
          %1662 = vmatpush1.bf16.msra.mxu0 0
          %1663 = vmatprep.subr.bf16.mxu0 0
          %1664 = vmatpush1.bf16.msra.mxu0 0
          %1665 = vmatprep.subr.bf16.mxu0 0
          %1666 = vmatpush1.bf16.msra.mxu0 0
          %1667 = vmatprep.subr.bf16.mxu0 0
          %1668 = vmatpush1.bf16.msra.mxu0 0
          %1669 = vmatprep.subr.bf16.mxu0 0
          %1670 = vmatpush1.bf16.msra.mxu0 0
          %1671 = vmatprep.subr.bf16.mxu0 0
          %1672 = vmatpush1.bf16.msra.mxu0 0
          %1673 = vmatprep.subr.bf16.mxu0 0
          %1674 = vmatpush1.bf16.msra.mxu0 0
          %1675 = vmatprep.subr.bf16.mxu0 0
          %1676 = vmatpush1.bf16.msra.mxu0 0
          %1677 = vmatprep.mubr.bf16.mxu0 0
          %1678 = vmatmul.mubr.bf16.gmra.mrb[0].mxu0 %v1643
          %v1679 = vpop.f32.mrb[0].mxu0
          %v1680 = vadd.f32 %v1628, %v1679
          %v1681 = vpop.f32.mrb[0].mxu0
          %v1682 = vpop.f32.mrb[0].mxu0
          %v1683 = vadd.f32 %v1628, %v1682
          %v1684 = vpop.f32.mrb[0].mxu0
          %1685 = vdwg.mxu0
          %v1686 = vmul.f32 %v1680, 0.5
          %v1687 = vmul.f32 %v1683, 0.5
          %v1688 = vmul.f32 %v1680, 0.70710677
          %v1689 = vmul.f32 %v1683, 0.70710677
          %v1690 = vand.u32 2147483647, %v1688
          %v1691 = vand.u32 2147483647, %v1689
          %v1692 = vmul.f32 %v1690, 0.3275911
          %v1693 = vmul.f32 %v1691, 0.3275911
          %v1694 = vadd.f32 %v1692, 1.0
          %v1695 = vadd.f32 %v1693, 1.0
          %v1696 = vrcp.pop %v1694
          %v1697 = vrcp.pop %v1695
          %v1698 = vmul.f32 %v1696, 1.0614054
          %v1699 = vmul.f32 %v1697, 1.0614054
          %v1700 = vadd.f32 %v1698, -1.4531521
          %v1701 = vadd.f32 %v1699, -1.4531521
          %v1702 = vmul.f32 %v1700, %v1696
          %v1703 = vmul.f32 %v1701, %v1697
          %v1704 = vadd.f32 %v1702, 1.4214138
          %v1705 = vadd.f32 %v1703, 1.4214138
          %v1706 = vmul.f32 %v1704, %v1696
          %v1707 = vmul.f32 %v1705, %v1697
          %v1708 = vadd.f32 %v1706, -0.28449672
          %v1709 = vadd.f32 %v1707, -0.28449672
          %v1710 = vmul.f32 %v1708, %v1696
          %v1711 = vmul.f32 %v1709, %v1697
          %v1712 = vadd.f32 %v1710, 0.2548296
          %v1713 = vadd.f32 %v1711, 0.2548296
          %v1714 = vmul.f32 %v1712, %v1696
          %v1715 = vmul.f32 %v1713, %v1697
          %v1716 = vsub.f32 0.0, %v1690
          %v1717 = vsub.f32 0.0, %v1691
          %v1718 = vmul.f32 %v1716, %v1690
          %v1719 = vmul.f32 %v1717, %v1691
          %v1720 = vmul.f32 %v1718, 1.442695
          %v1721 = vpow.pop %v1720
          %v1722 = vmul.f32 %v1719, 1.442695
          %v1723 = vpow.pop %v1722
          %v1724 = vmul.f32 %v1714, %v1721
          %v1725 = vmul.f32 %v1715, %v1723
          %v1726 = vsub.f32 1.0, %v1724
          %v1727 = vsub.f32 1.0, %v1725
          %vm1728 = vcmp.ge.f32.partialorder %v1688, 0.0
          %vm1729 = vcmp.ge.f32.partialorder %v1689, 0.0
          %v1730 = vsub.f32 0.0, %v1726
          %v1731 = vsub.f32 0.0, %v1727
          %v1732 = vsel %vm1728, %v1726, %v1730
          %v1733 = vsel %vm1729, %v1727, %v1731
          %v1734 = vadd.f32 %v1732, 1.0
          %v1735 = vadd.f32 %v1733, 1.0
          %v1736 = vmul.f32 %v1686, %v1734
          %v1737 = vmul.f32 %v1687, %v1735
          %v1738 = vpack.c.bf16 %v1737, %v1736
          %v1739 = vld [vmem:[%s14] sm:$0xf]
          %v1740 = vld [vmem:[%s14 + $0x4] sm:$0xf]
          %v1741 = vld [vmem:[%s14 + $0x8] sm:$0xf]
          %v1742 = vld [vmem:[%s14 + $0xc] sm:$0xf]
          %v1743 = vld [vmem:[%s14 + $0x10] sm:$0xf]
          %v1744 = vld [vmem:[%s14 + $0x14] sm:$0xf]
          %v1745 = vld [vmem:[%s14 + $0x18] sm:$0xf]
          %v1746 = vld [vmem:[%s14 + $0x1c] sm:$0xf]
          %v1747 = vld [vmem:[%s15] sm:$0x1]
          %v1749 = vlaneseq
          %v1750 = vshrl.u32 %v1749, 7
          %v1751 = vsub.s32 0, %v1750
          %v1752 = vrot.slane %v1747, %v1751
          %v1762 = vunpack.c.l.b16 %v1739
          %v1763 = vunpack.c.l.b16 %v1740
          %v1764 = vunpack.c.l.b16 %v1741
          %v1765 = vunpack.c.l.b16 %v1742
          %v1766 = vunpack.c.l.b16 %v1743
          %v1767 = vunpack.c.l.b16 %v1744
          %v1768 = vunpack.c.l.b16 %v1745
          %v1769 = vunpack.c.l.b16 %v1746
          %v1770 = vpack.c.b16 %v1763, %v1762
          %v1771 = vpack.c.b16 %v1765, %v1764
          %v1772 = vpack.c.b16 %v1767, %v1766
          %v1773 = vpack.c.b16 %v1769, %v1768
          %vm1778 = vcmask 523264
          %v1780 = vsel %vm1778, %v1738, 0
          %1782 = vmatprep.subr.bf16.mxu0 0
          %1783 = vmatpush1.bf16.msra.mxu0 %v1770
          %1784 = vmatprep.subr.bf16.mxu0 0
          %1785 = vmatpush1.bf16.msra.mxu0 %v1771
          %1786 = vmatprep.subr.bf16.mxu0 0
          %1787 = vmatpush1.bf16.msra.mxu0 %v1772
          %1788 = vmatprep.subr.bf16.mxu0 0
          %1789 = vmatpush1.bf16.msra.mxu0 %v1773
          %1790 = vmatprep.subr.bf16.mxu0 0
          %1791 = vmatpush1.bf16.msra.mxu0 0
          %1792 = vmatprep.subr.bf16.mxu0 0
          %1793 = vmatpush1.bf16.msra.mxu0 0
          %1794 = vmatprep.subr.bf16.mxu0 0
          %1795 = vmatpush1.bf16.msra.mxu0 0
          %1796 = vmatprep.subr.bf16.mxu0 0
          %1797 = vmatpush1.bf16.msra.mxu0 0
          %1798 = vmatprep.subr.bf16.mxu0 0
          %1799 = vmatpush1.bf16.msra.mxu0 0
          %1800 = vmatprep.subr.bf16.mxu0 0
          %1801 = vmatpush1.bf16.msra.mxu0 0
          %1802 = vmatprep.subr.bf16.mxu0 0
          %1803 = vmatpush1.bf16.msra.mxu0 0
          %1804 = vmatprep.subr.bf16.mxu0 0
          %1805 = vmatpush1.bf16.msra.mxu0 0
          %1806 = vmatprep.subr.bf16.mxu0 0
          %1807 = vmatpush1.bf16.msra.mxu0 0
          %1808 = vmatprep.subr.bf16.mxu0 0
          %1809 = vmatpush1.bf16.msra.mxu0 0
          %1810 = vmatprep.subr.bf16.mxu0 0
          %1811 = vmatpush1.bf16.msra.mxu0 0
          %1812 = vmatprep.subr.bf16.mxu0 0
          %1813 = vmatpush1.bf16.msra.mxu0 0
          %1814 = vmatprep.mubr.bf16.mxu0 0
          %1815 = vmatmul.mubr.bf16.gmra.mrb[0].mxu0 %v1780
          %v1816 = vpop.f32.mrb[0].mxu0
          %v1817 = vadd.f32 %v1752, %v1816
          %v1818 = vpop.f32.mrb[0].mxu0
          %v1819 = vpop.f32.mrb[0].mxu0
          %v1820 = vadd.f32 %v1752, %v1819
          %v1821 = vpop.f32.mrb[0].mxu0
          %1822 = vdwg.mxu0
          %v1823 = vadd.f32 %v1572, %v1817
          %v1824 = vadd.f32 %v1573, %v1820
          %1825 = vst.msk [vmem:[#allocation2] sm:$0xff] %vm699, %v1823
          %1826 = vst.msk [vmem:[#allocation2 + $0x8] sm:$0xff] %vm699, %v1824
          %v1827 = vld [vmem:[#allocation2] sm:$0xff]
          %v1828 = vld [vmem:[#allocation2 + $0x8] sm:$0xff]
          %s1829 = scalar_lea.vmem %s4, 1
          %v1830 = vld [vmem:[%s1829] sm:$0x1]
          %s1831 = scalar_lea.vmem %s5, 1
          %v1832 = vld [vmem:[%s1831] sm:$0x1]
          %v1833 = vsel %vm699, %v1827, 0.0
          %1834 = vadd.xlane.f32.xlu0 %v1833
          %v1835 = vpop.xlane.xlu0 %1834
          %v1836 = vsel %vm699, %v1828, 0.0
          %1837 = vadd.xlane.f32.xlu0 %v1836
          %v1838 = vpop.xlane.xlu0 %1837
          %v1839 = vmul.f32 %v1835, %v807
          %v1840 = vmul.f32 %v1838, %v807
          %v1841 = vsub.f32 %v1827, %v1839
          %v1842 = vsub.f32 %v1828, %v1840
          %v1843 = vmul.f32 %v1841, %v1841
          %v1844 = vmul.f32 %v1842, %v1842
          %v1845 = vsel %vm699, %v1843, 0.0
          %1846 = vadd.xlane.f32.xlu0 %v1845
          %v1847 = vpop.xlane.xlu0 %1846
          %v1848 = vsel %vm699, %v1844, 0.0
          %1849 = vadd.xlane.f32.xlu0 %v1848
          %v1850 = vpop.xlane.xlu0 %1849
          %v1851 = vmul.f32 %v1847, %v807
          %v1852 = vmul.f32 %v1850, %v807
          %v1853 = vadd.f32 %v1851, 1e-05
          %v1854 = vadd.f32 %v1852, 1e-05
          %v1855 = vrsqrt.pop %v1853
          %v1856 = vrsqrt.pop %v1854
          %v1857 = vmul.f32 %v1841, %v1855
          %v1858 = vmul.f32 %v1842, %v1856
          %v1860 = vlaneseq
          %v1861 = vshrl.u32 %v1860, 7
          %v1862 = vsub.s32 0, %v1861
          %v1863 = vrot.slane %v1830, %v1862
          %v1865 = vmul.f32 %v1857, %v1863
          %v1866 = vmul.f32 %v1858, %v1863
          %v1868 = vlaneseq
          %v1869 = vshrl.u32 %v1868, 7
          %v1870 = vsub.s32 0, %v1869
          %v1871 = vrot.slane %v1832, %v1870
          %v1873 = vadd.f32 %v1865, %v1871
          %v1874 = vadd.f32 %v1866, %v1871
          %v1875 = vpack.c.bf16 %v1874, %v1873
          %s1876 = scalar_lea.vmem %s6, 16
          %v1877 = vld [vmem:[%s1876] sm:$0xf]
          %v1878 = vld [vmem:[%s1876 + $0x4] sm:$0xf]
          %v1879 = vld [vmem:[%s1876 + $0x8] sm:$0xf]
          %v1880 = vld [vmem:[%s1876 + $0xc] sm:$0xf]
          %s1881 = scalar_lea.vmem %s7, 1
          %v1882 = vld [vmem:[%s1881] sm:$0x1]
          %v1884 = vlaneseq
          %v1885 = vshrl.u32 %v1884, 7
          %v1886 = vsub.s32 0, %v1885
          %v1887 = vrot.slane %v1882, %v1886
          %v1893 = vunpack.c.l.b16 %v1877
          %v1894 = vunpack.c.l.b16 %v1878
          %v1895 = vunpack.c.l.b16 %v1879
          %v1896 = vunpack.c.l.b16 %v1880
          %v1897 = vpack.c.b16 %v1894, %v1893
          %v1898 = vpack.c.b16 %v1896, %v1895
          %v1902 = vsel %vm699, %v1875, 0
          %1904 = vmatprep.subr.bf16.mxu0 0
          %1905 = vmatpush1.bf16.msra.mxu0 %v1897
          %1906 = vmatprep.subr.bf16.mxu0 0
          %1907 = vmatpush1.bf16.msra.mxu0 %v1898
          %1908 = vmatprep.subr.bf16.mxu0 0
          %1909 = vmatpush1.bf16.msra.mxu0 0
          %1910 = vmatprep.subr.bf16.mxu0 0
          %1911 = vmatpush1.bf16.msra.mxu0 0
          %1912 = vmatprep.subr.bf16.mxu0 0
          %1913 = vmatpush1.bf16.msra.mxu0 0
          %1914 = vmatprep.subr.bf16.mxu0 0
          %1915 = vmatpush1.bf16.msra.mxu0 0
          %1916 = vmatprep.subr.bf16.mxu0 0
          %1917 = vmatpush1.bf16.msra.mxu0 0
          %1918 = vmatprep.subr.bf16.mxu0 0
          %1919 = vmatpush1.bf16.msra.mxu0 0
          %1920 = vmatprep.subr.bf16.mxu0 0
          %1921 = vmatpush1.bf16.msra.mxu0 0
          %1922 = vmatprep.subr.bf16.mxu0 0
          %1923 = vmatpush1.bf16.msra.mxu0 0
          %1924 = vmatprep.subr.bf16.mxu0 0
          %1925 = vmatpush1.bf16.msra.mxu0 0
          %1926 = vmatprep.subr.bf16.mxu0 0
          %1927 = vmatpush1.bf16.msra.mxu0 0
          %1928 = vmatprep.subr.bf16.mxu0 0
          %1929 = vmatpush1.bf16.msra.mxu0 0
          %1930 = vmatprep.subr.bf16.mxu0 0
          %1931 = vmatpush1.bf16.msra.mxu0 0
          %1932 = vmatprep.subr.bf16.mxu0 0
          %1933 = vmatpush1.bf16.msra.mxu0 0
          %1934 = vmatprep.subr.bf16.mxu0 0
          %1935 = vmatpush1.bf16.msra.mxu0 0
          %1936 = vmatprep.mubr.bf16.mxu0 0
          %1937 = vmatmul.mubr.bf16.gmra.mrb[0].mxu0 %v1902
          %v1938 = vpop.f32.mrb[0].mxu0
          %v1939 = vadd.f32 %v1887, %v1938
          %v1940 = vpop.f32.mrb[0].mxu0
          %v1941 = vpop.f32.mrb[0].mxu0
          %v1942 = vadd.f32 %v1887, %v1941
          %v1943 = vpop.f32.mrb[0].mxu0
          %1944 = vdwg.mxu0
          %v1945 = vpack.c.bf16 %v1942, %v1939
          %1946 = vst.msk [vmem:[#allocation3] sm:$0xff] %vm913, %v1945
          %v1947 = vld [vmem:[#allocation2] sm:$0xff]
          %v1948 = vld [vmem:[#allocation2 + $0x8] sm:$0xff]
          %v1949 = vld [vmem:[#allocation3] sm:$0xff]
          %1951 = vrot.lane.b32.xlu0 %v1949, 96
          %v1952 = vpop.permute.xlu0 %1951
          %v1954 = vsel %vm921, %v1949, 0
          %v1957 = vsel %vm921, %v1952, 0
          %1959 = vmatprep.subr.bf16.mxu0 0
          %1960 = vmatpush1.bf16.xpose.msra.mxu0 %v1957
          %1961 = vmatprep.subr.bf16.mxu0 0
          %1962 = vmatpush1.bf16.xpose.msra.mxu0 0
          %1963 = vmatprep.subr.bf16.mxu0 0
          %1964 = vmatpush1.bf16.xpose.msra.mxu0 0
          %1965 = vmatprep.subr.bf16.mxu0 0
          %1966 = vmatpush1.bf16.xpose.msra.mxu0 0
          %1967 = vmatprep.subr.bf16.mxu0 0
          %1968 = vmatpush1.bf16.xpose.msra.mxu0 0
          %1969 = vmatprep.subr.bf16.mxu0 0
          %1970 = vmatpush1.bf16.xpose.msra.mxu0 0
          %1971 = vmatprep.subr.bf16.mxu0 0
          %1972 = vmatpush1.bf16.xpose.msra.mxu0 0
          %1973 = vmatprep.subr.bf16.mxu0 0
          %1974 = vmatpush1.bf16.xpose.msra.mxu0 0
          %1975 = vmatprep.subr.bf16.mxu0 0
          %1976 = vmatpush1.bf16.xpose.msra.mxu0 0
          %1977 = vmatprep.subr.bf16.mxu0 0
          %1978 = vmatpush1.bf16.xpose.msra.mxu0 0
          %1979 = vmatprep.subr.bf16.mxu0 0
          %1980 = vmatpush1.bf16.xpose.msra.mxu0 0
          %1981 = vmatprep.subr.bf16.mxu0 0
          %1982 = vmatpush1.bf16.xpose.msra.mxu0 0
          %1983 = vmatprep.subr.bf16.mxu0 0
          %1984 = vmatpush1.bf16.xpose.msra.mxu0 0
          %1985 = vmatprep.subr.bf16.mxu0 0
          %1986 = vmatpush1.bf16.xpose.msra.mxu0 0
          %1987 = vmatprep.subr.bf16.mxu0 0
          %1988 = vmatpush1.bf16.xpose.msra.mxu0 0
          %1989 = vmatprep.subr.bf16.mxu0 0
          %1990 = vmatpush1.bf16.xpose.msra.mxu0 0
          %1991 = vmatprep.mubr.bf16.mxu0 0
          %1992 = vmatmul.mubr.bf16.gmra.mrb[0].mxu0 %v1954
          %v1993 = vpop.f32.mrb[0].mxu0
          %v1994 = vadd.f32 0.0, %v1993
          %v1995 = vpop.f32.mrb[0].mxu0
          %v1996 = vpop.f32.mrb[0].mxu0
          %v1997 = vadd.f32 0.0, %v1996
          %v1998 = vpop.f32.mrb[0].mxu0
          %1999 = vdwg.mxu0
          %v2000 = vmul.f32 %v1994, 0.35355338
          %v2001 = vmul.f32 %v1997, 0.35355338
          %v2002 = vadd.f32 %v2000, %v980
          %v2003 = vadd.f32 %v2001, %v980
          %v2004 = vsel %vm983, %v2002, -inf
          %2005 = vmax.xlane.f32.xlu0 %v2004
          %v2006 = vpop.xlane.xlu0 %2005
          %v2007 = vsel %vm983, %v2003, -inf
          %2008 = vmax.xlane.f32.xlu0 %v2007
          %v2009 = vpop.xlane.xlu0 %2008
          %v2010 = vmax.f32 %v2006, -1e+30
          %v2011 = vmax.f32 %v2009, -1e+30
          %v2012 = vsub.f32 -1e+30, %v2010
          %v2013 = vsub.f32 -1e+30, %v2011
          %v2014 = vmul.f32 %v2012, 1.442695
          %v2015 = vpow.pop %v2014
          %v2016 = vmul.f32 %v2013, 1.442695
          %v2017 = vpow.pop %v2016
          %v2018 = vsub.f32 %v2002, %v2010
          %v2019 = vsub.f32 %v2003, %v2011
          %v2020 = vmul.f32 %v2018, 1.442695
          %v2021 = vpow.pop %v2020
          %v2022 = vmul.f32 %v2019, 1.442695
          %v2023 = vpow.pop %v2022
          %v2024 = vmul.f32 %v2015, 0.0
          %v2025 = vmul.f32 %v2017, 0.0
          %v2026 = vsel %vm983, %v2021, 0.0
          %2027 = vadd.xlane.f32.xlu0 %v2026
          %v2028 = vpop.xlane.xlu0 %2027
          %v2029 = vsel %vm983, %v2023, 0.0
          %2030 = vadd.xlane.f32.xlu0 %v2029
          %v2031 = vpop.xlane.xlu0 %2030
          %v2032 = vadd.f32 %v2024, %v2028
          %v2033 = vadd.f32 %v2025, %v2031
          %v2034 = vpack.c.bf16 %v2023, %v2021
          %2035 = vrot.lane.b32.xlu0 %v1949, 64
          %v2036 = vpop.permute.xlu0 %2035
          %v2039 = vsel %vm983, %v2034, 0
          %2041 = vmatprep.subr.bf16.mxu0 0
          %2042 = vmatpush1.bf16.msra.mxu0 %v2036
          %2043 = vmatprep.subr.bf16.mxu0 0
          %2044 = vmatpush1.bf16.msra.mxu0 0
          %2045 = vmatprep.subr.bf16.mxu0 0
          %2046 = vmatpush1.bf16.msra.mxu0 0
          %2047 = vmatprep.subr.bf16.mxu0 0
          %2048 = vmatpush1.bf16.msra.mxu0 0
          %2049 = vmatprep.subr.bf16.mxu0 0
          %2050 = vmatpush1.bf16.msra.mxu0 0
          %2051 = vmatprep.subr.bf16.mxu0 0
          %2052 = vmatpush1.bf16.msra.mxu0 0
          %2053 = vmatprep.subr.bf16.mxu0 0
          %2054 = vmatpush1.bf16.msra.mxu0 0
          %2055 = vmatprep.subr.bf16.mxu0 0
          %2056 = vmatpush1.bf16.msra.mxu0 0
          %2057 = vmatprep.subr.bf16.mxu0 0
          %2058 = vmatpush1.bf16.msra.mxu0 0
          %2059 = vmatprep.subr.bf16.mxu0 0
          %2060 = vmatpush1.bf16.msra.mxu0 0
          %2061 = vmatprep.subr.bf16.mxu0 0
          %2062 = vmatpush1.bf16.msra.mxu0 0
          %2063 = vmatprep.subr.bf16.mxu0 0
          %2064 = vmatpush1.bf16.msra.mxu0 0
          %2065 = vmatprep.subr.bf16.mxu0 0
          %2066 = vmatpush1.bf16.msra.mxu0 0
          %2067 = vmatprep.subr.bf16.mxu0 0
          %2068 = vmatpush1.bf16.msra.mxu0 0
          %2069 = vmatprep.subr.bf16.mxu0 0
          %2070 = vmatpush1.bf16.msra.mxu0 0
          %2071 = vmatprep.subr.bf16.mxu0 0
          %2072 = vmatpush1.bf16.msra.mxu0 0
          %2073 = vmatprep.mubr.bf16.mxu0 0
          %2074 = vmatmul.mubr.bf16.gmra.mrb[0].mxu0 %v2039
          %v2075 = vpop.f32.mrb[0].mxu0
          %v2076 = vadd.f32 0.0, %v2075
          %v2077 = vpop.f32.mrb[0].mxu0
          %v2078 = vpop.f32.mrb[0].mxu0
          %v2079 = vadd.f32 0.0, %v2078
          %v2080 = vpop.f32.mrb[0].mxu0
          %2081 = vdwg.mxu0
          %v2082 = vadd.f32 %v2024, %v2076
          %v2083 = vadd.f32 %v2025, %v2079
          %v2084 = vrcp.pop %v2032
          %v2085 = vrcp.pop %v2033
          %v2086 = vmul.f32 %v2082, %v2084
          %v2087 = vmul.f32 %v2083, %v2085
          %v2088 = vpack.c.bf16 %v2087, %v2086
          %2089 = vrot.lane.b32.xlu0 %v1949, 120
          %v2090 = vpop.permute.xlu0 %2089
          %2091 = vrot.lane.b32.xlu0 %v1949, 88
          %v2092 = vpop.permute.xlu0 %2091
          %v2094 = vsel %vm921, %v2090, 0
          %v2097 = vsel %vm921, %v2092, 0
          %2099 = vmatprep.subr.bf16.mxu0 0
          %2100 = vmatpush1.bf16.xpose.msra.mxu0 %v2097
          %2101 = vmatprep.subr.bf16.mxu0 0
          %2102 = vmatpush1.bf16.xpose.msra.mxu0 0
          %2103 = vmatprep.subr.bf16.mxu0 0
          %2104 = vmatpush1.bf16.xpose.msra.mxu0 0
          %2105 = vmatprep.subr.bf16.mxu0 0
          %2106 = vmatpush1.bf16.xpose.msra.mxu0 0
          %2107 = vmatprep.subr.bf16.mxu0 0
          %2108 = vmatpush1.bf16.xpose.msra.mxu0 0
          %2109 = vmatprep.subr.bf16.mxu0 0
          %2110 = vmatpush1.bf16.xpose.msra.mxu0 0
          %2111 = vmatprep.subr.bf16.mxu0 0
          %2112 = vmatpush1.bf16.xpose.msra.mxu0 0
          %2113 = vmatprep.subr.bf16.mxu0 0
          %2114 = vmatpush1.bf16.xpose.msra.mxu0 0
          %2115 = vmatprep.subr.bf16.mxu0 0
          %2116 = vmatpush1.bf16.xpose.msra.mxu0 0
          %2117 = vmatprep.subr.bf16.mxu0 0
          %2118 = vmatpush1.bf16.xpose.msra.mxu0 0
          %2119 = vmatprep.subr.bf16.mxu0 0
          %2120 = vmatpush1.bf16.xpose.msra.mxu0 0
          %2121 = vmatprep.subr.bf16.mxu0 0
          %2122 = vmatpush1.bf16.xpose.msra.mxu0 0
          %2123 = vmatprep.subr.bf16.mxu0 0
          %2124 = vmatpush1.bf16.xpose.msra.mxu0 0
          %2125 = vmatprep.subr.bf16.mxu0 0
          %2126 = vmatpush1.bf16.xpose.msra.mxu0 0
          %2127 = vmatprep.subr.bf16.mxu0 0
          %2128 = vmatpush1.bf16.xpose.msra.mxu0 0
          %2129 = vmatprep.subr.bf16.mxu0 0
          %2130 = vmatpush1.bf16.xpose.msra.mxu0 0
          %2131 = vmatprep.mubr.bf16.mxu0 0
          %2132 = vmatmul.mubr.bf16.gmra.mrb[0].mxu0 %v2094
          %v2133 = vpop.f32.mrb[0].mxu0
          %v2134 = vadd.f32 0.0, %v2133
          %v2135 = vpop.f32.mrb[0].mxu0
          %v2136 = vpop.f32.mrb[0].mxu0
          %v2137 = vadd.f32 0.0, %v2136
          %v2138 = vpop.f32.mrb[0].mxu0
          %2139 = vdwg.mxu0
          %v2140 = vmul.f32 %v2134, 0.35355338
          %v2141 = vmul.f32 %v2137, 0.35355338
          %v2142 = vadd.f32 %v2140, %v980
          %v2143 = vadd.f32 %v2141, %v980
          %v2144 = vsel %vm983, %v2142, -inf
          %2145 = vmax.xlane.f32.xlu0 %v2144
          %v2146 = vpop.xlane.xlu0 %2145
          %v2147 = vsel %vm983, %v2143, -inf
          %2148 = vmax.xlane.f32.xlu0 %v2147
          %v2149 = vpop.xlane.xlu0 %2148
          %v2150 = vmax.f32 %v2146, -1e+30
          %v2151 = vmax.f32 %v2149, -1e+30
          %v2152 = vsub.f32 -1e+30, %v2150
          %v2153 = vsub.f32 -1e+30, %v2151
          %v2154 = vmul.f32 %v2152, 1.442695
          %v2155 = vpow.pop %v2154
          %v2156 = vmul.f32 %v2153, 1.442695
          %v2157 = vpow.pop %v2156
          %v2158 = vsub.f32 %v2142, %v2150
          %v2159 = vsub.f32 %v2143, %v2151
          %v2160 = vmul.f32 %v2158, 1.442695
          %v2161 = vpow.pop %v2160
          %v2162 = vmul.f32 %v2159, 1.442695
          %v2163 = vpow.pop %v2162
          %v2164 = vmul.f32 %v2155, 0.0
          %v2165 = vmul.f32 %v2157, 0.0
          %v2166 = vsel %vm983, %v2161, 0.0
          %2167 = vadd.xlane.f32.xlu0 %v2166
          %v2168 = vpop.xlane.xlu0 %2167
          %v2169 = vsel %vm983, %v2163, 0.0
          %2170 = vadd.xlane.f32.xlu0 %v2169
          %v2171 = vpop.xlane.xlu0 %2170
          %v2172 = vadd.f32 %v2164, %v2168
          %v2173 = vadd.f32 %v2165, %v2171
          %v2174 = vpack.c.bf16 %v2163, %v2161
          %2175 = vrot.lane.b32.xlu0 %v1949, 56
          %v2176 = vpop.permute.xlu0 %2175
          %v2179 = vsel %vm983, %v2174, 0
          %2181 = vmatprep.subr.bf16.mxu0 0
          %2182 = vmatpush1.bf16.msra.mxu0 %v2176
          %2183 = vmatprep.subr.bf16.mxu0 0
          %2184 = vmatpush1.bf16.msra.mxu0 0
          %2185 = vmatprep.subr.bf16.mxu0 0
          %2186 = vmatpush1.bf16.msra.mxu0 0
          %2187 = vmatprep.subr.bf16.mxu0 0
          %2188 = vmatpush1.bf16.msra.mxu0 0
          %2189 = vmatprep.subr.bf16.mxu0 0
          %2190 = vmatpush1.bf16.msra.mxu0 0
          %2191 = vmatprep.subr.bf16.mxu0 0
          %2192 = vmatpush1.bf16.msra.mxu0 0
          %2193 = vmatprep.subr.bf16.mxu0 0
          %2194 = vmatpush1.bf16.msra.mxu0 0
          %2195 = vmatprep.subr.bf16.mxu0 0
          %2196 = vmatpush1.bf16.msra.mxu0 0
          %2197 = vmatprep.subr.bf16.mxu0 0
          %2198 = vmatpush1.bf16.msra.mxu0 0
          %2199 = vmatprep.subr.bf16.mxu0 0
          %2200 = vmatpush1.bf16.msra.mxu0 0
          %2201 = vmatprep.subr.bf16.mxu0 0
          %2202 = vmatpush1.bf16.msra.mxu0 0
          %2203 = vmatprep.subr.bf16.mxu0 0
          %2204 = vmatpush1.bf16.msra.mxu0 0
          %2205 = vmatprep.subr.bf16.mxu0 0
          %2206 = vmatpush1.bf16.msra.mxu0 0
          %2207 = vmatprep.subr.bf16.mxu0 0
          %2208 = vmatpush1.bf16.msra.mxu0 0
          %2209 = vmatprep.subr.bf16.mxu0 0
          %2210 = vmatpush1.bf16.msra.mxu0 0
          %2211 = vmatprep.subr.bf16.mxu0 0
          %2212 = vmatpush1.bf16.msra.mxu0 0
          %2213 = vmatprep.mubr.bf16.mxu0 0
          %2214 = vmatmul.mubr.bf16.gmra.mrb[0].mxu0 %v2179
          %v2215 = vpop.f32.mrb[0].mxu0
          %v2216 = vadd.f32 0.0, %v2215
          %v2217 = vpop.f32.mrb[0].mxu0
          %v2218 = vpop.f32.mrb[0].mxu0
          %v2219 = vadd.f32 0.0, %v2218
          %v2220 = vpop.f32.mrb[0].mxu0
          %2221 = vdwg.mxu0
          %v2222 = vadd.f32 %v2164, %v2216
          %v2223 = vadd.f32 %v2165, %v2219
          %v2224 = vrcp.pop %v2172
          %v2225 = vrcp.pop %v2173
          %v2226 = vmul.f32 %v2222, %v2224
          %v2227 = vmul.f32 %v2223, %v2225
          %v2228 = vpack.c.bf16 %v2227, %v2226
          %2229 = vrot.lane.b32.xlu0 %v1949, 112
          %v2230 = vpop.permute.xlu0 %2229
          %2231 = vrot.lane.b32.xlu0 %v1949, 80
          %v2232 = vpop.permute.xlu0 %2231
          %v2234 = vsel %vm921, %v2230, 0
          %v2237 = vsel %vm921, %v2232, 0
          %2239 = vmatprep.subr.bf16.mxu0 0
          %2240 = vmatpush1.bf16.xpose.msra.mxu0 %v2237
          %2241 = vmatprep.subr.bf16.mxu0 0
          %2242 = vmatpush1.bf16.xpose.msra.mxu0 0
          %2243 = vmatprep.subr.bf16.mxu0 0
          %2244 = vmatpush1.bf16.xpose.msra.mxu0 0
          %2245 = vmatprep.subr.bf16.mxu0 0
          %2246 = vmatpush1.bf16.xpose.msra.mxu0 0
          %2247 = vmatprep.subr.bf16.mxu0 0
          %2248 = vmatpush1.bf16.xpose.msra.mxu0 0
          %2249 = vmatprep.subr.bf16.mxu0 0
          %2250 = vmatpush1.bf16.xpose.msra.mxu0 0
          %2251 = vmatprep.subr.bf16.mxu0 0
          %2252 = vmatpush1.bf16.xpose.msra.mxu0 0
          %2253 = vmatprep.subr.bf16.mxu0 0
          %2254 = vmatpush1.bf16.xpose.msra.mxu0 0
          %2255 = vmatprep.subr.bf16.mxu0 0
          %2256 = vmatpush1.bf16.xpose.msra.mxu0 0
          %2257 = vmatprep.subr.bf16.mxu0 0
          %2258 = vmatpush1.bf16.xpose.msra.mxu0 0
          %2259 = vmatprep.subr.bf16.mxu0 0
          %2260 = vmatpush1.bf16.xpose.msra.mxu0 0
          %2261 = vmatprep.subr.bf16.mxu0 0
          %2262 = vmatpush1.bf16.xpose.msra.mxu0 0
          %2263 = vmatprep.subr.bf16.mxu0 0
          %2264 = vmatpush1.bf16.xpose.msra.mxu0 0
          %2265 = vmatprep.subr.bf16.mxu0 0
          %2266 = vmatpush1.bf16.xpose.msra.mxu0 0
          %2267 = vmatprep.subr.bf16.mxu0 0
          %2268 = vmatpush1.bf16.xpose.msra.mxu0 0
          %2269 = vmatprep.subr.bf16.mxu0 0
          %2270 = vmatpush1.bf16.xpose.msra.mxu0 0
          %2271 = vmatprep.mubr.bf16.mxu0 0
          %2272 = vmatmul.mubr.bf16.gmra.mrb[0].mxu0 %v2234
          %v2273 = vpop.f32.mrb[0].mxu0
          %v2274 = vadd.f32 0.0, %v2273
          %v2275 = vpop.f32.mrb[0].mxu0
          %v2276 = vpop.f32.mrb[0].mxu0
          %v2277 = vadd.f32 0.0, %v2276
          %v2278 = vpop.f32.mrb[0].mxu0
          %2279 = vdwg.mxu0
          %v2280 = vmul.f32 %v2274, 0.35355338
          %v2281 = vmul.f32 %v2277, 0.35355338
          %v2282 = vadd.f32 %v2280, %v980
          %v2283 = vadd.f32 %v2281, %v980
          %v2284 = vsel %vm983, %v2282, -inf
          %2285 = vmax.xlane.f32.xlu0 %v2284
          %v2286 = vpop.xlane.xlu0 %2285
          %v2287 = vsel %vm983, %v2283, -inf
          %2288 = vmax.xlane.f32.xlu0 %v2287
          %v2289 = vpop.xlane.xlu0 %2288
          %v2290 = vmax.f32 %v2286, -1e+30
          %v2291 = vmax.f32 %v2289, -1e+30
          %v2292 = vsub.f32 -1e+30, %v2290
          %v2293 = vsub.f32 -1e+30, %v2291
          %v2294 = vmul.f32 %v2292, 1.442695
          %v2295 = vpow.pop %v2294
          %v2296 = vmul.f32 %v2293, 1.442695
          %v2297 = vpow.pop %v2296
          %v2298 = vsub.f32 %v2282, %v2290
          %v2299 = vsub.f32 %v2283, %v2291
          %v2300 = vmul.f32 %v2298, 1.442695
          %v2301 = vpow.pop %v2300
          %v2302 = vmul.f32 %v2299, 1.442695
          %v2303 = vpow.pop %v2302
          %v2304 = vmul.f32 %v2295, 0.0
          %v2305 = vmul.f32 %v2297, 0.0
          %v2306 = vsel %vm983, %v2301, 0.0
          %2307 = vadd.xlane.f32.xlu0 %v2306
          %v2308 = vpop.xlane.xlu0 %2307
          %v2309 = vsel %vm983, %v2303, 0.0
          %2310 = vadd.xlane.f32.xlu0 %v2309
          %v2311 = vpop.xlane.xlu0 %2310
          %v2312 = vadd.f32 %v2304, %v2308
          %v2313 = vadd.f32 %v2305, %v2311
          %v2314 = vpack.c.bf16 %v2303, %v2301
          %2315 = vrot.lane.b32.xlu0 %v1949, 48
          %v2316 = vpop.permute.xlu0 %2315
          %v2319 = vsel %vm983, %v2314, 0
          %2321 = vmatprep.subr.bf16.mxu0 0
          %2322 = vmatpush1.bf16.msra.mxu0 %v2316
          %2323 = vmatprep.subr.bf16.mxu0 0
          %2324 = vmatpush1.bf16.msra.mxu0 0
          %2325 = vmatprep.subr.bf16.mxu0 0
          %2326 = vmatpush1.bf16.msra.mxu0 0
          %2327 = vmatprep.subr.bf16.mxu0 0
          %2328 = vmatpush1.bf16.msra.mxu0 0
          %2329 = vmatprep.subr.bf16.mxu0 0
          %2330 = vmatpush1.bf16.msra.mxu0 0
          %2331 = vmatprep.subr.bf16.mxu0 0
          %2332 = vmatpush1.bf16.msra.mxu0 0
          %2333 = vmatprep.subr.bf16.mxu0 0
          %2334 = vmatpush1.bf16.msra.mxu0 0
          %2335 = vmatprep.subr.bf16.mxu0 0
          %2336 = vmatpush1.bf16.msra.mxu0 0
          %2337 = vmatprep.subr.bf16.mxu0 0
          %2338 = vmatpush1.bf16.msra.mxu0 0
          %2339 = vmatprep.subr.bf16.mxu0 0
          %2340 = vmatpush1.bf16.msra.mxu0 0
          %2341 = vmatprep.subr.bf16.mxu0 0
          %2342 = vmatpush1.bf16.msra.mxu0 0
          %2343 = vmatprep.subr.bf16.mxu0 0
          %2344 = vmatpush1.bf16.msra.mxu0 0
          %2345 = vmatprep.subr.bf16.mxu0 0
          %2346 = vmatpush1.bf16.msra.mxu0 0
          %2347 = vmatprep.subr.bf16.mxu0 0
          %2348 = vmatpush1.bf16.msra.mxu0 0
          %2349 = vmatprep.subr.bf16.mxu0 0
          %2350 = vmatpush1.bf16.msra.mxu0 0
          %2351 = vmatprep.subr.bf16.mxu0 0
          %2352 = vmatpush1.bf16.msra.mxu0 0
          %2353 = vmatprep.mubr.bf16.mxu0 0
          %2354 = vmatmul.mubr.bf16.gmra.mrb[0].mxu0 %v2319
          %v2355 = vpop.f32.mrb[0].mxu0
          %v2356 = vadd.f32 0.0, %v2355
          %v2357 = vpop.f32.mrb[0].mxu0
          %v2358 = vpop.f32.mrb[0].mxu0
          %v2359 = vadd.f32 0.0, %v2358
          %v2360 = vpop.f32.mrb[0].mxu0
          %2361 = vdwg.mxu0
          %v2362 = vadd.f32 %v2304, %v2356
          %v2363 = vadd.f32 %v2305, %v2359
          %v2364 = vrcp.pop %v2312
          %v2365 = vrcp.pop %v2313
          %v2366 = vmul.f32 %v2362, %v2364
          %v2367 = vmul.f32 %v2363, %v2365
          %v2368 = vpack.c.bf16 %v2367, %v2366
          %2369 = vrot.lane.b32.xlu0 %v1949, 104
          %v2370 = vpop.permute.xlu0 %2369
          %2371 = vrot.lane.b32.xlu0 %v1949, 72
          %v2372 = vpop.permute.xlu0 %2371
          %v2374 = vsel %vm921, %v2370, 0
          %v2377 = vsel %vm921, %v2372, 0
          %2379 = vmatprep.subr.bf16.mxu0 0
          %2380 = vmatpush1.bf16.xpose.msra.mxu0 %v2377
          %2381 = vmatprep.subr.bf16.mxu0 0
          %2382 = vmatpush1.bf16.xpose.msra.mxu0 0
          %2383 = vmatprep.subr.bf16.mxu0 0
          %2384 = vmatpush1.bf16.xpose.msra.mxu0 0
          %2385 = vmatprep.subr.bf16.mxu0 0
          %2386 = vmatpush1.bf16.xpose.msra.mxu0 0
          %2387 = vmatprep.subr.bf16.mxu0 0
          %2388 = vmatpush1.bf16.xpose.msra.mxu0 0
          %2389 = vmatprep.subr.bf16.mxu0 0
          %2390 = vmatpush1.bf16.xpose.msra.mxu0 0
          %2391 = vmatprep.subr.bf16.mxu0 0
          %2392 = vmatpush1.bf16.xpose.msra.mxu0 0
          %2393 = vmatprep.subr.bf16.mxu0 0
          %2394 = vmatpush1.bf16.xpose.msra.mxu0 0
          %2395 = vmatprep.subr.bf16.mxu0 0
          %2396 = vmatpush1.bf16.xpose.msra.mxu0 0
          %2397 = vmatprep.subr.bf16.mxu0 0
          %2398 = vmatpush1.bf16.xpose.msra.mxu0 0
          %2399 = vmatprep.subr.bf16.mxu0 0
          %2400 = vmatpush1.bf16.xpose.msra.mxu0 0
          %2401 = vmatprep.subr.bf16.mxu0 0
          %2402 = vmatpush1.bf16.xpose.msra.mxu0 0
          %2403 = vmatprep.subr.bf16.mxu0 0
          %2404 = vmatpush1.bf16.xpose.msra.mxu0 0
          %2405 = vmatprep.subr.bf16.mxu0 0
          %2406 = vmatpush1.bf16.xpose.msra.mxu0 0
          %2407 = vmatprep.subr.bf16.mxu0 0
          %2408 = vmatpush1.bf16.xpose.msra.mxu0 0
          %2409 = vmatprep.subr.bf16.mxu0 0
          %2410 = vmatpush1.bf16.xpose.msra.mxu0 0
          %2411 = vmatprep.mubr.bf16.mxu0 0
          %2412 = vmatmul.mubr.bf16.gmra.mrb[0].mxu0 %v2374
          %v2413 = vpop.f32.mrb[0].mxu0
          %v2414 = vadd.f32 0.0, %v2413
          %v2415 = vpop.f32.mrb[0].mxu0
          %v2416 = vpop.f32.mrb[0].mxu0
          %v2417 = vadd.f32 0.0, %v2416
          %v2418 = vpop.f32.mrb[0].mxu0
          %2419 = vdwg.mxu0
          %v2420 = vmul.f32 %v2414, 0.35355338
          %v2421 = vmul.f32 %v2417, 0.35355338
          %v2422 = vadd.f32 %v2420, %v980
          %v2423 = vadd.f32 %v2421, %v980
          %v2424 = vsel %vm983, %v2422, -inf
          %2425 = vmax.xlane.f32.xlu0 %v2424
          %v2426 = vpop.xlane.xlu0 %2425
          %v2427 = vsel %vm983, %v2423, -inf
          %2428 = vmax.xlane.f32.xlu0 %v2427
          %v2429 = vpop.xlane.xlu0 %2428
          %v2430 = vmax.f32 %v2426, -1e+30
          %v2431 = vmax.f32 %v2429, -1e+30
          %v2432 = vsub.f32 -1e+30, %v2430
          %v2433 = vsub.f32 -1e+30, %v2431
          %v2434 = vmul.f32 %v2432, 1.442695
          %v2435 = vpow.pop %v2434
          %v2436 = vmul.f32 %v2433, 1.442695
          %v2437 = vpow.pop %v2436
          %v2438 = vsub.f32 %v2422, %v2430
          %v2439 = vsub.f32 %v2423, %v2431
          %v2440 = vmul.f32 %v2438, 1.442695
          %v2441 = vpow.pop %v2440
          %v2442 = vmul.f32 %v2439, 1.442695
          %v2443 = vpow.pop %v2442
          %v2444 = vmul.f32 %v2435, 0.0
          %v2445 = vmul.f32 %v2437, 0.0
          %v2446 = vsel %vm983, %v2441, 0.0
          %2447 = vadd.xlane.f32.xlu0 %v2446
          %v2448 = vpop.xlane.xlu0 %2447
          %v2449 = vsel %vm983, %v2443, 0.0
          %2450 = vadd.xlane.f32.xlu0 %v2449
          %v2451 = vpop.xlane.xlu0 %2450
          %v2452 = vadd.f32 %v2444, %v2448
          %v2453 = vadd.f32 %v2445, %v2451
          %v2454 = vpack.c.bf16 %v2443, %v2441
          %2455 = vrot.lane.b32.xlu0 %v1949, 40
          %v2456 = vpop.permute.xlu0 %2455
          %v2459 = vsel %vm983, %v2454, 0
          %2461 = vmatprep.subr.bf16.mxu0 0
          %2462 = vmatpush1.bf16.msra.mxu0 %v2456
          %2463 = vmatprep.subr.bf16.mxu0 0
          %2464 = vmatpush1.bf16.msra.mxu0 0
          %2465 = vmatprep.subr.bf16.mxu0 0
          %2466 = vmatpush1.bf16.msra.mxu0 0
          %2467 = vmatprep.subr.bf16.mxu0 0
          %2468 = vmatpush1.bf16.msra.mxu0 0
          %2469 = vmatprep.subr.bf16.mxu0 0
          %2470 = vmatpush1.bf16.msra.mxu0 0
          %2471 = vmatprep.subr.bf16.mxu0 0
          %2472 = vmatpush1.bf16.msra.mxu0 0
          %2473 = vmatprep.subr.bf16.mxu0 0
          %2474 = vmatpush1.bf16.msra.mxu0 0
          %2475 = vmatprep.subr.bf16.mxu0 0
          %2476 = vmatpush1.bf16.msra.mxu0 0
          %2477 = vmatprep.subr.bf16.mxu0 0
          %2478 = vmatpush1.bf16.msra.mxu0 0
          %2479 = vmatprep.subr.bf16.mxu0 0
          %2480 = vmatpush1.bf16.msra.mxu0 0
          %2481 = vmatprep.subr.bf16.mxu0 0
          %2482 = vmatpush1.bf16.msra.mxu0 0
          %2483 = vmatprep.subr.bf16.mxu0 0
          %2484 = vmatpush1.bf16.msra.mxu0 0
          %2485 = vmatprep.subr.bf16.mxu0 0
          %2486 = vmatpush1.bf16.msra.mxu0 0
          %2487 = vmatprep.subr.bf16.mxu0 0
          %2488 = vmatpush1.bf16.msra.mxu0 0
          %2489 = vmatprep.subr.bf16.mxu0 0
          %2490 = vmatpush1.bf16.msra.mxu0 0
          %2491 = vmatprep.subr.bf16.mxu0 0
          %2492 = vmatpush1.bf16.msra.mxu0 0
          %2493 = vmatprep.mubr.bf16.mxu0 0
          %2494 = vmatmul.mubr.bf16.gmra.mrb[0].mxu0 %v2459
          %v2495 = vpop.f32.mrb[0].mxu0
          %v2496 = vadd.f32 0.0, %v2495
          %v2497 = vpop.f32.mrb[0].mxu0
          %v2498 = vpop.f32.mrb[0].mxu0
          %v2499 = vadd.f32 0.0, %v2498
          %v2500 = vpop.f32.mrb[0].mxu0
          %2501 = vdwg.mxu0
          %v2502 = vadd.f32 %v2444, %v2496
          %v2503 = vadd.f32 %v2445, %v2499
          %v2504 = vrcp.pop %v2452
          %v2505 = vrcp.pop %v2453
          %v2506 = vmul.f32 %v2502, %v2504
          %v2507 = vmul.f32 %v2503, %v2505
          %v2508 = vpack.c.bf16 %v2507, %v2506
          %2510 = vrot.lane.b32.xlu0 %v2228, 8
          %v2511 = vpop.permute.xlu0 %2510
          %2513 = vrot.lane.b32.xlu0 %v2368, 16
          %v2514 = vpop.permute.xlu0 %2513
          %2516 = vrot.lane.b32.xlu0 %v2508, 24
          %v2517 = vpop.permute.xlu0 %2516
          %v2520 = vsel %vm921, %v2088, %v2511
          %v2522 = vsel %vm983, %v2520, %v2514
          %v2524 = vsel %vm1503, %v2522, %v2517
          %s2525 = scalar_lea.vmem %s8, 16
          %v2526 = vld [vmem:[%s2525] sm:$0xf]
          %v2527 = vld [vmem:[%s2525 + $0x4] sm:$0xf]
          %v2528 = vld [vmem:[%s2525 + $0x8] sm:$0xf]
          %v2529 = vld [vmem:[%s2525 + $0xc] sm:$0xf]
          %s2530 = scalar_lea.vmem %s9, 1
          %v2531 = vld [vmem:[%s2530] sm:$0x1]
          %v2533 = vlaneseq
          %v2534 = vshrl.u32 %v2533, 7
          %v2535 = vsub.s32 0, %v2534
          %v2536 = vrot.slane %v2531, %v2535
          %v2542 = vunpack.c.l.b16 %v2526
          %v2543 = vunpack.c.l.b16 %v2527
          %v2544 = vunpack.c.l.b16 %v2528
          %v2545 = vunpack.c.l.b16 %v2529
          %v2546 = vpack.c.b16 %v2543, %v2542
          %v2547 = vpack.c.b16 %v2545, %v2544
          %v2550 = vsel %vm699, %v2524, 0
          %2552 = vmatprep.subr.bf16.mxu0 0
          %2553 = vmatpush1.bf16.msra.mxu0 %v2546
          %2554 = vmatprep.subr.bf16.mxu0 0
          %2555 = vmatpush1.bf16.msra.mxu0 %v2547
          %2556 = vmatprep.subr.bf16.mxu0 0
          %2557 = vmatpush1.bf16.msra.mxu0 0
          %2558 = vmatprep.subr.bf16.mxu0 0
          %2559 = vmatpush1.bf16.msra.mxu0 0
          %2560 = vmatprep.subr.bf16.mxu0 0
          %2561 = vmatpush1.bf16.msra.mxu0 0
          %2562 = vmatprep.subr.bf16.mxu0 0
          %2563 = vmatpush1.bf16.msra.mxu0 0
          %2564 = vmatprep.subr.bf16.mxu0 0
          %2565 = vmatpush1.bf16.msra.mxu0 0
          %2566 = vmatprep.subr.bf16.mxu0 0
          %2567 = vmatpush1.bf16.msra.mxu0 0
          %2568 = vmatprep.subr.bf16.mxu0 0
          %2569 = vmatpush1.bf16.msra.mxu0 0
          %2570 = vmatprep.subr.bf16.mxu0 0
          %2571 = vmatpush1.bf16.msra.mxu0 0
          %2572 = vmatprep.subr.bf16.mxu0 0
          %2573 = vmatpush1.bf16.msra.mxu0 0
          %2574 = vmatprep.subr.bf16.mxu0 0
          %2575 = vmatpush1.bf16.msra.mxu0 0
          %2576 = vmatprep.subr.bf16.mxu0 0
          %2577 = vmatpush1.bf16.msra.mxu0 0
          %2578 = vmatprep.subr.bf16.mxu0 0
          %2579 = vmatpush1.bf16.msra.mxu0 0
          %2580 = vmatprep.subr.bf16.mxu0 0
          %2581 = vmatpush1.bf16.msra.mxu0 0
          %2582 = vmatprep.subr.bf16.mxu0 0
          %2583 = vmatpush1.bf16.msra.mxu0 0
          %2584 = vmatprep.mubr.bf16.mxu0 0
          %2585 = vmatmul.mubr.bf16.gmra.mrb[0].mxu0 %v2550
          %v2586 = vpop.f32.mrb[0].mxu0
          %v2587 = vadd.f32 %v2536, %v2586
          %v2588 = vpop.f32.mrb[0].mxu0
          %v2589 = vpop.f32.mrb[0].mxu0
          %v2590 = vadd.f32 %v2536, %v2589
          %v2591 = vpop.f32.mrb[0].mxu0
          %2592 = vdwg.mxu0
          %v2593 = vadd.f32 %v1947, %v2587
          %v2594 = vadd.f32 %v1948, %v2590
          %s2595 = scalar_lea.vmem %s10, 1
          %v2596 = vld [vmem:[%s2595] sm:$0x1]
          %s2597 = scalar_lea.vmem %s11, 1
          %v2598 = vld [vmem:[%s2597] sm:$0x1]
          %v2599 = vsel %vm699, %v2593, 0.0
          %2600 = vadd.xlane.f32.xlu0 %v2599
          %v2601 = vpop.xlane.xlu0 %2600
          %v2602 = vsel %vm699, %v2594, 0.0
          %2603 = vadd.xlane.f32.xlu0 %v2602
          %v2604 = vpop.xlane.xlu0 %2603
          %v2605 = vmul.f32 %v2601, %v807
          %v2606 = vmul.f32 %v2604, %v807
          %v2607 = vsub.f32 %v2593, %v2605
          %v2608 = vsub.f32 %v2594, %v2606
          %v2609 = vmul.f32 %v2607, %v2607
          %v2610 = vmul.f32 %v2608, %v2608
          %v2611 = vsel %vm699, %v2609, 0.0
          %2612 = vadd.xlane.f32.xlu0 %v2611
          %v2613 = vpop.xlane.xlu0 %2612
          %v2614 = vsel %vm699, %v2610, 0.0
          %2615 = vadd.xlane.f32.xlu0 %v2614
          %v2616 = vpop.xlane.xlu0 %2615
          %v2617 = vmul.f32 %v2613, %v807
          %v2618 = vmul.f32 %v2616, %v807
          %v2619 = vadd.f32 %v2617, 1e-05
          %v2620 = vadd.f32 %v2618, 1e-05
          %v2621 = vrsqrt.pop %v2619
          %v2622 = vrsqrt.pop %v2620
          %v2623 = vmul.f32 %v2607, %v2621
          %v2624 = vmul.f32 %v2608, %v2622
          %v2626 = vlaneseq
          %v2627 = vshrl.u32 %v2626, 7
          %v2628 = vsub.s32 0, %v2627
          %v2629 = vrot.slane %v2596, %v2628
          %v2631 = vmul.f32 %v2623, %v2629
          %v2632 = vmul.f32 %v2624, %v2629
          %v2634 = vlaneseq
          %v2635 = vshrl.u32 %v2634, 7
          %v2636 = vsub.s32 0, %v2635
          %v2637 = vrot.slane %v2598, %v2636
          %v2639 = vadd.f32 %v2631, %v2637
          %v2640 = vadd.f32 %v2632, %v2637
          %v2641 = vpack.c.bf16 %v2640, %v2639
          %s2642 = scalar_lea.vmem %s12, 16
          %v2643 = vld [vmem:[%s2642] sm:$0xf]
          %v2644 = vld [vmem:[%s2642 + $0x4] sm:$0xf]
          %v2645 = vld [vmem:[%s2642 + $0x8] sm:$0xf]
          %v2646 = vld [vmem:[%s2642 + $0xc] sm:$0xf]
          %s2647 = scalar_lea.vmem %s13, 1
          %v2648 = vld [vmem:[%s2647] sm:$0x1]
          %v2650 = vlaneseq
          %v2651 = vshrl.u32 %v2650, 7
          %v2652 = vsub.s32 0, %v2651
          %v2653 = vrot.slane %v2648, %v2652
          %v2659 = vunpack.c.l.b16 %v2643
          %v2660 = vunpack.c.l.b16 %v2644
          %v2661 = vunpack.c.l.b16 %v2645
          %v2662 = vunpack.c.l.b16 %v2646
          %v2663 = vpack.c.b16 %v2660, %v2659
          %v2664 = vpack.c.b16 %v2662, %v2661
          %v2668 = vsel %vm699, %v2641, 0
          %2670 = vmatprep.subr.bf16.mxu0 0
          %2671 = vmatpush1.bf16.msra.mxu0 %v2663
          %2672 = vmatprep.subr.bf16.mxu0 0
          %2673 = vmatpush1.bf16.msra.mxu0 %v2664
          %2674 = vmatprep.subr.bf16.mxu0 0
          %2675 = vmatpush1.bf16.msra.mxu0 0
          %2676 = vmatprep.subr.bf16.mxu0 0
          %2677 = vmatpush1.bf16.msra.mxu0 0
          %2678 = vmatprep.subr.bf16.mxu0 0
          %2679 = vmatpush1.bf16.msra.mxu0 0
          %2680 = vmatprep.subr.bf16.mxu0 0
          %2681 = vmatpush1.bf16.msra.mxu0 0
          %2682 = vmatprep.subr.bf16.mxu0 0
          %2683 = vmatpush1.bf16.msra.mxu0 0
          %2684 = vmatprep.subr.bf16.mxu0 0
          %2685 = vmatpush1.bf16.msra.mxu0 0
          %2686 = vmatprep.subr.bf16.mxu0 0
          %2687 = vmatpush1.bf16.msra.mxu0 0
          %2688 = vmatprep.subr.bf16.mxu0 0
          %2689 = vmatpush1.bf16.msra.mxu0 0
          %2690 = vmatprep.subr.bf16.mxu0 0
          %2691 = vmatpush1.bf16.msra.mxu0 0
          %2692 = vmatprep.subr.bf16.mxu0 0
          %2693 = vmatpush1.bf16.msra.mxu0 0
          %2694 = vmatprep.subr.bf16.mxu0 0
          %2695 = vmatpush1.bf16.msra.mxu0 0
          %2696 = vmatprep.subr.bf16.mxu0 0
          %2697 = vmatpush1.bf16.msra.mxu0 0
          %2698 = vmatprep.subr.bf16.mxu0 0
          %2699 = vmatpush1.bf16.msra.mxu0 0
          %2700 = vmatprep.subr.bf16.mxu0 0
          %2701 = vmatpush1.bf16.msra.mxu0 0
          %2702 = vmatprep.mubr.bf16.mxu0 0
          %2703 = vmatmul.mubr.bf16.gmra.mrb[0].mxu0 %v2668
          %v2704 = vpop.f32.mrb[0].mxu0
          %v2705 = vadd.f32 %v2653, %v2704
          %v2706 = vpop.f32.mrb[0].mxu0
          %v2707 = vpop.f32.mrb[0].mxu0
          %v2708 = vadd.f32 %v2653, %v2707
          %v2709 = vpop.f32.mrb[0].mxu0
          %2710 = vdwg.mxu0
          %v2711 = vmul.f32 %v2705, 0.5
          %v2712 = vmul.f32 %v2708, 0.5
          %v2713 = vmul.f32 %v2705, 0.70710677
          %v2714 = vmul.f32 %v2708, 0.70710677
          %v2715 = vand.u32 2147483647, %v2713
          %v2716 = vand.u32 2147483647, %v2714
          %v2717 = vmul.f32 %v2715, 0.3275911
          %v2718 = vmul.f32 %v2716, 0.3275911
          %v2719 = vadd.f32 %v2717, 1.0
          %v2720 = vadd.f32 %v2718, 1.0
          %v2721 = vrcp.pop %v2719
          %v2722 = vrcp.pop %v2720
          %v2723 = vmul.f32 %v2721, 1.0614054
          %v2724 = vmul.f32 %v2722, 1.0614054
          %v2725 = vadd.f32 %v2723, -1.4531521
          %v2726 = vadd.f32 %v2724, -1.4531521
          %v2727 = vmul.f32 %v2725, %v2721
          %v2728 = vmul.f32 %v2726, %v2722
          %v2729 = vadd.f32 %v2727, 1.4214138
          %v2730 = vadd.f32 %v2728, 1.4214138
          %v2731 = vmul.f32 %v2729, %v2721
          %v2732 = vmul.f32 %v2730, %v2722
          %v2733 = vadd.f32 %v2731, -0.28449672
          %v2734 = vadd.f32 %v2732, -0.28449672
          %v2735 = vmul.f32 %v2733, %v2721
          %v2736 = vmul.f32 %v2734, %v2722
          %v2737 = vadd.f32 %v2735, 0.2548296
          %v2738 = vadd.f32 %v2736, 0.2548296
          %v2739 = vmul.f32 %v2737, %v2721
          %v2740 = vmul.f32 %v2738, %v2722
          %v2741 = vsub.f32 0.0, %v2715
          %v2742 = vsub.f32 0.0, %v2716
          %v2743 = vmul.f32 %v2741, %v2715
          %v2744 = vmul.f32 %v2742, %v2716
          %v2745 = vmul.f32 %v2743, 1.442695
          %v2746 = vpow.pop %v2745
          %v2747 = vmul.f32 %v2744, 1.442695
          %v2748 = vpow.pop %v2747
          %v2749 = vmul.f32 %v2739, %v2746
          %v2750 = vmul.f32 %v2740, %v2748
          %v2751 = vsub.f32 1.0, %v2749
          %v2752 = vsub.f32 1.0, %v2750
          %vm2753 = vcmp.ge.f32.partialorder %v2713, 0.0
          %vm2754 = vcmp.ge.f32.partialorder %v2714, 0.0
          %v2755 = vsub.f32 0.0, %v2751
          %v2756 = vsub.f32 0.0, %v2752
          %v2757 = vsel %vm2753, %v2751, %v2755
          %v2758 = vsel %vm2754, %v2752, %v2756
          %v2759 = vadd.f32 %v2757, 1.0
          %v2760 = vadd.f32 %v2758, 1.0
          %v2761 = vmul.f32 %v2711, %v2759
          %v2762 = vmul.f32 %v2712, %v2760
          %v2763 = vpack.c.bf16 %v2762, %v2761
          %s2764 = scalar_lea.vmem %s14, 32
          %v2765 = vld [vmem:[%s2764] sm:$0xf]
          %v2766 = vld [vmem:[%s2764 + $0x4] sm:$0xf]
          %v2767 = vld [vmem:[%s2764 + $0x8] sm:$0xf]
          %v2768 = vld [vmem:[%s2764 + $0xc] sm:$0xf]
          %v2769 = vld [vmem:[%s2764 + $0x10] sm:$0xf]
          %v2770 = vld [vmem:[%s2764 + $0x14] sm:$0xf]
          %v2771 = vld [vmem:[%s2764 + $0x18] sm:$0xf]
          %v2772 = vld [vmem:[%s2764 + $0x1c] sm:$0xf]
          %s2773 = scalar_lea.vmem %s15, 1
          %v2774 = vld [vmem:[%s2773] sm:$0x1]
          %v2776 = vlaneseq
          %v2777 = vshrl.u32 %v2776, 7
          %v2778 = vsub.s32 0, %v2777
          %v2779 = vrot.slane %v2774, %v2778
          %v2789 = vunpack.c.l.b16 %v2765
          %v2790 = vunpack.c.l.b16 %v2766
          %v2791 = vunpack.c.l.b16 %v2767
          %v2792 = vunpack.c.l.b16 %v2768
          %v2793 = vunpack.c.l.b16 %v2769
          %v2794 = vunpack.c.l.b16 %v2770
          %v2795 = vunpack.c.l.b16 %v2771
          %v2796 = vunpack.c.l.b16 %v2772
          %v2797 = vpack.c.b16 %v2790, %v2789
          %v2798 = vpack.c.b16 %v2792, %v2791
          %v2799 = vpack.c.b16 %v2794, %v2793
          %v2800 = vpack.c.b16 %v2796, %v2795
          %v2806 = vsel %vm1778, %v2763, 0
          %2808 = vmatprep.subr.bf16.mxu0 0
          %2809 = vmatpush1.bf16.msra.mxu0 %v2797
          %2810 = vmatprep.subr.bf16.mxu0 0
          %2811 = vmatpush1.bf16.msra.mxu0 %v2798
          %2812 = vmatprep.subr.bf16.mxu0 0
          %2813 = vmatpush1.bf16.msra.mxu0 %v2799
          %2814 = vmatprep.subr.bf16.mxu0 0
          %2815 = vmatpush1.bf16.msra.mxu0 %v2800
          %2816 = vmatprep.subr.bf16.mxu0 0
          %2817 = vmatpush1.bf16.msra.mxu0 0
          %2818 = vmatprep.subr.bf16.mxu0 0
          %2819 = vmatpush1.bf16.msra.mxu0 0
          %2820 = vmatprep.subr.bf16.mxu0 0
          %2821 = vmatpush1.bf16.msra.mxu0 0
          %2822 = vmatprep.subr.bf16.mxu0 0
          %2823 = vmatpush1.bf16.msra.mxu0 0
          %2824 = vmatprep.subr.bf16.mxu0 0
          %2825 = vmatpush1.bf16.msra.mxu0 0
          %2826 = vmatprep.subr.bf16.mxu0 0
          %2827 = vmatpush1.bf16.msra.mxu0 0
          %2828 = vmatprep.subr.bf16.mxu0 0
          %2829 = vmatpush1.bf16.msra.mxu0 0
          %2830 = vmatprep.subr.bf16.mxu0 0
          %2831 = vmatpush1.bf16.msra.mxu0 0
          %2832 = vmatprep.subr.bf16.mxu0 0
          %2833 = vmatpush1.bf16.msra.mxu0 0
          %2834 = vmatprep.subr.bf16.mxu0 0
          %2835 = vmatpush1.bf16.msra.mxu0 0
          %2836 = vmatprep.subr.bf16.mxu0 0
          %2837 = vmatpush1.bf16.msra.mxu0 0
          %2838 = vmatprep.subr.bf16.mxu0 0
          %2839 = vmatpush1.bf16.msra.mxu0 0
          %2840 = vmatprep.mubr.bf16.mxu0 0
          %2841 = vmatmul.mubr.bf16.gmra.mrb[0].mxu0 %v2806
          %v2842 = vpop.f32.mrb[0].mxu0
          %v2843 = vadd.f32 %v2779, %v2842
          %v2844 = vpop.f32.mrb[0].mxu0
          %v2845 = vpop.f32.mrb[0].mxu0
          %v2846 = vadd.f32 %v2779, %v2845
          %v2847 = vpop.f32.mrb[0].mxu0
          %2848 = vdwg.mxu0
          %v2849 = vadd.f32 %v2593, %v2843
          %v2850 = vadd.f32 %v2594, %v2846
          %2851 = vst.msk [vmem:[#allocation2] sm:$0xff] %vm699, %v2849
          %2852 = vst.msk [vmem:[#allocation2 + $0x8] sm:$0xff] %vm699, %v2850
          %v2853 = vld [vmem:[#allocation2] sm:$0xff]
          %v2854 = vld [vmem:[%s16] sm:$0x1]
          %v2855 = vld [vmem:[%s17] sm:$0x1]
          %v2856 = vsel %vm699, %v2853, 0.0
          %2857 = vadd.xlane.f32.xlu0 %v2856
          %v2858 = vpop.xlane.xlu0 %2857
          %v2859 = vmul.f32 %v2858, %v807
          %v2860 = vsub.f32 %v2853, %v2859
          %v2861 = vmul.f32 %v2860, %v2860
          %v2862 = vsel %vm699, %v2861, 0.0
          %2863 = vadd.xlane.f32.xlu0 %v2862
          %v2864 = vpop.xlane.xlu0 %2863
          %v2865 = vmul.f32 %v2864, %v807
          %v2866 = vadd.f32 %v2865, 1e-05
          %v2867 = vrsqrt.pop %v2866
          %v2868 = vmul.f32 %v2860, %v2867
          %v2870 = vlaneseq
          %v2871 = vshrl.u32 %v2870, 7
          %v2872 = vsub.s32 0, %v2871
          %v2873 = vrot.slane %v2854, %v2872
          %v2875 = vmul.f32 %v2868, %v2873
          %v2877 = vlaneseq
          %v2878 = vshrl.u32 %v2877, 7
          %v2879 = vsub.s32 0, %v2878
          %v2880 = vrot.slane %v2855, %v2879
          %v2882 = vadd.f32 %v2875, %v2880
          %v2883 = vpack.c.bf16 %v2882, %v2882
          %v2884 = vld [vmem:[%s18] sm:$0xf]
          %v2885 = vld [vmem:[%s18 + $0x4] sm:$0xf]
          %v2886 = vld [vmem:[%s18 + $0x8] sm:$0xf]
          %v2887 = vld [vmem:[%s18 + $0xc] sm:$0xf]
          %v2888 = vld [vmem:[%s19] sm:$0x1]
          %v2890 = vlaneseq
          %v2891 = vshrl.u32 %v2890, 7
          %v2892 = vsub.s32 0, %v2891
          %v2893 = vrot.slane %v2888, %v2892
          %v2899 = vunpack.c.l.b16 %v2884
          %v2900 = vunpack.c.l.b16 %v2885
          %v2901 = vunpack.c.l.b16 %v2886
          %v2902 = vunpack.c.l.b16 %v2887
          %v2903 = vpack.c.b16 %v2900, %v2899
          %v2904 = vpack.c.b16 %v2902, %v2901
          %v2908 = vsel %vm699, %v2883, 0
          %2910 = vmatprep.subr.bf16.mxu0 0
          %2911 = vmatpush1.bf16.msra.mxu0 %v2903
          %2912 = vmatprep.subr.bf16.mxu0 0
          %2913 = vmatpush1.bf16.msra.mxu0 %v2904
          %2914 = vmatprep.subr.bf16.mxu0 0
          %2915 = vmatpush1.bf16.msra.mxu0 0
          %2916 = vmatprep.subr.bf16.mxu0 0
          %2917 = vmatpush1.bf16.msra.mxu0 0
          %2918 = vmatprep.subr.bf16.mxu0 0
          %2919 = vmatpush1.bf16.msra.mxu0 0
          %2920 = vmatprep.subr.bf16.mxu0 0
          %2921 = vmatpush1.bf16.msra.mxu0 0
          %2922 = vmatprep.subr.bf16.mxu0 0
          %2923 = vmatpush1.bf16.msra.mxu0 0
          %2924 = vmatprep.subr.bf16.mxu0 0
          %2925 = vmatpush1.bf16.msra.mxu0 0
          %2926 = vmatprep.subr.bf16.mxu0 0
          %2927 = vmatpush1.bf16.msra.mxu0 0
          %2928 = vmatprep.subr.bf16.mxu0 0
          %2929 = vmatpush1.bf16.msra.mxu0 0
          %2930 = vmatprep.subr.bf16.mxu0 0
          %2931 = vmatpush1.bf16.msra.mxu0 0
          %2932 = vmatprep.subr.bf16.mxu0 0
          %2933 = vmatpush1.bf16.msra.mxu0 0
          %2934 = vmatprep.subr.bf16.mxu0 0
          %2935 = vmatpush1.bf16.msra.mxu0 0
          %2936 = vmatprep.subr.bf16.mxu0 0
          %2937 = vmatpush1.bf16.msra.mxu0 0
          %2938 = vmatprep.subr.bf16.mxu0 0
          %2939 = vmatpush1.bf16.msra.mxu0 0
          %2940 = vmatprep.subr.bf16.mxu0 0
          %2941 = vmatpush1.bf16.msra.mxu0 0
          %2942 = vmatprep.mubr.bf16.mxu0 0
          %2943 = vmatmul.mubr.bf16.gmra.mrb[0].mxu0 %v2908
          %v2944 = vpop.f32.mrb[0].mxu0
          %v2945 = vadd.f32 %v2893, %v2944
          %v2946 = vpop.f32.mrb[0].mxu0
          %v2947 = vpop.f32.mrb[0].mxu0
          %v2948 = vpop.f32.mrb[0].mxu0
          %2949 = vdwg.mxu0
          %vm2950 = vcmask 16384
          %2951 = vst.msk [vmem:[%s665] sm:$0x1] %vm2950, %v2945
        $region112: #{tpu_custom_call.1} parent=99 // pred_fallthru
          _
        %s2952 = sand.u32 %s483, 1
        %s2953 = scalar_lea.sflag [#allocation6], %s2952
        %s2954 = sand.u32 %s483, 1
        %s2955 = scalar_lea.vmem [#allocation9], %s2954
        // Predicated region
        $region113: #{tpu_custom_call.1} parent=99 // pred_check
          %p2956 = pneg %p493
        $region114: #{tpu_custom_call.1} parent=99 // pred_check_branch
          %2958 = sbr.rel (%p2956) target = $region116
        $region115: #{tpu_custom_call.1} parent=99 // pred_region
          %s2960 = ssub.s32 16, 16
          %2961 = vsyncadd %s2953, %s2960
          %s2962 = smul.addr %s40, 16
          %s2963 = scalar_lea.hbm %s20, %s2962
          %s2965 = sshll.u32 %s2955, 4
          %s2966 = int_to_ptr.vmem [resolvable:$true] %s2965
          %2968 = dma.vmem_to_hbm [thread:$0]  %s2966, 16, %s2963, %s2953
        $region116: #{tpu_custom_call.1} parent=99 // pred_fallthru
          _
      $region100: #{tpu_custom_call.1} parent=5 // pred_fallthru
        _
      %p2969 = scmp.le.s32.totalorder 2, %s31
      // Predicated region
      $region117: #{tpu_custom_call.1} parent=5 // pred_check
        %p2970 = pneg %p2969
      $region118: #{tpu_custom_call.1} parent=5 // pred_check_branch
        %2972 = sbr.rel (%p2970) target = $region120
      $region119: #{tpu_custom_call.1} parent=5 // pred_region
        %s2973 = ssub.s32 %s31, 2
        // Predicated region
        $region121: #{tpu_custom_call.1} parent=119 // pred_check
          %p2974 = pneg %p499
        $region122: #{tpu_custom_call.1} parent=119 // pred_check_branch
          %2976 = sbr.rel (%p2974) target = $region124
        $region123: #{tpu_custom_call.1} parent=119 // pred_region
          %s2977 = sand.u32 %s484, 1
          %s2978 = scalar_lea.sflag [#allocation6], %s2977
          %s2979 = sand.u32 %s484, 1
          %s2980 = scalar_lea.vmem [#allocation9], %s2979
          %2981 = dma.done %s2978, 16
        $region124: #{tpu_custom_call.1} parent=119 // pred_fallthru
          _
      $region120: #{tpu_custom_call.1} parent=5 // pred_fallthru
        _
    $region6: #{tpu_custom_call.1} parent=1 // loop_footer
      %s35 = sadd.s32 1, %s31
    $region7: #{tpu_custom_call.1} parent=1 // loop_footer_branch
      %30 = sbr.rel target = $region3
    $region8: #{tpu_custom_call.1} parent=1 // loop_exit
      _
    %2982 = vsyncpa [#allocation5], 1
    %s2983 = scalar_lea.sflag [#allocation5], 1
    %2984 = vsyncpa %s2983, 1
    %2985 = vsyncpa [#allocation8], 1
    %2986 = vsyncpa [#allocation6], 1
    %s2987 = scalar_lea.sflag [#allocation6], 1
    %2988 = vsyncpa %s2987, 1

</llo_original>
